<compile_context>
chip_gen: v7x
topology: tpu7x:2x2x1
jax: 0.10.0
libtpu: 0.0.40
codegen_flags: <defaults>
</compile_context>

<pallas_src>
import functools

import jax
import jax.numpy as jnp
import numpy as np
from jax import lax
from jax.experimental import pallas as pl
from jax.experimental.pallas import tpu as pltpu


# ----------------------------- Pallas kernel --------------------------------

def selector_kernel(x_ref, w1_ref, wlin_ref, wgat_ref, blin_ref, bgat_ref,
                    gamma_ref, beta_ref, w2t_ref, b2_ref, alpha_ref,
                    out_ref, hpad_ref, *, dilations, kernel_size, filters,
                    max_pad):
  """One batch block per grid step.

  x_ref     : (Bblk, L, D)            bf16
  w1_ref    : (D, F)                  bf16
  wlin/wgat : (NL*K, F, F)            bf16  per-tap conv weights (lin / gate)
  blin/bgat : (NL, F)                 f32
  gamma/beta: (NL, F)                 f32
  w2t_ref   : (4, F)                  bf16
  b2_ref    : (4, 1)                  f32
  alpha_ref : (NL,)                   f32 in SMEM
  out_ref   : (1, 4, Bblk*L)          f32  (transposed -> lane-dense store)
  hpad_ref  : (Bblk, L+2*max_pad, F)  f32  scratch, halo rows stay zero
  """
  Bblk, L, D = x_ref.shape
  F = filters
  K = kernel_size
  M = Bblk * L

  # dense1 (no bias): (M, D) @ (D, F) -> f32 accumulate.
  x = x_ref[...].reshape(M, D)
  h = jnp.dot(x, w1_ref[...], preferred_element_type=jnp.float32)     # (M, F)

  # Zero only the halo rows of the padded scratch; the middle rows are
  # rewritten at the top of every layer.  Done every grid step (cheap) so it
  # is correct when the grid is sharded across TensorCores.
  halo = jnp.zeros((Bblk, max_pad, F), jnp.float32)
  hpad_ref[:, pl.ds(0, max_pad), :] = halo
  hpad_ref[:, pl.ds(max_pad + L, max_pad), :] = halo

  for i, dil in enumerate(dilations):                 # static unroll (layers)
    pad = dil * (K - 1) // 2

    # Current activations into the middle of the padded scratch.
    hpad_ref[:, pl.ds(max_pad, L), :] = h.reshape(Bblk, L, F)

    # Dilated conv as K accumulated matmuls.  Linear / gate halves have
    # separate (F, F) weights so both outputs stay lane-0 aligned.
    lin = jnp.zeros((M, F), jnp.float32)
    gat = jnp.zeros((M, F), jnp.float32)
    for t in range(K):                                # static unroll (taps)
      tap = hpad_ref[:, pl.ds(max_pad - pad + t * dil, L), :]
      tap = tap.reshape(M, F).astype(jnp.bfloat16)
      lin = lin + jnp.dot(tap, wlin_ref[i * K + t],
                          preferred_element_type=jnp.float32)
      gat = gat + jnp.dot(tap, wgat_ref[i * K + t],
                          preferred_element_type=jnp.float32)
    lin = lin + blin_ref[i][None, :]
    gat = gat + bgat_ref[i][None, :]

    g = lin * jax.nn.sigmoid(gat)                     # gated output (M, F)

    # LayerNorm over features (two-pass, biased variance, eps=1e-5 as torch).
    mu = jnp.mean(g, axis=-1, keepdims=True)
    d = g - mu
    var = jnp.mean(d * d, axis=-1, keepdims=True)
    gn = d * lax.rsqrt(var + 1e-5)
    gn = gn * gamma_ref[i][None, :] + beta_ref[i][None, :]

    h = h + alpha_ref[i] * gn                         # alpha: scalar (SMEM)

  # dense2, computed transposed: (4, F) . (M, F)^T -> (4, M).  The output
  # slab's last dim is M (a multiple of 128 in the demo) so the store and the
  # HBM writeback are lane-dense instead of 4-wide masked stores.
  out_t = lax.dot_general(w2t_ref[...], h.astype(jnp.bfloat16),
                          (((1,), (1,)), ((), ())),
                          preferred_element_type=jnp.float32)
  out_ref[0] = out_t + b2_ref[...]


# --------------------------------- wrapper -----------------------------------

def selector2_forward(x, params, *, dilations, kernel_size, filters,
                      block_batch=8):
  B, L, D = x.shape
  F = filters
  K = kernel_size
  NL = len(dilations)
  max_pad = max(dilations) * (K - 1) // 2

  # mask = torch.sum(|x| >= 1e-5, axis=-1).bool()   (computed in the wrapper;
  # no narrow masked store from the kernel)
  mask = jnp.max(jnp.abs(x), axis=-1) >= 1e-5

  bblk = min(block_batch, B)
  nblk = pl.cdiv(B, bblk)
  b_pad = nblk * bblk
  if b_pad != B:                                     # pad batch to a multiple
    x = jnp.pad(x, ((0, b_pad - B), (0, 0), (0, 0)))
  M = bblk * L

  # Host-side weight prep: per-tap im2col split + bf16 cast for the MXU.
  w_all = jnp.transpose(params["conv_w"], (0, 3, 2, 1))       # (NL, K, F, 2F)
  w_all = w_all.reshape(NL * K, F, 2 * F)
  w_lin = w_all[..., :F].astype(jnp.bfloat16)                 # (NL*K, F, F)
  w_gat = w_all[..., F:].astype(jnp.bfloat16)                 # (NL*K, F, F)
  b_lin = params["conv_b"][:, :F]
  b_gat = params["conv_b"][:, F:]
  w1 = params["w1"].astype(jnp.bfloat16)
  w2t = params["w2"].T.astype(jnp.bfloat16)                   # (4, F)
  b2c = params["b2"].reshape(4, 1)

  kern = functools.partial(selector_kernel, dilations=tuple(dilations),
                           kernel_size=K, filters=F, max_pad=max_pad)

  out_t = pl.pallas_call(
      kern,
      out_shape=jax.ShapeDtypeStruct((nblk, 4, M), jnp.float32),
      grid=(nblk,),
      in_specs=[
          pl.BlockSpec((bblk, L, D), lambda b: (b, 0, 0)),         # x
          pl.BlockSpec((D, F), lambda b: (0, 0)),                  # w1
          pl.BlockSpec((NL * K, F, F), lambda b: (0, 0, 0)),       # w_lin
          pl.BlockSpec((NL * K, F, F), lambda b: (0, 0, 0)),       # w_gat
          pl.BlockSpec((NL, F), lambda b: (0, 0)),                 # b_lin
          pl.BlockSpec((NL, F), lambda b: (0, 0)),                 # b_gat
          pl.BlockSpec((NL, F), lambda b: (0, 0)),                 # gamma
          pl.BlockSpec((NL, F), lambda b: (0, 0)),                 # beta
          pl.BlockSpec((4, F), lambda b: (0, 0)),                  # w2^T
          pl.BlockSpec((4, 1), lambda b: (0, 0)),                  # b2
          pl.BlockSpec(memory_space=pltpu.MemorySpace.SMEM),       # alpha
      ],
      out_specs=pl.BlockSpec((1, 4, M), lambda b: (b, 0, 0)),
      scratch_shapes=[pltpu.VMEM((bblk, L + 2 * max_pad, F), jnp.float32)],
      compiler_params=pltpu.CompilerParams(
          dimension_semantics=("parallel",)),
  )(x.astype(jnp.bfloat16), w1, w_lin, w_gat, b_lin, b_gat,
    params["gamma"], params["beta"], w2t, b2c, params["alpha"])

  # (nblk, 4, M) -> (B, L, 4)
  out = out_t.transpose(0, 2, 1).reshape(b_pad, L, 4)[:B]
  return out, mask


# --------------------------- pure-JAX reference ------------------------------

def selector2_reference(x, params, *, dilations, kernel_size, filters,
                        matmul_dtype=jnp.float32):
  """PyTorch-faithful reference. matmul_dtype=bf16 mimics the kernel's MXU
  operand precision (f32 accumulation either way)."""
  F = filters
  cast = lambda a: a.astype(matmul_dtype)
  mask = jnp.sum((jnp.abs(x) >= 1e-5).astype(jnp.int32), axis=-1) > 0
  h = jnp.dot(cast(x), cast(params["w1"]),
              preferred_element_type=jnp.float32)
  for i, dil in enumerate(dilations):
    pad = dil * (kernel_size - 1) // 2
    wt = params["conv_w"][i]                         # (2F, F, K) torch layout
    out = lax.conv_general_dilated(
        cast(jnp.transpose(h, (0, 2, 1))), cast(wt), window_strides=(1,),
        padding=[(pad, pad)], rhs_dilation=(dil,),
        dimension_numbers=("NCH", "OIH", "NCH"),
        preferred_element_type=jnp.float32)
    out = jnp.transpose(out, (0, 2, 1)) + params["conv_b"][i]
    gate = jax.nn.sigmoid(out[..., F:])
    g = out[..., :F] * gate
    mu = g.mean(-1, keepdims=True)
    var = ((g - mu) ** 2).mean(-1, keepdims=True)
    gn = (g - mu) * lax.rsqrt(var + 1e-5)
    gn = gn * params["gamma"][i] + params["beta"][i]
    h = h + params["alpha"][i] * gn
  out = jnp.dot(cast(h), cast(params["w2"]),
                preferred_element_type=jnp.float32)
  out = out + params["b2"].reshape(1, 1, 4)
  return out, mask


# --------------------------------- main --------------------------------------

if __name__ == "__main__":
  # module config
  INPUT_SIZE, FILTERS, KSIZE = 64, 32, 3
  DILATIONS = (1, 2, 4, 8, 1, 1)
  B, L = 12, 16                # B not a multiple of block_batch: exercises pad
  NL = len(DILATIONS)

  key = jax.random.PRNGKey(0)
  ks = jax.random.split(key, 8)

  params = {
      "w1": 0.1 * jax.random.normal(ks[0], (INPUT_SIZE, FILTERS), jnp.float32),
      "conv_w": 0.1 * jax.random.normal(
          ks[1], (NL, 2 * FILTERS, FILTERS, KSIZE), jnp.float32),
      "conv_b": 0.1 * jax.random.normal(ks[2], (NL, 2 * FILTERS), jnp.float32),
      "gamma": 1.0 + 0.05 * jax.random.normal(ks[3], (NL, FILTERS), jnp.float32),
      "beta": 0.05 * jax.random.normal(ks[4], (NL, FILTERS), jnp.float32),
      # torch init is zeros(1); use nonzero deterministic values so the
      # residual blocks are exercised.
      "alpha": 0.1 + 0.05 * jnp.arange(NL, dtype=jnp.float32),
      "w2": 0.1 * jax.random.normal(ks[5], (FILTERS, 4), jnp.float32),
      "b2": 0.1 * jax.random.normal(ks[6], (4,), jnp.float32),
  }

  x = jax.random.normal(ks[7], (B, L, INPUT_SIZE), jnp.float32)
  # zero out a couple of rows so the mask has both values
  x = x.at[0, 3].set(0.0).at[5, 7].set(0.0)

  fwd = jax.jit(functools.partial(
      selector2_forward, dilations=DILATIONS, kernel_size=KSIZE,
      filters=FILTERS, block_batch=8))
  out, mask = fwd(x, params)
  jax.block_until_ready((out, mask))

  # Strict check vs a reference using the same bf16 matmul-operand precision.
  ref_bf, ref_mask = selector2_reference(
      x, params, dilations=DILATIONS, kernel_size=KSIZE, filters=FILTERS,
      matmul_dtype=jnp.bfloat16)
  np.testing.assert_allclose(np.asarray(out), np.asarray(ref_bf),
                             rtol=2e-3, atol=2e-3)
  np.testing.assert_array_equal(np.asarray(mask), np.asarray(ref_mask))

  # Coarse sanity check vs the full-f32 (PyTorch-faithful) reference; the gap
  # is only bf16-vs-f32 matmul-operand rounding.
  ref_f32, _ = selector2_reference(
      x, params, dilations=DILATIONS, kernel_size=KSIZE, filters=FILTERS,
      matmul_dtype=jnp.float32)
  np.testing.assert_allclose(np.asarray(out), np.asarray(ref_f32),
                             rtol=5e-2, atol=5e-2)

  print("KERNEL_OK")
</pallas_src>

<mosaic_0001>
module attributes {stable_mosaic.version = 11 : i64} {
  func.func @selector_kernel(%arg0: i32, %arg1: memref<8x16x64xbf16, #tpu.memory_space<vmem>>, %arg2: memref<64x32xbf16, #tpu.memory_space<vmem>>, %arg3: memref<18x32x32xbf16, #tpu.memory_space<vmem>>, %arg4: memref<18x32x32xbf16, #tpu.memory_space<vmem>>, %arg5: memref<6x32xf32, #tpu.memory_space<vmem>>, %arg6: memref<6x32xf32, #tpu.memory_space<vmem>>, %arg7: memref<6x32xf32, #tpu.memory_space<vmem>>, %arg8: memref<6x32xf32, #tpu.memory_space<vmem>>, %arg9: memref<4x32xbf16, #tpu.memory_space<vmem>>, %arg10: memref<4x1xf32, #tpu.memory_space<vmem>>, %arg11: memref<6xf32, #tpu.memory_space<smem>>, %arg12: memref<1x4x128xf32, #tpu.memory_space<vmem>>, %arg13: memref<8x32x32xf32, #tpu.memory_space<vmem>>) attributes {dimension_semantics = [#tpu.dimension_semantics<parallel>], iteration_bounds = array<i64: 2>, scalar_prefetch = 0 : i64, scratch_operands = 1 : i64, tpu.core_type = #tpu.core_type<tc>, window_params = [{transform_indices = @transform_0, window_bounds = array<i64: 8, 16, 64>}, {pipeline_mode = #tpu.pipeline_mode<synchronous>, transform_indices = @transform_1, window_bounds = array<i64: 64, 32>}, {pipeline_mode = #tpu.pipeline_mode<synchronous>, transform_indices = @transform_2, window_bounds = array<i64: 18, 32, 32>}, {pipeline_mode = #tpu.pipeline_mode<synchronous>, transform_indices = @transform_3, window_bounds = array<i64: 18, 32, 32>}, {pipeline_mode = #tpu.pipeline_mode<synchronous>, transform_indices = @transform_4, window_bounds = array<i64: 6, 32>}, {pipeline_mode = #tpu.pipeline_mode<synchronous>, transform_indices = @transform_5, window_bounds = array<i64: 6, 32>}, {pipeline_mode = #tpu.pipeline_mode<synchronous>, transform_indices = @transform_6, window_bounds = array<i64: 6, 32>}, {pipeline_mode = #tpu.pipeline_mode<synchronous>, transform_indices = @transform_7, window_bounds = array<i64: 6, 32>}, {pipeline_mode = #tpu.pipeline_mode<synchronous>, transform_indices = @transform_8, window_bounds = array<i64: 4, 32>}, {pipeline_mode = #tpu.pipeline_mode<synchronous>, transform_indices = @transform_9, window_bounds = array<i64: 4, 1>}, {transform_indices = @transform_10, window_bounds = array<i64: 6>}, {transform_indices = @transform_11, window_bounds = array<i64: 1, 4, 128>}]} {
    %c0 = arith.constant 0 : index
    %c0_0 = arith.constant 0 : index
    %c0_1 = arith.constant 0 : index
    %0 = vector.load %arg1[%c0, %c0_0, %c0_1] : memref<8x16x64xbf16, #tpu.memory_space<vmem>>, vector<8x16x64xbf16>
    %1 = vector.shape_cast %0 : vector<8x16x64xbf16> to vector<128x64xbf16>
    %c0_2 = arith.constant 0 : index
    %c0_3 = arith.constant 0 : index
    %2 = vector.load %arg2[%c0_2, %c0_3] : memref<64x32xbf16, #tpu.memory_space<vmem>>, vector<64x32xbf16>
    %cst = arith.constant dense<0.000000e+00> : vector<128x32xf32>
    %3 = tpu.matmul %1, %2, %cst {dimension_numbers = #tpu.dot_dimension_numbers<[1], [0], [0], [1], [0, 0, 1, 1], [], []>} : vector<128x64xbf16>, vector<64x32xbf16>, vector<128x32xf32> -> vector<128x32xf32>
    %cst_4 = arith.constant 0.000000e+00 : f32
    %4 = vector.broadcast %cst_4 : f32 to vector<8x8x32xf32>
    %c0_5 = arith.constant 0 : index
    %c0_6 = arith.constant 0 : index
    %c0_7 = arith.constant 0 : index
    %5 = vector.load %arg13[%c0_5, %c0_6, %c0_7] : memref<8x32x32xf32, #tpu.memory_space<vmem>>, vector<8x8x32xf32>
    tpu.vector_store %arg13[%c0_5, %c0_6, %c0_7], %4 {strides = array<i32>} : memref<8x32x32xf32, #tpu.memory_space<vmem>>, vector<8x8x32xf32>,
    %c0_8 = arith.constant 0 : index
    %c24 = arith.constant 24 : index
    %c0_9 = arith.constant 0 : index
    %6 = vector.load %arg13[%c0_8, %c24, %c0_9] : memref<8x32x32xf32, #tpu.memory_space<vmem>>, vector<8x8x32xf32>
    tpu.vector_store %arg13[%c0_8, %c24, %c0_9], %4 {strides = array<i32>} : memref<8x32x32xf32, #tpu.memory_space<vmem>>, vector<8x8x32xf32>,
    %7 = vector.shape_cast %3 : vector<128x32xf32> to vector<8x16x32xf32>
    %c0_10 = arith.constant 0 : index
    %c8 = arith.constant 8 : index
    %c0_11 = arith.constant 0 : index
    %8 = vector.load %arg13[%c0_10, %c8, %c0_11] : memref<8x32x32xf32, #tpu.memory_space<vmem>>, vector<8x16x32xf32>
    tpu.vector_store %arg13[%c0_10, %c8, %c0_11], %7 {strides = array<i32>} : memref<8x32x32xf32, #tpu.memory_space<vmem>>, vector<8x16x32xf32>,
    %cst_12 = arith.constant 0.000000e+00 : f32
    %9 = vector.broadcast %cst_12 : f32 to vector<128x32xf32>
    %cst_13 = arith.constant 0.000000e+00 : f32
    %10 = vector.broadcast %cst_13 : f32 to vector<128x32xf32>
    %c0_14 = arith.constant 0 : index
    %c7 = arith.constant 7 : index
    %c0_15 = arith.constant 0 : index
    %11 = vector.load %arg13[%c0_14, %c7, %c0_15] : memref<8x32x32xf32, #tpu.memory_space<vmem>>, vector<8x16x32xf32>
    %12 = vector.shape_cast %11 : vector<8x16x32xf32> to vector<128x32xf32>
    %13 = arith.truncf %12 : vector<128x32xf32> to vector<128x32xbf16>
    %c0_16 = arith.constant 0 : index
    %c0_17 = arith.constant 0 : index
    %c0_18 = arith.constant 0 : index
    %14 = vector.load %arg3[%c0_16, %c0_17, %c0_18] : memref<18x32x32xbf16, #tpu.memory_space<vmem>>, vector<1x32x32xbf16>
    %15 = vector.shape_cast %14 : vector<1x32x32xbf16> to vector<32x32xbf16>
    %cst_19 = arith.constant dense<0.000000e+00> : vector<128x32xf32>
    %16 = tpu.matmul %13, %15, %cst_19 {dimension_numbers = #tpu.dot_dimension_numbers<[1], [0], [0], [1], [0, 0, 1, 1], [], []>} : vector<128x32xbf16>, vector<32x32xbf16>, vector<128x32xf32> -> vector<128x32xf32>
    %17 = arith.addf %9, %16 : vector<128x32xf32>
    %c0_20 = arith.constant 0 : index
    %c0_21 = arith.constant 0 : index
    %c0_22 = arith.constant 0 : index
    %18 = vector.load %arg4[%c0_20, %c0_21, %c0_22] : memref<18x32x32xbf16, #tpu.memory_space<vmem>>, vector<1x32x32xbf16>
    %19 = vector.shape_cast %18 : vector<1x32x32xbf16> to vector<32x32xbf16>
    %cst_23 = arith.constant dense<0.000000e+00> : vector<128x32xf32>
    %20 = tpu.matmul %13, %19, %cst_23 {dimension_numbers = #tpu.dot_dimension_numbers<[1], [0], [0], [1], [0, 0, 1, 1], [], []>} : vector<128x32xbf16>, vector<32x32xbf16>, vector<128x32xf32> -> vector<128x32xf32>
    %21 = arith.addf %10, %20 : vector<128x32xf32>
    %c0_24 = arith.constant 0 : index
    %c8_25 = arith.constant 8 : index
    %c0_26 = arith.constant 0 : index
    %22 = vector.load %arg13[%c0_24, %c8_25, %c0_26] : memref<8x32x32xf32, #tpu.memory_space<vmem>>, vector<8x16x32xf32>
    %23 = vector.shape_cast %22 : vector<8x16x32xf32> to vector<128x32xf32>
    %24 = arith.truncf %23 : vector<128x32xf32> to vector<128x32xbf16>
    %c1 = arith.constant 1 : index
    %c0_27 = arith.constant 0 : index
    %c0_28 = arith.constant 0 : index
    %25 = vector.load %arg3[%c1, %c0_27, %c0_28] : memref<18x32x32xbf16, #tpu.memory_space<vmem>>, vector<1x32x32xbf16>
    %26 = vector.shape_cast %25 : vector<1x32x32xbf16> to vector<32x32xbf16>
    %cst_29 = arith.constant dense<0.000000e+00> : vector<128x32xf32>
    %27 = tpu.matmul %24, %26, %cst_29 {dimension_numbers = #tpu.dot_dimension_numbers<[1], [0], [0], [1], [0, 0, 1, 1], [], []>} : vector<128x32xbf16>, vector<32x32xbf16>, vector<128x32xf32> -> vector<128x32xf32>
    %28 = arith.addf %17, %27 : vector<128x32xf32>
    %c1_30 = arith.constant 1 : index
    %c0_31 = arith.constant 0 : index
    %c0_32 = arith.constant 0 : index
    %29 = vector.load %arg4[%c1_30, %c0_31, %c0_32] : memref<18x32x32xbf16, #tpu.memory_space<vmem>>, vector<1x32x32xbf16>
    %30 = vector.shape_cast %29 : vector<1x32x32xbf16> to vector<32x32xbf16>
    %cst_33 = arith.constant dense<0.000000e+00> : vector<128x32xf32>
    %31 = tpu.matmul %24, %30, %cst_33 {dimension_numbers = #tpu.dot_dimension_numbers<[1], [0], [0], [1], [0, 0, 1, 1], [], []>} : vector<128x32xbf16>, vector<32x32xbf16>, vector<128x32xf32> -> vector<128x32xf32>
    %32 = arith.addf %21, %31 : vector<128x32xf32>
    %c0_34 = arith.constant 0 : index
    %c9 = arith.constant 9 : index
    %c0_35 = arith.constant 0 : index
    %33 = vector.load %arg13[%c0_34, %c9, %c0_35] : memref<8x32x32xf32, #tpu.memory_space<vmem>>, vector<8x16x32xf32>
    %34 = vector.shape_cast %33 : vector<8x16x32xf32> to vector<128x32xf32>
    %35 = arith.truncf %34 : vector<128x32xf32> to vector<128x32xbf16>
    %c2 = arith.constant 2 : index
    %c0_36 = arith.constant 0 : index
    %c0_37 = arith.constant 0 : index
    %36 = vector.load %arg3[%c2, %c0_36, %c0_37] : memref<18x32x32xbf16, #tpu.memory_space<vmem>>, vector<1x32x32xbf16>
    %37 = vector.shape_cast %36 : vector<1x32x32xbf16> to vector<32x32xbf16>
    %cst_38 = arith.constant dense<0.000000e+00> : vector<128x32xf32>
    %38 = tpu.matmul %35, %37, %cst_38 {dimension_numbers = #tpu.dot_dimension_numbers<[1], [0], [0], [1], [0, 0, 1, 1], [], []>} : vector<128x32xbf16>, vector<32x32xbf16>, vector<128x32xf32> -> vector<128x32xf32>
    %39 = arith.addf %28, %38 : vector<128x32xf32>
    %c2_39 = arith.constant 2 : index
    %c0_40 = arith.constant 0 : index
    %c0_41 = arith.constant 0 : index
    %40 = vector.load %arg4[%c2_39, %c0_40, %c0_41] : memref<18x32x32xbf16, #tpu.memory_space<vmem>>, vector<1x32x32xbf16>
    %41 = vector.shape_cast %40 : vector<1x32x32xbf16> to vector<32x32xbf16>
    %cst_42 = arith.constant dense<0.000000e+00> : vector<128x32xf32>
    %42 = tpu.matmul %35, %41, %cst_42 {dimension_numbers = #tpu.dot_dimension_numbers<[1], [0], [0], [1], [0, 0, 1, 1], [], []>} : vector<128x32xbf16>, vector<32x32xbf16>, vector<128x32xf32> -> vector<128x32xf32>
    %43 = arith.addf %32, %42 : vector<128x32xf32>
    %c0_43 = arith.constant 0 : index
    %c0_44 = arith.constant 0 : index
    %44 = vector.load %arg5[%c0_43, %c0_44] : memref<6x32xf32, #tpu.memory_space<vmem>>, vector<1x32xf32>
    %45 = vector.shape_cast %44 : vector<1x32xf32> to vector<32xf32>
    %46 = vector.shape_cast %45 : vector<32xf32> to vector<1x32xf32>
    %47 = vector.broadcast %46 : vector<1x32xf32> to vector<128x32xf32>
    %48 = arith.addf %39, %47 : vector<128x32xf32>
    %c0_45 = arith.constant 0 : index
    %c0_46 = arith.constant 0 : index
    %49 = vector.load %arg6[%c0_45, %c0_46] : memref<6x32xf32, #tpu.memory_space<vmem>>, vector<1x32xf32>
    %50 = vector.shape_cast %49 : vector<1x32xf32> to vector<32xf32>
    %51 = vector.shape_cast %50 : vector<32xf32> to vector<1x32xf32>
    %52 = vector.broadcast %51 : vector<1x32xf32> to vector<128x32xf32>
    %53 = arith.addf %43, %52 : vector<128x32xf32>
    %54 = arith.negf %53 : vector<128x32xf32>
    %55 = math.exp %54 : vector<128x32xf32>
    %cst_47 = arith.constant 1.000000e+00 : f32
    %56 = vector.broadcast %cst_47 : f32 to vector<128x32xf32>
    %57 = arith.addf %56, %55 : vector<128x32xf32>
    %58 = arith.divf %56, %57 : vector<128x32xf32>
    %59 = arith.mulf %48, %58 : vector<128x32xf32>
    %cst_48 = arith.constant dense<0.000000e+00> : vector<128xf32>
    %60 = vector.multi_reduction <add>, %59, %cst_48 [1] : vector<128x32xf32> to vector<128xf32>
    %61 = vector.shape_cast %60 : vector<128xf32> to vector<128x1xf32>
    %cst_49 = arith.constant 3.200000e+01 : f32
    %62 = vector.broadcast %cst_49 : f32 to vector<128x1xf32>
    %63 = arith.divf %61, %62 : vector<128x1xf32>
    %64 = vector.broadcast %63 : vector<128x1xf32> to vector<128x32xf32>
    %65 = arith.subf %59, %64 : vector<128x32xf32>
    %66 = arith.mulf %65, %65 : vector<128x32xf32>
    %cst_50 = arith.constant dense<0.000000e+00> : vector<128xf32>
    %67 = vector.multi_reduction <add>, %66, %cst_50 [1] : vector<128x32xf32> to vector<128xf32>
    %68 = vector.shape_cast %67 : vector<128xf32> to vector<128x1xf32>
    %cst_51 = arith.constant 3.200000e+01 : f32
    %69 = vector.broadcast %cst_51 : f32 to vector<128x1xf32>
    %70 = arith.divf %68, %69 : vector<128x1xf32>
    %cst_52 = arith.constant 9.99999974E-6 : f32
    %71 = vector.broadcast %cst_52 : f32 to vector<128x1xf32>
    %72 = arith.addf %70, %71 : vector<128x1xf32>
    %73 = math.rsqrt %72 : vector<128x1xf32>
    %74 = vector.broadcast %73 : vector<128x1xf32> to vector<128x32xf32>
    %75 = arith.mulf %65, %74 : vector<128x32xf32>
    %c0_53 = arith.constant 0 : index
    %c0_54 = arith.constant 0 : index
    %76 = vector.load %arg7[%c0_53, %c0_54] : memref<6x32xf32, #tpu.memory_space<vmem>>, vector<1x32xf32>
    %77 = vector.shape_cast %76 : vector<1x32xf32> to vector<32xf32>
    %78 = vector.shape_cast %77 : vector<32xf32> to vector<1x32xf32>
    %79 = vector.broadcast %78 : vector<1x32xf32> to vector<128x32xf32>
    %80 = arith.mulf %75, %79 : vector<128x32xf32>
    %c0_55 = arith.constant 0 : index
    %c0_56 = arith.constant 0 : index
    %81 = vector.load %arg8[%c0_55, %c0_56] : memref<6x32xf32, #tpu.memory_space<vmem>>, vector<1x32xf32>
    %82 = vector.shape_cast %81 : vector<1x32xf32> to vector<32xf32>
    %83 = vector.shape_cast %82 : vector<32xf32> to vector<1x32xf32>
    %84 = vector.broadcast %83 : vector<1x32xf32> to vector<128x32xf32>
    %85 = arith.addf %80, %84 : vector<128x32xf32>
    %c0_57 = arith.constant 0 : index
    %86 = memref.load %arg11[%c0_57] : memref<6xf32, #tpu.memory_space<smem>>
    %87 = vector.broadcast %86 : f32 to vector<128x32xf32>
    %88 = arith.mulf %87, %85 : vector<128x32xf32>
    %89 = arith.addf %3, %88 : vector<128x32xf32>
    %90 = vector.shape_cast %89 : vector<128x32xf32> to vector<8x16x32xf32>
    %c0_58 = arith.constant 0 : index
    %c8_59 = arith.constant 8 : index
    %c0_60 = arith.constant 0 : index
    %91 = vector.load %arg13[%c0_58, %c8_59, %c0_60] : memref<8x32x32xf32, #tpu.memory_space<vmem>>, vector<8x16x32xf32>
    tpu.vector_store %arg13[%c0_58, %c8_59, %c0_60], %90 {strides = array<i32>} : memref<8x32x32xf32, #tpu.memory_space<vmem>>, vector<8x16x32xf32>,
    %cst_61 = arith.constant 0.000000e+00 : f32
    %92 = vector.broadcast %cst_61 : f32 to vector<128x32xf32>
    %cst_62 = arith.constant 0.000000e+00 : f32
    %93 = vector.broadcast %cst_62 : f32 to vector<128x32xf32>
    %c0_63 = arith.constant 0 : index
    %c6 = arith.constant 6 : index
    %c0_64 = arith.constant 0 : index
    %94 = vector.load %arg13[%c0_63, %c6, %c0_64] : memref<8x32x32xf32, #tpu.memory_space<vmem>>, vector<8x16x32xf32>
    %95 = vector.shape_cast %94 : vector<8x16x32xf32> to vector<128x32xf32>
    %96 = arith.truncf %95 : vector<128x32xf32> to vector<128x32xbf16>
    %c3 = arith.constant 3 : index
    %c0_65 = arith.constant 0 : index
    %c0_66 = arith.constant 0 : index
    %97 = vector.load %arg3[%c3, %c0_65, %c0_66] : memref<18x32x32xbf16, #tpu.memory_space<vmem>>, vector<1x32x32xbf16>
    %98 = vector.shape_cast %97 : vector<1x32x32xbf16> to vector<32x32xbf16>
    %cst_67 = arith.constant dense<0.000000e+00> : vector<128x32xf32>
    %99 = tpu.matmul %96, %98, %cst_67 {dimension_numbers = #tpu.dot_dimension_numbers<[1], [0], [0], [1], [0, 0, 1, 1], [], []>} : vector<128x32xbf16>, vector<32x32xbf16>, vector<128x32xf32> -> vector<128x32xf32>
    %100 = arith.addf %92, %99 : vector<128x32xf32>
    %c3_68 = arith.constant 3 : index
    %c0_69 = arith.constant 0 : index
    %c0_70 = arith.constant 0 : index
    %101 = vector.load %arg4[%c3_68, %c0_69, %c0_70] : memref<18x32x32xbf16, #tpu.memory_space<vmem>>, vector<1x32x32xbf16>
    %102 = vector.shape_cast %101 : vector<1x32x32xbf16> to vector<32x32xbf16>
    %cst_71 = arith.constant dense<0.000000e+00> : vector<128x32xf32>
    %103 = tpu.matmul %96, %102, %cst_71 {dimension_numbers = #tpu.dot_dimension_numbers<[1], [0], [0], [1], [0, 0, 1, 1], [], []>} : vector<128x32xbf16>, vector<32x32xbf16>, vector<128x32xf32> -> vector<128x32xf32>
    %104 = arith.addf %93, %103 : vector<128x32xf32>
    %c0_72 = arith.constant 0 : index
    %c8_73 = arith.constant 8 : index
    %c0_74 = arith.constant 0 : index
    %105 = vector.load %arg13[%c0_72, %c8_73, %c0_74] : memref<8x32x32xf32, #tpu.memory_space<vmem>>, vector<8x16x32xf32>
    %106 = vector.shape_cast %105 : vector<8x16x32xf32> to vector<128x32xf32>
    %107 = arith.truncf %106 : vector<128x32xf32> to vector<128x32xbf16>
    %c4 = arith.constant 4 : index
    %c0_75 = arith.constant 0 : index
    %c0_76 = arith.constant 0 : index
    %108 = vector.load %arg3[%c4, %c0_75, %c0_76] : memref<18x32x32xbf16, #tpu.memory_space<vmem>>, vector<1x32x32xbf16>
    %109 = vector.shape_cast %108 : vector<1x32x32xbf16> to vector<32x32xbf16>
    %cst_77 = arith.constant dense<0.000000e+00> : vector<128x32xf32>
    %110 = tpu.matmul %107, %109, %cst_77 {dimension_numbers = #tpu.dot_dimension_numbers<[1], [0], [0], [1], [0, 0, 1, 1], [], []>} : vector<128x32xbf16>, vector<32x32xbf16>, vector<128x32xf32> -> vector<128x32xf32>
    %111 = arith.addf %100, %110 : vector<128x32xf32>
    %c4_78 = arith.constant 4 : index
    %c0_79 = arith.constant 0 : index
    %c0_80 = arith.constant 0 : index
    %112 = vector.load %arg4[%c4_78, %c0_79, %c0_80] : memref<18x32x32xbf16, #tpu.memory_space<vmem>>, vector<1x32x32xbf16>
    %113 = vector.shape_cast %112 : vector<1x32x32xbf16> to vector<32x32xbf16>
    %cst_81 = arith.constant dense<0.000000e+00> : vector<128x32xf32>
    %114 = tpu.matmul %107, %113, %cst_81 {dimension_numbers = #tpu.dot_dimension_numbers<[1], [0], [0], [1], [0, 0, 1, 1], [], []>} : vector<128x32xbf16>, vector<32x32xbf16>, vector<128x32xf32> -> vector<128x32xf32>
    %115 = arith.addf %104, %114 : vector<128x32xf32>
    %c0_82 = arith.constant 0 : index
    %c10 = arith.constant 10 : index
    %c0_83 = arith.constant 0 : index
    %116 = vector.load %arg13[%c0_82, %c10, %c0_83] : memref<8x32x32xf32, #tpu.memory_space<vmem>>, vector<8x16x32xf32>
    %117 = vector.shape_cast %116 : vector<8x16x32xf32> to vector<128x32xf32>
    %118 = arith.truncf %117 : vector<128x32xf32> to vector<128x32xbf16>
    %c5 = arith.constant 5 : index
    %c0_84 = arith.constant 0 : index
    %c0_85 = arith.constant 0 : index
    %119 = vector.load %arg3[%c5, %c0_84, %c0_85] : memref<18x32x32xbf16, #tpu.memory_space<vmem>>, vector<1x32x32xbf16>
    %120 = vector.shape_cast %119 : vector<1x32x32xbf16> to vector<32x32xbf16>
    %cst_86 = arith.constant dense<0.000000e+00> : vector<128x32xf32>
    %121 = tpu.matmul %118, %120, %cst_86 {dimension_numbers = #tpu.dot_dimension_numbers<[1], [0], [0], [1], [0, 0, 1, 1], [], []>} : vector<128x32xbf16>, vector<32x32xbf16>, vector<128x32xf32> -> vector<128x32xf32>
    %122 = arith.addf %111, %121 : vector<128x32xf32>
    %c5_87 = arith.constant 5 : index
    %c0_88 = arith.constant 0 : index
    %c0_89 = arith.constant 0 : index
    %123 = vector.load %arg4[%c5_87, %c0_88, %c0_89] : memref<18x32x32xbf16, #tpu.memory_space<vmem>>, vector<1x32x32xbf16>
    %124 = vector.shape_cast %123 : vector<1x32x32xbf16> to vector<32x32xbf16>
    %cst_90 = arith.constant dense<0.000000e+00> : vector<128x32xf32>
    %125 = tpu.matmul %118, %124, %cst_90 {dimension_numbers = #tpu.dot_dimension_numbers<[1], [0], [0], [1], [0, 0, 1, 1], [], []>} : vector<128x32xbf16>, vector<32x32xbf16>, vector<128x32xf32> -> vector<128x32xf32>
    %126 = arith.addf %115, %125 : vector<128x32xf32>
    %c1_91 = arith.constant 1 : index
    %c0_92 = arith.constant 0 : index
    %127 = vector.load %arg5[%c1_91, %c0_92] : memref<6x32xf32, #tpu.memory_space<vmem>>, vector<1x32xf32>
    %128 = vector.shape_cast %127 : vector<1x32xf32> to vector<32xf32>
    %129 = vector.shape_cast %128 : vector<32xf32> to vector<1x32xf32>
    %130 = vector.broadcast %129 : vector<1x32xf32> to vector<128x32xf32>
    %131 = arith.addf %122, %130 : vector<128x32xf32>
    %c1_93 = arith.constant 1 : index
    %c0_94 = arith.constant 0 : index
    %132 = vector.load %arg6[%c1_93, %c0_94] : memref<6x32xf32, #tpu.memory_space<vmem>>, vector<1x32xf32>
    %133 = vector.shape_cast %132 : vector<1x32xf32> to vector<32xf32>
    %134 = vector.shape_cast %133 : vector<32xf32> to vector<1x32xf32>
    %135 = vector.broadcast %134 : vector<1x32xf32> to vector<128x32xf32>
    %136 = arith.addf %126, %135 : vector<128x32xf32>
    %137 = arith.negf %136 : vector<128x32xf32>
    %138 = math.exp %137 : vector<128x32xf32>
    %cst_95 = arith.constant 1.000000e+00 : f32
    %139 = vector.broadcast %cst_95 : f32 to vector<128x32xf32>
    %140 = arith.addf %139, %138 : vector<128x32xf32>
    %141 = arith.divf %139, %140 : vector<128x32xf32>
    %142 = arith.mulf %131, %141 : vector<128x32xf32>
    %cst_96 = arith.constant dense<0.000000e+00> : vector<128xf32>
    %143 = vector.multi_reduction <add>, %142, %cst_96 [1] : vector<128x32xf32> to vector<128xf32>
    %144 = vector.shape_cast %143 : vector<128xf32> to vector<128x1xf32>
    %cst_97 = arith.constant 3.200000e+01 : f32
    %145 = vector.broadcast %cst_97 : f32 to vector<128x1xf32>
    %146 = arith.divf %144, %145 : vector<128x1xf32>
    %147 = vector.broadcast %146 : vector<128x1xf32> to vector<128x32xf32>
    %148 = arith.subf %142, %147 : vector<128x32xf32>
    %149 = arith.mulf %148, %148 : vector<128x32xf32>
    %cst_98 = arith.constant dense<0.000000e+00> : vector<128xf32>
    %150 = vector.multi_reduction <add>, %149, %cst_98 [1] : vector<128x32xf32> to vector<128xf32>
    %151 = vector.shape_cast %150 : vector<128xf32> to vector<128x1xf32>
    %cst_99 = arith.constant 3.200000e+01 : f32
    %152 = vector.broadcast %cst_99 : f32 to vector<128x1xf32>
    %153 = arith.divf %151, %152 : vector<128x1xf32>
    %cst_100 = arith.constant 9.99999974E-6 : f32
    %154 = vector.broadcast %cst_100 : f32 to vector<128x1xf32>
    %155 = arith.addf %153, %154 : vector<128x1xf32>
    %156 = math.rsqrt %155 : vector<128x1xf32>
    %157 = vector.broadcast %156 : vector<128x1xf32> to vector<128x32xf32>
    %158 = arith.mulf %148, %157 : vector<128x32xf32>
    %c1_101 = arith.constant 1 : index
    %c0_102 = arith.constant 0 : index
    %159 = vector.load %arg7[%c1_101, %c0_102] : memref<6x32xf32, #tpu.memory_space<vmem>>, vector<1x32xf32>
    %160 = vector.shape_cast %159 : vector<1x32xf32> to vector<32xf32>
    %161 = vector.shape_cast %160 : vector<32xf32> to vector<1x32xf32>
    %162 = vector.broadcast %161 : vector<1x32xf32> to vector<128x32xf32>
    %163 = arith.mulf %158, %162 : vector<128x32xf32>
    %c1_103 = arith.constant 1 : index
    %c0_104 = arith.constant 0 : index
    %164 = vector.load %arg8[%c1_103, %c0_104] : memref<6x32xf32, #tpu.memory_space<vmem>>, vector<1x32xf32>
    %165 = vector.shape_cast %164 : vector<1x32xf32> to vector<32xf32>
    %166 = vector.shape_cast %165 : vector<32xf32> to vector<1x32xf32>
    %167 = vector.broadcast %166 : vector<1x32xf32> to vector<128x32xf32>
    %168 = arith.addf %163, %167 : vector<128x32xf32>
    %c1_105 = arith.constant 1 : index
    %169 = memref.load %arg11[%c1_105] : memref<6xf32, #tpu.memory_space<smem>>
    %170 = vector.broadcast %169 : f32 to vector<128x32xf32>
    %171 = arith.mulf %170, %168 : vector<128x32xf32>
    %172 = arith.addf %89, %171 : vector<128x32xf32>
    %173 = vector.shape_cast %172 : vector<128x32xf32> to vector<8x16x32xf32>
    %c0_106 = arith.constant 0 : index
    %c8_107 = arith.constant 8 : index
    %c0_108 = arith.constant 0 : index
    %174 = vector.load %arg13[%c0_106, %c8_107, %c0_108] : memref<8x32x32xf32, #tpu.memory_space<vmem>>, vector<8x16x32xf32>
    tpu.vector_store %arg13[%c0_106, %c8_107, %c0_108], %173 {strides = array<i32>} : memref<8x32x32xf32, #tpu.memory_space<vmem>>, vector<8x16x32xf32>,
    %cst_109 = arith.constant 0.000000e+00 : f32
    %175 = vector.broadcast %cst_109 : f32 to vector<128x32xf32>
    %cst_110 = arith.constant 0.000000e+00 : f32
    %176 = vector.broadcast %cst_110 : f32 to vector<128x32xf32>
    %c0_111 = arith.constant 0 : index
    %c4_112 = arith.constant 4 : index
    %c0_113 = arith.constant 0 : index
    %177 = vector.load %arg13[%c0_111, %c4_112, %c0_113] : memref<8x32x32xf32, #tpu.memory_space<vmem>>, vector<8x16x32xf32>
    %178 = vector.shape_cast %177 : vector<8x16x32xf32> to vector<128x32xf32>
    %179 = arith.truncf %178 : vector<128x32xf32> to vector<128x32xbf16>
    %c6_114 = arith.constant 6 : index
    %c0_115 = arith.constant 0 : index
    %c0_116 = arith.constant 0 : index
    %180 = vector.load %arg3[%c6_114, %c0_115, %c0_116] : memref<18x32x32xbf16, #tpu.memory_space<vmem>>, vector<1x32x32xbf16>
    %181 = vector.shape_cast %180 : vector<1x32x32xbf16> to vector<32x32xbf16>
    %cst_117 = arith.constant dense<0.000000e+00> : vector<128x32xf32>
    %182 = tpu.matmul %179, %181, %cst_117 {dimension_numbers = #tpu.dot_dimension_numbers<[1], [0], [0], [1], [0, 0, 1, 1], [], []>} : vector<128x32xbf16>, vector<32x32xbf16>, vector<128x32xf32> -> vector<128x32xf32>
    %183 = arith.addf %175, %182 : vector<128x32xf32>
    %c6_118 = arith.constant 6 : index
    %c0_119 = arith.constant 0 : index
    %c0_120 = arith.constant 0 : index
    %184 = vector.load %arg4[%c6_118, %c0_119, %c0_120] : memref<18x32x32xbf16, #tpu.memory_space<vmem>>, vector<1x32x32xbf16>
    %185 = vector.shape_cast %184 : vector<1x32x32xbf16> to vector<32x32xbf16>
    %cst_121 = arith.constant dense<0.000000e+00> : vector<128x32xf32>
    %186 = tpu.matmul %179, %185, %cst_121 {dimension_numbers = #tpu.dot_dimension_numbers<[1], [0], [0], [1], [0, 0, 1, 1], [], []>} : vector<128x32xbf16>, vector<32x32xbf16>, vector<128x32xf32> -> vector<128x32xf32>
    %187 = arith.addf %176, %186 : vector<128x32xf32>
    %c0_122 = arith.constant 0 : index
    %c8_123 = arith.constant 8 : index
    %c0_124 = arith.constant 0 : index
    %188 = vector.load %arg13[%c0_122, %c8_123, %c0_124] : memref<8x32x32xf32, #tpu.memory_space<vmem>>, vector<8x16x32xf32>
    %189 = vector.shape_cast %188 : vector<8x16x32xf32> to vector<128x32xf32>
    %190 = arith.truncf %189 : vector<128x32xf32> to vector<128x32xbf16>
    %c7_125 = arith.constant 7 : index
    %c0_126 = arith.constant 0 : index
    %c0_127 = arith.constant 0 : index
    %191 = vector.load %arg3[%c7_125, %c0_126, %c0_127] : memref<18x32x32xbf16, #tpu.memory_space<vmem>>, vector<1x32x32xbf16>
    %192 = vector.shape_cast %191 : vector<1x32x32xbf16> to vector<32x32xbf16>
    %cst_128 = arith.constant dense<0.000000e+00> : vector<128x32xf32>
    %193 = tpu.matmul %190, %192, %cst_128 {dimension_numbers = #tpu.dot_dimension_numbers<[1], [0], [0], [1], [0, 0, 1, 1], [], []>} : vector<128x32xbf16>, vector<32x32xbf16>, vector<128x32xf32> -> vector<128x32xf32>
    %194 = arith.addf %183, %193 : vector<128x32xf32>
    %c7_129 = arith.constant 7 : index
    %c0_130 = arith.constant 0 : index
    %c0_131 = arith.constant 0 : index
    %195 = vector.load %arg4[%c7_129, %c0_130, %c0_131] : memref<18x32x32xbf16, #tpu.memory_space<vmem>>, vector<1x32x32xbf16>
    %196 = vector.shape_cast %195 : vector<1x32x32xbf16> to vector<32x32xbf16>
    %cst_132 = arith.constant dense<0.000000e+00> : vector<128x32xf32>
    %197 = tpu.matmul %190, %196, %cst_132 {dimension_numbers = #tpu.dot_dimension_numbers<[1], [0], [0], [1], [0, 0, 1, 1], [], []>} : vector<128x32xbf16>, vector<32x32xbf16>, vector<128x32xf32> -> vector<128x32xf32>
    %198 = arith.addf %187, %197 : vector<128x32xf32>
    %c0_133 = arith.constant 0 : index
    %c12 = arith.constant 12 : index
    %c0_134 = arith.constant 0 : index
    %199 = vector.load %arg13[%c0_133, %c12, %c0_134] : memref<8x32x32xf32, #tpu.memory_space<vmem>>, vector<8x16x32xf32>
    %200 = vector.shape_cast %199 : vector<8x16x32xf32> to vector<128x32xf32>
    %201 = arith.truncf %200 : vector<128x32xf32> to vector<128x32xbf16>
    %c8_135 = arith.constant 8 : index
    %c0_136 = arith.constant 0 : index
    %c0_137 = arith.constant 0 : index
    %202 = vector.load %arg3[%c8_135, %c0_136, %c0_137] : memref<18x32x32xbf16, #tpu.memory_space<vmem>>, vector<1x32x32xbf16>
    %203 = vector.shape_cast %202 : vector<1x32x32xbf16> to vector<32x32xbf16>
    %cst_138 = arith.constant dense<0.000000e+00> : vector<128x32xf32>
    %204 = tpu.matmul %201, %203, %cst_138 {dimension_numbers = #tpu.dot_dimension_numbers<[1], [0], [0], [1], [0, 0, 1, 1], [], []>} : vector<128x32xbf16>, vector<32x32xbf16>, vector<128x32xf32> -> vector<128x32xf32>
    %205 = arith.addf %194, %204 : vector<128x32xf32>
    %c8_139 = arith.constant 8 : index
    %c0_140 = arith.constant 0 : index
    %c0_141 = arith.constant 0 : index
    %206 = vector.load %arg4[%c8_139, %c0_140, %c0_141] : memref<18x32x32xbf16, #tpu.memory_space<vmem>>, vector<1x32x32xbf16>
    %207 = vector.shape_cast %206 : vector<1x32x32xbf16> to vector<32x32xbf16>
    %cst_142 = arith.constant dense<0.000000e+00> : vector<128x32xf32>
    %208 = tpu.matmul %201, %207, %cst_142 {dimension_numbers = #tpu.dot_dimension_numbers<[1], [0], [0], [1], [0, 0, 1, 1], [], []>} : vector<128x32xbf16>, vector<32x32xbf16>, vector<128x32xf32> -> vector<128x32xf32>
    %209 = arith.addf %198, %208 : vector<128x32xf32>
    %c2_143 = arith.constant 2 : index
    %c0_144 = arith.constant 0 : index
    %210 = vector.load %arg5[%c2_143, %c0_144] : memref<6x32xf32, #tpu.memory_space<vmem>>, vector<1x32xf32>
    %211 = vector.shape_cast %210 : vector<1x32xf32> to vector<32xf32>
    %212 = vector.shape_cast %211 : vector<32xf32> to vector<1x32xf32>
    %213 = vector.broadcast %212 : vector<1x32xf32> to vector<128x32xf32>
    %214 = arith.addf %205, %213 : vector<128x32xf32>
    %c2_145 = arith.constant 2 : index
    %c0_146 = arith.constant 0 : index
    %215 = vector.load %arg6[%c2_145, %c0_146] : memref<6x32xf32, #tpu.memory_space<vmem>>, vector<1x32xf32>
    %216 = vector.shape_cast %215 : vector<1x32xf32> to vector<32xf32>
    %217 = vector.shape_cast %216 : vector<32xf32> to vector<1x32xf32>
    %218 = vector.broadcast %217 : vector<1x32xf32> to vector<128x32xf32>
    %219 = arith.addf %209, %218 : vector<128x32xf32>
    %220 = arith.negf %219 : vector<128x32xf32>
    %221 = math.exp %220 : vector<128x32xf32>
    %cst_147 = arith.constant 1.000000e+00 : f32
    %222 = vector.broadcast %cst_147 : f32 to vector<128x32xf32>
    %223 = arith.addf %222, %221 : vector<128x32xf32>
    %224 = arith.divf %222, %223 : vector<128x32xf32>
    %225 = arith.mulf %214, %224 : vector<128x32xf32>
    %cst_148 = arith.constant dense<0.000000e+00> : vector<128xf32>
    %226 = vector.multi_reduction <add>, %225, %cst_148 [1] : vector<128x32xf32> to vector<128xf32>
    %227 = vector.shape_cast %226 : vector<128xf32> to vector<128x1xf32>
    %cst_149 = arith.constant 3.200000e+01 : f32
    %228 = vector.broadcast %cst_149 : f32 to vector<128x1xf32>
    %229 = arith.divf %227, %228 : vector<128x1xf32>
    %230 = vector.broadcast %229 : vector<128x1xf32> to vector<128x32xf32>
    %231 = arith.subf %225, %230 : vector<128x32xf32>
    %232 = arith.mulf %231, %231 : vector<128x32xf32>
    %cst_150 = arith.constant dense<0.000000e+00> : vector<128xf32>
    %233 = vector.multi_reduction <add>, %232, %cst_150 [1] : vector<128x32xf32> to vector<128xf32>
    %234 = vector.shape_cast %233 : vector<128xf32> to vector<128x1xf32>
    %cst_151 = arith.constant 3.200000e+01 : f32
    %235 = vector.broadcast %cst_151 : f32 to vector<128x1xf32>
    %236 = arith.divf %234, %235 : vector<128x1xf32>
    %cst_152 = arith.constant 9.99999974E-6 : f32
    %237 = vector.broadcast %cst_152 : f32 to vector<128x1xf32>
    %238 = arith.addf %236, %237 : vector<128x1xf32>
    %239 = math.rsqrt %238 : vector<128x1xf32>
    %240 = vector.broadcast %239 : vector<128x1xf32> to vector<128x32xf32>
    %241 = arith.mulf %231, %240 : vector<128x32xf32>
    %c2_153 = arith.constant 2 : index
    %c0_154 = arith.constant 0 : index
    %242 = vector.load %arg7[%c2_153, %c0_154] : memref<6x32xf32, #tpu.memory_space<vmem>>, vector<1x32xf32>
    %243 = vector.shape_cast %242 : vector<1x32xf32> to vector<32xf32>
    %244 = vector.shape_cast %243 : vector<32xf32> to vector<1x32xf32>
    %245 = vector.broadcast %244 : vector<1x32xf32> to vector<128x32xf32>
    %246 = arith.mulf %241, %245 : vector<128x32xf32>
    %c2_155 = arith.constant 2 : index
    %c0_156 = arith.constant 0 : index
    %247 = vector.load %arg8[%c2_155, %c0_156] : memref<6x32xf32, #tpu.memory_space<vmem>>, vector<1x32xf32>
    %248 = vector.shape_cast %247 : vector<1x32xf32> to vector<32xf32>
    %249 = vector.shape_cast %248 : vector<32xf32> to vector<1x32xf32>
    %250 = vector.broadcast %249 : vector<1x32xf32> to vector<128x32xf32>
    %251 = arith.addf %246, %250 : vector<128x32xf32>
    %c2_157 = arith.constant 2 : index
    %252 = memref.load %arg11[%c2_157] : memref<6xf32, #tpu.memory_space<smem>>
    %253 = vector.broadcast %252 : f32 to vector<128x32xf32>
    %254 = arith.mulf %253, %251 : vector<128x32xf32>
    %255 = arith.addf %172, %254 : vector<128x32xf32>
    %256 = vector.shape_cast %255 : vector<128x32xf32> to vector<8x16x32xf32>
    %c0_158 = arith.constant 0 : index
    %c8_159 = arith.constant 8 : index
    %c0_160 = arith.constant 0 : index
    %257 = vector.load %arg13[%c0_158, %c8_159, %c0_160] : memref<8x32x32xf32, #tpu.memory_space<vmem>>, vector<8x16x32xf32>
    tpu.vector_store %arg13[%c0_158, %c8_159, %c0_160], %256 {strides = array<i32>} : memref<8x32x32xf32, #tpu.memory_space<vmem>>, vector<8x16x32xf32>,
    %cst_161 = arith.constant 0.000000e+00 : f32
    %258 = vector.broadcast %cst_161 : f32 to vector<128x32xf32>
    %cst_162 = arith.constant 0.000000e+00 : f32
    %259 = vector.broadcast %cst_162 : f32 to vector<128x32xf32>
    %c0_163 = arith.constant 0 : index
    %c0_164 = arith.constant 0 : index
    %c0_165 = arith.constant 0 : index
    %260 = vector.load %arg13[%c0_163, %c0_164, %c0_165] : memref<8x32x32xf32, #tpu.memory_space<vmem>>, vector<8x16x32xf32>
    %261 = vector.shape_cast %260 : vector<8x16x32xf32> to vector<128x32xf32>
    %262 = arith.truncf %261 : vector<128x32xf32> to vector<128x32xbf16>
    %c9_166 = arith.constant 9 : index
    %c0_167 = arith.constant 0 : index
    %c0_168 = arith.constant 0 : index
    %263 = vector.load %arg3[%c9_166, %c0_167, %c0_168] : memref<18x32x32xbf16, #tpu.memory_space<vmem>>, vector<1x32x32xbf16>
    %264 = vector.shape_cast %263 : vector<1x32x32xbf16> to vector<32x32xbf16>
    %cst_169 = arith.constant dense<0.000000e+00> : vector<128x32xf32>
    %265 = tpu.matmul %262, %264, %cst_169 {dimension_numbers = #tpu.dot_dimension_numbers<[1], [0], [0], [1], [0, 0, 1, 1], [], []>} : vector<128x32xbf16>, vector<32x32xbf16>, vector<128x32xf32> -> vector<128x32xf32>
    %266 = arith.addf %258, %265 : vector<128x32xf32>
    %c9_170 = arith.constant 9 : index
    %c0_171 = arith.constant 0 : index
    %c0_172 = arith.constant 0 : index
    %267 = vector.load %arg4[%c9_170, %c0_171, %c0_172] : memref<18x32x32xbf16, #tpu.memory_space<vmem>>, vector<1x32x32xbf16>
    %268 = vector.shape_cast %267 : vector<1x32x32xbf16> to vector<32x32xbf16>
    %cst_173 = arith.constant dense<0.000000e+00> : vector<128x32xf32>
    %269 = tpu.matmul %262, %268, %cst_173 {dimension_numbers = #tpu.dot_dimension_numbers<[1], [0], [0], [1], [0, 0, 1, 1], [], []>} : vector<128x32xbf16>, vector<32x32xbf16>, vector<128x32xf32> -> vector<128x32xf32>
    %270 = arith.addf %259, %269 : vector<128x32xf32>
    %c0_174 = arith.constant 0 : index
    %c8_175 = arith.constant 8 : index
    %c0_176 = arith.constant 0 : index
    %271 = vector.load %arg13[%c0_174, %c8_175, %c0_176] : memref<8x32x32xf32, #tpu.memory_space<vmem>>, vector<8x16x32xf32>
    %272 = vector.shape_cast %271 : vector<8x16x32xf32> to vector<128x32xf32>
    %273 = arith.truncf %272 : vector<128x32xf32> to vector<128x32xbf16>
    %c10_177 = arith.constant 10 : index
    %c0_178 = arith.constant 0 : index
    %c0_179 = arith.constant 0 : index
    %274 = vector.load %arg3[%c10_177, %c0_178, %c0_179] : memref<18x32x32xbf16, #tpu.memory_space<vmem>>, vector<1x32x32xbf16>
    %275 = vector.shape_cast %274 : vector<1x32x32xbf16> to vector<32x32xbf16>
    %cst_180 = arith.constant dense<0.000000e+00> : vector<128x32xf32>
    %276 = tpu.matmul %273, %275, %cst_180 {dimension_numbers = #tpu.dot_dimension_numbers<[1], [0], [0], [1], [0, 0, 1, 1], [], []>} : vector<128x32xbf16>, vector<32x32xbf16>, vector<128x32xf32> -> vector<128x32xf32>
    %277 = arith.addf %266, %276 : vector<128x32xf32>
    %c10_181 = arith.constant 10 : index
    %c0_182 = arith.constant 0 : index
    %c0_183 = arith.constant 0 : index
    %278 = vector.load %arg4[%c10_181, %c0_182, %c0_183] : memref<18x32x32xbf16, #tpu.memory_space<vmem>>, vector<1x32x32xbf16>
    %279 = vector.shape_cast %278 : vector<1x32x32xbf16> to vector<32x32xbf16>
    %cst_184 = arith.constant dense<0.000000e+00> : vector<128x32xf32>
    %280 = tpu.matmul %273, %279, %cst_184 {dimension_numbers = #tpu.dot_dimension_numbers<[1], [0], [0], [1], [0, 0, 1, 1], [], []>} : vector<128x32xbf16>, vector<32x32xbf16>, vector<128x32xf32> -> vector<128x32xf32>
    %281 = arith.addf %270, %280 : vector<128x32xf32>
    %c0_185 = arith.constant 0 : index
    %c16 = arith.constant 16 : index
    %c0_186 = arith.constant 0 : index
    %282 = vector.load %arg13[%c0_185, %c16, %c0_186] : memref<8x32x32xf32, #tpu.memory_space<vmem>>, vector<8x16x32xf32>
    %283 = vector.shape_cast %282 : vector<8x16x32xf32> to vector<128x32xf32>
    %284 = arith.truncf %283 : vector<128x32xf32> to vector<128x32xbf16>
    %c11 = arith.constant 11 : index
    %c0_187 = arith.constant 0 : index
    %c0_188 = arith.constant 0 : index
    %285 = vector.load %arg3[%c11, %c0_187, %c0_188] : memref<18x32x32xbf16, #tpu.memory_space<vmem>>, vector<1x32x32xbf16>
    %286 = vector.shape_cast %285 : vector<1x32x32xbf16> to vector<32x32xbf16>
    %cst_189 = arith.constant dense<0.000000e+00> : vector<128x32xf32>
    %287 = tpu.matmul %284, %286, %cst_189 {dimension_numbers = #tpu.dot_dimension_numbers<[1], [0], [0], [1], [0, 0, 1, 1], [], []>} : vector<128x32xbf16>, vector<32x32xbf16>, vector<128x32xf32> -> vector<128x32xf32>
    %288 = arith.addf %277, %287 : vector<128x32xf32>
    %c11_190 = arith.constant 11 : index
    %c0_191 = arith.constant 0 : index
    %c0_192 = arith.constant 0 : index
    %289 = vector.load %arg4[%c11_190, %c0_191, %c0_192] : memref<18x32x32xbf16, #tpu.memory_space<vmem>>, vector<1x32x32xbf16>
    %290 = vector.shape_cast %289 : vector<1x32x32xbf16> to vector<32x32xbf16>
    %cst_193 = arith.constant dense<0.000000e+00> : vector<128x32xf32>
    %291 = tpu.matmul %284, %290, %cst_193 {dimension_numbers = #tpu.dot_dimension_numbers<[1], [0], [0], [1], [0, 0, 1, 1], [], []>} : vector<128x32xbf16>, vector<32x32xbf16>, vector<128x32xf32> -> vector<128x32xf32>
    %292 = arith.addf %281, %291 : vector<128x32xf32>
    %c3_194 = arith.constant 3 : index
    %c0_195 = arith.constant 0 : index
    %293 = vector.load %arg5[%c3_194, %c0_195] : memref<6x32xf32, #tpu.memory_space<vmem>>, vector<1x32xf32>
    %294 = vector.shape_cast %293 : vector<1x32xf32> to vector<32xf32>
    %295 = vector.shape_cast %294 : vector<32xf32> to vector<1x32xf32>
    %296 = vector.broadcast %295 : vector<1x32xf32> to vector<128x32xf32>
    %297 = arith.addf %288, %296 : vector<128x32xf32>
    %c3_196 = arith.constant 3 : index
    %c0_197 = arith.constant 0 : index
    %298 = vector.load %arg6[%c3_196, %c0_197] : memref<6x32xf32, #tpu.memory_space<vmem>>, vector<1x32xf32>
    %299 = vector.shape_cast %298 : vector<1x32xf32> to vector<32xf32>
    %300 = vector.shape_cast %299 : vector<32xf32> to vector<1x32xf32>
    %301 = vector.broadcast %300 : vector<1x32xf32> to vector<128x32xf32>
    %302 = arith.addf %292, %301 : vector<128x32xf32>
    %303 = arith.negf %302 : vector<128x32xf32>
    %304 = math.exp %303 : vector<128x32xf32>
    %cst_198 = arith.constant 1.000000e+00 : f32
    %305 = vector.broadcast %cst_198 : f32 to vector<128x32xf32>
    %306 = arith.addf %305, %304 : vector<128x32xf32>
    %307 = arith.divf %305, %306 : vector<128x32xf32>
    %308 = arith.mulf %297, %307 : vector<128x32xf32>
    %cst_199 = arith.constant dense<0.000000e+00> : vector<128xf32>
    %309 = vector.multi_reduction <add>, %308, %cst_199 [1] : vector<128x32xf32> to vector<128xf32>
    %310 = vector.shape_cast %309 : vector<128xf32> to vector<128x1xf32>
    %cst_200 = arith.constant 3.200000e+01 : f32
    %311 = vector.broadcast %cst_200 : f32 to vector<128x1xf32>
    %312 = arith.divf %310, %311 : vector<128x1xf32>
    %313 = vector.broadcast %312 : vector<128x1xf32> to vector<128x32xf32>
    %314 = arith.subf %308, %313 : vector<128x32xf32>
    %315 = arith.mulf %314, %314 : vector<128x32xf32>
    %cst_201 = arith.constant dense<0.000000e+00> : vector<128xf32>
    %316 = vector.multi_reduction <add>, %315, %cst_201 [1] : vector<128x32xf32> to vector<128xf32>
    %317 = vector.shape_cast %316 : vector<128xf32> to vector<128x1xf32>
    %cst_202 = arith.constant 3.200000e+01 : f32
    %318 = vector.broadcast %cst_202 : f32 to vector<128x1xf32>
    %319 = arith.divf %317, %318 : vector<128x1xf32>
    %cst_203 = arith.constant 9.99999974E-6 : f32
    %320 = vector.broadcast %cst_203 : f32 to vector<128x1xf32>
    %321 = arith.addf %319, %320 : vector<128x1xf32>
    %322 = math.rsqrt %321 : vector<128x1xf32>
    %323 = vector.broadcast %322 : vector<128x1xf32> to vector<128x32xf32>
    %324 = arith.mulf %314, %323 : vector<128x32xf32>
    %c3_204 = arith.constant 3 : index
    %c0_205 = arith.constant 0 : index
    %325 = vector.load %arg7[%c3_204, %c0_205] : memref<6x32xf32, #tpu.memory_space<vmem>>, vector<1x32xf32>
    %326 = vector.shape_cast %325 : vector<1x32xf32> to vector<32xf32>
    %327 = vector.shape_cast %326 : vector<32xf32> to vector<1x32xf32>
    %328 = vector.broadcast %327 : vector<1x32xf32> to vector<128x32xf32>
    %329 = arith.mulf %324, %328 : vector<128x32xf32>
    %c3_206 = arith.constant 3 : index
    %c0_207 = arith.constant 0 : index
    %330 = vector.load %arg8[%c3_206, %c0_207] : memref<6x32xf32, #tpu.memory_space<vmem>>, vector<1x32xf32>
    %331 = vector.shape_cast %330 : vector<1x32xf32> to vector<32xf32>
    %332 = vector.shape_cast %331 : vector<32xf32> to vector<1x32xf32>
    %333 = vector.broadcast %332 : vector<1x32xf32> to vector<128x32xf32>
    %334 = arith.addf %329, %333 : vector<128x32xf32>
    %c3_208 = arith.constant 3 : index
    %335 = memref.load %arg11[%c3_208] : memref<6xf32, #tpu.memory_space<smem>>
    %336 = vector.broadcast %335 : f32 to vector<128x32xf32>
    %337 = arith.mulf %336, %334 : vector<128x32xf32>
    %338 = arith.addf %255, %337 : vector<128x32xf32>
    %339 = vector.shape_cast %338 : vector<128x32xf32> to vector<8x16x32xf32>
    %c0_209 = arith.constant 0 : index
    %c8_210 = arith.constant 8 : index
    %c0_211 = arith.constant 0 : index
    %340 = vector.load %arg13[%c0_209, %c8_210, %c0_211] : memref<8x32x32xf32, #tpu.memory_space<vmem>>, vector<8x16x32xf32>
    tpu.vector_store %arg13[%c0_209, %c8_210, %c0_211], %339 {strides = array<i32>} : memref<8x32x32xf32, #tpu.memory_space<vmem>>, vector<8x16x32xf32>,
    %cst_212 = arith.constant 0.000000e+00 : f32
    %341 = vector.broadcast %cst_212 : f32 to vector<128x32xf32>
    %cst_213 = arith.constant 0.000000e+00 : f32
    %342 = vector.broadcast %cst_213 : f32 to vector<128x32xf32>
    %c0_214 = arith.constant 0 : index
    %c7_215 = arith.constant 7 : index
    %c0_216 = arith.constant 0 : index
    %343 = vector.load %arg13[%c0_214, %c7_215, %c0_216] : memref<8x32x32xf32, #tpu.memory_space<vmem>>, vector<8x16x32xf32>
    %344 = vector.shape_cast %343 : vector<8x16x32xf32> to vector<128x32xf32>
    %345 = arith.truncf %344 : vector<128x32xf32> to vector<128x32xbf16>
    %c12_217 = arith.constant 12 : index
    %c0_218 = arith.constant 0 : index
    %c0_219 = arith.constant 0 : index
    %346 = vector.load %arg3[%c12_217, %c0_218, %c0_219] : memref<18x32x32xbf16, #tpu.memory_space<vmem>>, vector<1x32x32xbf16>
    %347 = vector.shape_cast %346 : vector<1x32x32xbf16> to vector<32x32xbf16>
    %cst_220 = arith.constant dense<0.000000e+00> : vector<128x32xf32>
    %348 = tpu.matmul %345, %347, %cst_220 {dimension_numbers = #tpu.dot_dimension_numbers<[1], [0], [0], [1], [0, 0, 1, 1], [], []>} : vector<128x32xbf16>, vector<32x32xbf16>, vector<128x32xf32> -> vector<128x32xf32>
    %349 = arith.addf %341, %348 : vector<128x32xf32>
    %c12_221 = arith.constant 12 : index
    %c0_222 = arith.constant 0 : index
    %c0_223 = arith.constant 0 : index
    %350 = vector.load %arg4[%c12_221, %c0_222, %c0_223] : memref<18x32x32xbf16, #tpu.memory_space<vmem>>, vector<1x32x32xbf16>
    %351 = vector.shape_cast %350 : vector<1x32x32xbf16> to vector<32x32xbf16>
    %cst_224 = arith.constant dense<0.000000e+00> : vector<128x32xf32>
    %352 = tpu.matmul %345, %351, %cst_224 {dimension_numbers = #tpu.dot_dimension_numbers<[1], [0], [0], [1], [0, 0, 1, 1], [], []>} : vector<128x32xbf16>, vector<32x32xbf16>, vector<128x32xf32> -> vector<128x32xf32>
    %353 = arith.addf %342, %352 : vector<128x32xf32>
    %c0_225 = arith.constant 0 : index
    %c8_226 = arith.constant 8 : index
    %c0_227 = arith.constant 0 : index
    %354 = vector.load %arg13[%c0_225, %c8_226, %c0_227] : memref<8x32x32xf32, #tpu.memory_space<vmem>>, vector<8x16x32xf32>
    %355 = vector.shape_cast %354 : vector<8x16x32xf32> to vector<128x32xf32>
    %356 = arith.truncf %355 : vector<128x32xf32> to vector<128x32xbf16>
    %c13 = arith.constant 13 : index
    %c0_228 = arith.constant 0 : index
    %c0_229 = arith.constant 0 : index
    %357 = vector.load %arg3[%c13, %c0_228, %c0_229] : memref<18x32x32xbf16, #tpu.memory_space<vmem>>, vector<1x32x32xbf16>
    %358 = vector.shape_cast %357 : vector<1x32x32xbf16> to vector<32x32xbf16>
    %cst_230 = arith.constant dense<0.000000e+00> : vector<128x32xf32>
    %359 = tpu.matmul %356, %358, %cst_230 {dimension_numbers = #tpu.dot_dimension_numbers<[1], [0], [0], [1], [0, 0, 1, 1], [], []>} : vector<128x32xbf16>, vector<32x32xbf16>, vector<128x32xf32> -> vector<128x32xf32>
    %360 = arith.addf %349, %359 : vector<128x32xf32>
    %c13_231 = arith.constant 13 : index
    %c0_232 = arith.constant 0 : index
    %c0_233 = arith.constant 0 : index
    %361 = vector.load %arg4[%c13_231, %c0_232, %c0_233] : memref<18x32x32xbf16, #tpu.memory_space<vmem>>, vector<1x32x32xbf16>
    %362 = vector.shape_cast %361 : vector<1x32x32xbf16> to vector<32x32xbf16>
    %cst_234 = arith.constant dense<0.000000e+00> : vector<128x32xf32>
    %363 = tpu.matmul %356, %362, %cst_234 {dimension_numbers = #tpu.dot_dimension_numbers<[1], [0], [0], [1], [0, 0, 1, 1], [], []>} : vector<128x32xbf16>, vector<32x32xbf16>, vector<128x32xf32> -> vector<128x32xf32>
    %364 = arith.addf %353, %363 : vector<128x32xf32>
    %c0_235 = arith.constant 0 : index
    %c9_236 = arith.constant 9 : index
    %c0_237 = arith.constant 0 : index
    %365 = vector.load %arg13[%c0_235, %c9_236, %c0_237] : memref<8x32x32xf32, #tpu.memory_space<vmem>>, vector<8x16x32xf32>
    %366 = vector.shape_cast %365 : vector<8x16x32xf32> to vector<128x32xf32>
    %367 = arith.truncf %366 : vector<128x32xf32> to vector<128x32xbf16>
    %c14 = arith.constant 14 : index
    %c0_238 = arith.constant 0 : index
    %c0_239 = arith.constant 0 : index
    %368 = vector.load %arg3[%c14, %c0_238, %c0_239] : memref<18x32x32xbf16, #tpu.memory_space<vmem>>, vector<1x32x32xbf16>
    %369 = vector.shape_cast %368 : vector<1x32x32xbf16> to vector<32x32xbf16>
    %cst_240 = arith.constant dense<0.000000e+00> : vector<128x32xf32>
    %370 = tpu.matmul %367, %369, %cst_240 {dimension_numbers = #tpu.dot_dimension_numbers<[1], [0], [0], [1], [0, 0, 1, 1], [], []>} : vector<128x32xbf16>, vector<32x32xbf16>, vector<128x32xf32> -> vector<128x32xf32>
    %371 = arith.addf %360, %370 : vector<128x32xf32>
    %c14_241 = arith.constant 14 : index
    %c0_242 = arith.constant 0 : index
    %c0_243 = arith.constant 0 : index
    %372 = vector.load %arg4[%c14_241, %c0_242, %c0_243] : memref<18x32x32xbf16, #tpu.memory_space<vmem>>, vector<1x32x32xbf16>
    %373 = vector.shape_cast %372 : vector<1x32x32xbf16> to vector<32x32xbf16>
    %cst_244 = arith.constant dense<0.000000e+00> : vector<128x32xf32>
    %374 = tpu.matmul %367, %373, %cst_244 {dimension_numbers = #tpu.dot_dimension_numbers<[1], [0], [0], [1], [0, 0, 1, 1], [], []>} : vector<128x32xbf16>, vector<32x32xbf16>, vector<128x32xf32> -> vector<128x32xf32>
    %375 = arith.addf %364, %374 : vector<128x32xf32>
    %c4_245 = arith.constant 4 : index
    %c0_246 = arith.constant 0 : index
    %376 = vector.load %arg5[%c4_245, %c0_246] : memref<6x32xf32, #tpu.memory_space<vmem>>, vector<1x32xf32>
    %377 = vector.shape_cast %376 : vector<1x32xf32> to vector<32xf32>
    %378 = vector.shape_cast %377 : vector<32xf32> to vector<1x32xf32>
    %379 = vector.broadcast %378 : vector<1x32xf32> to vector<128x32xf32>
    %380 = arith.addf %371, %379 : vector<128x32xf32>
    %c4_247 = arith.constant 4 : index
    %c0_248 = arith.constant 0 : index
    %381 = vector.load %arg6[%c4_247, %c0_248] : memref<6x32xf32, #tpu.memory_space<vmem>>, vector<1x32xf32>
    %382 = vector.shape_cast %381 : vector<1x32xf32> to vector<32xf32>
    %383 = vector.shape_cast %382 : vector<32xf32> to vector<1x32xf32>
    %384 = vector.broadcast %383 : vector<1x32xf32> to vector<128x32xf32>
    %385 = arith.addf %375, %384 : vector<128x32xf32>
    %386 = arith.negf %385 : vector<128x32xf32>
    %387 = math.exp %386 : vector<128x32xf32>
    %cst_249 = arith.constant 1.000000e+00 : f32
    %388 = vector.broadcast %cst_249 : f32 to vector<128x32xf32>
    %389 = arith.addf %388, %387 : vector<128x32xf32>
    %390 = arith.divf %388, %389 : vector<128x32xf32>
    %391 = arith.mulf %380, %390 : vector<128x32xf32>
    %cst_250 = arith.constant dense<0.000000e+00> : vector<128xf32>
    %392 = vector.multi_reduction <add>, %391, %cst_250 [1] : vector<128x32xf32> to vector<128xf32>
    %393 = vector.shape_cast %392 : vector<128xf32> to vector<128x1xf32>
    %cst_251 = arith.constant 3.200000e+01 : f32
    %394 = vector.broadcast %cst_251 : f32 to vector<128x1xf32>
    %395 = arith.divf %393, %394 : vector<128x1xf32>
    %396 = vector.broadcast %395 : vector<128x1xf32> to vector<128x32xf32>
    %397 = arith.subf %391, %396 : vector<128x32xf32>
    %398 = arith.mulf %397, %397 : vector<128x32xf32>
    %cst_252 = arith.constant dense<0.000000e+00> : vector<128xf32>
    %399 = vector.multi_reduction <add>, %398, %cst_252 [1] : vector<128x32xf32> to vector<128xf32>
    %400 = vector.shape_cast %399 : vector<128xf32> to vector<128x1xf32>
    %cst_253 = arith.constant 3.200000e+01 : f32
    %401 = vector.broadcast %cst_253 : f32 to vector<128x1xf32>
    %402 = arith.divf %400, %401 : vector<128x1xf32>
    %cst_254 = arith.constant 9.99999974E-6 : f32
    %403 = vector.broadcast %cst_254 : f32 to vector<128x1xf32>
    %404 = arith.addf %402, %403 : vector<128x1xf32>
    %405 = math.rsqrt %404 : vector<128x1xf32>
    %406 = vector.broadcast %405 : vector<128x1xf32> to vector<128x32xf32>
    %407 = arith.mulf %397, %406 : vector<128x32xf32>
    %c4_255 = arith.constant 4 : index
    %c0_256 = arith.constant 0 : index
    %408 = vector.load %arg7[%c4_255, %c0_256] : memref<6x32xf32, #tpu.memory_space<vmem>>, vector<1x32xf32>
    %409 = vector.shape_cast %408 : vector<1x32xf32> to vector<32xf32>
    %410 = vector.shape_cast %409 : vector<32xf32> to vector<1x32xf32>
    %411 = vector.broadcast %410 : vector<1x32xf32> to vector<128x32xf32>
    %412 = arith.mulf %407, %411 : vector<128x32xf32>
    %c4_257 = arith.constant 4 : index
    %c0_258 = arith.constant 0 : index
    %413 = vector.load %arg8[%c4_257, %c0_258] : memref<6x32xf32, #tpu.memory_space<vmem>>, vector<1x32xf32>
    %414 = vector.shape_cast %413 : vector<1x32xf32> to vector<32xf32>
    %415 = vector.shape_cast %414 : vector<32xf32> to vector<1x32xf32>
    %416 = vector.broadcast %415 : vector<1x32xf32> to vector<128x32xf32>
    %417 = arith.addf %412, %416 : vector<128x32xf32>
    %c4_259 = arith.constant 4 : index
    %418 = memref.load %arg11[%c4_259] : memref<6xf32, #tpu.memory_space<smem>>
    %419 = vector.broadcast %418 : f32 to vector<128x32xf32>
    %420 = arith.mulf %419, %417 : vector<128x32xf32>
    %421 = arith.addf %338, %420 : vector<128x32xf32>
    %422 = vector.shape_cast %421 : vector<128x32xf32> to vector<8x16x32xf32>
    %c0_260 = arith.constant 0 : index
    %c8_261 = arith.constant 8 : index
    %c0_262 = arith.constant 0 : index
    %423 = vector.load %arg13[%c0_260, %c8_261, %c0_262] : memref<8x32x32xf32, #tpu.memory_space<vmem>>, vector<8x16x32xf32>
    tpu.vector_store %arg13[%c0_260, %c8_261, %c0_262], %422 {strides = array<i32>} : memref<8x32x32xf32, #tpu.memory_space<vmem>>, vector<8x16x32xf32>,
    %cst_263 = arith.constant 0.000000e+00 : f32
    %424 = vector.broadcast %cst_263 : f32 to vector<128x32xf32>
    %cst_264 = arith.constant 0.000000e+00 : f32
    %425 = vector.broadcast %cst_264 : f32 to vector<128x32xf32>
    %c0_265 = arith.constant 0 : index
    %c7_266 = arith.constant 7 : index
    %c0_267 = arith.constant 0 : index
    %426 = vector.load %arg13[%c0_265, %c7_266, %c0_267] : memref<8x32x32xf32, #tpu.memory_space<vmem>>, vector<8x16x32xf32>
    %427 = vector.shape_cast %426 : vector<8x16x32xf32> to vector<128x32xf32>
    %428 = arith.truncf %427 : vector<128x32xf32> to vector<128x32xbf16>
    %c15 = arith.constant 15 : index
    %c0_268 = arith.constant 0 : index
    %c0_269 = arith.constant 0 : index
    %429 = vector.load %arg3[%c15, %c0_268, %c0_269] : memref<18x32x32xbf16, #tpu.memory_space<vmem>>, vector<1x32x32xbf16>
    %430 = vector.shape_cast %429 : vector<1x32x32xbf16> to vector<32x32xbf16>
    %cst_270 = arith.constant dense<0.000000e+00> : vector<128x32xf32>
    %431 = tpu.matmul %428, %430, %cst_270 {dimension_numbers = #tpu.dot_dimension_numbers<[1], [0], [0], [1], [0, 0, 1, 1], [], []>} : vector<128x32xbf16>, vector<32x32xbf16>, vector<128x32xf32> -> vector<128x32xf32>
    %432 = arith.addf %424, %431 : vector<128x32xf32>
    %c15_271 = arith.constant 15 : index
    %c0_272 = arith.constant 0 : index
    %c0_273 = arith.constant 0 : index
    %433 = vector.load %arg4[%c15_271, %c0_272, %c0_273] : memref<18x32x32xbf16, #tpu.memory_space<vmem>>, vector<1x32x32xbf16>
    %434 = vector.shape_cast %433 : vector<1x32x32xbf16> to vector<32x32xbf16>
    %cst_274 = arith.constant dense<0.000000e+00> : vector<128x32xf32>
    %435 = tpu.matmul %428, %434, %cst_274 {dimension_numbers = #tpu.dot_dimension_numbers<[1], [0], [0], [1], [0, 0, 1, 1], [], []>} : vector<128x32xbf16>, vector<32x32xbf16>, vector<128x32xf32> -> vector<128x32xf32>
    %436 = arith.addf %425, %435 : vector<128x32xf32>
    %c0_275 = arith.constant 0 : index
    %c8_276 = arith.constant 8 : index
    %c0_277 = arith.constant 0 : index
    %437 = vector.load %arg13[%c0_275, %c8_276, %c0_277] : memref<8x32x32xf32, #tpu.memory_space<vmem>>, vector<8x16x32xf32>
    %438 = vector.shape_cast %437 : vector<8x16x32xf32> to vector<128x32xf32>
    %439 = arith.truncf %438 : vector<128x32xf32> to vector<128x32xbf16>
    %c16_278 = arith.constant 16 : index
    %c0_279 = arith.constant 0 : index
    %c0_280 = arith.constant 0 : index
    %440 = vector.load %arg3[%c16_278, %c0_279, %c0_280] : memref<18x32x32xbf16, #tpu.memory_space<vmem>>, vector<1x32x32xbf16>
    %441 = vector.shape_cast %440 : vector<1x32x32xbf16> to vector<32x32xbf16>
    %cst_281 = arith.constant dense<0.000000e+00> : vector<128x32xf32>
    %442 = tpu.matmul %439, %441, %cst_281 {dimension_numbers = #tpu.dot_dimension_numbers<[1], [0], [0], [1], [0, 0, 1, 1], [], []>} : vector<128x32xbf16>, vector<32x32xbf16>, vector<128x32xf32> -> vector<128x32xf32>
    %443 = arith.addf %432, %442 : vector<128x32xf32>
    %c16_282 = arith.constant 16 : index
    %c0_283 = arith.constant 0 : index
    %c0_284 = arith.constant 0 : index
    %444 = vector.load %arg4[%c16_282, %c0_283, %c0_284] : memref<18x32x32xbf16, #tpu.memory_space<vmem>>, vector<1x32x32xbf16>
    %445 = vector.shape_cast %444 : vector<1x32x32xbf16> to vector<32x32xbf16>
    %cst_285 = arith.constant dense<0.000000e+00> : vector<128x32xf32>
    %446 = tpu.matmul %439, %445, %cst_285 {dimension_numbers = #tpu.dot_dimension_numbers<[1], [0], [0], [1], [0, 0, 1, 1], [], []>} : vector<128x32xbf16>, vector<32x32xbf16>, vector<128x32xf32> -> vector<128x32xf32>
    %447 = arith.addf %436, %446 : vector<128x32xf32>
    %c0_286 = arith.constant 0 : index
    %c9_287 = arith.constant 9 : index
    %c0_288 = arith.constant 0 : index
    %448 = vector.load %arg13[%c0_286, %c9_287, %c0_288] : memref<8x32x32xf32, #tpu.memory_space<vmem>>, vector<8x16x32xf32>
    %449 = vector.shape_cast %448 : vector<8x16x32xf32> to vector<128x32xf32>
    %450 = arith.truncf %449 : vector<128x32xf32> to vector<128x32xbf16>
    %c17 = arith.constant 17 : index
    %c0_289 = arith.constant 0 : index
    %c0_290 = arith.constant 0 : index
    %451 = vector.load %arg3[%c17, %c0_289, %c0_290] : memref<18x32x32xbf16, #tpu.memory_space<vmem>>, vector<1x32x32xbf16>
    %452 = vector.shape_cast %451 : vector<1x32x32xbf16> to vector<32x32xbf16>
    %cst_291 = arith.constant dense<0.000000e+00> : vector<128x32xf32>
    %453 = tpu.matmul %450, %452, %cst_291 {dimension_numbers = #tpu.dot_dimension_numbers<[1], [0], [0], [1], [0, 0, 1, 1], [], []>} : vector<128x32xbf16>, vector<32x32xbf16>, vector<128x32xf32> -> vector<128x32xf32>
    %454 = arith.addf %443, %453 : vector<128x32xf32>
    %c17_292 = arith.constant 17 : index
    %c0_293 = arith.constant 0 : index
    %c0_294 = arith.constant 0 : index
    %455 = vector.load %arg4[%c17_292, %c0_293, %c0_294] : memref<18x32x32xbf16, #tpu.memory_space<vmem>>, vector<1x32x32xbf16>
    %456 = vector.shape_cast %455 : vector<1x32x32xbf16> to vector<32x32xbf16>
    %cst_295 = arith.constant dense<0.000000e+00> : vector<128x32xf32>
    %457 = tpu.matmul %450, %456, %cst_295 {dimension_numbers = #tpu.dot_dimension_numbers<[1], [0], [0], [1], [0, 0, 1, 1], [], []>} : vector<128x32xbf16>, vector<32x32xbf16>, vector<128x32xf32> -> vector<128x32xf32>
    %458 = arith.addf %447, %457 : vector<128x32xf32>
    %c5_296 = arith.constant 5 : index
    %c0_297 = arith.constant 0 : index
    %459 = vector.load %arg5[%c5_296, %c0_297] : memref<6x32xf32, #tpu.memory_space<vmem>>, vector<1x32xf32>
    %460 = vector.shape_cast %459 : vector<1x32xf32> to vector<32xf32>
    %461 = vector.shape_cast %460 : vector<32xf32> to vector<1x32xf32>
    %462 = vector.broadcast %461 : vector<1x32xf32> to vector<128x32xf32>
    %463 = arith.addf %454, %462 : vector<128x32xf32>
    %c5_298 = arith.constant 5 : index
    %c0_299 = arith.constant 0 : index
    %464 = vector.load %arg6[%c5_298, %c0_299] : memref<6x32xf32, #tpu.memory_space<vmem>>, vector<1x32xf32>
    %465 = vector.shape_cast %464 : vector<1x32xf32> to vector<32xf32>
    %466 = vector.shape_cast %465 : vector<32xf32> to vector<1x32xf32>
    %467 = vector.broadcast %466 : vector<1x32xf32> to vector<128x32xf32>
    %468 = arith.addf %458, %467 : vector<128x32xf32>
    %469 = arith.negf %468 : vector<128x32xf32>
    %470 = math.exp %469 : vector<128x32xf32>
    %cst_300 = arith.constant 1.000000e+00 : f32
    %471 = vector.broadcast %cst_300 : f32 to vector<128x32xf32>
    %472 = arith.addf %471, %470 : vector<128x32xf32>
    %473 = arith.divf %471, %472 : vector<128x32xf32>
    %474 = arith.mulf %463, %473 : vector<128x32xf32>
    %cst_301 = arith.constant dense<0.000000e+00> : vector<128xf32>
    %475 = vector.multi_reduction <add>, %474, %cst_301 [1] : vector<128x32xf32> to vector<128xf32>
    %476 = vector.shape_cast %475 : vector<128xf32> to vector<128x1xf32>
    %cst_302 = arith.constant 3.200000e+01 : f32
    %477 = vector.broadcast %cst_302 : f32 to vector<128x1xf32>
    %478 = arith.divf %476, %477 : vector<128x1xf32>
    %479 = vector.broadcast %478 : vector<128x1xf32> to vector<128x32xf32>
    %480 = arith.subf %474, %479 : vector<128x32xf32>
    %481 = arith.mulf %480, %480 : vector<128x32xf32>
    %cst_303 = arith.constant dense<0.000000e+00> : vector<128xf32>
    %482 = vector.multi_reduction <add>, %481, %cst_303 [1] : vector<128x32xf32> to vector<128xf32>
    %483 = vector.shape_cast %482 : vector<128xf32> to vector<128x1xf32>
    %cst_304 = arith.constant 3.200000e+01 : f32
    %484 = vector.broadcast %cst_304 : f32 to vector<128x1xf32>
    %485 = arith.divf %483, %484 : vector<128x1xf32>
    %cst_305 = arith.constant 9.99999974E-6 : f32
    %486 = vector.broadcast %cst_305 : f32 to vector<128x1xf32>
    %487 = arith.addf %485, %486 : vector<128x1xf32>
    %488 = math.rsqrt %487 : vector<128x1xf32>
    %489 = vector.broadcast %488 : vector<128x1xf32> to vector<128x32xf32>
    %490 = arith.mulf %480, %489 : vector<128x32xf32>
    %c5_306 = arith.constant 5 : index
    %c0_307 = arith.constant 0 : index
    %491 = vector.load %arg7[%c5_306, %c0_307] : memref<6x32xf32, #tpu.memory_space<vmem>>, vector<1x32xf32>
    %492 = vector.shape_cast %491 : vector<1x32xf32> to vector<32xf32>
    %493 = vector.shape_cast %492 : vector<32xf32> to vector<1x32xf32>
    %494 = vector.broadcast %493 : vector<1x32xf32> to vector<128x32xf32>
    %495 = arith.mulf %490, %494 : vector<128x32xf32>
    %c5_308 = arith.constant 5 : index
    %c0_309 = arith.constant 0 : index
    %496 = vector.load %arg8[%c5_308, %c0_309] : memref<6x32xf32, #tpu.memory_space<vmem>>, vector<1x32xf32>
    %497 = vector.shape_cast %496 : vector<1x32xf32> to vector<32xf32>
    %498 = vector.shape_cast %497 : vector<32xf32> to vector<1x32xf32>
    %499 = vector.broadcast %498 : vector<1x32xf32> to vector<128x32xf32>
    %500 = arith.addf %495, %499 : vector<128x32xf32>
    %c5_310 = arith.constant 5 : index
    %501 = memref.load %arg11[%c5_310] : memref<6xf32, #tpu.memory_space<smem>>
    %502 = vector.broadcast %501 : f32 to vector<128x32xf32>
    %503 = arith.mulf %502, %500 : vector<128x32xf32>
    %504 = arith.addf %421, %503 : vector<128x32xf32>
    %c0_311 = arith.constant 0 : index
    %c0_312 = arith.constant 0 : index
    %505 = vector.load %arg9[%c0_311, %c0_312] : memref<4x32xbf16, #tpu.memory_space<vmem>>, vector<4x32xbf16>
    %506 = arith.truncf %504 : vector<128x32xf32> to vector<128x32xbf16>
    %cst_313 = arith.constant dense<0.000000e+00> : vector<4x128xf32>
    %507 = tpu.matmul %505, %506, %cst_313 {dimension_numbers = #tpu.dot_dimension_numbers<[1], [1], [0], [0], [0, 0, 1, 0], [], []>} : vector<4x32xbf16>, vector<128x32xbf16>, vector<4x128xf32> -> vector<4x128xf32>
    %c0_314 = arith.constant 0 : index
    %c0_315 = arith.constant 0 : index
    %508 = vector.load %arg10[%c0_314, %c0_315] : memref<4x1xf32, #tpu.memory_space<vmem>>, vector<4x1xf32>
    %509 = vector.broadcast %508 : vector<4x1xf32> to vector<4x128xf32>
    %510 = arith.addf %507, %509 : vector<4x128xf32>
    %c0_316 = arith.constant 0 : index
    %c0_317 = arith.constant 0 : index
    %c0_318 = arith.constant 0 : index
    %511 = vector.load %arg12[%c0_316, %c0_317, %c0_318] : memref<1x4x128xf32, #tpu.memory_space<vmem>>, vector<1x4x128xf32>
    %512 = vector.shape_cast %511 : vector<1x4x128xf32> to vector<4x128xf32>
    %513 = vector.shape_cast %510 : vector<4x128xf32> to vector<1x4x128xf32>
    tpu.vector_store %arg12[%c0_316, %c0_317, %c0_318], %513 {strides = array<i32>} : memref<1x4x128xf32, #tpu.memory_space<vmem>>, vector<1x4x128xf32>,
    return
  }
  func.func @transform_0(%arg0: i32) -> (i32, i32, i32) {
    %c0_i32 = arith.constant 0 : i32
    %c0_i32_0 = arith.constant 0 : i32
    %c0_i32_1 = arith.constant 0 : i32
    return %arg0, %c0_i32, %c0_i32_0 : i32, i32, i32
  }
  func.func @transform_1(%arg0: i32) -> (i32, i32) {
    %c0_i32 = arith.constant 0 : i32
    %c0_i32_0 = arith.constant 0 : i32
    %c0_i32_1 = arith.constant 0 : i32
    return %c0_i32, %c0_i32_0 : i32, i32
  }
  func.func @transform_2(%arg0: i32) -> (i32, i32, i32) {
    %c0_i32 = arith.constant 0 : i32
    %c0_i32_0 = arith.constant 0 : i32
    %c0_i32_1 = arith.constant 0 : i32
    %c0_i32_2 = arith.constant 0 : i32
    return %c0_i32, %c0_i32_0, %c0_i32_1 : i32, i32, i32
  }
  func.func @transform_3(%arg0: i32) -> (i32, i32, i32) {
    %c0_i32 = arith.constant 0 : i32
    %c0_i32_0 = arith.constant 0 : i32
    %c0_i32_1 = arith.constant 0 : i32
    %c0_i32_2 = arith.constant 0 : i32
    return %c0_i32, %c0_i32_0, %c0_i32_1 : i32, i32, i32
  }
  func.func @transform_4(%arg0: i32) -> (i32, i32) {
    %c0_i32 = arith.constant 0 : i32
    %c0_i32_0 = arith.constant 0 : i32
    %c0_i32_1 = arith.constant 0 : i32
    return %c0_i32, %c0_i32_0 : i32, i32
  }
  func.func @transform_5(%arg0: i32) -> (i32, i32) {
    %c0_i32 = arith.constant 0 : i32
    %c0_i32_0 = arith.constant 0 : i32
    %c0_i32_1 = arith.constant 0 : i32
    return %c0_i32, %c0_i32_0 : i32, i32
  }
  func.func @transform_6(%arg0: i32) -> (i32, i32) {
    %c0_i32 = arith.constant 0 : i32
    %c0_i32_0 = arith.constant 0 : i32
    %c0_i32_1 = arith.constant 0 : i32
    return %c0_i32, %c0_i32_0 : i32, i32
  }
  func.func @transform_7(%arg0: i32) -> (i32, i32) {
    %c0_i32 = arith.constant 0 : i32
    %c0_i32_0 = arith.constant 0 : i32
    %c0_i32_1 = arith.constant 0 : i32
    return %c0_i32, %c0_i32_0 : i32, i32
  }
  func.func @transform_8(%arg0: i32) -> (i32, i32) {
    %c0_i32 = arith.constant 0 : i32
    %c0_i32_0 = arith.constant 0 : i32
    %c0_i32_1 = arith.constant 0 : i32
    return %c0_i32, %c0_i32_0 : i32, i32
  }
  func.func @transform_9(%arg0: i32) -> (i32, i32) {
    %c0_i32 = arith.constant 0 : i32
    %c0_i32_0 = arith.constant 0 : i32
    %c0_i32_1 = arith.constant 0 : i32
    return %c0_i32, %c0_i32_0 : i32, i32
  }
  func.func @transform_10(%arg0: i32) -> i32 {
    %c0_i32 = arith.constant 0 : i32
    %c0_i32_0 = arith.constant 0 : i32
    return %c0_i32 : i32
  }
  func.func @transform_11(%arg0: i32) -> (i32, i32, i32) {
    %c0_i32 = arith.constant 0 : i32
    %c0_i32_0 = arith.constant 0 : i32
    %c0_i32_1 = arith.constant 0 : i32
    return %arg0, %c0_i32, %c0_i32_0 : i32, i32, i32
  }
}

</mosaic_0001>

<llo_original>
// kernel: selector2_forward.1
$region0: #{selector2_forward.1}
  #allocation0 [shape = 'u32[]', space=smem, size = 0x4, offset = 0x4, fixed_abs, tag = 'smem constant byte address 0x4 - core index']
  #allocation1 [shape = 'u32[144,128]{1,0:T(1,128)}', space=vmem, size = 0x12000, scoped, tag = 'internal scratch']
  #allocation2 [shape = 'f32[8,32,32]{2,1,0:T(8,128)}', space=vmem, size = 0x20000, scoped, tag = 'scratch operand']
  %s0 = inlined_call_operand.vmem [shape: bf16[16,16,64], index: 0, kind: input, shape index: {}]
  %s1 = inlined_call_operand.vmem [shape: bf16[64,32], index: 1, kind: input, shape index: {}]
  %s2 = inlined_call_operand.vmem [shape: bf16[18,32,32], index: 2, kind: input, shape index: {}]
  %s3 = inlined_call_operand.vmem [shape: bf16[18,32,32], index: 3, kind: input, shape index: {}]
  %s4 = inlined_call_operand.vmem [shape: f32[6,32], index: 4, kind: input, shape index: {}]
  %s5 = inlined_call_operand.vmem [shape: f32[6,32], index: 5, kind: input, shape index: {}]
  %s6 = inlined_call_operand.vmem [shape: f32[6,32], index: 6, kind: input, shape index: {}]
  %s7 = inlined_call_operand.vmem [shape: f32[6,32], index: 7, kind: input, shape index: {}]
  %s8 = inlined_call_operand.vmem [shape: bf16[4,32], index: 8, kind: input, shape index: {}]
  %s9 = inlined_call_operand.vmem [shape: f32[4,1], index: 9, kind: input, shape index: {}]
  %s10 = inlined_call_operand.vmem [shape: f32[6], index: 10, kind: input, shape index: {}]
  %s11 = inlined_call_operand.vmem [shape: f32[2,4,128], index: 11, kind: output, shape index: {}]
  %s12 = sld [smem:[#allocation0]]
  $region81: #{selector2_forward.1} parent=0
    _
  %s14 = ssub.s32 1, %s12
  %s15 = scalar_select 0, %s14, %s12
  $region1: #{selector2_forward.1} parent=0
    #allocation3 [shape = 'u8[512]{0}', space=smem, size = 0x200, scoped, tag = 'input window, operand 10, single buffered']
    #allocation4 [shape = 's32[2]{0}', space=sflag, size = 0x8, scoped, tag = 'scoped memory for selector2_forward.1']
    %16 = vsyncpa [#allocation4], 0
    loop: start=0, step=1, limit=4
    $region2: #{selector2_forward.1} parent=1 // loop_pre_header
      _
    $region3: #{selector2_forward.1} parent=1 // loop_header
      %s18 = sphi 0, %s22
      %p19 = scmp.ge.s32.totalorder %s18, 4
      %s28 = sphi 0, %s30
      %s31 = sphi 0, %s28
      %s32 = sphi 0, %s31
      %s48 = sphi 0, %s32
      %s52 = sphi 0, %s52
      %s54 = sphi 0, %s52
      %s55 = sphi 0, %s54
      %s69 = sphi 0, %s55
      %s73 = sphi 0, %s73
      %s75 = sphi 0, %s73
      %s76 = sphi 0, %s75
      %s90 = sphi 0, %s76
      %s94 = sphi 0, %s94
      %s96 = sphi 0, %s94
      %s97 = sphi 0, %s96
      %s111 = sphi 0, %s97
      %s115 = sphi 0, %s115
      %s117 = sphi 0, %s115
      %s118 = sphi 0, %s117
      %s132 = sphi 0, %s118
      %s136 = sphi 0, %s136
      %s138 = sphi 0, %s136
      %s139 = sphi 0, %s138
      %s153 = sphi 0, %s139
      %s157 = sphi 0, %s157
      %s159 = sphi 0, %s157
      %s160 = sphi 0, %s159
      %s174 = sphi 0, %s160
      %s178 = sphi 0, %s178
      %s180 = sphi 0, %s178
      %s181 = sphi 0, %s180
      %s195 = sphi 0, %s181
      %s199 = sphi 0, %s199
      %s201 = sphi 0, %s199
      %s202 = sphi 0, %s201
      %s216 = sphi 0, %s202
      %s220 = sphi 0, %s220
      %s222 = sphi 0, %s220
      %s223 = sphi 0, %s222
      %s237 = sphi 0, %s223
      %s241 = sphi 0, %s241
      %s243 = sphi 0, %s241
      %s244 = sphi 0, %s243
      %s258 = sphi 0, %s244
      %s264 = sphi 0, %s266
      %s267 = sphi 0, %s264
      %s268 = sphi 0, %s267
      %s284 = sphi 0, %s268
    $region4: #{selector2_forward.1} parent=1 // loop_header_branch
      %21 = sbr.rel (%p19) target = $region8
    $region5: #{selector2_forward.1} parent=1 // loop_body
      %s23 = ssub.s32 %s18, 1
      %s24 = ssub.s32 %s18, 2
      %s25 = sadd.s32 %s18, 1
      %s26 = ssub.s32 %s18, %s25
      %p27 = scmp.eq.s32.totalorder %s26, 0
      %s29 = sadd.s32 %s28, 1
      %s30 = scalar_select %p27, %s28, %s29
      %p33 = pneg %p27
      %p34 = scmp.eq.s32.totalorder %s18, 1
      %p35 = por %p33, %p34
      %p36 = scmp.ne.s32.totalorder %s28, %s31
      %p37 = scmp.eq.s32.totalorder %s18, 0
      %p38 = por %p36, %p37
      %p39 = scmp.ne.s32.totalorder %s28, %s31
      %p40 = scmp.eq.s32.totalorder %s23, 1
      %p41 = por %p39, %p40
      %p42 = scmp.ne.s32.totalorder %s31, %s32
      %p43 = scmp.eq.s32.totalorder %s23, 0
      %p44 = por %p42, %p43
      %p45 = scmp.ne.s32.totalorder %s31, %s32
      %p46 = scmp.eq.s32.totalorder %s24, 1
      %p47 = por %p45, %p46
      %p49 = scmp.ne.s32.totalorder %s32, %s48
      %p50 = scmp.eq.s32.totalorder %s24, 0
      %p51 = por %p49, %p50
      %s53 = sadd.s32 %s52, 1
      %p56 = scmp.eq.s32.totalorder %s18, 1
      %p57 = scmp.ne.s32.totalorder %s52, %s54
      %p58 = scmp.eq.s32.totalorder %s18, 0
      %p59 = por %p57, %p58
      %p60 = scmp.ne.s32.totalorder %s52, %s54
      %p61 = scmp.eq.s32.totalorder %s23, 1
      %p62 = por %p60, %p61
      %p63 = scmp.ne.s32.totalorder %s54, %s55
      %p64 = scmp.eq.s32.totalorder %s23, 0
      %p65 = por %p63, %p64
      %p66 = scmp.ne.s32.totalorder %s54, %s55
      %p67 = scmp.eq.s32.totalorder %s24, 1
      %p68 = por %p66, %p67
      %p70 = scmp.ne.s32.totalorder %s55, %s69
      %p71 = scmp.eq.s32.totalorder %s24, 0
      %p72 = por %p70, %p71
      %s74 = sadd.s32 %s73, 1
      %p77 = scmp.eq.s32.totalorder %s18, 1
      %p78 = scmp.ne.s32.totalorder %s73, %s75
      %p79 = scmp.eq.s32.totalorder %s18, 0
      %p80 = por %p78, %p79
      %p81 = scmp.ne.s32.totalorder %s73, %s75
      %p82 = scmp.eq.s32.totalorder %s23, 1
      %p83 = por %p81, %p82
      %p84 = scmp.ne.s32.totalorder %s75, %s76
      %p85 = scmp.eq.s32.totalorder %s23, 0
      %p86 = por %p84, %p85
      %p87 = scmp.ne.s32.totalorder %s75, %s76
      %p88 = scmp.eq.s32.totalorder %s24, 1
      %p89 = por %p87, %p88
      %p91 = scmp.ne.s32.totalorder %s76, %s90
      %p92 = scmp.eq.s32.totalorder %s24, 0
      %p93 = por %p91, %p92
      %s95 = sadd.s32 %s94, 1
      %p98 = scmp.eq.s32.totalorder %s18, 1
      %p99 = scmp.ne.s32.totalorder %s94, %s96
      %p100 = scmp.eq.s32.totalorder %s18, 0
      %p101 = por %p99, %p100
      %p102 = scmp.ne.s32.totalorder %s94, %s96
      %p103 = scmp.eq.s32.totalorder %s23, 1
      %p104 = por %p102, %p103
      %p105 = scmp.ne.s32.totalorder %s96, %s97
      %p106 = scmp.eq.s32.totalorder %s23, 0
      %p107 = por %p105, %p106
      %p108 = scmp.ne.s32.totalorder %s96, %s97
      %p109 = scmp.eq.s32.totalorder %s24, 1
      %p110 = por %p108, %p109
      %p112 = scmp.ne.s32.totalorder %s97, %s111
      %p113 = scmp.eq.s32.totalorder %s24, 0
      %p114 = por %p112, %p113
      %s116 = sadd.s32 %s115, 1
      %p119 = scmp.eq.s32.totalorder %s18, 1
      %p120 = scmp.ne.s32.totalorder %s115, %s117
      %p121 = scmp.eq.s32.totalorder %s18, 0
      %p122 = por %p120, %p121
      %p123 = scmp.ne.s32.totalorder %s115, %s117
      %p124 = scmp.eq.s32.totalorder %s23, 1
      %p125 = por %p123, %p124
      %p126 = scmp.ne.s32.totalorder %s117, %s118
      %p127 = scmp.eq.s32.totalorder %s23, 0
      %p128 = por %p126, %p127
      %p129 = scmp.ne.s32.totalorder %s117, %s118
      %p130 = scmp.eq.s32.totalorder %s24, 1
      %p131 = por %p129, %p130
      %p133 = scmp.ne.s32.totalorder %s118, %s132
      %p134 = scmp.eq.s32.totalorder %s24, 0
      %p135 = por %p133, %p134
      %s137 = sadd.s32 %s136, 1
      %p140 = scmp.eq.s32.totalorder %s18, 1
      %p141 = scmp.ne.s32.totalorder %s136, %s138
      %p142 = scmp.eq.s32.totalorder %s18, 0
      %p143 = por %p141, %p142
      %p144 = scmp.ne.s32.totalorder %s136, %s138
      %p145 = scmp.eq.s32.totalorder %s23, 1
      %p146 = por %p144, %p145
      %p147 = scmp.ne.s32.totalorder %s138, %s139
      %p148 = scmp.eq.s32.totalorder %s23, 0
      %p149 = por %p147, %p148
      %p150 = scmp.ne.s32.totalorder %s138, %s139
      %p151 = scmp.eq.s32.totalorder %s24, 1
      %p152 = por %p150, %p151
      %p154 = scmp.ne.s32.totalorder %s139, %s153
      %p155 = scmp.eq.s32.totalorder %s24, 0
      %p156 = por %p154, %p155
      %s158 = sadd.s32 %s157, 1
      %p161 = scmp.eq.s32.totalorder %s18, 1
      %p162 = scmp.ne.s32.totalorder %s157, %s159
      %p163 = scmp.eq.s32.totalorder %s18, 0
      %p164 = por %p162, %p163
      %p165 = scmp.ne.s32.totalorder %s157, %s159
      %p166 = scmp.eq.s32.totalorder %s23, 1
      %p167 = por %p165, %p166
      %p168 = scmp.ne.s32.totalorder %s159, %s160
      %p169 = scmp.eq.s32.totalorder %s23, 0
      %p170 = por %p168, %p169
      %p171 = scmp.ne.s32.totalorder %s159, %s160
      %p172 = scmp.eq.s32.totalorder %s24, 1
      %p173 = por %p171, %p172
      %p175 = scmp.ne.s32.totalorder %s160, %s174
      %p176 = scmp.eq.s32.totalorder %s24, 0
      %p177 = por %p175, %p176
      %s179 = sadd.s32 %s178, 1
      %p182 = scmp.eq.s32.totalorder %s18, 1
      %p183 = scmp.ne.s32.totalorder %s178, %s180
      %p184 = scmp.eq.s32.totalorder %s18, 0
      %p185 = por %p183, %p184
      %p186 = scmp.ne.s32.totalorder %s178, %s180
      %p187 = scmp.eq.s32.totalorder %s23, 1
      %p188 = por %p186, %p187
      %p189 = scmp.ne.s32.totalorder %s180, %s181
      %p190 = scmp.eq.s32.totalorder %s23, 0
      %p191 = por %p189, %p190
      %p192 = scmp.ne.s32.totalorder %s180, %s181
      %p193 = scmp.eq.s32.totalorder %s24, 1
      %p194 = por %p192, %p193
      %p196 = scmp.ne.s32.totalorder %s181, %s195
      %p197 = scmp.eq.s32.totalorder %s24, 0
      %p198 = por %p196, %p197
      %s200 = sadd.s32 %s199, 1
      %p203 = scmp.eq.s32.totalorder %s18, 1
      %p204 = scmp.ne.s32.totalorder %s199, %s201
      %p205 = scmp.eq.s32.totalorder %s18, 0
      %p206 = por %p204, %p205
      %p207 = scmp.ne.s32.totalorder %s199, %s201
      %p208 = scmp.eq.s32.totalorder %s23, 1
      %p209 = por %p207, %p208
      %p210 = scmp.ne.s32.totalorder %s201, %s202
      %p211 = scmp.eq.s32.totalorder %s23, 0
      %p212 = por %p210, %p211
      %p213 = scmp.ne.s32.totalorder %s201, %s202
      %p214 = scmp.eq.s32.totalorder %s24, 1
      %p215 = por %p213, %p214
      %p217 = scmp.ne.s32.totalorder %s202, %s216
      %p218 = scmp.eq.s32.totalorder %s24, 0
      %p219 = por %p217, %p218
      %s221 = sadd.s32 %s220, 1
      %p224 = scmp.eq.s32.totalorder %s18, 1
      %p225 = scmp.ne.s32.totalorder %s220, %s222
      %p226 = scmp.eq.s32.totalorder %s18, 0
      %p227 = por %p225, %p226
      %p228 = scmp.ne.s32.totalorder %s220, %s222
      %p229 = scmp.eq.s32.totalorder %s23, 1
      %p230 = por %p228, %p229
      %p231 = scmp.ne.s32.totalorder %s222, %s223
      %p232 = scmp.eq.s32.totalorder %s23, 0
      %p233 = por %p231, %p232
      %p234 = scmp.ne.s32.totalorder %s222, %s223
      %p235 = scmp.eq.s32.totalorder %s24, 1
      %p236 = por %p234, %p235
      %p238 = scmp.ne.s32.totalorder %s223, %s237
      %p239 = scmp.eq.s32.totalorder %s24, 0
      %p240 = por %p238, %p239
      %s242 = sadd.s32 %s241, 1
      %p245 = scmp.eq.s32.totalorder %s18, 1
      %p246 = scmp.ne.s32.totalorder %s241, %s243
      %p247 = scmp.eq.s32.totalorder %s18, 0
      %p248 = por %p246, %p247
      %p249 = scmp.ne.s32.totalorder %s241, %s243
      %p250 = scmp.eq.s32.totalorder %s23, 1
      %p251 = por %p249, %p250
      %p252 = scmp.ne.s32.totalorder %s243, %s244
      %p253 = scmp.eq.s32.totalorder %s23, 0
      %p254 = por %p252, %p253
      %p255 = scmp.ne.s32.totalorder %s243, %s244
      %p256 = scmp.eq.s32.totalorder %s24, 1
      %p257 = por %p255, %p256
      %p259 = scmp.ne.s32.totalorder %s244, %s258
      %p260 = scmp.eq.s32.totalorder %s24, 0
      %p261 = por %p259, %p260
      %s262 = ssub.s32 %s18, %s25
      %p263 = scmp.eq.s32.totalorder %s262, 0
      %s265 = sadd.s32 %s264, 1
      %s266 = scalar_select %p263, %s264, %s265
      %p269 = pneg %p263
      %p270 = scmp.eq.s32.totalorder %s18, 1
      %p271 = por %p269, %p270
      %p272 = scmp.ne.s32.totalorder %s264, %s267
      %p273 = scmp.eq.s32.totalorder %s18, 0
      %p274 = por %p272, %p273
      %p275 = scmp.ne.s32.totalorder %s264, %s267
      %p276 = scmp.eq.s32.totalorder %s23, 1
      %p277 = por %p275, %p276
      %p278 = scmp.ne.s32.totalorder %s267, %s268
      %p279 = scmp.eq.s32.totalorder %s23, 0
      %p280 = por %p278, %p279
      %p281 = scmp.ne.s32.totalorder %s267, %s268
      %p282 = scmp.eq.s32.totalorder %s24, 1
      %p283 = por %p281, %p282
      %p285 = scmp.ne.s32.totalorder %s268, %s284
      %p286 = scmp.eq.s32.totalorder %s24, 0
      %p287 = por %p285, %p286
      %p288 = scmp.le.s32.totalorder 1, %s18
      %p289 = scmp.lt.s32.totalorder %s18, 3
      %p290 = pnand %p288, %p289
      %p291 = pneg %p290
      // Predicated region
      $region9: #{selector2_forward.1} parent=5 // pred_check
        _
      $region10: #{selector2_forward.1} parent=5 // pred_check_branch
        %293 = sbr.rel (%p290) target = $region12
      $region11: #{selector2_forward.1} parent=5 // pred_region
        %s294 = ssub.s32 %s18, 1
        // Predicated region
        $region13: #{selector2_forward.1} parent=11 // pred_check
          %p295 = pneg %p65
        $region14: #{selector2_forward.1} parent=11 // pred_check_branch
          %297 = sbr.rel (%p295) target = $region16
        $region15: #{selector2_forward.1} parent=11 // pred_region
          _
        $region16: #{selector2_forward.1} parent=11 // pred_fallthru
          _
        // Predicated region
        $region17: #{selector2_forward.1} parent=11 // pred_check
          %p298 = pneg %p86
        $region18: #{selector2_forward.1} parent=11 // pred_check_branch
          %300 = sbr.rel (%p298) target = $region20
        $region19: #{selector2_forward.1} parent=11 // pred_region
          _
        $region20: #{selector2_forward.1} parent=11 // pred_fallthru
          _
        // Predicated region
        $region21: #{selector2_forward.1} parent=11 // pred_check
          %p301 = pneg %p107
        $region22: #{selector2_forward.1} parent=11 // pred_check_branch
          %303 = sbr.rel (%p301) target = $region24
        $region23: #{selector2_forward.1} parent=11 // pred_region
          _
        $region24: #{selector2_forward.1} parent=11 // pred_fallthru
          _
        // Predicated region
        $region25: #{selector2_forward.1} parent=11 // pred_check
          %p304 = pneg %p128
        $region26: #{selector2_forward.1} parent=11 // pred_check_branch
          %306 = sbr.rel (%p304) target = $region28
        $region27: #{selector2_forward.1} parent=11 // pred_region
          _
        $region28: #{selector2_forward.1} parent=11 // pred_fallthru
          _
        // Predicated region
        $region29: #{selector2_forward.1} parent=11 // pred_check
          %p307 = pneg %p149
        $region30: #{selector2_forward.1} parent=11 // pred_check_branch
          %309 = sbr.rel (%p307) target = $region32
        $region31: #{selector2_forward.1} parent=11 // pred_region
          _
        $region32: #{selector2_forward.1} parent=11 // pred_fallthru
          _
        // Predicated region
        $region33: #{selector2_forward.1} parent=11 // pred_check
          %p310 = pneg %p170
        $region34: #{selector2_forward.1} parent=11 // pred_check_branch
          %312 = sbr.rel (%p310) target = $region36
        $region35: #{selector2_forward.1} parent=11 // pred_region
          _
        $region36: #{selector2_forward.1} parent=11 // pred_fallthru
          _
        // Predicated region
        $region37: #{selector2_forward.1} parent=11 // pred_check
          %p313 = pneg %p191
        $region38: #{selector2_forward.1} parent=11 // pred_check_branch
          %315 = sbr.rel (%p313) target = $region40
        $region39: #{selector2_forward.1} parent=11 // pred_region
          _
        $region40: #{selector2_forward.1} parent=11 // pred_fallthru
          _
        // Predicated region
        $region41: #{selector2_forward.1} parent=11 // pred_check
          %p316 = pneg %p212
        $region42: #{selector2_forward.1} parent=11 // pred_check_branch
          %318 = sbr.rel (%p316) target = $region44
        $region43: #{selector2_forward.1} parent=11 // pred_region
          _
        $region44: #{selector2_forward.1} parent=11 // pred_fallthru
          _
        // Predicated region
        $region45: #{selector2_forward.1} parent=11 // pred_check
          %p319 = pneg %p233
        $region46: #{selector2_forward.1} parent=11 // pred_check_branch
          %321 = sbr.rel (%p319) target = $region48
        $region47: #{selector2_forward.1} parent=11 // pred_region
          _
        $region48: #{selector2_forward.1} parent=11 // pred_fallthru
          _
        // Predicated region
        $region49: #{selector2_forward.1} parent=11 // pred_check
          %p322 = pneg %p254
        $region50: #{selector2_forward.1} parent=11 // pred_check_branch
          %324 = sbr.rel (%p322) target = $region52
        $region51: #{selector2_forward.1} parent=11 // pred_region
          %s326 = ssub.s32 16, 16
          %327 = vsyncadd [#allocation4], %s326
          %s329 = sshll.u32 %s10, 4
          %s330 = int_to_ptr.vmem [resolvable:$true] %s329
          %332 = dma.vmem_to_smem %s330, 16, [#allocation3], [#allocation4]
        $region52: #{selector2_forward.1} parent=11 // pred_fallthru
          _
      $region12: #{selector2_forward.1} parent=5 // pred_fallthru
        _
      %p333 = scmp.lt.s32.totalorder %s18, 2
      // Predicated region
      $region53: #{selector2_forward.1} parent=5 // pred_check
        %p334 = pneg %p333
      $region54: #{selector2_forward.1} parent=5 // pred_check_branch
        %336 = sbr.rel (%p334) target = $region56
      $region55: #{selector2_forward.1} parent=5 // pred_region
        // Predicated region
        $region57: #{selector2_forward.1} parent=55 // pred_check
          %p337 = pneg %p38
        $region58: #{selector2_forward.1} parent=55 // pred_check_branch
          %339 = sbr.rel (%p337) target = $region60
        $region59: #{selector2_forward.1} parent=55 // pred_region
          %s340 = smul.u32 8, %s18
          %p341 = scmp.lt.s32.totalorder %s340, 15
          %s342 = scalar_select %p341, %s340, 15
          %s343 = smul.addr %s342, 2
          %s344 = smul.addr %s343, 4
          %s345 = scalar_lea.vmem %s0, %s344
          %s346 = smul.u32 8, %s18
        $region60: #{selector2_forward.1} parent=55 // pred_fallthru
          _
      $region56: #{selector2_forward.1} parent=5 // pred_fallthru
        _
      %p347 = scmp.le.s32.totalorder 1, %s18
      %p348 = scmp.lt.s32.totalorder %s18, 3
      %p349 = pnand %p347, %p348
      %p350 = pneg %p349
      // Predicated region
      $region61: #{selector2_forward.1} parent=5 // pred_check
        _
      $region62: #{selector2_forward.1} parent=5 // pred_check_branch
        %352 = sbr.rel (%p349) target = $region64
      $region63: #{selector2_forward.1} parent=5 // pred_region
        %s353 = ssub.s32 %s18, 1
        // Predicated region
        $region65: #{selector2_forward.1} parent=63 // pred_check
          %p354 = pneg %p254
        $region66: #{selector2_forward.1} parent=63 // pred_check_branch
          %356 = sbr.rel (%p354) target = $region68
        $region67: #{selector2_forward.1} parent=63 // pred_region
          %357 = dma.done [#allocation4], 16
        $region68: #{selector2_forward.1} parent=63 // pred_fallthru
          _
        %358 = sfence
        %s359 = smul.u32 8, %s23
        %p360 = scmp.lt.s32.totalorder %s359, 15
        %s361 = scalar_select %p360, %s359, 15
        %s362 = smul.addr %s361, 2
        %s363 = smul.addr %s362, 4
        %s364 = scalar_lea.vmem %s0, %s363
        %p365 = pneg %p44
        %p366 = pneg %p41
        %p367 = pneg %p65
        %p368 = pneg %p62
        %p369 = pneg %p86
        %p370 = pneg %p83
        %p371 = pneg %p107
        %p372 = pneg %p104
        %p373 = pneg %p128
        %p374 = pneg %p125
        %p375 = pneg %p149
        %p376 = pneg %p146
        %p377 = pneg %p170
        %p378 = pneg %p167
        %p379 = pneg %p191
        %p380 = pneg %p188
        %p381 = pneg %p212
        %p382 = pneg %p209
        %p383 = pneg %p233
        %p384 = pneg %p230
        %p385 = pneg %p254
        %p386 = pneg %p251
        %p387 = pneg %p280
        %p388 = pneg %p277
        %p389 = scmp.lt.s32.totalorder %s23, 1
        %s390 = scalar_select %p389, %s23, 1
        %s391 = smul.addr %s390, 4
        %s392 = scalar_lea.vmem %s11, %s391
        %s393 = smul.u32 8, %s23
        %p394 = scmp.lt.s32.totalorder %s393, 15
        %s395 = scalar_select %p394, %s393, 15
        %s396 = smul.addr %s395, 2
        %s397 = smul.addr %s396, 4
        %s398 = scalar_lea.vmem %s0, %s397
        %s399 = smul.u32 8, %s23
        %p400 = scmp.lt.s32.totalorder %s23, 1
        %s401 = scalar_select %p400, %s23, 1
        %s402 = smul.addr %s401, 4
        %s403 = scalar_lea.vmem %s11, %s402
        %v405 = vld [vmem:[%s398] sm:$0xf]
        %v406 = vld [vmem:[%s398 + $0x4] sm:$0xf]
        %v407 = vld [vmem:[%s398 + $0x8] sm:$0xf]
        %v408 = vld [vmem:[%s398 + $0xc] sm:$0xf]
        %v409 = vld [vmem:[%s398 + $0x10] sm:$0xf]
        %v410 = vld [vmem:[%s398 + $0x14] sm:$0xf]
        %v411 = vld [vmem:[%s398 + $0x18] sm:$0xf]
        %v412 = vld [vmem:[%s398 + $0x1c] sm:$0xf]
        %v413 = vld [vmem:[%s398 + $0x20] sm:$0xf]
        %v414 = vld [vmem:[%s398 + $0x24] sm:$0xf]
        %v415 = vld [vmem:[%s398 + $0x28] sm:$0xf]
        %v416 = vld [vmem:[%s398 + $0x2c] sm:$0xf]
        %v417 = vld [vmem:[%s398 + $0x30] sm:$0xf]
        %v418 = vld [vmem:[%s398 + $0x34] sm:$0xf]
        %v419 = vld [vmem:[%s398 + $0x38] sm:$0xf]
        %v420 = vld [vmem:[%s398 + $0x3c] sm:$0xf]
        %v421 = vld [vmem:[%s1] sm:$0xf]
        %v422 = vld [vmem:[%s1 + $0x4] sm:$0xf]
        %v423 = vld [vmem:[%s1 + $0x8] sm:$0xf]
        %v424 = vld [vmem:[%s1 + $0xc] sm:$0xf]
        %v425 = vld [vmem:[%s1 + $0x10] sm:$0xf]
        %v426 = vld [vmem:[%s1 + $0x14] sm:$0xf]
        %v427 = vld [vmem:[%s1 + $0x18] sm:$0xf]
        %v428 = vld [vmem:[%s1 + $0x1c] sm:$0xf]
        %v445 = vunpack.c.l.b16 %v405
        %v446 = vunpack.c.l.b16 %v406
        %v447 = vunpack.c.l.b16 %v407
        %v448 = vunpack.c.l.b16 %v408
        %v449 = vunpack.c.l.b16 %v409
        %v450 = vunpack.c.l.b16 %v410
        %v451 = vunpack.c.l.b16 %v411
        %v452 = vunpack.c.l.b16 %v412
        %v453 = vunpack.c.l.b16 %v413
        %v454 = vunpack.c.l.b16 %v414
        %v455 = vunpack.c.l.b16 %v415
        %v456 = vunpack.c.l.b16 %v416
        %v457 = vunpack.c.l.b16 %v417
        %v458 = vunpack.c.l.b16 %v418
        %v459 = vunpack.c.l.b16 %v419
        %v460 = vunpack.c.l.b16 %v420
        %v461 = vpack.c.b16 %v446, %v445
        %v462 = vpack.c.b16 %v448, %v447
        %v463 = vpack.c.b16 %v450, %v449
        %v464 = vpack.c.b16 %v452, %v451
        %v465 = vpack.c.b16 %v454, %v453
        %v466 = vpack.c.b16 %v456, %v455
        %v467 = vpack.c.b16 %v458, %v457
        %v468 = vpack.c.b16 %v460, %v459
        %v477 = vunpack.c.l.b16 %v421
        %v478 = vunpack.c.l.b16 %v422
        %v479 = vunpack.c.l.b16 %v423
        %v480 = vunpack.c.l.b16 %v424
        %v481 = vunpack.c.l.b16 %v425
        %v482 = vunpack.c.l.b16 %v426
        %v483 = vunpack.c.l.b16 %v427
        %v484 = vunpack.c.l.b16 %v428
        %v485 = vpack.c.b16 %v478, %v477
        %v486 = vpack.c.b16 %v480, %v479
        %v487 = vpack.c.b16 %v482, %v481
        %v488 = vpack.c.b16 %v484, %v483
        %vm493 = vcmask 523264
        %v495 = vsel %vm493, %v461, 0
        %v498 = vsel %vm493, %v462, 0
        %v501 = vsel %vm493, %v463, 0
        %v504 = vsel %vm493, %v464, 0
        %v507 = vsel %vm493, %v465, 0
        %v510 = vsel %vm493, %v466, 0
        %v513 = vsel %vm493, %v467, 0
        %v516 = vsel %vm493, %v468, 0
        %518 = vmatprep.subr.bf16.mxu0 0
        %519 = vmatpush1.bf16.msra.mxu0 %v485
        %520 = vmatprep.subr.bf16.mxu0 0
        %521 = vmatpush1.bf16.msra.mxu0 %v486
        %522 = vmatprep.subr.bf16.mxu0 0
        %523 = vmatpush1.bf16.msra.mxu0 %v487
        %524 = vmatprep.subr.bf16.mxu0 0
        %525 = vmatpush1.bf16.msra.mxu0 %v488
        %526 = vmatprep.subr.bf16.mxu0 0
        %527 = vmatpush1.bf16.msra.mxu0 0
        %528 = vmatprep.subr.bf16.mxu0 0
        %529 = vmatpush1.bf16.msra.mxu0 0
        %530 = vmatprep.subr.bf16.mxu0 0
        %531 = vmatpush1.bf16.msra.mxu0 0
        %532 = vmatprep.subr.bf16.mxu0 0
        %533 = vmatpush1.bf16.msra.mxu0 0
        %534 = vmatprep.subr.bf16.mxu0 0
        %535 = vmatpush1.bf16.msra.mxu0 0
        %536 = vmatprep.subr.bf16.mxu0 0
        %537 = vmatpush1.bf16.msra.mxu0 0
        %538 = vmatprep.subr.bf16.mxu0 0
        %539 = vmatpush1.bf16.msra.mxu0 0
        %540 = vmatprep.subr.bf16.mxu0 0
        %541 = vmatpush1.bf16.msra.mxu0 0
        %542 = vmatprep.subr.bf16.mxu0 0
        %543 = vmatpush1.bf16.msra.mxu0 0
        %544 = vmatprep.subr.bf16.mxu0 0
        %545 = vmatpush1.bf16.msra.mxu0 0
        %546 = vmatprep.subr.bf16.mxu0 0
        %547 = vmatpush1.bf16.msra.mxu0 0
        %548 = vmatprep.subr.bf16.mxu0 0
        %549 = vmatpush1.bf16.msra.mxu0 0
        %550 = vmatprep.mubr.bf16.mxu0 0
        %551 = vmatmul.mubr.bf16.gmra.mrb[0].mxu0 %v495
        %v552 = vpop.f32.mrb[0].mxu0
        %v553 = vadd.f32 0.0, %v552
        %v554 = vpop.f32.mrb[0].mxu0
        %v555 = vpop.f32.mrb[0].mxu0
        %v556 = vadd.f32 0.0, %v555
        %v557 = vpop.f32.mrb[0].mxu0
        %558 = vmatprep.mubr.bf16.mxu0 0
        %559 = vmatmul.mubr.bf16.gmra.mrb[0].mxu0 %v498
        %v560 = vpop.f32.mrb[0].mxu0
        %v561 = vadd.f32 0.0, %v560
        %v562 = vpop.f32.mrb[0].mxu0
        %v563 = vpop.f32.mrb[0].mxu0
        %v564 = vadd.f32 0.0, %v563
        %v565 = vpop.f32.mrb[0].mxu0
        %566 = vmatprep.mubr.bf16.mxu0 0
        %567 = vmatmul.mubr.bf16.gmra.mrb[0].mxu0 %v501
        %v568 = vpop.f32.mrb[0].mxu0
        %v569 = vadd.f32 0.0, %v568
        %v570 = vpop.f32.mrb[0].mxu0
        %v571 = vpop.f32.mrb[0].mxu0
        %v572 = vadd.f32 0.0, %v571
        %v573 = vpop.f32.mrb[0].mxu0
        %574 = vmatprep.mubr.bf16.mxu0 0
        %575 = vmatmul.mubr.bf16.gmra.mrb[0].mxu0 %v504
        %v576 = vpop.f32.mrb[0].mxu0
        %v577 = vadd.f32 0.0, %v576
        %v578 = vpop.f32.mrb[0].mxu0
        %v579 = vpop.f32.mrb[0].mxu0
        %v580 = vadd.f32 0.0, %v579
        %v581 = vpop.f32.mrb[0].mxu0
        %582 = vmatprep.mubr.bf16.mxu0 0
        %583 = vmatmul.mubr.bf16.gmra.mrb[0].mxu0 %v507
        %v584 = vpop.f32.mrb[0].mxu0
        %v585 = vadd.f32 0.0, %v584
        %v586 = vpop.f32.mrb[0].mxu0
        %v587 = vpop.f32.mrb[0].mxu0
        %v588 = vadd.f32 0.0, %v587
        %v589 = vpop.f32.mrb[0].mxu0
        %590 = vmatprep.mubr.bf16.mxu0 0
        %591 = vmatmul.mubr.bf16.gmra.mrb[0].mxu0 %v510
        %v592 = vpop.f32.mrb[0].mxu0
        %v593 = vadd.f32 0.0, %v592
        %v594 = vpop.f32.mrb[0].mxu0
        %v595 = vpop.f32.mrb[0].mxu0
        %v596 = vadd.f32 0.0, %v595
        %v597 = vpop.f32.mrb[0].mxu0
        %598 = vmatprep.mubr.bf16.mxu0 0
        %599 = vmatmul.mubr.bf16.gmra.mrb[0].mxu0 %v513
        %v600 = vpop.f32.mrb[0].mxu0
        %v601 = vadd.f32 0.0, %v600
        %v602 = vpop.f32.mrb[0].mxu0
        %v603 = vpop.f32.mrb[0].mxu0
        %v604 = vadd.f32 0.0, %v603
        %v605 = vpop.f32.mrb[0].mxu0
        %606 = vmatprep.mubr.bf16.mxu0 0
        %607 = vmatmul.mubr.bf16.gmra.mrb[0].mxu0 %v516
        %v608 = vpop.f32.mrb[0].mxu0
        %v609 = vadd.f32 0.0, %v608
        %v610 = vpop.f32.mrb[0].mxu0
        %v611 = vpop.f32.mrb[0].mxu0
        %v612 = vadd.f32 0.0, %v611
        %v613 = vpop.f32.mrb[0].mxu0
        %614 = vdwg.mxu0
        %vm615 = vcmask 261120
        %616 = vst.msk [vmem:[#allocation2] sm:$0xff] %vm615, 0.0
        %617 = vst.msk [vmem:[#allocation2 + $0x20] sm:$0xff] %vm615, 0.0
        %618 = vst.msk [vmem:[#allocation2 + $0x40] sm:$0xff] %vm615, 0.0
        %619 = vst.msk [vmem:[#allocation2 + $0x60] sm:$0xff] %vm615, 0.0
        %620 = vst.msk [vmem:[#allocation2 + $0x80] sm:$0xff] %vm615, 0.0
        %621 = vst.msk [vmem:[#allocation2 + $0xa0] sm:$0xff] %vm615, 0.0
        %622 = vst.msk [vmem:[#allocation2 + $0xc0] sm:$0xff] %vm615, 0.0
        %623 = vst.msk [vmem:[#allocation2 + $0xe0] sm:$0xff] %vm615, 0.0
        %624 = vst.msk [vmem:[#allocation2 + $0x18] sm:$0xff] %vm615, 0.0
        %625 = vst.msk [vmem:[#allocation2 + $0x38] sm:$0xff] %vm615, 0.0
        %626 = vst.msk [vmem:[#allocation2 + $0x58] sm:$0xff] %vm615, 0.0
        %627 = vst.msk [vmem:[#allocation2 + $0x78] sm:$0xff] %vm615, 0.0
        %628 = vst.msk [vmem:[#allocation2 + $0x98] sm:$0xff] %vm615, 0.0
        %629 = vst.msk [vmem:[#allocation2 + $0xb8] sm:$0xff] %vm615, 0.0
        %630 = vst.msk [vmem:[#allocation2 + $0xd8] sm:$0xff] %vm615, 0.0
        %631 = vst.msk [vmem:[#allocation2 + $0xf8] sm:$0xff] %vm615, 0.0
        %632 = vst.msk [vmem:[#allocation2 + $0x8] sm:$0xff] %vm615, %v553
        %633 = vst.msk [vmem:[#allocation2 + $0x10] sm:$0xff] %vm615, %v556
        %634 = vst.msk [vmem:[#allocation2 + $0x28] sm:$0xff] %vm615, %v561
        %635 = vst.msk [vmem:[#allocation2 + $0x30] sm:$0xff] %vm615, %v564
        %636 = vst.msk [vmem:[#allocation2 + $0x48] sm:$0xff] %vm615, %v569
        %637 = vst.msk [vmem:[#allocation2 + $0x50] sm:$0xff] %vm615, %v572
        %638 = vst.msk [vmem:[#allocation2 + $0x68] sm:$0xff] %vm615, %v577
        %639 = vst.msk [vmem:[#allocation2 + $0x70] sm:$0xff] %vm615, %v580
        %640 = vst.msk [vmem:[#allocation2 + $0x88] sm:$0xff] %vm615, %v585
        %641 = vst.msk [vmem:[#allocation2 + $0x90] sm:$0xff] %vm615, %v588
        %642 = vst.msk [vmem:[#allocation2 + $0xa8] sm:$0xff] %vm615, %v593
        %643 = vst.msk [vmem:[#allocation2 + $0xb0] sm:$0xff] %vm615, %v596
        %644 = vst.msk [vmem:[#allocation2 + $0xc8] sm:$0xff] %vm615, %v601
        %645 = vst.msk [vmem:[#allocation2 + $0xd0] sm:$0xff] %vm615, %v604
        %646 = vst.msk [vmem:[#allocation2 + $0xe8] sm:$0xff] %vm615, %v609
        %647 = vst.msk [vmem:[#allocation2 + $0xf0] sm:$0xff] %vm615, %v612
        %v648 = vld [vmem:[#allocation2 + $0x7] sm:$0xff]
        %v649 = vld [vmem:[#allocation2 + $0xf] sm:$0xff]
        %v650 = vld [vmem:[#allocation2 + $0x27] sm:$0xff]
        %v651 = vld [vmem:[#allocation2 + $0x2f] sm:$0xff]
        %v652 = vld [vmem:[#allocation2 + $0x47] sm:$0xff]
        %v653 = vld [vmem:[#allocation2 + $0x4f] sm:$0xff]
        %v654 = vld [vmem:[#allocation2 + $0x67] sm:$0xff]
        %v655 = vld [vmem:[#allocation2 + $0x6f] sm:$0xff]
        %v656 = vld [vmem:[#allocation2 + $0x87] sm:$0xff]
        %v657 = vld [vmem:[#allocation2 + $0x8f] sm:$0xff]
        %v658 = vld [vmem:[#allocation2 + $0xa7] sm:$0xff]
        %v659 = vld [vmem:[#allocation2 + $0xaf] sm:$0xff]
        %v660 = vld [vmem:[#allocation2 + $0xc7] sm:$0xff]
        %v661 = vld [vmem:[#allocation2 + $0xcf] sm:$0xff]
        %v662 = vld [vmem:[#allocation2 + $0xe7] sm:$0xff]
        %v663 = vld [vmem:[#allocation2 + $0xef] sm:$0xff]
        %v664 = vpack.c.bf16 %v649, %v648
        %v665 = vpack.c.bf16 %v651, %v650
        %v666 = vpack.c.bf16 %v653, %v652
        %v667 = vpack.c.bf16 %v655, %v654
        %v668 = vpack.c.bf16 %v657, %v656
        %v669 = vpack.c.bf16 %v659, %v658
        %v670 = vpack.c.bf16 %v661, %v660
        %v671 = vpack.c.bf16 %v663, %v662
        %v672 = vld [vmem:[%s2] sm:$0xf]
        %v673 = vld [vmem:[%s2 + $0x4] sm:$0xf]
        %v674 = vld [vmem:[%s2 + $0x8] sm:$0xf]
        %v675 = vld [vmem:[%s2 + $0xc] sm:$0xf]
        %v676 = vld [vmem:[%s3] sm:$0xf]
        %v677 = vld [vmem:[%s3 + $0x4] sm:$0xf]
        %v678 = vld [vmem:[%s3 + $0x8] sm:$0xf]
        %v679 = vld [vmem:[%s3 + $0xc] sm:$0xf]
        %v680 = vld [vmem:[#allocation2 + $0x8] sm:$0xff]
        %v681 = vld [vmem:[#allocation2 + $0x10] sm:$0xff]
        %v682 = vld [vmem:[#allocation2 + $0x28] sm:$0xff]
        %v683 = vld [vmem:[#allocation2 + $0x30] sm:$0xff]
        %v684 = vld [vmem:[#allocation2 + $0x48] sm:$0xff]
        %v685 = vld [vmem:[#allocation2 + $0x50] sm:$0xff]
        %v686 = vld [vmem:[#allocation2 + $0x68] sm:$0xff]
        %v687 = vld [vmem:[#allocation2 + $0x70] sm:$0xff]
        %v688 = vld [vmem:[#allocation2 + $0x88] sm:$0xff]
        %v689 = vld [vmem:[#allocation2 + $0x90] sm:$0xff]
        %v690 = vld [vmem:[#allocation2 + $0xa8] sm:$0xff]
        %v691 = vld [vmem:[#allocation2 + $0xb0] sm:$0xff]
        %v692 = vld [vmem:[#allocation2 + $0xc8] sm:$0xff]
        %v693 = vld [vmem:[#allocation2 + $0xd0] sm:$0xff]
        %v694 = vld [vmem:[#allocation2 + $0xe8] sm:$0xff]
        %v695 = vld [vmem:[#allocation2 + $0xf0] sm:$0xff]
        %v696 = vpack.c.bf16 %v681, %v680
        %v697 = vpack.c.bf16 %v683, %v682
        %v698 = vpack.c.bf16 %v685, %v684
        %v699 = vpack.c.bf16 %v687, %v686
        %v700 = vpack.c.bf16 %v689, %v688
        %v701 = vpack.c.bf16 %v691, %v690
        %v702 = vpack.c.bf16 %v693, %v692
        %v703 = vpack.c.bf16 %v695, %v694
        %s704 = scalar_lea.vmem %s2, 16
        %v705 = vld [vmem:[%s704] sm:$0xf]
        %v706 = vld [vmem:[%s704 + $0x4] sm:$0xf]
        %v707 = vld [vmem:[%s704 + $0x8] sm:$0xf]
        %v708 = vld [vmem:[%s704 + $0xc] sm:$0xf]
        %v713 = vunpack.c.l.b16 %v705
        %v714 = vunpack.c.l.b16 %v706
        %v715 = vunpack.c.l.b16 %v707
        %v716 = vunpack.c.l.b16 %v708
        %v717 = vpack.c.b16 %v714, %v713
        %v718 = vpack.c.b16 %v716, %v715
        %v722 = vsel %vm615, %v696, 0
        %v725 = vsel %vm615, %v697, 0
        %v728 = vsel %vm615, %v698, 0
        %v731 = vsel %vm615, %v699, 0
        %v734 = vsel %vm615, %v700, 0
        %v737 = vsel %vm615, %v701, 0
        %v740 = vsel %vm615, %v702, 0
        %v743 = vsel %vm615, %v703, 0
        %745 = vmatprep.subr.bf16.mxu0 0
        %746 = vmatpush1.bf16.msra.mxu0 %v717
        %747 = vmatprep.subr.bf16.mxu0 0
        %748 = vmatpush1.bf16.msra.mxu0 %v718
        %749 = vmatprep.subr.bf16.mxu0 0
        %750 = vmatpush1.bf16.msra.mxu0 0
        %751 = vmatprep.subr.bf16.mxu0 0
        %752 = vmatpush1.bf16.msra.mxu0 0
        %753 = vmatprep.subr.bf16.mxu0 0
        %754 = vmatpush1.bf16.msra.mxu0 0
        %755 = vmatprep.subr.bf16.mxu0 0
        %756 = vmatpush1.bf16.msra.mxu0 0
        %757 = vmatprep.subr.bf16.mxu0 0
        %758 = vmatpush1.bf16.msra.mxu0 0
        %759 = vmatprep.subr.bf16.mxu0 0
        %760 = vmatpush1.bf16.msra.mxu0 0
        %761 = vmatprep.subr.bf16.mxu0 0
        %762 = vmatpush1.bf16.msra.mxu0 0
        %763 = vmatprep.subr.bf16.mxu0 0
        %764 = vmatpush1.bf16.msra.mxu0 0
        %765 = vmatprep.subr.bf16.mxu0 0
        %766 = vmatpush1.bf16.msra.mxu0 0
        %767 = vmatprep.subr.bf16.mxu0 0
        %768 = vmatpush1.bf16.msra.mxu0 0
        %769 = vmatprep.subr.bf16.mxu0 0
        %770 = vmatpush1.bf16.msra.mxu0 0
        %771 = vmatprep.subr.bf16.mxu0 0
        %772 = vmatpush1.bf16.msra.mxu0 0
        %773 = vmatprep.subr.bf16.mxu0 0
        %774 = vmatpush1.bf16.msra.mxu0 0
        %775 = vmatprep.subr.bf16.mxu0 0
        %776 = vmatpush1.bf16.msra.mxu0 0
        %777 = vmatprep.mubr.bf16.mxu0 0
        %778 = vmatmul.mubr.bf16.gmra.mrb[0].mxu0 %v722
        %v779 = vpop.f32.mrb[0].mxu0
        %v780 = vadd.f32 0.0, %v779
        %v781 = vpop.f32.mrb[0].mxu0
        %v782 = vpop.f32.mrb[0].mxu0
        %v783 = vadd.f32 0.0, %v782
        %v784 = vpop.f32.mrb[0].mxu0
        %785 = vmatprep.mubr.bf16.mxu0 0
        %786 = vmatmul.mubr.bf16.gmra.mrb[0].mxu0 %v725
        %v787 = vpop.f32.mrb[0].mxu0
        %v788 = vadd.f32 0.0, %v787
        %v789 = vpop.f32.mrb[0].mxu0
        %v790 = vpop.f32.mrb[0].mxu0
        %v791 = vadd.f32 0.0, %v790
        %v792 = vpop.f32.mrb[0].mxu0
        %793 = vmatprep.mubr.bf16.mxu0 0
        %794 = vmatmul.mubr.bf16.gmra.mrb[0].mxu0 %v728
        %v795 = vpop.f32.mrb[0].mxu0
        %v796 = vadd.f32 0.0, %v795
        %v797 = vpop.f32.mrb[0].mxu0
        %v798 = vpop.f32.mrb[0].mxu0
        %v799 = vadd.f32 0.0, %v798
        %v800 = vpop.f32.mrb[0].mxu0
        %801 = vmatprep.mubr.bf16.mxu0 0
        %802 = vmatmul.mubr.bf16.gmra.mrb[0].mxu0 %v731
        %v803 = vpop.f32.mrb[0].mxu0
        %v804 = vadd.f32 0.0, %v803
        %v805 = vpop.f32.mrb[0].mxu0
        %v806 = vpop.f32.mrb[0].mxu0
        %v807 = vadd.f32 0.0, %v806
        %v808 = vpop.f32.mrb[0].mxu0
        %809 = vmatprep.mubr.bf16.mxu0 0
        %810 = vmatmul.mubr.bf16.gmra.mrb[0].mxu0 %v734
        %v811 = vpop.f32.mrb[0].mxu0
        %v812 = vadd.f32 0.0, %v811
        %v813 = vpop.f32.mrb[0].mxu0
        %v814 = vpop.f32.mrb[0].mxu0
        %v815 = vadd.f32 0.0, %v814
        %v816 = vpop.f32.mrb[0].mxu0
        %817 = vmatprep.mubr.bf16.mxu0 0
        %818 = vmatmul.mubr.bf16.gmra.mrb[0].mxu0 %v737
        %v819 = vpop.f32.mrb[0].mxu0
        %v820 = vadd.f32 0.0, %v819
        %v821 = vpop.f32.mrb[0].mxu0
        %v822 = vpop.f32.mrb[0].mxu0
        %v823 = vadd.f32 0.0, %v822
        %v824 = vpop.f32.mrb[0].mxu0
        %825 = vmatprep.mubr.bf16.mxu0 0
        %826 = vmatmul.mubr.bf16.gmra.mrb[0].mxu0 %v740
        %v827 = vpop.f32.mrb[0].mxu0
        %v828 = vadd.f32 0.0, %v827
        %v829 = vpop.f32.mrb[0].mxu0
        %v830 = vpop.f32.mrb[0].mxu0
        %v831 = vadd.f32 0.0, %v830
        %v832 = vpop.f32.mrb[0].mxu0
        %833 = vmatprep.mubr.bf16.mxu0 0
        %834 = vmatmul.mubr.bf16.gmra.mrb[0].mxu0 %v743
        %v835 = vpop.f32.mrb[0].mxu0
        %v836 = vadd.f32 0.0, %v835
        %v837 = vpop.f32.mrb[0].mxu0
        %v838 = vpop.f32.mrb[0].mxu0
        %v839 = vadd.f32 0.0, %v838
        %v840 = vpop.f32.mrb[0].mxu0
        %841 = vdwg.mxu0
        %v846 = vunpack.c.l.b16 %v672
        %v847 = vunpack.c.l.b16 %v673
        %v848 = vunpack.c.l.b16 %v674
        %v849 = vunpack.c.l.b16 %v675
        %v850 = vpack.c.b16 %v847, %v846
        %v851 = vpack.c.b16 %v849, %v848
        %v855 = vsel %vm615, %v664, 0
        %v858 = vsel %vm615, %v665, 0
        %v861 = vsel %vm615, %v666, 0
        %v864 = vsel %vm615, %v667, 0
        %v867 = vsel %vm615, %v668, 0
        %v870 = vsel %vm615, %v669, 0
        %v873 = vsel %vm615, %v670, 0
        %v876 = vsel %vm615, %v671, 0
        %878 = vmatprep.subr.bf16.mxu0 0
        %879 = vmatpush1.bf16.msra.mxu0 %v850
        %880 = vmatprep.subr.bf16.mxu0 0
        %881 = vmatpush1.bf16.msra.mxu0 %v851
        %882 = vmatprep.subr.bf16.mxu0 0
        %883 = vmatpush1.bf16.msra.mxu0 0
        %884 = vmatprep.subr.bf16.mxu0 0
        %885 = vmatpush1.bf16.msra.mxu0 0
        %886 = vmatprep.subr.bf16.mxu0 0
        %887 = vmatpush1.bf16.msra.mxu0 0
        %888 = vmatprep.subr.bf16.mxu0 0
        %889 = vmatpush1.bf16.msra.mxu0 0
        %890 = vmatprep.subr.bf16.mxu0 0
        %891 = vmatpush1.bf16.msra.mxu0 0
        %892 = vmatprep.subr.bf16.mxu0 0
        %893 = vmatpush1.bf16.msra.mxu0 0
        %894 = vmatprep.subr.bf16.mxu0 0
        %895 = vmatpush1.bf16.msra.mxu0 0
        %896 = vmatprep.subr.bf16.mxu0 0
        %897 = vmatpush1.bf16.msra.mxu0 0
        %898 = vmatprep.subr.bf16.mxu0 0
        %899 = vmatpush1.bf16.msra.mxu0 0
        %900 = vmatprep.subr.bf16.mxu0 0
        %901 = vmatpush1.bf16.msra.mxu0 0
        %902 = vmatprep.subr.bf16.mxu0 0
        %903 = vmatpush1.bf16.msra.mxu0 0
        %904 = vmatprep.subr.bf16.mxu0 0
        %905 = vmatpush1.bf16.msra.mxu0 0
        %906 = vmatprep.subr.bf16.mxu0 0
        %907 = vmatpush1.bf16.msra.mxu0 0
        %908 = vmatprep.subr.bf16.mxu0 0
        %909 = vmatpush1.bf16.msra.mxu0 0
        %910 = vmatprep.mubr.bf16.mxu0 0
        %911 = vmatmul.mubr.bf16.gmra.mrb[0].mxu0 %v855
        %v912 = vpop.f32.mrb[0].mxu0
        %v913 = vadd.f32 %v780, %v912
        %v914 = vpop.f32.mrb[0].mxu0
        %v915 = vpop.f32.mrb[0].mxu0
        %v916 = vadd.f32 %v783, %v915
        %v917 = vpop.f32.mrb[0].mxu0
        %918 = vmatprep.mubr.bf16.mxu0 0
        %919 = vmatmul.mubr.bf16.gmra.mrb[0].mxu0 %v858
        %v920 = vpop.f32.mrb[0].mxu0
        %v921 = vadd.f32 %v788, %v920
        %v922 = vpop.f32.mrb[0].mxu0
        %v923 = vpop.f32.mrb[0].mxu0
        %v924 = vadd.f32 %v791, %v923
        %v925 = vpop.f32.mrb[0].mxu0
        %926 = vmatprep.mubr.bf16.mxu0 0
        %927 = vmatmul.mubr.bf16.gmra.mrb[0].mxu0 %v861
        %v928 = vpop.f32.mrb[0].mxu0
        %v929 = vadd.f32 %v796, %v928
        %v930 = vpop.f32.mrb[0].mxu0
        %v931 = vpop.f32.mrb[0].mxu0
        %v932 = vadd.f32 %v799, %v931
        %v933 = vpop.f32.mrb[0].mxu0
        %934 = vmatprep.mubr.bf16.mxu0 0
        %935 = vmatmul.mubr.bf16.gmra.mrb[0].mxu0 %v864
        %v936 = vpop.f32.mrb[0].mxu0
        %v937 = vadd.f32 %v804, %v936
        %v938 = vpop.f32.mrb[0].mxu0
        %v939 = vpop.f32.mrb[0].mxu0
        %v940 = vadd.f32 %v807, %v939
        %v941 = vpop.f32.mrb[0].mxu0
        %942 = vmatprep.mubr.bf16.mxu0 0
        %943 = vmatmul.mubr.bf16.gmra.mrb[0].mxu0 %v867
        %v944 = vpop.f32.mrb[0].mxu0
        %v945 = vadd.f32 %v812, %v944
        %v946 = vpop.f32.mrb[0].mxu0
        %v947 = vpop.f32.mrb[0].mxu0
        %v948 = vadd.f32 %v815, %v947
        %v949 = vpop.f32.mrb[0].mxu0
        %950 = vmatprep.mubr.bf16.mxu0 0
        %951 = vmatmul.mubr.bf16.gmra.mrb[0].mxu0 %v870
        %v952 = vpop.f32.mrb[0].mxu0
        %v953 = vadd.f32 %v820, %v952
        %v954 = vpop.f32.mrb[0].mxu0
        %v955 = vpop.f32.mrb[0].mxu0
        %v956 = vadd.f32 %v823, %v955
        %v957 = vpop.f32.mrb[0].mxu0
        %958 = vmatprep.mubr.bf16.mxu0 0
        %959 = vmatmul.mubr.bf16.gmra.mrb[0].mxu0 %v873
        %v960 = vpop.f32.mrb[0].mxu0
        %v961 = vadd.f32 %v828, %v960
        %v962 = vpop.f32.mrb[0].mxu0
        %v963 = vpop.f32.mrb[0].mxu0
        %v964 = vadd.f32 %v831, %v963
        %v965 = vpop.f32.mrb[0].mxu0
        %966 = vmatprep.mubr.bf16.mxu0 0
        %967 = vmatmul.mubr.bf16.gmra.mrb[0].mxu0 %v876
        %v968 = vpop.f32.mrb[0].mxu0
        %v969 = vadd.f32 %v836, %v968
        %v970 = vpop.f32.mrb[0].mxu0
        %v971 = vpop.f32.mrb[0].mxu0
        %v972 = vadd.f32 %v839, %v971
        %v973 = vpop.f32.mrb[0].mxu0
        %974 = vdwg.mxu0
        %s975 = scalar_lea.vmem %s3, 16
        %v976 = vld [vmem:[%s975] sm:$0xf]
        %v977 = vld [vmem:[%s975 + $0x4] sm:$0xf]
        %v978 = vld [vmem:[%s975 + $0x8] sm:$0xf]
        %v979 = vld [vmem:[%s975 + $0xc] sm:$0xf]
        %v984 = vunpack.c.l.b16 %v976
        %v985 = vunpack.c.l.b16 %v977
        %v986 = vunpack.c.l.b16 %v978
        %v987 = vunpack.c.l.b16 %v979
        %v988 = vpack.c.b16 %v985, %v984
        %v989 = vpack.c.b16 %v987, %v986
        %992 = vmatprep.subr.bf16.mxu0 0
        %993 = vmatpush1.bf16.msra.mxu0 %v988
        %994 = vmatprep.subr.bf16.mxu0 0
        %995 = vmatpush1.bf16.msra.mxu0 %v989
        %996 = vmatprep.subr.bf16.mxu0 0
        %997 = vmatpush1.bf16.msra.mxu0 0
        %998 = vmatprep.subr.bf16.mxu0 0
        %999 = vmatpush1.bf16.msra.mxu0 0
        %1000 = vmatprep.subr.bf16.mxu0 0
        %1001 = vmatpush1.bf16.msra.mxu0 0
        %1002 = vmatprep.subr.bf16.mxu0 0
        %1003 = vmatpush1.bf16.msra.mxu0 0
        %1004 = vmatprep.subr.bf16.mxu0 0
        %1005 = vmatpush1.bf16.msra.mxu0 0
        %1006 = vmatprep.subr.bf16.mxu0 0
        %1007 = vmatpush1.bf16.msra.mxu0 0
        %1008 = vmatprep.subr.bf16.mxu0 0
        %1009 = vmatpush1.bf16.msra.mxu0 0
        %1010 = vmatprep.subr.bf16.mxu0 0
        %1011 = vmatpush1.bf16.msra.mxu0 0
        %1012 = vmatprep.subr.bf16.mxu0 0
        %1013 = vmatpush1.bf16.msra.mxu0 0
        %1014 = vmatprep.subr.bf16.mxu0 0
        %1015 = vmatpush1.bf16.msra.mxu0 0
        %1016 = vmatprep.subr.bf16.mxu0 0
        %1017 = vmatpush1.bf16.msra.mxu0 0
        %1018 = vmatprep.subr.bf16.mxu0 0
        %1019 = vmatpush1.bf16.msra.mxu0 0
        %1020 = vmatprep.subr.bf16.mxu0 0
        %1021 = vmatpush1.bf16.msra.mxu0 0
        %1022 = vmatprep.subr.bf16.mxu0 0
        %1023 = vmatpush1.bf16.msra.mxu0 0
        %1024 = vmatprep.mubr.bf16.mxu0 0
        %1025 = vmatmul.mubr.bf16.gmra.mrb[0].mxu0 %v722
        %v1026 = vpop.f32.mrb[0].mxu0
        %v1027 = vadd.f32 0.0, %v1026
        %v1028 = vpop.f32.mrb[0].mxu0
        %v1029 = vpop.f32.mrb[0].mxu0
        %v1030 = vadd.f32 0.0, %v1029
        %v1031 = vpop.f32.mrb[0].mxu0
        %1032 = vmatprep.mubr.bf16.mxu0 0
        %1033 = vmatmul.mubr.bf16.gmra.mrb[0].mxu0 %v725
        %v1034 = vpop.f32.mrb[0].mxu0
        %v1035 = vadd.f32 0.0, %v1034
        %v1036 = vpop.f32.mrb[0].mxu0
        %v1037 = vpop.f32.mrb[0].mxu0
        %v1038 = vadd.f32 0.0, %v1037
        %v1039 = vpop.f32.mrb[0].mxu0
        %1040 = vmatprep.mubr.bf16.mxu0 0
        %1041 = vmatmul.mubr.bf16.gmra.mrb[0].mxu0 %v728
        %v1042 = vpop.f32.mrb[0].mxu0
        %v1043 = vadd.f32 0.0, %v1042
        %v1044 = vpop.f32.mrb[0].mxu0
        %v1045 = vpop.f32.mrb[0].mxu0
        %v1046 = vadd.f32 0.0, %v1045
        %v1047 = vpop.f32.mrb[0].mxu0
        %1048 = vmatprep.mubr.bf16.mxu0 0
        %1049 = vmatmul.mubr.bf16.gmra.mrb[0].mxu0 %v731
        %v1050 = vpop.f32.mrb[0].mxu0
        %v1051 = vadd.f32 0.0, %v1050
        %v1052 = vpop.f32.mrb[0].mxu0
        %v1053 = vpop.f32.mrb[0].mxu0
        %v1054 = vadd.f32 0.0, %v1053
        %v1055 = vpop.f32.mrb[0].mxu0
        %1056 = vmatprep.mubr.bf16.mxu0 0
        %1057 = vmatmul.mubr.bf16.gmra.mrb[0].mxu0 %v734
        %v1058 = vpop.f32.mrb[0].mxu0
        %v1059 = vadd.f32 0.0, %v1058
        %v1060 = vpop.f32.mrb[0].mxu0
        %v1061 = vpop.f32.mrb[0].mxu0
        %v1062 = vadd.f32 0.0, %v1061
        %v1063 = vpop.f32.mrb[0].mxu0
        %1064 = vmatprep.mubr.bf16.mxu0 0
        %1065 = vmatmul.mubr.bf16.gmra.mrb[0].mxu0 %v737
        %v1066 = vpop.f32.mrb[0].mxu0
        %v1067 = vadd.f32 0.0, %v1066
        %v1068 = vpop.f32.mrb[0].mxu0
        %v1069 = vpop.f32.mrb[0].mxu0
        %v1070 = vadd.f32 0.0, %v1069
        %v1071 = vpop.f32.mrb[0].mxu0
        %1072 = vmatprep.mubr.bf16.mxu0 0
        %1073 = vmatmul.mubr.bf16.gmra.mrb[0].mxu0 %v740
        %v1074 = vpop.f32.mrb[0].mxu0
        %v1075 = vadd.f32 0.0, %v1074
        %v1076 = vpop.f32.mrb[0].mxu0
        %v1077 = vpop.f32.mrb[0].mxu0
        %v1078 = vadd.f32 0.0, %v1077
        %v1079 = vpop.f32.mrb[0].mxu0
        %1080 = vmatprep.mubr.bf16.mxu0 0
        %1081 = vmatmul.mubr.bf16.gmra.mrb[0].mxu0 %v743
        %v1082 = vpop.f32.mrb[0].mxu0
        %v1083 = vadd.f32 0.0, %v1082
        %v1084 = vpop.f32.mrb[0].mxu0
        %v1085 = vpop.f32.mrb[0].mxu0
        %v1086 = vadd.f32 0.0, %v1085
        %v1087 = vpop.f32.mrb[0].mxu0
        %1088 = vdwg.mxu0
        %v1093 = vunpack.c.l.b16 %v676
        %v1094 = vunpack.c.l.b16 %v677
        %v1095 = vunpack.c.l.b16 %v678
        %v1096 = vunpack.c.l.b16 %v679
        %v1097 = vpack.c.b16 %v1094, %v1093
        %v1098 = vpack.c.b16 %v1096, %v1095
        %1101 = vmatprep.subr.bf16.mxu0 0
        %1102 = vmatpush1.bf16.msra.mxu0 %v1097
        %1103 = vmatprep.subr.bf16.mxu0 0
        %1104 = vmatpush1.bf16.msra.mxu0 %v1098
        %1105 = vmatprep.subr.bf16.mxu0 0
        %1106 = vmatpush1.bf16.msra.mxu0 0
        %1107 = vmatprep.subr.bf16.mxu0 0
        %1108 = vmatpush1.bf16.msra.mxu0 0
        %1109 = vmatprep.subr.bf16.mxu0 0
        %1110 = vmatpush1.bf16.msra.mxu0 0
        %1111 = vmatprep.subr.bf16.mxu0 0
        %1112 = vmatpush1.bf16.msra.mxu0 0
        %1113 = vmatprep.subr.bf16.mxu0 0
        %1114 = vmatpush1.bf16.msra.mxu0 0
        %1115 = vmatprep.subr.bf16.mxu0 0
        %1116 = vmatpush1.bf16.msra.mxu0 0
        %1117 = vmatprep.subr.bf16.mxu0 0
        %1118 = vmatpush1.bf16.msra.mxu0 0
        %1119 = vmatprep.subr.bf16.mxu0 0
        %1120 = vmatpush1.bf16.msra.mxu0 0
        %1121 = vmatprep.subr.bf16.mxu0 0
        %1122 = vmatpush1.bf16.msra.mxu0 0
        %1123 = vmatprep.subr.bf16.mxu0 0
        %1124 = vmatpush1.bf16.msra.mxu0 0
        %1125 = vmatprep.subr.bf16.mxu0 0
        %1126 = vmatpush1.bf16.msra.mxu0 0
        %1127 = vmatprep.subr.bf16.mxu0 0
        %1128 = vmatpush1.bf16.msra.mxu0 0
        %1129 = vmatprep.subr.bf16.mxu0 0
        %1130 = vmatpush1.bf16.msra.mxu0 0
        %1131 = vmatprep.subr.bf16.mxu0 0
        %1132 = vmatpush1.bf16.msra.mxu0 0
        %1133 = vmatprep.mubr.bf16.mxu0 0
        %1134 = vmatmul.mubr.bf16.gmra.mrb[0].mxu0 %v855
        %v1135 = vpop.f32.mrb[0].mxu0
        %v1136 = vadd.f32 %v1027, %v1135
        %v1137 = vpop.f32.mrb[0].mxu0
        %v1138 = vpop.f32.mrb[0].mxu0
        %v1139 = vadd.f32 %v1030, %v1138
        %v1140 = vpop.f32.mrb[0].mxu0
        %1141 = vmatprep.mubr.bf16.mxu0 0
        %1142 = vmatmul.mubr.bf16.gmra.mrb[0].mxu0 %v858
        %v1143 = vpop.f32.mrb[0].mxu0
        %v1144 = vadd.f32 %v1035, %v1143
        %v1145 = vpop.f32.mrb[0].mxu0
        %v1146 = vpop.f32.mrb[0].mxu0
        %v1147 = vadd.f32 %v1038, %v1146
        %v1148 = vpop.f32.mrb[0].mxu0
        %1149 = vmatprep.mubr.bf16.mxu0 0
        %1150 = vmatmul.mubr.bf16.gmra.mrb[0].mxu0 %v861
        %v1151 = vpop.f32.mrb[0].mxu0
        %v1152 = vadd.f32 %v1043, %v1151
        %v1153 = vpop.f32.mrb[0].mxu0
        %v1154 = vpop.f32.mrb[0].mxu0
        %v1155 = vadd.f32 %v1046, %v1154
        %v1156 = vpop.f32.mrb[0].mxu0
        %1157 = vmatprep.mubr.bf16.mxu0 0
        %1158 = vmatmul.mubr.bf16.gmra.mrb[0].mxu0 %v864
        %v1159 = vpop.f32.mrb[0].mxu0
        %v1160 = vadd.f32 %v1051, %v1159
        %v1161 = vpop.f32.mrb[0].mxu0
        %v1162 = vpop.f32.mrb[0].mxu0
        %v1163 = vadd.f32 %v1054, %v1162
        %v1164 = vpop.f32.mrb[0].mxu0
        %1165 = vmatprep.mubr.bf16.mxu0 0
        %1166 = vmatmul.mubr.bf16.gmra.mrb[0].mxu0 %v867
        %v1167 = vpop.f32.mrb[0].mxu0
        %v1168 = vadd.f32 %v1059, %v1167
        %v1169 = vpop.f32.mrb[0].mxu0
        %v1170 = vpop.f32.mrb[0].mxu0
        %v1171 = vadd.f32 %v1062, %v1170
        %v1172 = vpop.f32.mrb[0].mxu0
        %1173 = vmatprep.mubr.bf16.mxu0 0
        %1174 = vmatmul.mubr.bf16.gmra.mrb[0].mxu0 %v870
        %v1175 = vpop.f32.mrb[0].mxu0
        %v1176 = vadd.f32 %v1067, %v1175
        %v1177 = vpop.f32.mrb[0].mxu0
        %v1178 = vpop.f32.mrb[0].mxu0
        %v1179 = vadd.f32 %v1070, %v1178
        %v1180 = vpop.f32.mrb[0].mxu0
        %1181 = vmatprep.mubr.bf16.mxu0 0
        %1182 = vmatmul.mubr.bf16.gmra.mrb[0].mxu0 %v873
        %v1183 = vpop.f32.mrb[0].mxu0
        %v1184 = vadd.f32 %v1075, %v1183
        %v1185 = vpop.f32.mrb[0].mxu0
        %v1186 = vpop.f32.mrb[0].mxu0
        %v1187 = vadd.f32 %v1078, %v1186
        %v1188 = vpop.f32.mrb[0].mxu0
        %1189 = vmatprep.mubr.bf16.mxu0 0
        %1190 = vmatmul.mubr.bf16.gmra.mrb[0].mxu0 %v876
        %v1191 = vpop.f32.mrb[0].mxu0
        %v1192 = vadd.f32 %v1083, %v1191
        %v1193 = vpop.f32.mrb[0].mxu0
        %v1194 = vpop.f32.mrb[0].mxu0
        %v1195 = vadd.f32 %v1086, %v1194
        %v1196 = vpop.f32.mrb[0].mxu0
        %1197 = vdwg.mxu0
        %v1198 = vld [vmem:[#allocation2 + $0x9] sm:$0xff]
        %v1199 = vld [vmem:[#allocation2 + $0x11] sm:$0xff]
        %v1200 = vld [vmem:[#allocation2 + $0x29] sm:$0xff]
        %v1201 = vld [vmem:[#allocation2 + $0x31] sm:$0xff]
        %v1202 = vld [vmem:[#allocation2 + $0x49] sm:$0xff]
        %v1203 = vld [vmem:[#allocation2 + $0x51] sm:$0xff]
        %v1204 = vld [vmem:[#allocation2 + $0x69] sm:$0xff]
        %v1205 = vld [vmem:[#allocation2 + $0x71] sm:$0xff]
        %v1206 = vld [vmem:[#allocation2 + $0x89] sm:$0xff]
        %v1207 = vld [vmem:[#allocation2 + $0x91] sm:$0xff]
        %v1208 = vld [vmem:[#allocation2 + $0xa9] sm:$0xff]
        %v1209 = vld [vmem:[#allocation2 + $0xb1] sm:$0xff]
        %v1210 = vld [vmem:[#allocation2 + $0xc9] sm:$0xff]
        %v1211 = vld [vmem:[#allocation2 + $0xd1] sm:$0xff]
        %v1212 = vld [vmem:[#allocation2 + $0xe9] sm:$0xff]
        %v1213 = vld [vmem:[#allocation2 + $0xf1] sm:$0xff]
        %v1214 = vpack.c.bf16 %v1199, %v1198
        %v1215 = vpack.c.bf16 %v1201, %v1200
        %v1216 = vpack.c.bf16 %v1203, %v1202
        %v1217 = vpack.c.bf16 %v1205, %v1204
        %v1218 = vpack.c.bf16 %v1207, %v1206
        %v1219 = vpack.c.bf16 %v1209, %v1208
        %v1220 = vpack.c.bf16 %v1211, %v1210
        %v1221 = vpack.c.bf16 %v1213, %v1212
        %s1222 = scalar_lea.vmem %s2, 32
        %v1223 = vld [vmem:[%s1222] sm:$0xf]
        %v1224 = vld [vmem:[%s1222 + $0x4] sm:$0xf]
        %v1225 = vld [vmem:[%s1222 + $0x8] sm:$0xf]
        %v1226 = vld [vmem:[%s1222 + $0xc] sm:$0xf]
        %v1231 = vunpack.c.l.b16 %v1223
        %v1232 = vunpack.c.l.b16 %v1224
        %v1233 = vunpack.c.l.b16 %v1225
        %v1234 = vunpack.c.l.b16 %v1226
        %v1235 = vpack.c.b16 %v1232, %v1231
        %v1236 = vpack.c.b16 %v1234, %v1233
        %v1240 = vsel %vm615, %v1214, 0
        %v1243 = vsel %vm615, %v1215, 0
        %v1246 = vsel %vm615, %v1216, 0
        %v1249 = vsel %vm615, %v1217, 0
        %v1252 = vsel %vm615, %v1218, 0
        %v1255 = vsel %vm615, %v1219, 0
        %v1258 = vsel %vm615, %v1220, 0
        %v1261 = vsel %vm615, %v1221, 0
        %1263 = vmatprep.subr.bf16.mxu0 0
        %1264 = vmatpush1.bf16.msra.mxu0 %v1235
        %1265 = vmatprep.subr.bf16.mxu0 0
        %1266 = vmatpush1.bf16.msra.mxu0 %v1236
        %1267 = vmatprep.subr.bf16.mxu0 0
        %1268 = vmatpush1.bf16.msra.mxu0 0
        %1269 = vmatprep.subr.bf16.mxu0 0
        %1270 = vmatpush1.bf16.msra.mxu0 0
        %1271 = vmatprep.subr.bf16.mxu0 0
        %1272 = vmatpush1.bf16.msra.mxu0 0
        %1273 = vmatprep.subr.bf16.mxu0 0
        %1274 = vmatpush1.bf16.msra.mxu0 0
        %1275 = vmatprep.subr.bf16.mxu0 0
        %1276 = vmatpush1.bf16.msra.mxu0 0
        %1277 = vmatprep.subr.bf16.mxu0 0
        %1278 = vmatpush1.bf16.msra.mxu0 0
        %1279 = vmatprep.subr.bf16.mxu0 0
        %1280 = vmatpush1.bf16.msra.mxu0 0
        %1281 = vmatprep.subr.bf16.mxu0 0
        %1282 = vmatpush1.bf16.msra.mxu0 0
        %1283 = vmatprep.subr.bf16.mxu0 0
        %1284 = vmatpush1.bf16.msra.mxu0 0
        %1285 = vmatprep.subr.bf16.mxu0 0
        %1286 = vmatpush1.bf16.msra.mxu0 0
        %1287 = vmatprep.subr.bf16.mxu0 0
        %1288 = vmatpush1.bf16.msra.mxu0 0
        %1289 = vmatprep.subr.bf16.mxu0 0
        %1290 = vmatpush1.bf16.msra.mxu0 0
        %1291 = vmatprep.subr.bf16.mxu0 0
        %1292 = vmatpush1.bf16.msra.mxu0 0
        %1293 = vmatprep.subr.bf16.mxu0 0
        %1294 = vmatpush1.bf16.msra.mxu0 0
        %1295 = vmatprep.mubr.bf16.mxu0 0
        %1296 = vmatmul.mubr.bf16.gmra.mrb[0].mxu0 %v1240
        %v1297 = vpop.f32.mrb[0].mxu0
        %v1298 = vadd.f32 0.0, %v1297
        %v1299 = vpop.f32.mrb[0].mxu0
        %v1300 = vpop.f32.mrb[0].mxu0
        %v1301 = vadd.f32 0.0, %v1300
        %v1302 = vpop.f32.mrb[0].mxu0
        %1303 = vmatprep.mubr.bf16.mxu0 0
        %1304 = vmatmul.mubr.bf16.gmra.mrb[0].mxu0 %v1243
        %v1305 = vpop.f32.mrb[0].mxu0
        %v1306 = vadd.f32 0.0, %v1305
        %v1307 = vpop.f32.mrb[0].mxu0
        %v1308 = vpop.f32.mrb[0].mxu0
        %v1309 = vadd.f32 0.0, %v1308
        %v1310 = vpop.f32.mrb[0].mxu0
        %1311 = vmatprep.mubr.bf16.mxu0 0
        %1312 = vmatmul.mubr.bf16.gmra.mrb[0].mxu0 %v1246
        %v1313 = vpop.f32.mrb[0].mxu0
        %v1314 = vadd.f32 0.0, %v1313
        %v1315 = vpop.f32.mrb[0].mxu0
        %v1316 = vpop.f32.mrb[0].mxu0
        %v1317 = vadd.f32 0.0, %v1316
        %v1318 = vpop.f32.mrb[0].mxu0
        %1319 = vmatprep.mubr.bf16.mxu0 0
        %1320 = vmatmul.mubr.bf16.gmra.mrb[0].mxu0 %v1249
        %v1321 = vpop.f32.mrb[0].mxu0
        %v1322 = vadd.f32 0.0, %v1321
        %v1323 = vpop.f32.mrb[0].mxu0
        %v1324 = vpop.f32.mrb[0].mxu0
        %v1325 = vadd.f32 0.0, %v1324
        %v1326 = vpop.f32.mrb[0].mxu0
        %1327 = vmatprep.mubr.bf16.mxu0 0
        %1328 = vmatmul.mubr.bf16.gmra.mrb[0].mxu0 %v1252
        %v1329 = vpop.f32.mrb[0].mxu0
        %v1330 = vadd.f32 0.0, %v1329
        %v1331 = vpop.f32.mrb[0].mxu0
        %v1332 = vpop.f32.mrb[0].mxu0
        %v1333 = vadd.f32 0.0, %v1332
        %v1334 = vpop.f32.mrb[0].mxu0
        %1335 = vmatprep.mubr.bf16.mxu0 0
        %1336 = vmatmul.mubr.bf16.gmra.mrb[0].mxu0 %v1255
        %v1337 = vpop.f32.mrb[0].mxu0
        %v1338 = vadd.f32 0.0, %v1337
        %v1339 = vpop.f32.mrb[0].mxu0
        %v1340 = vpop.f32.mrb[0].mxu0
        %v1341 = vadd.f32 0.0, %v1340
        %v1342 = vpop.f32.mrb[0].mxu0
        %1343 = vmatprep.mubr.bf16.mxu0 0
        %1344 = vmatmul.mubr.bf16.gmra.mrb[0].mxu0 %v1258
        %v1345 = vpop.f32.mrb[0].mxu0
        %v1346 = vadd.f32 0.0, %v1345
        %v1347 = vpop.f32.mrb[0].mxu0
        %v1348 = vpop.f32.mrb[0].mxu0
        %v1349 = vadd.f32 0.0, %v1348
        %v1350 = vpop.f32.mrb[0].mxu0
        %1351 = vmatprep.mubr.bf16.mxu0 0
        %1352 = vmatmul.mubr.bf16.gmra.mrb[0].mxu0 %v1261
        %v1353 = vpop.f32.mrb[0].mxu0
        %v1354 = vadd.f32 0.0, %v1353
        %v1355 = vpop.f32.mrb[0].mxu0
        %v1356 = vpop.f32.mrb[0].mxu0
        %v1357 = vadd.f32 0.0, %v1356
        %v1358 = vpop.f32.mrb[0].mxu0
        %1359 = vdwg.mxu0
        %v1360 = vadd.f32 %v913, %v1298
        %v1361 = vadd.f32 %v916, %v1301
        %v1362 = vadd.f32 %v921, %v1306
        %v1363 = vadd.f32 %v924, %v1309
        %v1364 = vadd.f32 %v929, %v1314
        %v1365 = vadd.f32 %v932, %v1317
        %v1366 = vadd.f32 %v937, %v1322
        %v1367 = vadd.f32 %v940, %v1325
        %v1368 = vadd.f32 %v945, %v1330
        %v1369 = vadd.f32 %v948, %v1333
        %v1370 = vadd.f32 %v953, %v1338
        %v1371 = vadd.f32 %v956, %v1341
        %v1372 = vadd.f32 %v961, %v1346
        %v1373 = vadd.f32 %v964, %v1349
        %v1374 = vadd.f32 %v969, %v1354
        %v1375 = vadd.f32 %v972, %v1357
        %s1376 = scalar_lea.vmem %s3, 32
        %v1377 = vld [vmem:[%s1376] sm:$0xf]
        %v1378 = vld [vmem:[%s1376 + $0x4] sm:$0xf]
        %v1379 = vld [vmem:[%s1376 + $0x8] sm:$0xf]
        %v1380 = vld [vmem:[%s1376 + $0xc] sm:$0xf]
        %v1385 = vunpack.c.l.b16 %v1377
        %v1386 = vunpack.c.l.b16 %v1378
        %v1387 = vunpack.c.l.b16 %v1379
        %v1388 = vunpack.c.l.b16 %v1380
        %v1389 = vpack.c.b16 %v1386, %v1385
        %v1390 = vpack.c.b16 %v1388, %v1387
        %1393 = vmatprep.subr.bf16.mxu0 0
        %1394 = vmatpush1.bf16.msra.mxu0 %v1389
        %1395 = vmatprep.subr.bf16.mxu0 0
        %1396 = vmatpush1.bf16.msra.mxu0 %v1390
        %1397 = vmatprep.subr.bf16.mxu0 0
        %1398 = vmatpush1.bf16.msra.mxu0 0
        %1399 = vmatprep.subr.bf16.mxu0 0
        %1400 = vmatpush1.bf16.msra.mxu0 0
        %1401 = vmatprep.subr.bf16.mxu0 0
        %1402 = vmatpush1.bf16.msra.mxu0 0
        %1403 = vmatprep.subr.bf16.mxu0 0
        %1404 = vmatpush1.bf16.msra.mxu0 0
        %1405 = vmatprep.subr.bf16.mxu0 0
        %1406 = vmatpush1.bf16.msra.mxu0 0
        %1407 = vmatprep.subr.bf16.mxu0 0
        %1408 = vmatpush1.bf16.msra.mxu0 0
        %1409 = vmatprep.subr.bf16.mxu0 0
        %1410 = vmatpush1.bf16.msra.mxu0 0
        %1411 = vmatprep.subr.bf16.mxu0 0
        %1412 = vmatpush1.bf16.msra.mxu0 0
        %1413 = vmatprep.subr.bf16.mxu0 0
        %1414 = vmatpush1.bf16.msra.mxu0 0
        %1415 = vmatprep.subr.bf16.mxu0 0
        %1416 = vmatpush1.bf16.msra.mxu0 0
        %1417 = vmatprep.subr.bf16.mxu0 0
        %1418 = vmatpush1.bf16.msra.mxu0 0
        %1419 = vmatprep.subr.bf16.mxu0 0
        %1420 = vmatpush1.bf16.msra.mxu0 0
        %1421 = vmatprep.subr.bf16.mxu0 0
        %1422 = vmatpush1.bf16.msra.mxu0 0
        %1423 = vmatprep.subr.bf16.mxu0 0
        %1424 = vmatpush1.bf16.msra.mxu0 0
        %1425 = vmatprep.mubr.bf16.mxu0 0
        %1426 = vmatmul.mubr.bf16.gmra.mrb[0].mxu0 %v1240
        %v1427 = vpop.f32.mrb[0].mxu0
        %v1428 = vadd.f32 0.0, %v1427
        %v1429 = vpop.f32.mrb[0].mxu0
        %v1430 = vpop.f32.mrb[0].mxu0
        %v1431 = vadd.f32 0.0, %v1430
        %v1432 = vpop.f32.mrb[0].mxu0
        %1433 = vmatprep.mubr.bf16.mxu0 0
        %1434 = vmatmul.mubr.bf16.gmra.mrb[0].mxu0 %v1243
        %v1435 = vpop.f32.mrb[0].mxu0
        %v1436 = vadd.f32 0.0, %v1435
        %v1437 = vpop.f32.mrb[0].mxu0
        %v1438 = vpop.f32.mrb[0].mxu0
        %v1439 = vadd.f32 0.0, %v1438
        %v1440 = vpop.f32.mrb[0].mxu0
        %1441 = vmatprep.mubr.bf16.mxu0 0
        %1442 = vmatmul.mubr.bf16.gmra.mrb[0].mxu0 %v1246
        %v1443 = vpop.f32.mrb[0].mxu0
        %v1444 = vadd.f32 0.0, %v1443
        %v1445 = vpop.f32.mrb[0].mxu0
        %v1446 = vpop.f32.mrb[0].mxu0
        %v1447 = vadd.f32 0.0, %v1446
        %v1448 = vpop.f32.mrb[0].mxu0
        %1449 = vmatprep.mubr.bf16.mxu0 0
        %1450 = vmatmul.mubr.bf16.gmra.mrb[0].mxu0 %v1249
        %v1451 = vpop.f32.mrb[0].mxu0
        %v1452 = vadd.f32 0.0, %v1451
        %v1453 = vpop.f32.mrb[0].mxu0
        %v1454 = vpop.f32.mrb[0].mxu0
        %v1455 = vadd.f32 0.0, %v1454
        %v1456 = vpop.f32.mrb[0].mxu0
        %1457 = vmatprep.mubr.bf16.mxu0 0
        %1458 = vmatmul.mubr.bf16.gmra.mrb[0].mxu0 %v1252
        %v1459 = vpop.f32.mrb[0].mxu0
        %v1460 = vadd.f32 0.0, %v1459
        %v1461 = vpop.f32.mrb[0].mxu0
        %v1462 = vpop.f32.mrb[0].mxu0
        %v1463 = vadd.f32 0.0, %v1462
        %v1464 = vpop.f32.mrb[0].mxu0
        %1465 = vmatprep.mubr.bf16.mxu0 0
        %1466 = vmatmul.mubr.bf16.gmra.mrb[0].mxu0 %v1255
        %v1467 = vpop.f32.mrb[0].mxu0
        %v1468 = vadd.f32 0.0, %v1467
        %v1469 = vpop.f32.mrb[0].mxu0
        %v1470 = vpop.f32.mrb[0].mxu0
        %v1471 = vadd.f32 0.0, %v1470
        %v1472 = vpop.f32.mrb[0].mxu0
        %1473 = vmatprep.mubr.bf16.mxu0 0
        %1474 = vmatmul.mubr.bf16.gmra.mrb[0].mxu0 %v1258
        %v1475 = vpop.f32.mrb[0].mxu0
        %v1476 = vadd.f32 0.0, %v1475
        %v1477 = vpop.f32.mrb[0].mxu0
        %v1478 = vpop.f32.mrb[0].mxu0
        %v1479 = vadd.f32 0.0, %v1478
        %v1480 = vpop.f32.mrb[0].mxu0
        %1481 = vmatprep.mubr.bf16.mxu0 0
        %1482 = vmatmul.mubr.bf16.gmra.mrb[0].mxu0 %v1261
        %v1483 = vpop.f32.mrb[0].mxu0
        %v1484 = vadd.f32 0.0, %v1483
        %v1485 = vpop.f32.mrb[0].mxu0
        %v1486 = vpop.f32.mrb[0].mxu0
        %v1487 = vadd.f32 0.0, %v1486
        %v1488 = vpop.f32.mrb[0].mxu0
        %1489 = vdwg.mxu0
        %v1490 = vadd.f32 %v1136, %v1428
        %v1491 = vadd.f32 %v1139, %v1431
        %v1492 = vadd.f32 %v1144, %v1436
        %v1493 = vadd.f32 %v1147, %v1439
        %v1494 = vadd.f32 %v1152, %v1444
        %v1495 = vadd.f32 %v1155, %v1447
        %v1496 = vadd.f32 %v1160, %v1452
        %v1497 = vadd.f32 %v1163, %v1455
        %v1498 = vadd.f32 %v1168, %v1460
        %v1499 = vadd.f32 %v1171, %v1463
        %v1500 = vadd.f32 %v1176, %v1468
        %v1501 = vadd.f32 %v1179, %v1471
        %v1502 = vadd.f32 %v1184, %v1476
        %v1503 = vadd.f32 %v1187, %v1479
        %v1504 = vadd.f32 %v1192, %v1484
        %v1505 = vadd.f32 %v1195, %v1487
        %v1506 = vld [vmem:[%s4] sm:$0x1]
        %v1507 = vlaneseq
        %v1508 = vshrl.u32 %v1507, 7
        %v1509 = vsub.s32 0, %v1508
        %v1510 = vrot.slane %v1506, %v1509
        %v1511 = vadd.f32 %v1360, %v1510
        %v1512 = vadd.f32 %v1361, %v1510
        %v1513 = vadd.f32 %v1362, %v1510
        %v1514 = vadd.f32 %v1363, %v1510
        %v1515 = vadd.f32 %v1364, %v1510
        %v1516 = vadd.f32 %v1365, %v1510
        %v1517 = vadd.f32 %v1366, %v1510
        %v1518 = vadd.f32 %v1367, %v1510
        %v1519 = vadd.f32 %v1368, %v1510
        %v1520 = vadd.f32 %v1369, %v1510
        %v1521 = vadd.f32 %v1370, %v1510
        %v1522 = vadd.f32 %v1371, %v1510
        %v1523 = vadd.f32 %v1372, %v1510
        %v1524 = vadd.f32 %v1373, %v1510
        %v1525 = vadd.f32 %v1374, %v1510
        %v1526 = vadd.f32 %v1375, %v1510
        %v1527 = vld [vmem:[%s5] sm:$0x1]
        %v1528 = vlaneseq
        %v1529 = vshrl.u32 %v1528, 7
        %v1530 = vsub.s32 0, %v1529
        %v1531 = vrot.slane %v1527, %v1530
        %v1532 = vadd.f32 %v1490, %v1531
        %v1533 = vadd.f32 %v1491, %v1531
        %v1534 = vadd.f32 %v1492, %v1531
        %v1535 = vadd.f32 %v1493, %v1531
        %v1536 = vadd.f32 %v1494, %v1531
        %v1537 = vadd.f32 %v1495, %v1531
        %v1538 = vadd.f32 %v1496, %v1531
        %v1539 = vadd.f32 %v1497, %v1531
        %v1540 = vadd.f32 %v1498, %v1531
        %v1541 = vadd.f32 %v1499, %v1531
        %v1542 = vadd.f32 %v1500, %v1531
        %v1543 = vadd.f32 %v1501, %v1531
        %v1544 = vadd.f32 %v1502, %v1531
        %v1545 = vadd.f32 %v1503, %v1531
        %v1546 = vadd.f32 %v1504, %v1531
        %v1547 = vadd.f32 %v1505, %v1531
        %v1548 = vxor.u32 %v1532, 2147483648
        %v1549 = vxor.u32 %v1533, 2147483648
        %v1550 = vxor.u32 %v1534, 2147483648
        %v1551 = vxor.u32 %v1535, 2147483648
        %v1552 = vxor.u32 %v1536, 2147483648
        %v1553 = vxor.u32 %v1537, 2147483648
        %v1554 = vxor.u32 %v1538, 2147483648
        %v1555 = vxor.u32 %v1539, 2147483648
        %v1556 = vxor.u32 %v1540, 2147483648
        %v1557 = vxor.u32 %v1541, 2147483648
        %v1558 = vxor.u32 %v1542, 2147483648
        %v1559 = vxor.u32 %v1543, 2147483648
        %v1560 = vxor.u32 %v1544, 2147483648
        %v1561 = vxor.u32 %v1545, 2147483648
        %v1562 = vxor.u32 %v1546, 2147483648
        %v1563 = vxor.u32 %v1547, 2147483648
        %v1564 = vmul.f32 %v1548, 1.442695
        %v1565 = vpow.pop %v1564
        %v1566 = vmul.f32 %v1549, 1.442695
        %v1567 = vpow.pop %v1566
        %v1568 = vmul.f32 %v1550, 1.442695
        %v1569 = vpow.pop %v1568
        %v1570 = vmul.f32 %v1551, 1.442695
        %v1571 = vpow.pop %v1570
        %v1572 = vmul.f32 %v1552, 1.442695
        %v1573 = vpow.pop %v1572
        %v1574 = vmul.f32 %v1553, 1.442695
        %v1575 = vpow.pop %v1574
        %v1576 = vmul.f32 %v1554, 1.442695
        %v1577 = vpow.pop %v1576
        %v1578 = vmul.f32 %v1555, 1.442695
        %v1579 = vpow.pop %v1578
        %v1580 = vmul.f32 %v1556, 1.442695
        %v1581 = vpow.pop %v1580
        %v1582 = vmul.f32 %v1557, 1.442695
        %v1583 = vpow.pop %v1582
        %v1584 = vmul.f32 %v1558, 1.442695
        %v1585 = vpow.pop %v1584
        %v1586 = vmul.f32 %v1559, 1.442695
        %v1587 = vpow.pop %v1586
        %v1588 = vmul.f32 %v1560, 1.442695
        %v1589 = vpow.pop %v1588
        %v1590 = vmul.f32 %v1561, 1.442695
        %v1591 = vpow.pop %v1590
        %v1592 = vmul.f32 %v1562, 1.442695
        %v1593 = vpow.pop %v1592
        %v1594 = vmul.f32 %v1563, 1.442695
        %v1595 = vpow.pop %v1594
        %v1596 = vadd.f32 %v1565, 1.0
        %v1597 = vadd.f32 %v1567, 1.0
        %v1598 = vadd.f32 %v1569, 1.0
        %v1599 = vadd.f32 %v1571, 1.0
        %v1600 = vadd.f32 %v1573, 1.0
        %v1601 = vadd.f32 %v1575, 1.0
        %v1602 = vadd.f32 %v1577, 1.0
        %v1603 = vadd.f32 %v1579, 1.0
        %v1604 = vadd.f32 %v1581, 1.0
        %v1605 = vadd.f32 %v1583, 1.0
        %v1606 = vadd.f32 %v1585, 1.0
        %v1607 = vadd.f32 %v1587, 1.0
        %v1608 = vadd.f32 %v1589, 1.0
        %v1609 = vadd.f32 %v1591, 1.0
        %v1610 = vadd.f32 %v1593, 1.0
        %v1611 = vadd.f32 %v1595, 1.0
        %v1612 = vrcp.pop %v1596
        %v1613 = vmul.f32 1.0, %v1612
        %v1614 = vrcp.pop %v1597
        %v1615 = vmul.f32 1.0, %v1614
        %v1616 = vrcp.pop %v1598
        %v1617 = vmul.f32 1.0, %v1616
        %v1618 = vrcp.pop %v1599
        %v1619 = vmul.f32 1.0, %v1618
        %v1620 = vrcp.pop %v1600
        %v1621 = vmul.f32 1.0, %v1620
        %v1622 = vrcp.pop %v1601
        %v1623 = vmul.f32 1.0, %v1622
        %v1624 = vrcp.pop %v1602
        %v1625 = vmul.f32 1.0, %v1624
        %v1626 = vrcp.pop %v1603
        %v1627 = vmul.f32 1.0, %v1626
        %v1628 = vrcp.pop %v1604
        %v1629 = vmul.f32 1.0, %v1628
        %v1630 = vrcp.pop %v1605
        %v1631 = vmul.f32 1.0, %v1630
        %v1632 = vrcp.pop %v1606
        %v1633 = vmul.f32 1.0, %v1632
        %v1634 = vrcp.pop %v1607
        %v1635 = vmul.f32 1.0, %v1634
        %v1636 = vrcp.pop %v1608
        %v1637 = vmul.f32 1.0, %v1636
        %v1638 = vrcp.pop %v1609
        %v1639 = vmul.f32 1.0, %v1638
        %v1640 = vrcp.pop %v1610
        %v1641 = vmul.f32 1.0, %v1640
        %v1642 = vrcp.pop %v1611
        %v1643 = vmul.f32 1.0, %v1642
        %v1644 = vmul.f32 %v1511, %v1613
        %v1645 = vmul.f32 %v1512, %v1615
        %v1646 = vmul.f32 %v1513, %v1617
        %v1647 = vmul.f32 %v1514, %v1619
        %v1648 = vmul.f32 %v1515, %v1621
        %v1649 = vmul.f32 %v1516, %v1623
        %v1650 = vmul.f32 %v1517, %v1625
        %v1651 = vmul.f32 %v1518, %v1627
        %v1652 = vmul.f32 %v1519, %v1629
        %v1653 = vmul.f32 %v1520, %v1631
        %v1654 = vmul.f32 %v1521, %v1633
        %v1655 = vmul.f32 %v1522, %v1635
        %v1656 = vmul.f32 %v1523, %v1637
        %v1657 = vmul.f32 %v1524, %v1639
        %v1658 = vmul.f32 %v1525, %v1641
        %v1659 = vmul.f32 %v1526, %v1643
        %v1660 = vsel %vm615, %v1644, 0.0
        %1661 = vadd.xlane.f32.xlu0 %v1660
        %v1662 = vpop.xlane.xlu0 %1661
        %v1663 = vsel %vm615, %v1645, 0.0
        %1664 = vadd.xlane.f32.xlu0 %v1663
        %v1665 = vpop.xlane.xlu0 %1664
        %v1666 = vsel %vm615, %v1646, 0.0
        %1667 = vadd.xlane.f32.xlu0 %v1666
        %v1668 = vpop.xlane.xlu0 %1667
        %v1669 = vsel %vm615, %v1647, 0.0
        %1670 = vadd.xlane.f32.xlu0 %v1669
        %v1671 = vpop.xlane.xlu0 %1670
        %v1672 = vsel %vm615, %v1648, 0.0
        %1673 = vadd.xlane.f32.xlu0 %v1672
        %v1674 = vpop.xlane.xlu0 %1673
        %v1675 = vsel %vm615, %v1649, 0.0
        %1676 = vadd.xlane.f32.xlu0 %v1675
        %v1677 = vpop.xlane.xlu0 %1676
        %v1678 = vsel %vm615, %v1650, 0.0
        %1679 = vadd.xlane.f32.xlu0 %v1678
        %v1680 = vpop.xlane.xlu0 %1679
        %v1681 = vsel %vm615, %v1651, 0.0
        %1682 = vadd.xlane.f32.xlu0 %v1681
        %v1683 = vpop.xlane.xlu0 %1682
        %v1684 = vsel %vm615, %v1652, 0.0
        %1685 = vadd.xlane.f32.xlu0 %v1684
        %v1686 = vpop.xlane.xlu0 %1685
        %v1687 = vsel %vm615, %v1653, 0.0
        %1688 = vadd.xlane.f32.xlu0 %v1687
        %v1689 = vpop.xlane.xlu0 %1688
        %v1690 = vsel %vm615, %v1654, 0.0
        %1691 = vadd.xlane.f32.xlu0 %v1690
        %v1692 = vpop.xlane.xlu0 %1691
        %v1693 = vsel %vm615, %v1655, 0.0
        %1694 = vadd.xlane.f32.xlu0 %v1693
        %v1695 = vpop.xlane.xlu0 %1694
        %v1696 = vsel %vm615, %v1656, 0.0
        %1697 = vadd.xlane.f32.xlu0 %v1696
        %v1698 = vpop.xlane.xlu0 %1697
        %v1699 = vsel %vm615, %v1657, 0.0
        %1700 = vadd.xlane.f32.xlu0 %v1699
        %v1701 = vpop.xlane.xlu0 %1700
        %v1702 = vsel %vm615, %v1658, 0.0
        %1703 = vadd.xlane.f32.xlu0 %v1702
        %v1704 = vpop.xlane.xlu0 %1703
        %v1705 = vsel %vm615, %v1659, 0.0
        %1706 = vadd.xlane.f32.xlu0 %v1705
        %v1707 = vpop.xlane.xlu0 %1706
        %v1708 = vrcp.pop 32.0
        %v1709 = vmul.f32 %v1662, %v1708
        %v1710 = vmul.f32 %v1665, %v1708
        %v1711 = vmul.f32 %v1668, %v1708
        %v1712 = vmul.f32 %v1671, %v1708
        %v1713 = vmul.f32 %v1674, %v1708
        %v1714 = vmul.f32 %v1677, %v1708
        %v1715 = vmul.f32 %v1680, %v1708
        %v1716 = vmul.f32 %v1683, %v1708
        %v1717 = vmul.f32 %v1686, %v1708
        %v1718 = vmul.f32 %v1689, %v1708
        %v1719 = vmul.f32 %v1692, %v1708
        %v1720 = vmul.f32 %v1695, %v1708
        %v1721 = vmul.f32 %v1698, %v1708
        %v1722 = vmul.f32 %v1701, %v1708
        %v1723 = vmul.f32 %v1704, %v1708
        %v1724 = vmul.f32 %v1707, %v1708
        %v1725 = vsub.f32 %v1644, %v1709
        %v1726 = vsub.f32 %v1645, %v1710
        %v1727 = vsub.f32 %v1646, %v1711
        %v1728 = vsub.f32 %v1647, %v1712
        %v1729 = vsub.f32 %v1648, %v1713
        %v1730 = vsub.f32 %v1649, %v1714
        %v1731 = vsub.f32 %v1650, %v1715
        %v1732 = vsub.f32 %v1651, %v1716
        %v1733 = vsub.f32 %v1652, %v1717
        %v1734 = vsub.f32 %v1653, %v1718
        %v1735 = vsub.f32 %v1654, %v1719
        %v1736 = vsub.f32 %v1655, %v1720
        %v1737 = vsub.f32 %v1656, %v1721
        %v1738 = vsub.f32 %v1657, %v1722
        %v1739 = vsub.f32 %v1658, %v1723
        %v1740 = vsub.f32 %v1659, %v1724
        %v1741 = vmul.f32 %v1725, %v1725
        %v1742 = vmul.f32 %v1726, %v1726
        %v1743 = vmul.f32 %v1727, %v1727
        %v1744 = vmul.f32 %v1728, %v1728
        %v1745 = vmul.f32 %v1729, %v1729
        %v1746 = vmul.f32 %v1730, %v1730
        %v1747 = vmul.f32 %v1731, %v1731
        %v1748 = vmul.f32 %v1732, %v1732
        %v1749 = vmul.f32 %v1733, %v1733
        %v1750 = vmul.f32 %v1734, %v1734
        %v1751 = vmul.f32 %v1735, %v1735
        %v1752 = vmul.f32 %v1736, %v1736
        %v1753 = vmul.f32 %v1737, %v1737
        %v1754 = vmul.f32 %v1738, %v1738
        %v1755 = vmul.f32 %v1739, %v1739
        %v1756 = vmul.f32 %v1740, %v1740
        %v1757 = vsel %vm615, %v1741, 0.0
        %1758 = vadd.xlane.f32.xlu0 %v1757
        %v1759 = vpop.xlane.xlu0 %1758
        %v1760 = vsel %vm615, %v1742, 0.0
        %1761 = vadd.xlane.f32.xlu0 %v1760
        %v1762 = vpop.xlane.xlu0 %1761
        %v1763 = vsel %vm615, %v1743, 0.0
        %1764 = vadd.xlane.f32.xlu0 %v1763
        %v1765 = vpop.xlane.xlu0 %1764
        %v1766 = vsel %vm615, %v1744, 0.0
        %1767 = vadd.xlane.f32.xlu0 %v1766
        %v1768 = vpop.xlane.xlu0 %1767
        %v1769 = vsel %vm615, %v1745, 0.0
        %1770 = vadd.xlane.f32.xlu0 %v1769
        %v1771 = vpop.xlane.xlu0 %1770
        %v1772 = vsel %vm615, %v1746, 0.0
        %1773 = vadd.xlane.f32.xlu0 %v1772
        %v1774 = vpop.xlane.xlu0 %1773
        %v1775 = vsel %vm615, %v1747, 0.0
        %1776 = vadd.xlane.f32.xlu0 %v1775
        %v1777 = vpop.xlane.xlu0 %1776
        %v1778 = vsel %vm615, %v1748, 0.0
        %1779 = vadd.xlane.f32.xlu0 %v1778
        %v1780 = vpop.xlane.xlu0 %1779
        %v1781 = vsel %vm615, %v1749, 0.0
        %1782 = vadd.xlane.f32.xlu0 %v1781
        %v1783 = vpop.xlane.xlu0 %1782
        %v1784 = vsel %vm615, %v1750, 0.0
        %1785 = vadd.xlane.f32.xlu0 %v1784
        %v1786 = vpop.xlane.xlu0 %1785
        %v1787 = vsel %vm615, %v1751, 0.0
        %1788 = vadd.xlane.f32.xlu0 %v1787
        %v1789 = vpop.xlane.xlu0 %1788
        %v1790 = vsel %vm615, %v1752, 0.0
        %1791 = vadd.xlane.f32.xlu0 %v1790
        %v1792 = vpop.xlane.xlu0 %1791
        %v1793 = vsel %vm615, %v1753, 0.0
        %1794 = vadd.xlane.f32.xlu0 %v1793
        %v1795 = vpop.xlane.xlu0 %1794
        %v1796 = vsel %vm615, %v1754, 0.0
        %1797 = vadd.xlane.f32.xlu0 %v1796
        %v1798 = vpop.xlane.xlu0 %1797
        %v1799 = vsel %vm615, %v1755, 0.0
        %1800 = vadd.xlane.f32.xlu0 %v1799
        %v1801 = vpop.xlane.xlu0 %1800
        %v1802 = vsel %vm615, %v1756, 0.0
        %1803 = vadd.xlane.f32.xlu0 %v1802
        %v1804 = vpop.xlane.xlu0 %1803
        %v1805 = vmul.f32 %v1759, %v1708
        %v1806 = vmul.f32 %v1762, %v1708
        %v1807 = vmul.f32 %v1765, %v1708
        %v1808 = vmul.f32 %v1768, %v1708
        %v1809 = vmul.f32 %v1771, %v1708
        %v1810 = vmul.f32 %v1774, %v1708
        %v1811 = vmul.f32 %v1777, %v1708
        %v1812 = vmul.f32 %v1780, %v1708
        %v1813 = vmul.f32 %v1783, %v1708
        %v1814 = vmul.f32 %v1786, %v1708
        %v1815 = vmul.f32 %v1789, %v1708
        %v1816 = vmul.f32 %v1792, %v1708
        %v1817 = vmul.f32 %v1795, %v1708
        %v1818 = vmul.f32 %v1798, %v1708
        %v1819 = vmul.f32 %v1801, %v1708
        %v1820 = vmul.f32 %v1804, %v1708
        %v1821 = vadd.f32 %v1805, 1e-05
        %v1822 = vadd.f32 %v1806, 1e-05
        %v1823 = vadd.f32 %v1807, 1e-05
        %v1824 = vadd.f32 %v1808, 1e-05
        %v1825 = vadd.f32 %v1809, 1e-05
        %v1826 = vadd.f32 %v1810, 1e-05
        %v1827 = vadd.f32 %v1811, 1e-05
        %v1828 = vadd.f32 %v1812, 1e-05
        %v1829 = vadd.f32 %v1813, 1e-05
        %v1830 = vadd.f32 %v1814, 1e-05
        %v1831 = vadd.f32 %v1815, 1e-05
        %v1832 = vadd.f32 %v1816, 1e-05
        %v1833 = vadd.f32 %v1817, 1e-05
        %v1834 = vadd.f32 %v1818, 1e-05
        %v1835 = vadd.f32 %v1819, 1e-05
        %v1836 = vadd.f32 %v1820, 1e-05
        %v1837 = vrsqrt.pop %v1821
        %v1838 = vrsqrt.pop %v1822
        %v1839 = vrsqrt.pop %v1823
        %v1840 = vrsqrt.pop %v1824
        %v1841 = vrsqrt.pop %v1825
        %v1842 = vrsqrt.pop %v1826
        %v1843 = vrsqrt.pop %v1827
        %v1844 = vrsqrt.pop %v1828
        %v1845 = vrsqrt.pop %v1829
        %v1846 = vrsqrt.pop %v1830
        %v1847 = vrsqrt.pop %v1831
        %v1848 = vrsqrt.pop %v1832
        %v1849 = vrsqrt.pop %v1833
        %v1850 = vrsqrt.pop %v1834
        %v1851 = vrsqrt.pop %v1835
        %v1852 = vrsqrt.pop %v1836
        %v1853 = vmul.f32 %v1725, %v1837
        %v1854 = vmul.f32 %v1726, %v1838
        %v1855 = vmul.f32 %v1727, %v1839
        %v1856 = vmul.f32 %v1728, %v1840
        %v1857 = vmul.f32 %v1729, %v1841
        %v1858 = vmul.f32 %v1730, %v1842
        %v1859 = vmul.f32 %v1731, %v1843
        %v1860 = vmul.f32 %v1732, %v1844
        %v1861 = vmul.f32 %v1733, %v1845
        %v1862 = vmul.f32 %v1734, %v1846
        %v1863 = vmul.f32 %v1735, %v1847
        %v1864 = vmul.f32 %v1736, %v1848
        %v1865 = vmul.f32 %v1737, %v1849
        %v1866 = vmul.f32 %v1738, %v1850
        %v1867 = vmul.f32 %v1739, %v1851
        %v1868 = vmul.f32 %v1740, %v1852
        %v1869 = vld [vmem:[%s6] sm:$0x1]
        %v1870 = vlaneseq
        %v1871 = vshrl.u32 %v1870, 7
        %v1872 = vsub.s32 0, %v1871
        %v1873 = vrot.slane %v1869, %v1872
        %v1874 = vmul.f32 %v1853, %v1873
        %v1875 = vmul.f32 %v1854, %v1873
        %v1876 = vmul.f32 %v1855, %v1873
        %v1877 = vmul.f32 %v1856, %v1873
        %v1878 = vmul.f32 %v1857, %v1873
        %v1879 = vmul.f32 %v1858, %v1873
        %v1880 = vmul.f32 %v1859, %v1873
        %v1881 = vmul.f32 %v1860, %v1873
        %v1882 = vmul.f32 %v1861, %v1873
        %v1883 = vmul.f32 %v1862, %v1873
        %v1884 = vmul.f32 %v1863, %v1873
        %v1885 = vmul.f32 %v1864, %v1873
        %v1886 = vmul.f32 %v1865, %v1873
        %v1887 = vmul.f32 %v1866, %v1873
        %v1888 = vmul.f32 %v1867, %v1873
        %v1889 = vmul.f32 %v1868, %v1873
        %v1890 = vld [vmem:[%s7] sm:$0x1]
        %v1891 = vlaneseq
        %v1892 = vshrl.u32 %v1891, 7
        %v1893 = vsub.s32 0, %v1892
        %v1894 = vrot.slane %v1890, %v1893
        %v1895 = vadd.f32 %v1874, %v1894
        %v1896 = vadd.f32 %v1875, %v1894
        %v1897 = vadd.f32 %v1876, %v1894
        %v1898 = vadd.f32 %v1877, %v1894
        %v1899 = vadd.f32 %v1878, %v1894
        %v1900 = vadd.f32 %v1879, %v1894
        %v1901 = vadd.f32 %v1880, %v1894
        %v1902 = vadd.f32 %v1881, %v1894
        %v1903 = vadd.f32 %v1882, %v1894
        %v1904 = vadd.f32 %v1883, %v1894
        %v1905 = vadd.f32 %v1884, %v1894
        %v1906 = vadd.f32 %v1885, %v1894
        %v1907 = vadd.f32 %v1886, %v1894
        %v1908 = vadd.f32 %v1887, %v1894
        %v1909 = vadd.f32 %v1888, %v1894
        %v1910 = vadd.f32 %v1889, %v1894
        %s1911 = sld [smem:[#allocation3]]
        %v1912 = vstv %s1911
        %v1913 = vmul.f32 %v1912, %v1895
        %v1914 = vmul.f32 %v1912, %v1896
        %v1915 = vmul.f32 %v1912, %v1897
        %v1916 = vmul.f32 %v1912, %v1898
        %v1917 = vmul.f32 %v1912, %v1899
        %v1918 = vmul.f32 %v1912, %v1900
        %v1919 = vmul.f32 %v1912, %v1901
        %v1920 = vmul.f32 %v1912, %v1902
        %v1921 = vmul.f32 %v1912, %v1903
        %v1922 = vmul.f32 %v1912, %v1904
        %v1923 = vmul.f32 %v1912, %v1905
        %v1924 = vmul.f32 %v1912, %v1906
        %v1925 = vmul.f32 %v1912, %v1907
        %v1926 = vmul.f32 %v1912, %v1908
        %v1927 = vmul.f32 %v1912, %v1909
        %v1928 = vmul.f32 %v1912, %v1910
        %v1929 = vadd.f32 %v553, %v1913
        %v1930 = vadd.f32 %v556, %v1914
        %v1931 = vadd.f32 %v561, %v1915
        %v1932 = vadd.f32 %v564, %v1916
        %v1933 = vadd.f32 %v569, %v1917
        %v1934 = vadd.f32 %v572, %v1918
        %v1935 = vadd.f32 %v577, %v1919
        %v1936 = vadd.f32 %v580, %v1920
        %v1937 = vadd.f32 %v585, %v1921
        %v1938 = vadd.f32 %v588, %v1922
        %v1939 = vadd.f32 %v593, %v1923
        %v1940 = vadd.f32 %v596, %v1924
        %v1941 = vadd.f32 %v601, %v1925
        %v1942 = vadd.f32 %v604, %v1926
        %v1943 = vadd.f32 %v609, %v1927
        %v1944 = vadd.f32 %v612, %v1928
        %1945 = vst.msk [vmem:[#allocation2 + $0x8] sm:$0xff] %vm615, %v1929
        %1946 = vst.msk [vmem:[#allocation2 + $0x10] sm:$0xff] %vm615, %v1930
        %1947 = vst.msk [vmem:[#allocation2 + $0x28] sm:$0xff] %vm615, %v1931
        %1948 = vst.msk [vmem:[#allocation2 + $0x30] sm:$0xff] %vm615, %v1932
        %1949 = vst.msk [vmem:[#allocation2 + $0x48] sm:$0xff] %vm615, %v1933
        %1950 = vst.msk [vmem:[#allocation2 + $0x50] sm:$0xff] %vm615, %v1934
        %1951 = vst.msk [vmem:[#allocation2 + $0x68] sm:$0xff] %vm615, %v1935
        %1952 = vst.msk [vmem:[#allocation2 + $0x70] sm:$0xff] %vm615, %v1936
        %1953 = vst.msk [vmem:[#allocation2 + $0x88] sm:$0xff] %vm615, %v1937
        %1954 = vst.msk [vmem:[#allocation2 + $0x90] sm:$0xff] %vm615, %v1938
        %1955 = vst.msk [vmem:[#allocation2 + $0xa8] sm:$0xff] %vm615, %v1939
        %1956 = vst.msk [vmem:[#allocation2 + $0xb0] sm:$0xff] %vm615, %v1940
        %1957 = vst.msk [vmem:[#allocation2 + $0xc8] sm:$0xff] %vm615, %v1941
        %1958 = vst.msk [vmem:[#allocation2 + $0xd0] sm:$0xff] %vm615, %v1942
        %1959 = vst.msk [vmem:[#allocation2 + $0xe8] sm:$0xff] %vm615, %v1943
        %1960 = vst.msk [vmem:[#allocation2 + $0xf0] sm:$0xff] %vm615, %v1944
        %v1961 = vld [vmem:[#allocation2 + $0x6] sm:$0xff]
        %v1962 = vld [vmem:[#allocation2 + $0xe] sm:$0xff]
        %v1963 = vld [vmem:[#allocation2 + $0x26] sm:$0xff]
        %v1964 = vld [vmem:[#allocation2 + $0x2e] sm:$0xff]
        %v1965 = vld [vmem:[#allocation2 + $0x46] sm:$0xff]
        %v1966 = vld [vmem:[#allocation2 + $0x4e] sm:$0xff]
        %v1967 = vld [vmem:[#allocation2 + $0x66] sm:$0xff]
        %v1968 = vld [vmem:[#allocation2 + $0x6e] sm:$0xff]
        %v1969 = vld [vmem:[#allocation2 + $0x86] sm:$0xff]
        %v1970 = vld [vmem:[#allocation2 + $0x8e] sm:$0xff]
        %v1971 = vld [vmem:[#allocation2 + $0xa6] sm:$0xff]
        %v1972 = vld [vmem:[#allocation2 + $0xae] sm:$0xff]
        %v1973 = vld [vmem:[#allocation2 + $0xc6] sm:$0xff]
        %v1974 = vld [vmem:[#allocation2 + $0xce] sm:$0xff]
        %v1975 = vld [vmem:[#allocation2 + $0xe6] sm:$0xff]
        %v1976 = vld [vmem:[#allocation2 + $0xee] sm:$0xff]
        %v1977 = vpack.c.bf16 %v1962, %v1961
        %v1978 = vpack.c.bf16 %v1964, %v1963
        %v1979 = vpack.c.bf16 %v1966, %v1965
        %v1980 = vpack.c.bf16 %v1968, %v1967
        %v1981 = vpack.c.bf16 %v1970, %v1969
        %v1982 = vpack.c.bf16 %v1972, %v1971
        %v1983 = vpack.c.bf16 %v1974, %v1973
        %v1984 = vpack.c.bf16 %v1976, %v1975
        %s1985 = scalar_lea.vmem %s2, 48
        %v1986 = vld [vmem:[%s1985] sm:$0xf]
        %v1987 = vld [vmem:[%s1985 + $0x4] sm:$0xf]
        %v1988 = vld [vmem:[%s1985 + $0x8] sm:$0xf]
        %v1989 = vld [vmem:[%s1985 + $0xc] sm:$0xf]
        %s1990 = scalar_lea.vmem %s3, 48
        %v1991 = vld [vmem:[%s1990] sm:$0xf]
        %v1992 = vld [vmem:[%s1990 + $0x4] sm:$0xf]
        %v1993 = vld [vmem:[%s1990 + $0x8] sm:$0xf]
        %v1994 = vld [vmem:[%s1990 + $0xc] sm:$0xf]
        %v1995 = vld [vmem:[#allocation2 + $0x8] sm:$0xff]
        %v1996 = vld [vmem:[#allocation2 + $0x10] sm:$0xff]
        %v1997 = vld [vmem:[#allocation2 + $0x28] sm:$0xff]
        %v1998 = vld [vmem:[#allocation2 + $0x30] sm:$0xff]
        %v1999 = vld [vmem:[#allocation2 + $0x48] sm:$0xff]
        %v2000 = vld [vmem:[#allocation2 + $0x50] sm:$0xff]
        %v2001 = vld [vmem:[#allocation2 + $0x68] sm:$0xff]
        %v2002 = vld [vmem:[#allocation2 + $0x70] sm:$0xff]
        %v2003 = vld [vmem:[#allocation2 + $0x88] sm:$0xff]
        %v2004 = vld [vmem:[#allocation2 + $0x90] sm:$0xff]
        %v2005 = vld [vmem:[#allocation2 + $0xa8] sm:$0xff]
        %v2006 = vld [vmem:[#allocation2 + $0xb0] sm:$0xff]
        %v2007 = vld [vmem:[#allocation2 + $0xc8] sm:$0xff]
        %v2008 = vld [vmem:[#allocation2 + $0xd0] sm:$0xff]
        %v2009 = vld [vmem:[#allocation2 + $0xe8] sm:$0xff]
        %v2010 = vld [vmem:[#allocation2 + $0xf0] sm:$0xff]
        %v2011 = vpack.c.bf16 %v1996, %v1995
        %v2012 = vpack.c.bf16 %v1998, %v1997
        %v2013 = vpack.c.bf16 %v2000, %v1999
        %v2014 = vpack.c.bf16 %v2002, %v2001
        %v2015 = vpack.c.bf16 %v2004, %v2003
        %v2016 = vpack.c.bf16 %v2006, %v2005
        %v2017 = vpack.c.bf16 %v2008, %v2007
        %v2018 = vpack.c.bf16 %v2010, %v2009
        %s2019 = scalar_lea.vmem %s2, 64
        %v2020 = vld [vmem:[%s2019] sm:$0xf]
        %v2021 = vld [vmem:[%s2019 + $0x4] sm:$0xf]
        %v2022 = vld [vmem:[%s2019 + $0x8] sm:$0xf]
        %v2023 = vld [vmem:[%s2019 + $0xc] sm:$0xf]
        %v2028 = vunpack.c.l.b16 %v2020
        %v2029 = vunpack.c.l.b16 %v2021
        %v2030 = vunpack.c.l.b16 %v2022
        %v2031 = vunpack.c.l.b16 %v2023
        %v2032 = vpack.c.b16 %v2029, %v2028
        %v2033 = vpack.c.b16 %v2031, %v2030
        %v2037 = vsel %vm615, %v2011, 0
        %v2040 = vsel %vm615, %v2012, 0
        %v2043 = vsel %vm615, %v2013, 0
        %v2046 = vsel %vm615, %v2014, 0
        %v2049 = vsel %vm615, %v2015, 0
        %v2052 = vsel %vm615, %v2016, 0
        %v2055 = vsel %vm615, %v2017, 0
        %v2058 = vsel %vm615, %v2018, 0
        %2060 = vmatprep.subr.bf16.mxu0 0
        %2061 = vmatpush1.bf16.msra.mxu0 %v2032
        %2062 = vmatprep.subr.bf16.mxu0 0
        %2063 = vmatpush1.bf16.msra.mxu0 %v2033
        %2064 = vmatprep.subr.bf16.mxu0 0
        %2065 = vmatpush1.bf16.msra.mxu0 0
        %2066 = vmatprep.subr.bf16.mxu0 0
        %2067 = vmatpush1.bf16.msra.mxu0 0
        %2068 = vmatprep.subr.bf16.mxu0 0
        %2069 = vmatpush1.bf16.msra.mxu0 0
        %2070 = vmatprep.subr.bf16.mxu0 0
        %2071 = vmatpush1.bf16.msra.mxu0 0
        %2072 = vmatprep.subr.bf16.mxu0 0
        %2073 = vmatpush1.bf16.msra.mxu0 0
        %2074 = vmatprep.subr.bf16.mxu0 0
        %2075 = vmatpush1.bf16.msra.mxu0 0
        %2076 = vmatprep.subr.bf16.mxu0 0
        %2077 = vmatpush1.bf16.msra.mxu0 0
        %2078 = vmatprep.subr.bf16.mxu0 0
        %2079 = vmatpush1.bf16.msra.mxu0 0
        %2080 = vmatprep.subr.bf16.mxu0 0
        %2081 = vmatpush1.bf16.msra.mxu0 0
        %2082 = vmatprep.subr.bf16.mxu0 0
        %2083 = vmatpush1.bf16.msra.mxu0 0
        %2084 = vmatprep.subr.bf16.mxu0 0
        %2085 = vmatpush1.bf16.msra.mxu0 0
        %2086 = vmatprep.subr.bf16.mxu0 0
        %2087 = vmatpush1.bf16.msra.mxu0 0
        %2088 = vmatprep.subr.bf16.mxu0 0
        %2089 = vmatpush1.bf16.msra.mxu0 0
        %2090 = vmatprep.subr.bf16.mxu0 0
        %2091 = vmatpush1.bf16.msra.mxu0 0
        %2092 = vmatprep.mubr.bf16.mxu0 0
        %2093 = vmatmul.mubr.bf16.gmra.mrb[0].mxu0 %v2037
        %v2094 = vpop.f32.mrb[0].mxu0
        %v2095 = vadd.f32 0.0, %v2094
        %v2096 = vpop.f32.mrb[0].mxu0
        %v2097 = vpop.f32.mrb[0].mxu0
        %v2098 = vadd.f32 0.0, %v2097
        %v2099 = vpop.f32.mrb[0].mxu0
        %2100 = vmatprep.mubr.bf16.mxu0 0
        %2101 = vmatmul.mubr.bf16.gmra.mrb[0].mxu0 %v2040
        %v2102 = vpop.f32.mrb[0].mxu0
        %v2103 = vadd.f32 0.0, %v2102
        %v2104 = vpop.f32.mrb[0].mxu0
        %v2105 = vpop.f32.mrb[0].mxu0
        %v2106 = vadd.f32 0.0, %v2105
        %v2107 = vpop.f32.mrb[0].mxu0
        %2108 = vmatprep.mubr.bf16.mxu0 0
        %2109 = vmatmul.mubr.bf16.gmra.mrb[0].mxu0 %v2043
        %v2110 = vpop.f32.mrb[0].mxu0
        %v2111 = vadd.f32 0.0, %v2110
        %v2112 = vpop.f32.mrb[0].mxu0
        %v2113 = vpop.f32.mrb[0].mxu0
        %v2114 = vadd.f32 0.0, %v2113
        %v2115 = vpop.f32.mrb[0].mxu0
        %2116 = vmatprep.mubr.bf16.mxu0 0
        %2117 = vmatmul.mubr.bf16.gmra.mrb[0].mxu0 %v2046
        %v2118 = vpop.f32.mrb[0].mxu0
        %v2119 = vadd.f32 0.0, %v2118
        %v2120 = vpop.f32.mrb[0].mxu0
        %v2121 = vpop.f32.mrb[0].mxu0
        %v2122 = vadd.f32 0.0, %v2121
        %v2123 = vpop.f32.mrb[0].mxu0
        %2124 = vmatprep.mubr.bf16.mxu0 0
        %2125 = vmatmul.mubr.bf16.gmra.mrb[0].mxu0 %v2049
        %v2126 = vpop.f32.mrb[0].mxu0
        %v2127 = vadd.f32 0.0, %v2126
        %v2128 = vpop.f32.mrb[0].mxu0
        %v2129 = vpop.f32.mrb[0].mxu0
        %v2130 = vadd.f32 0.0, %v2129
        %v2131 = vpop.f32.mrb[0].mxu0
        %2132 = vmatprep.mubr.bf16.mxu0 0
        %2133 = vmatmul.mubr.bf16.gmra.mrb[0].mxu0 %v2052
        %v2134 = vpop.f32.mrb[0].mxu0
        %v2135 = vadd.f32 0.0, %v2134
        %v2136 = vpop.f32.mrb[0].mxu0
        %v2137 = vpop.f32.mrb[0].mxu0
        %v2138 = vadd.f32 0.0, %v2137
        %v2139 = vpop.f32.mrb[0].mxu0
        %2140 = vmatprep.mubr.bf16.mxu0 0
        %2141 = vmatmul.mubr.bf16.gmra.mrb[0].mxu0 %v2055
        %v2142 = vpop.f32.mrb[0].mxu0
        %v2143 = vadd.f32 0.0, %v2142
        %v2144 = vpop.f32.mrb[0].mxu0
        %v2145 = vpop.f32.mrb[0].mxu0
        %v2146 = vadd.f32 0.0, %v2145
        %v2147 = vpop.f32.mrb[0].mxu0
        %2148 = vmatprep.mubr.bf16.mxu0 0
        %2149 = vmatmul.mubr.bf16.gmra.mrb[0].mxu0 %v2058
        %v2150 = vpop.f32.mrb[0].mxu0
        %v2151 = vadd.f32 0.0, %v2150
        %v2152 = vpop.f32.mrb[0].mxu0
        %v2153 = vpop.f32.mrb[0].mxu0
        %v2154 = vadd.f32 0.0, %v2153
        %v2155 = vpop.f32.mrb[0].mxu0
        %2156 = vdwg.mxu0
        %v2161 = vunpack.c.l.b16 %v1986
        %v2162 = vunpack.c.l.b16 %v1987
        %v2163 = vunpack.c.l.b16 %v1988
        %v2164 = vunpack.c.l.b16 %v1989
        %v2165 = vpack.c.b16 %v2162, %v2161
        %v2166 = vpack.c.b16 %v2164, %v2163
        %v2170 = vsel %vm615, %v1977, 0
        %v2173 = vsel %vm615, %v1978, 0
        %v2176 = vsel %vm615, %v1979, 0
        %v2179 = vsel %vm615, %v1980, 0
        %v2182 = vsel %vm615, %v1981, 0
        %v2185 = vsel %vm615, %v1982, 0
        %v2188 = vsel %vm615, %v1983, 0
        %v2191 = vsel %vm615, %v1984, 0
        %2193 = vmatprep.subr.bf16.mxu0 0
        %2194 = vmatpush1.bf16.msra.mxu0 %v2165
        %2195 = vmatprep.subr.bf16.mxu0 0
        %2196 = vmatpush1.bf16.msra.mxu0 %v2166
        %2197 = vmatprep.subr.bf16.mxu0 0
        %2198 = vmatpush1.bf16.msra.mxu0 0
        %2199 = vmatprep.subr.bf16.mxu0 0
        %2200 = vmatpush1.bf16.msra.mxu0 0
        %2201 = vmatprep.subr.bf16.mxu0 0
        %2202 = vmatpush1.bf16.msra.mxu0 0
        %2203 = vmatprep.subr.bf16.mxu0 0
        %2204 = vmatpush1.bf16.msra.mxu0 0
        %2205 = vmatprep.subr.bf16.mxu0 0
        %2206 = vmatpush1.bf16.msra.mxu0 0
        %2207 = vmatprep.subr.bf16.mxu0 0
        %2208 = vmatpush1.bf16.msra.mxu0 0
        %2209 = vmatprep.subr.bf16.mxu0 0
        %2210 = vmatpush1.bf16.msra.mxu0 0
        %2211 = vmatprep.subr.bf16.mxu0 0
        %2212 = vmatpush1.bf16.msra.mxu0 0
        %2213 = vmatprep.subr.bf16.mxu0 0
        %2214 = vmatpush1.bf16.msra.mxu0 0
        %2215 = vmatprep.subr.bf16.mxu0 0
        %2216 = vmatpush1.bf16.msra.mxu0 0
        %2217 = vmatprep.subr.bf16.mxu0 0
        %2218 = vmatpush1.bf16.msra.mxu0 0
        %2219 = vmatprep.subr.bf16.mxu0 0
        %2220 = vmatpush1.bf16.msra.mxu0 0
        %2221 = vmatprep.subr.bf16.mxu0 0
        %2222 = vmatpush1.bf16.msra.mxu0 0
        %2223 = vmatprep.subr.bf16.mxu0 0
        %2224 = vmatpush1.bf16.msra.mxu0 0
        %2225 = vmatprep.mubr.bf16.mxu0 0
        %2226 = vmatmul.mubr.bf16.gmra.mrb[0].mxu0 %v2170
        %v2227 = vpop.f32.mrb[0].mxu0
        %v2228 = vadd.f32 %v2095, %v2227
        %v2229 = vpop.f32.mrb[0].mxu0
        %v2230 = vpop.f32.mrb[0].mxu0
        %v2231 = vadd.f32 %v2098, %v2230
        %v2232 = vpop.f32.mrb[0].mxu0
        %2233 = vmatprep.mubr.bf16.mxu0 0
        %2234 = vmatmul.mubr.bf16.gmra.mrb[0].mxu0 %v2173
        %v2235 = vpop.f32.mrb[0].mxu0
        %v2236 = vadd.f32 %v2103, %v2235
        %v2237 = vpop.f32.mrb[0].mxu0
        %v2238 = vpop.f32.mrb[0].mxu0
        %v2239 = vadd.f32 %v2106, %v2238
        %v2240 = vpop.f32.mrb[0].mxu0
        %2241 = vmatprep.mubr.bf16.mxu0 0
        %2242 = vmatmul.mubr.bf16.gmra.mrb[0].mxu0 %v2176
        %v2243 = vpop.f32.mrb[0].mxu0
        %v2244 = vadd.f32 %v2111, %v2243
        %v2245 = vpop.f32.mrb[0].mxu0
        %v2246 = vpop.f32.mrb[0].mxu0
        %v2247 = vadd.f32 %v2114, %v2246
        %v2248 = vpop.f32.mrb[0].mxu0
        %2249 = vmatprep.mubr.bf16.mxu0 0
        %2250 = vmatmul.mubr.bf16.gmra.mrb[0].mxu0 %v2179
        %v2251 = vpop.f32.mrb[0].mxu0
        %v2252 = vadd.f32 %v2119, %v2251
        %v2253 = vpop.f32.mrb[0].mxu0
        %v2254 = vpop.f32.mrb[0].mxu0
        %v2255 = vadd.f32 %v2122, %v2254
        %v2256 = vpop.f32.mrb[0].mxu0
        %2257 = vmatprep.mubr.bf16.mxu0 0
        %2258 = vmatmul.mubr.bf16.gmra.mrb[0].mxu0 %v2182
        %v2259 = vpop.f32.mrb[0].mxu0
        %v2260 = vadd.f32 %v2127, %v2259
        %v2261 = vpop.f32.mrb[0].mxu0
        %v2262 = vpop.f32.mrb[0].mxu0
        %v2263 = vadd.f32 %v2130, %v2262
        %v2264 = vpop.f32.mrb[0].mxu0
        %2265 = vmatprep.mubr.bf16.mxu0 0
        %2266 = vmatmul.mubr.bf16.gmra.mrb[0].mxu0 %v2185
        %v2267 = vpop.f32.mrb[0].mxu0
        %v2268 = vadd.f32 %v2135, %v2267
        %v2269 = vpop.f32.mrb[0].mxu0
        %v2270 = vpop.f32.mrb[0].mxu0
        %v2271 = vadd.f32 %v2138, %v2270
        %v2272 = vpop.f32.mrb[0].mxu0
        %2273 = vmatprep.mubr.bf16.mxu0 0
        %2274 = vmatmul.mubr.bf16.gmra.mrb[0].mxu0 %v2188
        %v2275 = vpop.f32.mrb[0].mxu0
        %v2276 = vadd.f32 %v2143, %v2275
        %v2277 = vpop.f32.mrb[0].mxu0
        %v2278 = vpop.f32.mrb[0].mxu0
        %v2279 = vadd.f32 %v2146, %v2278
        %v2280 = vpop.f32.mrb[0].mxu0
        %2281 = vmatprep.mubr.bf16.mxu0 0
        %2282 = vmatmul.mubr.bf16.gmra.mrb[0].mxu0 %v2191
        %v2283 = vpop.f32.mrb[0].mxu0
        %v2284 = vadd.f32 %v2151, %v2283
        %v2285 = vpop.f32.mrb[0].mxu0
        %v2286 = vpop.f32.mrb[0].mxu0
        %v2287 = vadd.f32 %v2154, %v2286
        %v2288 = vpop.f32.mrb[0].mxu0
        %2289 = vdwg.mxu0
        %s2290 = scalar_lea.vmem %s3, 64
        %v2291 = vld [vmem:[%s2290] sm:$0xf]
        %v2292 = vld [vmem:[%s2290 + $0x4] sm:$0xf]
        %v2293 = vld [vmem:[%s2290 + $0x8] sm:$0xf]
        %v2294 = vld [vmem:[%s2290 + $0xc] sm:$0xf]
        %v2299 = vunpack.c.l.b16 %v2291
        %v2300 = vunpack.c.l.b16 %v2292
        %v2301 = vunpack.c.l.b16 %v2293
        %v2302 = vunpack.c.l.b16 %v2294
        %v2303 = vpack.c.b16 %v2300, %v2299
        %v2304 = vpack.c.b16 %v2302, %v2301
        %2307 = vmatprep.subr.bf16.mxu0 0
        %2308 = vmatpush1.bf16.msra.mxu0 %v2303
        %2309 = vmatprep.subr.bf16.mxu0 0
        %2310 = vmatpush1.bf16.msra.mxu0 %v2304
        %2311 = vmatprep.subr.bf16.mxu0 0
        %2312 = vmatpush1.bf16.msra.mxu0 0
        %2313 = vmatprep.subr.bf16.mxu0 0
        %2314 = vmatpush1.bf16.msra.mxu0 0
        %2315 = vmatprep.subr.bf16.mxu0 0
        %2316 = vmatpush1.bf16.msra.mxu0 0
        %2317 = vmatprep.subr.bf16.mxu0 0
        %2318 = vmatpush1.bf16.msra.mxu0 0
        %2319 = vmatprep.subr.bf16.mxu0 0
        %2320 = vmatpush1.bf16.msra.mxu0 0
        %2321 = vmatprep.subr.bf16.mxu0 0
        %2322 = vmatpush1.bf16.msra.mxu0 0
        %2323 = vmatprep.subr.bf16.mxu0 0
        %2324 = vmatpush1.bf16.msra.mxu0 0
        %2325 = vmatprep.subr.bf16.mxu0 0
        %2326 = vmatpush1.bf16.msra.mxu0 0
        %2327 = vmatprep.subr.bf16.mxu0 0
        %2328 = vmatpush1.bf16.msra.mxu0 0
        %2329 = vmatprep.subr.bf16.mxu0 0
        %2330 = vmatpush1.bf16.msra.mxu0 0
        %2331 = vmatprep.subr.bf16.mxu0 0
        %2332 = vmatpush1.bf16.msra.mxu0 0
        %2333 = vmatprep.subr.bf16.mxu0 0
        %2334 = vmatpush1.bf16.msra.mxu0 0
        %2335 = vmatprep.subr.bf16.mxu0 0
        %2336 = vmatpush1.bf16.msra.mxu0 0
        %2337 = vmatprep.subr.bf16.mxu0 0
        %2338 = vmatpush1.bf16.msra.mxu0 0
        %2339 = vmatprep.mubr.bf16.mxu0 0
        %2340 = vmatmul.mubr.bf16.gmra.mrb[0].mxu0 %v2037
        %v2341 = vpop.f32.mrb[0].mxu0
        %v2342 = vadd.f32 0.0, %v2341
        %v2343 = vpop.f32.mrb[0].mxu0
        %v2344 = vpop.f32.mrb[0].mxu0
        %v2345 = vadd.f32 0.0, %v2344
        %v2346 = vpop.f32.mrb[0].mxu0
        %2347 = vmatprep.mubr.bf16.mxu0 0
        %2348 = vmatmul.mubr.bf16.gmra.mrb[0].mxu0 %v2040
        %v2349 = vpop.f32.mrb[0].mxu0
        %v2350 = vadd.f32 0.0, %v2349
        %v2351 = vpop.f32.mrb[0].mxu0
        %v2352 = vpop.f32.mrb[0].mxu0
        %v2353 = vadd.f32 0.0, %v2352
        %v2354 = vpop.f32.mrb[0].mxu0
        %2355 = vmatprep.mubr.bf16.mxu0 0
        %2356 = vmatmul.mubr.bf16.gmra.mrb[0].mxu0 %v2043
        %v2357 = vpop.f32.mrb[0].mxu0
        %v2358 = vadd.f32 0.0, %v2357
        %v2359 = vpop.f32.mrb[0].mxu0
        %v2360 = vpop.f32.mrb[0].mxu0
        %v2361 = vadd.f32 0.0, %v2360
        %v2362 = vpop.f32.mrb[0].mxu0
        %2363 = vmatprep.mubr.bf16.mxu0 0
        %2364 = vmatmul.mubr.bf16.gmra.mrb[0].mxu0 %v2046
        %v2365 = vpop.f32.mrb[0].mxu0
        %v2366 = vadd.f32 0.0, %v2365
        %v2367 = vpop.f32.mrb[0].mxu0
        %v2368 = vpop.f32.mrb[0].mxu0
        %v2369 = vadd.f32 0.0, %v2368
        %v2370 = vpop.f32.mrb[0].mxu0
        %2371 = vmatprep.mubr.bf16.mxu0 0
        %2372 = vmatmul.mubr.bf16.gmra.mrb[0].mxu0 %v2049
        %v2373 = vpop.f32.mrb[0].mxu0
        %v2374 = vadd.f32 0.0, %v2373
        %v2375 = vpop.f32.mrb[0].mxu0
        %v2376 = vpop.f32.mrb[0].mxu0
        %v2377 = vadd.f32 0.0, %v2376
        %v2378 = vpop.f32.mrb[0].mxu0
        %2379 = vmatprep.mubr.bf16.mxu0 0
        %2380 = vmatmul.mubr.bf16.gmra.mrb[0].mxu0 %v2052
        %v2381 = vpop.f32.mrb[0].mxu0
        %v2382 = vadd.f32 0.0, %v2381
        %v2383 = vpop.f32.mrb[0].mxu0
        %v2384 = vpop.f32.mrb[0].mxu0
        %v2385 = vadd.f32 0.0, %v2384
        %v2386 = vpop.f32.mrb[0].mxu0
        %2387 = vmatprep.mubr.bf16.mxu0 0
        %2388 = vmatmul.mubr.bf16.gmra.mrb[0].mxu0 %v2055
        %v2389 = vpop.f32.mrb[0].mxu0
        %v2390 = vadd.f32 0.0, %v2389
        %v2391 = vpop.f32.mrb[0].mxu0
        %v2392 = vpop.f32.mrb[0].mxu0
        %v2393 = vadd.f32 0.0, %v2392
        %v2394 = vpop.f32.mrb[0].mxu0
        %2395 = vmatprep.mubr.bf16.mxu0 0
        %2396 = vmatmul.mubr.bf16.gmra.mrb[0].mxu0 %v2058
        %v2397 = vpop.f32.mrb[0].mxu0
        %v2398 = vadd.f32 0.0, %v2397
        %v2399 = vpop.f32.mrb[0].mxu0
        %v2400 = vpop.f32.mrb[0].mxu0
        %v2401 = vadd.f32 0.0, %v2400
        %v2402 = vpop.f32.mrb[0].mxu0
        %2403 = vdwg.mxu0
        %v2408 = vunpack.c.l.b16 %v1991
        %v2409 = vunpack.c.l.b16 %v1992
        %v2410 = vunpack.c.l.b16 %v1993
        %v2411 = vunpack.c.l.b16 %v1994
        %v2412 = vpack.c.b16 %v2409, %v2408
        %v2413 = vpack.c.b16 %v2411, %v2410
        %2416 = vmatprep.subr.bf16.mxu0 0
        %2417 = vmatpush1.bf16.msra.mxu0 %v2412
        %2418 = vmatprep.subr.bf16.mxu0 0
        %2419 = vmatpush1.bf16.msra.mxu0 %v2413
        %2420 = vmatprep.subr.bf16.mxu0 0
        %2421 = vmatpush1.bf16.msra.mxu0 0
        %2422 = vmatprep.subr.bf16.mxu0 0
        %2423 = vmatpush1.bf16.msra.mxu0 0
        %2424 = vmatprep.subr.bf16.mxu0 0
        %2425 = vmatpush1.bf16.msra.mxu0 0
        %2426 = vmatprep.subr.bf16.mxu0 0
        %2427 = vmatpush1.bf16.msra.mxu0 0
        %2428 = vmatprep.subr.bf16.mxu0 0
        %2429 = vmatpush1.bf16.msra.mxu0 0
        %2430 = vmatprep.subr.bf16.mxu0 0
        %2431 = vmatpush1.bf16.msra.mxu0 0
        %2432 = vmatprep.subr.bf16.mxu0 0
        %2433 = vmatpush1.bf16.msra.mxu0 0
        %2434 = vmatprep.subr.bf16.mxu0 0
        %2435 = vmatpush1.bf16.msra.mxu0 0
        %2436 = vmatprep.subr.bf16.mxu0 0
        %2437 = vmatpush1.bf16.msra.mxu0 0
        %2438 = vmatprep.subr.bf16.mxu0 0
        %2439 = vmatpush1.bf16.msra.mxu0 0
        %2440 = vmatprep.subr.bf16.mxu0 0
        %2441 = vmatpush1.bf16.msra.mxu0 0
        %2442 = vmatprep.subr.bf16.mxu0 0
        %2443 = vmatpush1.bf16.msra.mxu0 0
        %2444 = vmatprep.subr.bf16.mxu0 0
        %2445 = vmatpush1.bf16.msra.mxu0 0
        %2446 = vmatprep.subr.bf16.mxu0 0
        %2447 = vmatpush1.bf16.msra.mxu0 0
        %2448 = vmatprep.mubr.bf16.mxu0 0
        %2449 = vmatmul.mubr.bf16.gmra.mrb[0].mxu0 %v2170
        %v2450 = vpop.f32.mrb[0].mxu0
        %v2451 = vadd.f32 %v2342, %v2450
        %v2452 = vpop.f32.mrb[0].mxu0
        %v2453 = vpop.f32.mrb[0].mxu0
        %v2454 = vadd.f32 %v2345, %v2453
        %v2455 = vpop.f32.mrb[0].mxu0
        %2456 = vmatprep.mubr.bf16.mxu0 0
        %2457 = vmatmul.mubr.bf16.gmra.mrb[0].mxu0 %v2173
        %v2458 = vpop.f32.mrb[0].mxu0
        %v2459 = vadd.f32 %v2350, %v2458
        %v2460 = vpop.f32.mrb[0].mxu0
        %v2461 = vpop.f32.mrb[0].mxu0
        %v2462 = vadd.f32 %v2353, %v2461
        %v2463 = vpop.f32.mrb[0].mxu0
        %2464 = vmatprep.mubr.bf16.mxu0 0
        %2465 = vmatmul.mubr.bf16.gmra.mrb[0].mxu0 %v2176
        %v2466 = vpop.f32.mrb[0].mxu0
        %v2467 = vadd.f32 %v2358, %v2466
        %v2468 = vpop.f32.mrb[0].mxu0
        %v2469 = vpop.f32.mrb[0].mxu0
        %v2470 = vadd.f32 %v2361, %v2469
        %v2471 = vpop.f32.mrb[0].mxu0
        %2472 = vmatprep.mubr.bf16.mxu0 0
        %2473 = vmatmul.mubr.bf16.gmra.mrb[0].mxu0 %v2179
        %v2474 = vpop.f32.mrb[0].mxu0
        %v2475 = vadd.f32 %v2366, %v2474
        %v2476 = vpop.f32.mrb[0].mxu0
        %v2477 = vpop.f32.mrb[0].mxu0
        %v2478 = vadd.f32 %v2369, %v2477
        %v2479 = vpop.f32.mrb[0].mxu0
        %2480 = vmatprep.mubr.bf16.mxu0 0
        %2481 = vmatmul.mubr.bf16.gmra.mrb[0].mxu0 %v2182
        %v2482 = vpop.f32.mrb[0].mxu0
        %v2483 = vadd.f32 %v2374, %v2482
        %v2484 = vpop.f32.mrb[0].mxu0
        %v2485 = vpop.f32.mrb[0].mxu0
        %v2486 = vadd.f32 %v2377, %v2485
        %v2487 = vpop.f32.mrb[0].mxu0
        %2488 = vmatprep.mubr.bf16.mxu0 0
        %2489 = vmatmul.mubr.bf16.gmra.mrb[0].mxu0 %v2185
        %v2490 = vpop.f32.mrb[0].mxu0
        %v2491 = vadd.f32 %v2382, %v2490
        %v2492 = vpop.f32.mrb[0].mxu0
        %v2493 = vpop.f32.mrb[0].mxu0
        %v2494 = vadd.f32 %v2385, %v2493
        %v2495 = vpop.f32.mrb[0].mxu0
        %2496 = vmatprep.mubr.bf16.mxu0 0
        %2497 = vmatmul.mubr.bf16.gmra.mrb[0].mxu0 %v2188
        %v2498 = vpop.f32.mrb[0].mxu0
        %v2499 = vadd.f32 %v2390, %v2498
        %v2500 = vpop.f32.mrb[0].mxu0
        %v2501 = vpop.f32.mrb[0].mxu0
        %v2502 = vadd.f32 %v2393, %v2501
        %v2503 = vpop.f32.mrb[0].mxu0
        %2504 = vmatprep.mubr.bf16.mxu0 0
        %2505 = vmatmul.mubr.bf16.gmra.mrb[0].mxu0 %v2191
        %v2506 = vpop.f32.mrb[0].mxu0
        %v2507 = vadd.f32 %v2398, %v2506
        %v2508 = vpop.f32.mrb[0].mxu0
        %v2509 = vpop.f32.mrb[0].mxu0
        %v2510 = vadd.f32 %v2401, %v2509
        %v2511 = vpop.f32.mrb[0].mxu0
        %2512 = vdwg.mxu0
        %v2513 = vld [vmem:[#allocation2 + $0xa] sm:$0xff]
        %v2514 = vld [vmem:[#allocation2 + $0x12] sm:$0xff]
        %v2515 = vld [vmem:[#allocation2 + $0x2a] sm:$0xff]
        %v2516 = vld [vmem:[#allocation2 + $0x32] sm:$0xff]
        %v2517 = vld [vmem:[#allocation2 + $0x4a] sm:$0xff]
        %v2518 = vld [vmem:[#allocation2 + $0x52] sm:$0xff]
        %v2519 = vld [vmem:[#allocation2 + $0x6a] sm:$0xff]
        %v2520 = vld [vmem:[#allocation2 + $0x72] sm:$0xff]
        %v2521 = vld [vmem:[#allocation2 + $0x8a] sm:$0xff]
        %v2522 = vld [vmem:[#allocation2 + $0x92] sm:$0xff]
        %v2523 = vld [vmem:[#allocation2 + $0xaa] sm:$0xff]
        %v2524 = vld [vmem:[#allocation2 + $0xb2] sm:$0xff]
        %v2525 = vld [vmem:[#allocation2 + $0xca] sm:$0xff]
        %v2526 = vld [vmem:[#allocation2 + $0xd2] sm:$0xff]
        %v2527 = vld [vmem:[#allocation2 + $0xea] sm:$0xff]
        %v2528 = vld [vmem:[#allocation2 + $0xf2] sm:$0xff]
        %v2529 = vpack.c.bf16 %v2514, %v2513
        %v2530 = vpack.c.bf16 %v2516, %v2515
        %v2531 = vpack.c.bf16 %v2518, %v2517
        %v2532 = vpack.c.bf16 %v2520, %v2519
        %v2533 = vpack.c.bf16 %v2522, %v2521
        %v2534 = vpack.c.bf16 %v2524, %v2523
        %v2535 = vpack.c.bf16 %v2526, %v2525
        %v2536 = vpack.c.bf16 %v2528, %v2527
        %s2537 = scalar_lea.vmem %s2, 80
        %v2538 = vld [vmem:[%s2537] sm:$0xf]
        %v2539 = vld [vmem:[%s2537 + $0x4] sm:$0xf]
        %v2540 = vld [vmem:[%s2537 + $0x8] sm:$0xf]
        %v2541 = vld [vmem:[%s2537 + $0xc] sm:$0xf]
        %v2546 = vunpack.c.l.b16 %v2538
        %v2547 = vunpack.c.l.b16 %v2539
        %v2548 = vunpack.c.l.b16 %v2540
        %v2549 = vunpack.c.l.b16 %v2541
        %v2550 = vpack.c.b16 %v2547, %v2546
        %v2551 = vpack.c.b16 %v2549, %v2548
        %v2555 = vsel %vm615, %v2529, 0
        %v2558 = vsel %vm615, %v2530, 0
        %v2561 = vsel %vm615, %v2531, 0
        %v2564 = vsel %vm615, %v2532, 0
        %v2567 = vsel %vm615, %v2533, 0
        %v2570 = vsel %vm615, %v2534, 0
        %v2573 = vsel %vm615, %v2535, 0
        %v2576 = vsel %vm615, %v2536, 0
        %2578 = vmatprep.subr.bf16.mxu0 0
        %2579 = vmatpush1.bf16.msra.mxu0 %v2550
        %2580 = vmatprep.subr.bf16.mxu0 0
        %2581 = vmatpush1.bf16.msra.mxu0 %v2551
        %2582 = vmatprep.subr.bf16.mxu0 0
        %2583 = vmatpush1.bf16.msra.mxu0 0
        %2584 = vmatprep.subr.bf16.mxu0 0
        %2585 = vmatpush1.bf16.msra.mxu0 0
        %2586 = vmatprep.subr.bf16.mxu0 0
        %2587 = vmatpush1.bf16.msra.mxu0 0
        %2588 = vmatprep.subr.bf16.mxu0 0
        %2589 = vmatpush1.bf16.msra.mxu0 0
        %2590 = vmatprep.subr.bf16.mxu0 0
        %2591 = vmatpush1.bf16.msra.mxu0 0
        %2592 = vmatprep.subr.bf16.mxu0 0
        %2593 = vmatpush1.bf16.msra.mxu0 0
        %2594 = vmatprep.subr.bf16.mxu0 0
        %2595 = vmatpush1.bf16.msra.mxu0 0
        %2596 = vmatprep.subr.bf16.mxu0 0
        %2597 = vmatpush1.bf16.msra.mxu0 0
        %2598 = vmatprep.subr.bf16.mxu0 0
        %2599 = vmatpush1.bf16.msra.mxu0 0
        %2600 = vmatprep.subr.bf16.mxu0 0
        %2601 = vmatpush1.bf16.msra.mxu0 0
        %2602 = vmatprep.subr.bf16.mxu0 0
        %2603 = vmatpush1.bf16.msra.mxu0 0
        %2604 = vmatprep.subr.bf16.mxu0 0
        %2605 = vmatpush1.bf16.msra.mxu0 0
        %2606 = vmatprep.subr.bf16.mxu0 0
        %2607 = vmatpush1.bf16.msra.mxu0 0
        %2608 = vmatprep.subr.bf16.mxu0 0
        %2609 = vmatpush1.bf16.msra.mxu0 0
        %2610 = vmatprep.mubr.bf16.mxu0 0
        %2611 = vmatmul.mubr.bf16.gmra.mrb[0].mxu0 %v2555
        %v2612 = vpop.f32.mrb[0].mxu0
        %v2613 = vadd.f32 0.0, %v2612
        %v2614 = vpop.f32.mrb[0].mxu0
        %v2615 = vpop.f32.mrb[0].mxu0
        %v2616 = vadd.f32 0.0, %v2615
        %v2617 = vpop.f32.mrb[0].mxu0
        %2618 = vmatprep.mubr.bf16.mxu0 0
        %2619 = vmatmul.mubr.bf16.gmra.mrb[0].mxu0 %v2558
        %v2620 = vpop.f32.mrb[0].mxu0
        %v2621 = vadd.f32 0.0, %v2620
        %v2622 = vpop.f32.mrb[0].mxu0
        %v2623 = vpop.f32.mrb[0].mxu0
        %v2624 = vadd.f32 0.0, %v2623
        %v2625 = vpop.f32.mrb[0].mxu0
        %2626 = vmatprep.mubr.bf16.mxu0 0
        %2627 = vmatmul.mubr.bf16.gmra.mrb[0].mxu0 %v2561
        %v2628 = vpop.f32.mrb[0].mxu0
        %v2629 = vadd.f32 0.0, %v2628
        %v2630 = vpop.f32.mrb[0].mxu0
        %v2631 = vpop.f32.mrb[0].mxu0
        %v2632 = vadd.f32 0.0, %v2631
        %v2633 = vpop.f32.mrb[0].mxu0
        %2634 = vmatprep.mubr.bf16.mxu0 0
        %2635 = vmatmul.mubr.bf16.gmra.mrb[0].mxu0 %v2564
        %v2636 = vpop.f32.mrb[0].mxu0
        %v2637 = vadd.f32 0.0, %v2636
        %v2638 = vpop.f32.mrb[0].mxu0
        %v2639 = vpop.f32.mrb[0].mxu0
        %v2640 = vadd.f32 0.0, %v2639
        %v2641 = vpop.f32.mrb[0].mxu0
        %2642 = vmatprep.mubr.bf16.mxu0 0
        %2643 = vmatmul.mubr.bf16.gmra.mrb[0].mxu0 %v2567
        %v2644 = vpop.f32.mrb[0].mxu0
        %v2645 = vadd.f32 0.0, %v2644
        %v2646 = vpop.f32.mrb[0].mxu0
        %v2647 = vpop.f32.mrb[0].mxu0
        %v2648 = vadd.f32 0.0, %v2647
        %v2649 = vpop.f32.mrb[0].mxu0
        %2650 = vmatprep.mubr.bf16.mxu0 0
        %2651 = vmatmul.mubr.bf16.gmra.mrb[0].mxu0 %v2570
        %v2652 = vpop.f32.mrb[0].mxu0
        %v2653 = vadd.f32 0.0, %v2652
        %v2654 = vpop.f32.mrb[0].mxu0
        %v2655 = vpop.f32.mrb[0].mxu0
        %v2656 = vadd.f32 0.0, %v2655
        %v2657 = vpop.f32.mrb[0].mxu0
        %2658 = vmatprep.mubr.bf16.mxu0 0
        %2659 = vmatmul.mubr.bf16.gmra.mrb[0].mxu0 %v2573
        %v2660 = vpop.f32.mrb[0].mxu0
        %v2661 = vadd.f32 0.0, %v2660
        %v2662 = vpop.f32.mrb[0].mxu0
        %v2663 = vpop.f32.mrb[0].mxu0
        %v2664 = vadd.f32 0.0, %v2663
        %v2665 = vpop.f32.mrb[0].mxu0
        %2666 = vmatprep.mubr.bf16.mxu0 0
        %2667 = vmatmul.mubr.bf16.gmra.mrb[0].mxu0 %v2576
        %v2668 = vpop.f32.mrb[0].mxu0
        %v2669 = vadd.f32 0.0, %v2668
        %v2670 = vpop.f32.mrb[0].mxu0
        %v2671 = vpop.f32.mrb[0].mxu0
        %v2672 = vadd.f32 0.0, %v2671
        %v2673 = vpop.f32.mrb[0].mxu0
        %2674 = vdwg.mxu0
        %v2675 = vadd.f32 %v2228, %v2613
        %v2676 = vadd.f32 %v2231, %v2616
        %v2677 = vadd.f32 %v2236, %v2621
        %v2678 = vadd.f32 %v2239, %v2624
        %v2679 = vadd.f32 %v2244, %v2629
        %v2680 = vadd.f32 %v2247, %v2632
        %v2681 = vadd.f32 %v2252, %v2637
        %v2682 = vadd.f32 %v2255, %v2640
        %v2683 = vadd.f32 %v2260, %v2645
        %v2684 = vadd.f32 %v2263, %v2648
        %v2685 = vadd.f32 %v2268, %v2653
        %v2686 = vadd.f32 %v2271, %v2656
        %v2687 = vadd.f32 %v2276, %v2661
        %v2688 = vadd.f32 %v2279, %v2664
        %v2689 = vadd.f32 %v2284, %v2669
        %v2690 = vadd.f32 %v2287, %v2672
        %s2691 = scalar_lea.vmem %s3, 80
        %v2692 = vld [vmem:[%s2691] sm:$0xf]
        %v2693 = vld [vmem:[%s2691 + $0x4] sm:$0xf]
        %v2694 = vld [vmem:[%s2691 + $0x8] sm:$0xf]
        %v2695 = vld [vmem:[%s2691 + $0xc] sm:$0xf]
        %v2700 = vunpack.c.l.b16 %v2692
        %v2701 = vunpack.c.l.b16 %v2693
        %v2702 = vunpack.c.l.b16 %v2694
        %v2703 = vunpack.c.l.b16 %v2695
        %v2704 = vpack.c.b16 %v2701, %v2700
        %v2705 = vpack.c.b16 %v2703, %v2702
        %2708 = vmatprep.subr.bf16.mxu0 0
        %2709 = vmatpush1.bf16.msra.mxu0 %v2704
        %2710 = vmatprep.subr.bf16.mxu0 0
        %2711 = vmatpush1.bf16.msra.mxu0 %v2705
        %2712 = vmatprep.subr.bf16.mxu0 0
        %2713 = vmatpush1.bf16.msra.mxu0 0
        %2714 = vmatprep.subr.bf16.mxu0 0
        %2715 = vmatpush1.bf16.msra.mxu0 0
        %2716 = vmatprep.subr.bf16.mxu0 0
        %2717 = vmatpush1.bf16.msra.mxu0 0
        %2718 = vmatprep.subr.bf16.mxu0 0
        %2719 = vmatpush1.bf16.msra.mxu0 0
        %2720 = vmatprep.subr.bf16.mxu0 0
        %2721 = vmatpush1.bf16.msra.mxu0 0
        %2722 = vmatprep.subr.bf16.mxu0 0
        %2723 = vmatpush1.bf16.msra.mxu0 0
        %2724 = vmatprep.subr.bf16.mxu0 0
        %2725 = vmatpush1.bf16.msra.mxu0 0
        %2726 = vmatprep.subr.bf16.mxu0 0
        %2727 = vmatpush1.bf16.msra.mxu0 0
        %2728 = vmatprep.subr.bf16.mxu0 0
        %2729 = vmatpush1.bf16.msra.mxu0 0
        %2730 = vmatprep.subr.bf16.mxu0 0
        %2731 = vmatpush1.bf16.msra.mxu0 0
        %2732 = vmatprep.subr.bf16.mxu0 0
        %2733 = vmatpush1.bf16.msra.mxu0 0
        %2734 = vmatprep.subr.bf16.mxu0 0
        %2735 = vmatpush1.bf16.msra.mxu0 0
        %2736 = vmatprep.subr.bf16.mxu0 0
        %2737 = vmatpush1.bf16.msra.mxu0 0
        %2738 = vmatprep.subr.bf16.mxu0 0
        %2739 = vmatpush1.bf16.msra.mxu0 0
        %2740 = vmatprep.mubr.bf16.mxu0 0
        %2741 = vmatmul.mubr.bf16.gmra.mrb[0].mxu0 %v2555
        %v2742 = vpop.f32.mrb[0].mxu0
        %v2743 = vadd.f32 0.0, %v2742
        %v2744 = vpop.f32.mrb[0].mxu0
        %v2745 = vpop.f32.mrb[0].mxu0
        %v2746 = vadd.f32 0.0, %v2745
        %v2747 = vpop.f32.mrb[0].mxu0
        %2748 = vmatprep.mubr.bf16.mxu0 0
        %2749 = vmatmul.mubr.bf16.gmra.mrb[0].mxu0 %v2558
        %v2750 = vpop.f32.mrb[0].mxu0
        %v2751 = vadd.f32 0.0, %v2750
        %v2752 = vpop.f32.mrb[0].mxu0
        %v2753 = vpop.f32.mrb[0].mxu0
        %v2754 = vadd.f32 0.0, %v2753
        %v2755 = vpop.f32.mrb[0].mxu0
        %2756 = vmatprep.mubr.bf16.mxu0 0
        %2757 = vmatmul.mubr.bf16.gmra.mrb[0].mxu0 %v2561
        %v2758 = vpop.f32.mrb[0].mxu0
        %v2759 = vadd.f32 0.0, %v2758
        %v2760 = vpop.f32.mrb[0].mxu0
        %v2761 = vpop.f32.mrb[0].mxu0
        %v2762 = vadd.f32 0.0, %v2761
        %v2763 = vpop.f32.mrb[0].mxu0
        %2764 = vmatprep.mubr.bf16.mxu0 0
        %2765 = vmatmul.mubr.bf16.gmra.mrb[0].mxu0 %v2564
        %v2766 = vpop.f32.mrb[0].mxu0
        %v2767 = vadd.f32 0.0, %v2766
        %v2768 = vpop.f32.mrb[0].mxu0
        %v2769 = vpop.f32.mrb[0].mxu0
        %v2770 = vadd.f32 0.0, %v2769
        %v2771 = vpop.f32.mrb[0].mxu0
        %2772 = vmatprep.mubr.bf16.mxu0 0
        %2773 = vmatmul.mubr.bf16.gmra.mrb[0].mxu0 %v2567
        %v2774 = vpop.f32.mrb[0].mxu0
        %v2775 = vadd.f32 0.0, %v2774
        %v2776 = vpop.f32.mrb[0].mxu0
        %v2777 = vpop.f32.mrb[0].mxu0
        %v2778 = vadd.f32 0.0, %v2777
        %v2779 = vpop.f32.mrb[0].mxu0
        %2780 = vmatprep.mubr.bf16.mxu0 0
        %2781 = vmatmul.mubr.bf16.gmra.mrb[0].mxu0 %v2570
        %v2782 = vpop.f32.mrb[0].mxu0
        %v2783 = vadd.f32 0.0, %v2782
        %v2784 = vpop.f32.mrb[0].mxu0
        %v2785 = vpop.f32.mrb[0].mxu0
        %v2786 = vadd.f32 0.0, %v2785
        %v2787 = vpop.f32.mrb[0].mxu0
        %2788 = vmatprep.mubr.bf16.mxu0 0
        %2789 = vmatmul.mubr.bf16.gmra.mrb[0].mxu0 %v2573
        %v2790 = vpop.f32.mrb[0].mxu0
        %v2791 = vadd.f32 0.0, %v2790
        %v2792 = vpop.f32.mrb[0].mxu0
        %v2793 = vpop.f32.mrb[0].mxu0
        %v2794 = vadd.f32 0.0, %v2793
        %v2795 = vpop.f32.mrb[0].mxu0
        %2796 = vmatprep.mubr.bf16.mxu0 0
        %2797 = vmatmul.mubr.bf16.gmra.mrb[0].mxu0 %v2576
        %v2798 = vpop.f32.mrb[0].mxu0
        %v2799 = vadd.f32 0.0, %v2798
        %v2800 = vpop.f32.mrb[0].mxu0
        %v2801 = vpop.f32.mrb[0].mxu0
        %v2802 = vadd.f32 0.0, %v2801
        %v2803 = vpop.f32.mrb[0].mxu0
        %2804 = vdwg.mxu0
        %v2805 = vadd.f32 %v2451, %v2743
        %v2806 = vadd.f32 %v2454, %v2746
        %v2807 = vadd.f32 %v2459, %v2751
        %v2808 = vadd.f32 %v2462, %v2754
        %v2809 = vadd.f32 %v2467, %v2759
        %v2810 = vadd.f32 %v2470, %v2762
        %v2811 = vadd.f32 %v2475, %v2767
        %v2812 = vadd.f32 %v2478, %v2770
        %v2813 = vadd.f32 %v2483, %v2775
        %v2814 = vadd.f32 %v2486, %v2778
        %v2815 = vadd.f32 %v2491, %v2783
        %v2816 = vadd.f32 %v2494, %v2786
        %v2817 = vadd.f32 %v2499, %v2791
        %v2818 = vadd.f32 %v2502, %v2794
        %v2819 = vadd.f32 %v2507, %v2799
        %v2820 = vadd.f32 %v2510, %v2802
        %v2821 = vld [vmem:[%s4 + $0x1] sm:$0x1]
        %v2822 = vlaneseq
        %v2823 = vshrl.u32 %v2822, 7
        %v2824 = vsub.s32 0, %v2823
        %v2825 = vrot.slane %v2821, %v2824
        %v2826 = vadd.f32 %v2675, %v2825
        %v2827 = vadd.f32 %v2676, %v2825
        %v2828 = vadd.f32 %v2677, %v2825
        %v2829 = vadd.f32 %v2678, %v2825
        %v2830 = vadd.f32 %v2679, %v2825
        %v2831 = vadd.f32 %v2680, %v2825
        %v2832 = vadd.f32 %v2681, %v2825
        %v2833 = vadd.f32 %v2682, %v2825
        %v2834 = vadd.f32 %v2683, %v2825
        %v2835 = vadd.f32 %v2684, %v2825
        %v2836 = vadd.f32 %v2685, %v2825
        %v2837 = vadd.f32 %v2686, %v2825
        %v2838 = vadd.f32 %v2687, %v2825
        %v2839 = vadd.f32 %v2688, %v2825
        %v2840 = vadd.f32 %v2689, %v2825
        %v2841 = vadd.f32 %v2690, %v2825
        %v2842 = vld [vmem:[%s5 + $0x1] sm:$0x1]
        %v2843 = vlaneseq
        %v2844 = vshrl.u32 %v2843, 7
        %v2845 = vsub.s32 0, %v2844
        %v2846 = vrot.slane %v2842, %v2845
        %v2847 = vadd.f32 %v2805, %v2846
        %v2848 = vadd.f32 %v2806, %v2846
        %v2849 = vadd.f32 %v2807, %v2846
        %v2850 = vadd.f32 %v2808, %v2846
        %v2851 = vadd.f32 %v2809, %v2846
        %v2852 = vadd.f32 %v2810, %v2846
        %v2853 = vadd.f32 %v2811, %v2846
        %v2854 = vadd.f32 %v2812, %v2846
        %v2855 = vadd.f32 %v2813, %v2846
        %v2856 = vadd.f32 %v2814, %v2846
        %v2857 = vadd.f32 %v2815, %v2846
        %v2858 = vadd.f32 %v2816, %v2846
        %v2859 = vadd.f32 %v2817, %v2846
        %v2860 = vadd.f32 %v2818, %v2846
        %v2861 = vadd.f32 %v2819, %v2846
        %v2862 = vadd.f32 %v2820, %v2846
        %v2863 = vxor.u32 %v2847, 2147483648
        %v2864 = vxor.u32 %v2848, 2147483648
        %v2865 = vxor.u32 %v2849, 2147483648
        %v2866 = vxor.u32 %v2850, 2147483648
        %v2867 = vxor.u32 %v2851, 2147483648
        %v2868 = vxor.u32 %v2852, 2147483648
        %v2869 = vxor.u32 %v2853, 2147483648
        %v2870 = vxor.u32 %v2854, 2147483648
        %v2871 = vxor.u32 %v2855, 2147483648
        %v2872 = vxor.u32 %v2856, 2147483648
        %v2873 = vxor.u32 %v2857, 2147483648
        %v2874 = vxor.u32 %v2858, 2147483648
        %v2875 = vxor.u32 %v2859, 2147483648
        %v2876 = vxor.u32 %v2860, 2147483648
        %v2877 = vxor.u32 %v2861, 2147483648
        %v2878 = vxor.u32 %v2862, 2147483648
        %v2879 = vmul.f32 %v2863, 1.442695
        %v2880 = vpow.pop %v2879
        %v2881 = vmul.f32 %v2864, 1.442695
        %v2882 = vpow.pop %v2881
        %v2883 = vmul.f32 %v2865, 1.442695
        %v2884 = vpow.pop %v2883
        %v2885 = vmul.f32 %v2866, 1.442695
        %v2886 = vpow.pop %v2885
        %v2887 = vmul.f32 %v2867, 1.442695
        %v2888 = vpow.pop %v2887
        %v2889 = vmul.f32 %v2868, 1.442695
        %v2890 = vpow.pop %v2889
        %v2891 = vmul.f32 %v2869, 1.442695
        %v2892 = vpow.pop %v2891
        %v2893 = vmul.f32 %v2870, 1.442695
        %v2894 = vpow.pop %v2893
        %v2895 = vmul.f32 %v2871, 1.442695
        %v2896 = vpow.pop %v2895
        %v2897 = vmul.f32 %v2872, 1.442695
        %v2898 = vpow.pop %v2897
        %v2899 = vmul.f32 %v2873, 1.442695
        %v2900 = vpow.pop %v2899
        %v2901 = vmul.f32 %v2874, 1.442695
        %v2902 = vpow.pop %v2901
        %v2903 = vmul.f32 %v2875, 1.442695
        %v2904 = vpow.pop %v2903
        %v2905 = vmul.f32 %v2876, 1.442695
        %v2906 = vpow.pop %v2905
        %v2907 = vmul.f32 %v2877, 1.442695
        %v2908 = vpow.pop %v2907
        %v2909 = vmul.f32 %v2878, 1.442695
        %v2910 = vpow.pop %v2909
        %v2911 = vadd.f32 %v2880, 1.0
        %v2912 = vadd.f32 %v2882, 1.0
        %v2913 = vadd.f32 %v2884, 1.0
        %v2914 = vadd.f32 %v2886, 1.0
        %v2915 = vadd.f32 %v2888, 1.0
        %v2916 = vadd.f32 %v2890, 1.0
        %v2917 = vadd.f32 %v2892, 1.0
        %v2918 = vadd.f32 %v2894, 1.0
        %v2919 = vadd.f32 %v2896, 1.0
        %v2920 = vadd.f32 %v2898, 1.0
        %v2921 = vadd.f32 %v2900, 1.0
        %v2922 = vadd.f32 %v2902, 1.0
        %v2923 = vadd.f32 %v2904, 1.0
        %v2924 = vadd.f32 %v2906, 1.0
        %v2925 = vadd.f32 %v2908, 1.0
        %v2926 = vadd.f32 %v2910, 1.0
        %v2927 = vrcp.pop %v2911
        %v2928 = vmul.f32 1.0, %v2927
        %v2929 = vrcp.pop %v2912
        %v2930 = vmul.f32 1.0, %v2929
        %v2931 = vrcp.pop %v2913
        %v2932 = vmul.f32 1.0, %v2931
        %v2933 = vrcp.pop %v2914
        %v2934 = vmul.f32 1.0, %v2933
        %v2935 = vrcp.pop %v2915
        %v2936 = vmul.f32 1.0, %v2935
        %v2937 = vrcp.pop %v2916
        %v2938 = vmul.f32 1.0, %v2937
        %v2939 = vrcp.pop %v2917
        %v2940 = vmul.f32 1.0, %v2939
        %v2941 = vrcp.pop %v2918
        %v2942 = vmul.f32 1.0, %v2941
        %v2943 = vrcp.pop %v2919
        %v2944 = vmul.f32 1.0, %v2943
        %v2945 = vrcp.pop %v2920
        %v2946 = vmul.f32 1.0, %v2945
        %v2947 = vrcp.pop %v2921
        %v2948 = vmul.f32 1.0, %v2947
        %v2949 = vrcp.pop %v2922
        %v2950 = vmul.f32 1.0, %v2949
        %v2951 = vrcp.pop %v2923
        %v2952 = vmul.f32 1.0, %v2951
        %v2953 = vrcp.pop %v2924
        %v2954 = vmul.f32 1.0, %v2953
        %v2955 = vrcp.pop %v2925
        %v2956 = vmul.f32 1.0, %v2955
        %v2957 = vrcp.pop %v2926
        %v2958 = vmul.f32 1.0, %v2957
        %v2959 = vmul.f32 %v2826, %v2928
        %v2960 = vmul.f32 %v2827, %v2930
        %v2961 = vmul.f32 %v2828, %v2932
        %v2962 = vmul.f32 %v2829, %v2934
        %v2963 = vmul.f32 %v2830, %v2936
        %v2964 = vmul.f32 %v2831, %v2938
        %v2965 = vmul.f32 %v2832, %v2940
        %v2966 = vmul.f32 %v2833, %v2942
        %v2967 = vmul.f32 %v2834, %v2944
        %v2968 = vmul.f32 %v2835, %v2946
        %v2969 = vmul.f32 %v2836, %v2948
        %v2970 = vmul.f32 %v2837, %v2950
        %v2971 = vmul.f32 %v2838, %v2952
        %v2972 = vmul.f32 %v2839, %v2954
        %v2973 = vmul.f32 %v2840, %v2956
        %v2974 = vmul.f32 %v2841, %v2958
        %v2975 = vsel %vm615, %v2959, 0.0
        %2976 = vadd.xlane.f32.xlu0 %v2975
        %v2977 = vpop.xlane.xlu0 %2976
        %v2978 = vsel %vm615, %v2960, 0.0
        %2979 = vadd.xlane.f32.xlu0 %v2978
        %v2980 = vpop.xlane.xlu0 %2979
        %v2981 = vsel %vm615, %v2961, 0.0
        %2982 = vadd.xlane.f32.xlu0 %v2981
        %v2983 = vpop.xlane.xlu0 %2982
        %v2984 = vsel %vm615, %v2962, 0.0
        %2985 = vadd.xlane.f32.xlu0 %v2984
        %v2986 = vpop.xlane.xlu0 %2985
        %v2987 = vsel %vm615, %v2963, 0.0
        %2988 = vadd.xlane.f32.xlu0 %v2987
        %v2989 = vpop.xlane.xlu0 %2988
        %v2990 = vsel %vm615, %v2964, 0.0
        %2991 = vadd.xlane.f32.xlu0 %v2990
        %v2992 = vpop.xlane.xlu0 %2991
        %v2993 = vsel %vm615, %v2965, 0.0
        %2994 = vadd.xlane.f32.xlu0 %v2993
        %v2995 = vpop.xlane.xlu0 %2994
        %v2996 = vsel %vm615, %v2966, 0.0
        %2997 = vadd.xlane.f32.xlu0 %v2996
        %v2998 = vpop.xlane.xlu0 %2997
        %v2999 = vsel %vm615, %v2967, 0.0
        %3000 = vadd.xlane.f32.xlu0 %v2999
        %v3001 = vpop.xlane.xlu0 %3000
        %v3002 = vsel %vm615, %v2968, 0.0
        %3003 = vadd.xlane.f32.xlu0 %v3002
        %v3004 = vpop.xlane.xlu0 %3003
        %v3005 = vsel %vm615, %v2969, 0.0
        %3006 = vadd.xlane.f32.xlu0 %v3005
        %v3007 = vpop.xlane.xlu0 %3006
        %v3008 = vsel %vm615, %v2970, 0.0
        %3009 = vadd.xlane.f32.xlu0 %v3008
        %v3010 = vpop.xlane.xlu0 %3009
        %v3011 = vsel %vm615, %v2971, 0.0
        %3012 = vadd.xlane.f32.xlu0 %v3011
        %v3013 = vpop.xlane.xlu0 %3012
        %v3014 = vsel %vm615, %v2972, 0.0
        %3015 = vadd.xlane.f32.xlu0 %v3014
        %v3016 = vpop.xlane.xlu0 %3015
        %v3017 = vsel %vm615, %v2973, 0.0
        %3018 = vadd.xlane.f32.xlu0 %v3017
        %v3019 = vpop.xlane.xlu0 %3018
        %v3020 = vsel %vm615, %v2974, 0.0
        %3021 = vadd.xlane.f32.xlu0 %v3020
        %v3022 = vpop.xlane.xlu0 %3021
        %v3023 = vmul.f32 %v2977, %v1708
        %v3024 = vmul.f32 %v2980, %v1708
        %v3025 = vmul.f32 %v2983, %v1708
        %v3026 = vmul.f32 %v2986, %v1708
        %v3027 = vmul.f32 %v2989, %v1708
        %v3028 = vmul.f32 %v2992, %v1708
        %v3029 = vmul.f32 %v2995, %v1708
        %v3030 = vmul.f32 %v2998, %v1708
        %v3031 = vmul.f32 %v3001, %v1708
        %v3032 = vmul.f32 %v3004, %v1708
        %v3033 = vmul.f32 %v3007, %v1708
        %v3034 = vmul.f32 %v3010, %v1708
        %v3035 = vmul.f32 %v3013, %v1708
        %v3036 = vmul.f32 %v3016, %v1708
        %v3037 = vmul.f32 %v3019, %v1708
        %v3038 = vmul.f32 %v3022, %v1708
        %v3039 = vsub.f32 %v2959, %v3023
        %v3040 = vsub.f32 %v2960, %v3024
        %v3041 = vsub.f32 %v2961, %v3025
        %v3042 = vsub.f32 %v2962, %v3026
        %v3043 = vsub.f32 %v2963, %v3027
        %v3044 = vsub.f32 %v2964, %v3028
        %v3045 = vsub.f32 %v2965, %v3029
        %v3046 = vsub.f32 %v2966, %v3030
        %v3047 = vsub.f32 %v2967, %v3031
        %v3048 = vsub.f32 %v2968, %v3032
        %v3049 = vsub.f32 %v2969, %v3033
        %v3050 = vsub.f32 %v2970, %v3034
        %v3051 = vsub.f32 %v2971, %v3035
        %v3052 = vsub.f32 %v2972, %v3036
        %v3053 = vsub.f32 %v2973, %v3037
        %v3054 = vsub.f32 %v2974, %v3038
        %v3055 = vmul.f32 %v3039, %v3039
        %v3056 = vmul.f32 %v3040, %v3040
        %v3057 = vmul.f32 %v3041, %v3041
        %v3058 = vmul.f32 %v3042, %v3042
        %v3059 = vmul.f32 %v3043, %v3043
        %v3060 = vmul.f32 %v3044, %v3044
        %v3061 = vmul.f32 %v3045, %v3045
        %v3062 = vmul.f32 %v3046, %v3046
        %v3063 = vmul.f32 %v3047, %v3047
        %v3064 = vmul.f32 %v3048, %v3048
        %v3065 = vmul.f32 %v3049, %v3049
        %v3066 = vmul.f32 %v3050, %v3050
        %v3067 = vmul.f32 %v3051, %v3051
        %v3068 = vmul.f32 %v3052, %v3052
        %v3069 = vmul.f32 %v3053, %v3053
        %v3070 = vmul.f32 %v3054, %v3054
        %v3071 = vsel %vm615, %v3055, 0.0
        %3072 = vadd.xlane.f32.xlu0 %v3071
        %v3073 = vpop.xlane.xlu0 %3072
        %v3074 = vsel %vm615, %v3056, 0.0
        %3075 = vadd.xlane.f32.xlu0 %v3074
        %v3076 = vpop.xlane.xlu0 %3075
        %v3077 = vsel %vm615, %v3057, 0.0
        %3078 = vadd.xlane.f32.xlu0 %v3077
        %v3079 = vpop.xlane.xlu0 %3078
        %v3080 = vsel %vm615, %v3058, 0.0
        %3081 = vadd.xlane.f32.xlu0 %v3080
        %v3082 = vpop.xlane.xlu0 %3081
        %v3083 = vsel %vm615, %v3059, 0.0
        %3084 = vadd.xlane.f32.xlu0 %v3083
        %v3085 = vpop.xlane.xlu0 %3084
        %v3086 = vsel %vm615, %v3060, 0.0
        %3087 = vadd.xlane.f32.xlu0 %v3086
        %v3088 = vpop.xlane.xlu0 %3087
        %v3089 = vsel %vm615, %v3061, 0.0
        %3090 = vadd.xlane.f32.xlu0 %v3089
        %v3091 = vpop.xlane.xlu0 %3090
        %v3092 = vsel %vm615, %v3062, 0.0
        %3093 = vadd.xlane.f32.xlu0 %v3092
        %v3094 = vpop.xlane.xlu0 %3093
        %v3095 = vsel %vm615, %v3063, 0.0
        %3096 = vadd.xlane.f32.xlu0 %v3095
        %v3097 = vpop.xlane.xlu0 %3096
        %v3098 = vsel %vm615, %v3064, 0.0
        %3099 = vadd.xlane.f32.xlu0 %v3098
        %v3100 = vpop.xlane.xlu0 %3099
        %v3101 = vsel %vm615, %v3065, 0.0
        %3102 = vadd.xlane.f32.xlu0 %v3101
        %v3103 = vpop.xlane.xlu0 %3102
        %v3104 = vsel %vm615, %v3066, 0.0
        %3105 = vadd.xlane.f32.xlu0 %v3104
        %v3106 = vpop.xlane.xlu0 %3105
        %v3107 = vsel %vm615, %v3067, 0.0
        %3108 = vadd.xlane.f32.xlu0 %v3107
        %v3109 = vpop.xlane.xlu0 %3108
        %v3110 = vsel %vm615, %v3068, 0.0
        %3111 = vadd.xlane.f32.xlu0 %v3110
        %v3112 = vpop.xlane.xlu0 %3111
        %v3113 = vsel %vm615, %v3069, 0.0
        %3114 = vadd.xlane.f32.xlu0 %v3113
        %v3115 = vpop.xlane.xlu0 %3114
        %v3116 = vsel %vm615, %v3070, 0.0
        %3117 = vadd.xlane.f32.xlu0 %v3116
        %v3118 = vpop.xlane.xlu0 %3117
        %v3119 = vmul.f32 %v3073, %v1708
        %v3120 = vmul.f32 %v3076, %v1708
        %v3121 = vmul.f32 %v3079, %v1708
        %v3122 = vmul.f32 %v3082, %v1708
        %v3123 = vmul.f32 %v3085, %v1708
        %v3124 = vmul.f32 %v3088, %v1708
        %v3125 = vmul.f32 %v3091, %v1708
        %v3126 = vmul.f32 %v3094, %v1708
        %v3127 = vmul.f32 %v3097, %v1708
        %v3128 = vmul.f32 %v3100, %v1708
        %v3129 = vmul.f32 %v3103, %v1708
        %v3130 = vmul.f32 %v3106, %v1708
        %v3131 = vmul.f32 %v3109, %v1708
        %v3132 = vmul.f32 %v3112, %v1708
        %v3133 = vmul.f32 %v3115, %v1708
        %v3134 = vmul.f32 %v3118, %v1708
        %v3135 = vadd.f32 %v3119, 1e-05
        %v3136 = vadd.f32 %v3120, 1e-05
        %v3137 = vadd.f32 %v3121, 1e-05
        %v3138 = vadd.f32 %v3122, 1e-05
        %v3139 = vadd.f32 %v3123, 1e-05
        %v3140 = vadd.f32 %v3124, 1e-05
        %v3141 = vadd.f32 %v3125, 1e-05
        %v3142 = vadd.f32 %v3126, 1e-05
        %v3143 = vadd.f32 %v3127, 1e-05
        %v3144 = vadd.f32 %v3128, 1e-05
        %v3145 = vadd.f32 %v3129, 1e-05
        %v3146 = vadd.f32 %v3130, 1e-05
        %v3147 = vadd.f32 %v3131, 1e-05
        %v3148 = vadd.f32 %v3132, 1e-05
        %v3149 = vadd.f32 %v3133, 1e-05
        %v3150 = vadd.f32 %v3134, 1e-05
        %v3151 = vrsqrt.pop %v3135
        %v3152 = vrsqrt.pop %v3136
        %v3153 = vrsqrt.pop %v3137
        %v3154 = vrsqrt.pop %v3138
        %v3155 = vrsqrt.pop %v3139
        %v3156 = vrsqrt.pop %v3140
        %v3157 = vrsqrt.pop %v3141
        %v3158 = vrsqrt.pop %v3142
        %v3159 = vrsqrt.pop %v3143
        %v3160 = vrsqrt.pop %v3144
        %v3161 = vrsqrt.pop %v3145
        %v3162 = vrsqrt.pop %v3146
        %v3163 = vrsqrt.pop %v3147
        %v3164 = vrsqrt.pop %v3148
        %v3165 = vrsqrt.pop %v3149
        %v3166 = vrsqrt.pop %v3150
        %v3167 = vmul.f32 %v3039, %v3151
        %v3168 = vmul.f32 %v3040, %v3152
        %v3169 = vmul.f32 %v3041, %v3153
        %v3170 = vmul.f32 %v3042, %v3154
        %v3171 = vmul.f32 %v3043, %v3155
        %v3172 = vmul.f32 %v3044, %v3156
        %v3173 = vmul.f32 %v3045, %v3157
        %v3174 = vmul.f32 %v3046, %v3158
        %v3175 = vmul.f32 %v3047, %v3159
        %v3176 = vmul.f32 %v3048, %v3160
        %v3177 = vmul.f32 %v3049, %v3161
        %v3178 = vmul.f32 %v3050, %v3162
        %v3179 = vmul.f32 %v3051, %v3163
        %v3180 = vmul.f32 %v3052, %v3164
        %v3181 = vmul.f32 %v3053, %v3165
        %v3182 = vmul.f32 %v3054, %v3166
        %v3183 = vld [vmem:[%s6 + $0x1] sm:$0x1]
        %v3184 = vlaneseq
        %v3185 = vshrl.u32 %v3184, 7
        %v3186 = vsub.s32 0, %v3185
        %v3187 = vrot.slane %v3183, %v3186
        %v3188 = vmul.f32 %v3167, %v3187
        %v3189 = vmul.f32 %v3168, %v3187
        %v3190 = vmul.f32 %v3169, %v3187
        %v3191 = vmul.f32 %v3170, %v3187
        %v3192 = vmul.f32 %v3171, %v3187
        %v3193 = vmul.f32 %v3172, %v3187
        %v3194 = vmul.f32 %v3173, %v3187
        %v3195 = vmul.f32 %v3174, %v3187
        %v3196 = vmul.f32 %v3175, %v3187
        %v3197 = vmul.f32 %v3176, %v3187
        %v3198 = vmul.f32 %v3177, %v3187
        %v3199 = vmul.f32 %v3178, %v3187
        %v3200 = vmul.f32 %v3179, %v3187
        %v3201 = vmul.f32 %v3180, %v3187
        %v3202 = vmul.f32 %v3181, %v3187
        %v3203 = vmul.f32 %v3182, %v3187
        %v3204 = vld [vmem:[%s7 + $0x1] sm:$0x1]
        %v3205 = vlaneseq
        %v3206 = vshrl.u32 %v3205, 7
        %v3207 = vsub.s32 0, %v3206
        %v3208 = vrot.slane %v3204, %v3207
        %v3209 = vadd.f32 %v3188, %v3208
        %v3210 = vadd.f32 %v3189, %v3208
        %v3211 = vadd.f32 %v3190, %v3208
        %v3212 = vadd.f32 %v3191, %v3208
        %v3213 = vadd.f32 %v3192, %v3208
        %v3214 = vadd.f32 %v3193, %v3208
        %v3215 = vadd.f32 %v3194, %v3208
        %v3216 = vadd.f32 %v3195, %v3208
        %v3217 = vadd.f32 %v3196, %v3208
        %v3218 = vadd.f32 %v3197, %v3208
        %v3219 = vadd.f32 %v3198, %v3208
        %v3220 = vadd.f32 %v3199, %v3208
        %v3221 = vadd.f32 %v3200, %v3208
        %v3222 = vadd.f32 %v3201, %v3208
        %v3223 = vadd.f32 %v3202, %v3208
        %v3224 = vadd.f32 %v3203, %v3208
        %s3225 = sld [smem:[#allocation3 + $0x1]]
        %v3226 = vstv %s3225
        %v3227 = vmul.f32 %v3226, %v3209
        %v3228 = vmul.f32 %v3226, %v3210
        %v3229 = vmul.f32 %v3226, %v3211
        %v3230 = vmul.f32 %v3226, %v3212
        %v3231 = vmul.f32 %v3226, %v3213
        %v3232 = vmul.f32 %v3226, %v3214
        %v3233 = vmul.f32 %v3226, %v3215
        %v3234 = vmul.f32 %v3226, %v3216
        %v3235 = vmul.f32 %v3226, %v3217
        %v3236 = vmul.f32 %v3226, %v3218
        %v3237 = vmul.f32 %v3226, %v3219
        %v3238 = vmul.f32 %v3226, %v3220
        %v3239 = vmul.f32 %v3226, %v3221
        %v3240 = vmul.f32 %v3226, %v3222
        %v3241 = vmul.f32 %v3226, %v3223
        %v3242 = vmul.f32 %v3226, %v3224
        %v3243 = vadd.f32 %v1929, %v3227
        %v3244 = vadd.f32 %v1930, %v3228
        %v3245 = vadd.f32 %v1931, %v3229
        %v3246 = vadd.f32 %v1932, %v3230
        %v3247 = vadd.f32 %v1933, %v3231
        %v3248 = vadd.f32 %v1934, %v3232
        %v3249 = vadd.f32 %v1935, %v3233
        %v3250 = vadd.f32 %v1936, %v3234
        %v3251 = vadd.f32 %v1937, %v3235
        %v3252 = vadd.f32 %v1938, %v3236
        %v3253 = vadd.f32 %v1939, %v3237
        %v3254 = vadd.f32 %v1940, %v3238
        %v3255 = vadd.f32 %v1941, %v3239
        %v3256 = vadd.f32 %v1942, %v3240
        %v3257 = vadd.f32 %v1943, %v3241
        %v3258 = vadd.f32 %v1944, %v3242
        %3259 = vst.msk [vmem:[#allocation2 + $0x8] sm:$0xff] %vm615, %v3243
        %3260 = vst.msk [vmem:[#allocation2 + $0x10] sm:$0xff] %vm615, %v3244
        %3261 = vst.msk [vmem:[#allocation2 + $0x28] sm:$0xff] %vm615, %v3245
        %3262 = vst.msk [vmem:[#allocation2 + $0x30] sm:$0xff] %vm615, %v3246
        %3263 = vst.msk [vmem:[#allocation2 + $0x48] sm:$0xff] %vm615, %v3247
        %3264 = vst.msk [vmem:[#allocation2 + $0x50] sm:$0xff] %vm615, %v3248
        %3265 = vst.msk [vmem:[#allocation2 + $0x68] sm:$0xff] %vm615, %v3249
        %3266 = vst.msk [vmem:[#allocation2 + $0x70] sm:$0xff] %vm615, %v3250
        %3267 = vst.msk [vmem:[#allocation2 + $0x88] sm:$0xff] %vm615, %v3251
        %3268 = vst.msk [vmem:[#allocation2 + $0x90] sm:$0xff] %vm615, %v3252
        %3269 = vst.msk [vmem:[#allocation2 + $0xa8] sm:$0xff] %vm615, %v3253
        %3270 = vst.msk [vmem:[#allocation2 + $0xb0] sm:$0xff] %vm615, %v3254
        %3271 = vst.msk [vmem:[#allocation2 + $0xc8] sm:$0xff] %vm615, %v3255
        %3272 = vst.msk [vmem:[#allocation2 + $0xd0] sm:$0xff] %vm615, %v3256
        %3273 = vst.msk [vmem:[#allocation2 + $0xe8] sm:$0xff] %vm615, %v3257
        %3274 = vst.msk [vmem:[#allocation2 + $0xf0] sm:$0xff] %vm615, %v3258
        %v3275 = vld [vmem:[#allocation2 + $0x4] sm:$0xff]
        %v3276 = vld [vmem:[#allocation2 + $0xc] sm:$0xff]
        %v3277 = vld [vmem:[#allocation2 + $0x24] sm:$0xff]
        %v3278 = vld [vmem:[#allocation2 + $0x2c] sm:$0xff]
        %v3279 = vld [vmem:[#allocation2 + $0x44] sm:$0xff]
        %v3280 = vld [vmem:[#allocation2 + $0x4c] sm:$0xff]
        %v3281 = vld [vmem:[#allocation2 + $0x64] sm:$0xff]
        %v3282 = vld [vmem:[#allocation2 + $0x6c] sm:$0xff]
        %v3283 = vld [vmem:[#allocation2 + $0x84] sm:$0xff]
        %v3284 = vld [vmem:[#allocation2 + $0x8c] sm:$0xff]
        %v3285 = vld [vmem:[#allocation2 + $0xa4] sm:$0xff]
        %v3286 = vld [vmem:[#allocation2 + $0xac] sm:$0xff]
        %v3287 = vld [vmem:[#allocation2 + $0xc4] sm:$0xff]
        %v3288 = vld [vmem:[#allocation2 + $0xcc] sm:$0xff]
        %v3289 = vld [vmem:[#allocation2 + $0xe4] sm:$0xff]
        %v3290 = vld [vmem:[#allocation2 + $0xec] sm:$0xff]
        %v3291 = vpack.c.bf16 %v3276, %v3275
        %v3292 = vpack.c.bf16 %v3278, %v3277
        %v3293 = vpack.c.bf16 %v3280, %v3279
        %v3294 = vpack.c.bf16 %v3282, %v3281
        %v3295 = vpack.c.bf16 %v3284, %v3283
        %v3296 = vpack.c.bf16 %v3286, %v3285
        %v3297 = vpack.c.bf16 %v3288, %v3287
        %v3298 = vpack.c.bf16 %v3290, %v3289
        %s3299 = scalar_lea.vmem %s2, 96
        %v3300 = vld [vmem:[%s3299] sm:$0xf]
        %v3301 = vld [vmem:[%s3299 + $0x4] sm:$0xf]
        %v3302 = vld [vmem:[%s3299 + $0x8] sm:$0xf]
        %v3303 = vld [vmem:[%s3299 + $0xc] sm:$0xf]
        %s3304 = scalar_lea.vmem %s3, 96
        %v3305 = vld [vmem:[%s3304] sm:$0xf]
        %v3306 = vld [vmem:[%s3304 + $0x4] sm:$0xf]
        %v3307 = vld [vmem:[%s3304 + $0x8] sm:$0xf]
        %v3308 = vld [vmem:[%s3304 + $0xc] sm:$0xf]
        %v3309 = vld [vmem:[#allocation2 + $0x8] sm:$0xff]
        %v3310 = vld [vmem:[#allocation2 + $0x10] sm:$0xff]
        %v3311 = vld [vmem:[#allocation2 + $0x28] sm:$0xff]
        %v3312 = vld [vmem:[#allocation2 + $0x30] sm:$0xff]
        %v3313 = vld [vmem:[#allocation2 + $0x48] sm:$0xff]
        %v3314 = vld [vmem:[#allocation2 + $0x50] sm:$0xff]
        %v3315 = vld [vmem:[#allocation2 + $0x68] sm:$0xff]
        %v3316 = vld [vmem:[#allocation2 + $0x70] sm:$0xff]
        %v3317 = vld [vmem:[#allocation2 + $0x88] sm:$0xff]
        %v3318 = vld [vmem:[#allocation2 + $0x90] sm:$0xff]
        %v3319 = vld [vmem:[#allocation2 + $0xa8] sm:$0xff]
        %v3320 = vld [vmem:[#allocation2 + $0xb0] sm:$0xff]
        %v3321 = vld [vmem:[#allocation2 + $0xc8] sm:$0xff]
        %v3322 = vld [vmem:[#allocation2 + $0xd0] sm:$0xff]
        %v3323 = vld [vmem:[#allocation2 + $0xe8] sm:$0xff]
        %v3324 = vld [vmem:[#allocation2 + $0xf0] sm:$0xff]
        %v3325 = vpack.c.bf16 %v3310, %v3309
        %v3326 = vpack.c.bf16 %v3312, %v3311
        %v3327 = vpack.c.bf16 %v3314, %v3313
        %v3328 = vpack.c.bf16 %v3316, %v3315
        %v3329 = vpack.c.bf16 %v3318, %v3317
        %v3330 = vpack.c.bf16 %v3320, %v3319
        %v3331 = vpack.c.bf16 %v3322, %v3321
        %v3332 = vpack.c.bf16 %v3324, %v3323
        %s3333 = scalar_lea.vmem %s2, 112
        %v3334 = vld [vmem:[%s3333] sm:$0xf]
        %v3335 = vld [vmem:[%s3333 + $0x4] sm:$0xf]
        %v3336 = vld [vmem:[%s3333 + $0x8] sm:$0xf]
        %v3337 = vld [vmem:[%s3333 + $0xc] sm:$0xf]
        %v3342 = vunpack.c.l.b16 %v3334
        %v3343 = vunpack.c.l.b16 %v3335
        %v3344 = vunpack.c.l.b16 %v3336
        %v3345 = vunpack.c.l.b16 %v3337
        %v3346 = vpack.c.b16 %v3343, %v3342
        %v3347 = vpack.c.b16 %v3345, %v3344
        %v3351 = vsel %vm615, %v3325, 0
        %v3354 = vsel %vm615, %v3326, 0
        %v3357 = vsel %vm615, %v3327, 0
        %v3360 = vsel %vm615, %v3328, 0
        %v3363 = vsel %vm615, %v3329, 0
        %v3366 = vsel %vm615, %v3330, 0
        %v3369 = vsel %vm615, %v3331, 0
        %v3372 = vsel %vm615, %v3332, 0
        %3374 = vmatprep.subr.bf16.mxu0 0
        %3375 = vmatpush1.bf16.msra.mxu0 %v3346
        %3376 = vmatprep.subr.bf16.mxu0 0
        %3377 = vmatpush1.bf16.msra.mxu0 %v3347
        %3378 = vmatprep.subr.bf16.mxu0 0
        %3379 = vmatpush1.bf16.msra.mxu0 0
        %3380 = vmatprep.subr.bf16.mxu0 0
        %3381 = vmatpush1.bf16.msra.mxu0 0
        %3382 = vmatprep.subr.bf16.mxu0 0
        %3383 = vmatpush1.bf16.msra.mxu0 0
        %3384 = vmatprep.subr.bf16.mxu0 0
        %3385 = vmatpush1.bf16.msra.mxu0 0
        %3386 = vmatprep.subr.bf16.mxu0 0
        %3387 = vmatpush1.bf16.msra.mxu0 0
        %3388 = vmatprep.subr.bf16.mxu0 0
        %3389 = vmatpush1.bf16.msra.mxu0 0
        %3390 = vmatprep.subr.bf16.mxu0 0
        %3391 = vmatpush1.bf16.msra.mxu0 0
        %3392 = vmatprep.subr.bf16.mxu0 0
        %3393 = vmatpush1.bf16.msra.mxu0 0
        %3394 = vmatprep.subr.bf16.mxu0 0
        %3395 = vmatpush1.bf16.msra.mxu0 0
        %3396 = vmatprep.subr.bf16.mxu0 0
        %3397 = vmatpush1.bf16.msra.mxu0 0
        %3398 = vmatprep.subr.bf16.mxu0 0
        %3399 = vmatpush1.bf16.msra.mxu0 0
        %3400 = vmatprep.subr.bf16.mxu0 0
        %3401 = vmatpush1.bf16.msra.mxu0 0
        %3402 = vmatprep.subr.bf16.mxu0 0
        %3403 = vmatpush1.bf16.msra.mxu0 0
        %3404 = vmatprep.subr.bf16.mxu0 0
        %3405 = vmatpush1.bf16.msra.mxu0 0
        %3406 = vmatprep.mubr.bf16.mxu0 0
        %3407 = vmatmul.mubr.bf16.gmra.mrb[0].mxu0 %v3351
        %v3408 = vpop.f32.mrb[0].mxu0
        %v3409 = vadd.f32 0.0, %v3408
        %v3410 = vpop.f32.mrb[0].mxu0
        %v3411 = vpop.f32.mrb[0].mxu0
        %v3412 = vadd.f32 0.0, %v3411
        %v3413 = vpop.f32.mrb[0].mxu0
        %3414 = vmatprep.mubr.bf16.mxu0 0
        %3415 = vmatmul.mubr.bf16.gmra.mrb[0].mxu0 %v3354
        %v3416 = vpop.f32.mrb[0].mxu0
        %v3417 = vadd.f32 0.0, %v3416
        %v3418 = vpop.f32.mrb[0].mxu0
        %v3419 = vpop.f32.mrb[0].mxu0
        %v3420 = vadd.f32 0.0, %v3419
        %v3421 = vpop.f32.mrb[0].mxu0
        %3422 = vmatprep.mubr.bf16.mxu0 0
        %3423 = vmatmul.mubr.bf16.gmra.mrb[0].mxu0 %v3357
        %v3424 = vpop.f32.mrb[0].mxu0
        %v3425 = vadd.f32 0.0, %v3424
        %v3426 = vpop.f32.mrb[0].mxu0
        %v3427 = vpop.f32.mrb[0].mxu0
        %v3428 = vadd.f32 0.0, %v3427
        %v3429 = vpop.f32.mrb[0].mxu0
        %3430 = vmatprep.mubr.bf16.mxu0 0
        %3431 = vmatmul.mubr.bf16.gmra.mrb[0].mxu0 %v3360
        %v3432 = vpop.f32.mrb[0].mxu0
        %v3433 = vadd.f32 0.0, %v3432
        %v3434 = vpop.f32.mrb[0].mxu0
        %v3435 = vpop.f32.mrb[0].mxu0
        %v3436 = vadd.f32 0.0, %v3435
        %v3437 = vpop.f32.mrb[0].mxu0
        %3438 = vmatprep.mubr.bf16.mxu0 0
        %3439 = vmatmul.mubr.bf16.gmra.mrb[0].mxu0 %v3363
        %v3440 = vpop.f32.mrb[0].mxu0
        %v3441 = vadd.f32 0.0, %v3440
        %v3442 = vpop.f32.mrb[0].mxu0
        %v3443 = vpop.f32.mrb[0].mxu0
        %v3444 = vadd.f32 0.0, %v3443
        %v3445 = vpop.f32.mrb[0].mxu0
        %3446 = vmatprep.mubr.bf16.mxu0 0
        %3447 = vmatmul.mubr.bf16.gmra.mrb[0].mxu0 %v3366
        %v3448 = vpop.f32.mrb[0].mxu0
        %v3449 = vadd.f32 0.0, %v3448
        %v3450 = vpop.f32.mrb[0].mxu0
        %v3451 = vpop.f32.mrb[0].mxu0
        %v3452 = vadd.f32 0.0, %v3451
        %v3453 = vpop.f32.mrb[0].mxu0
        %3454 = vmatprep.mubr.bf16.mxu0 0
        %3455 = vmatmul.mubr.bf16.gmra.mrb[0].mxu0 %v3369
        %v3456 = vpop.f32.mrb[0].mxu0
        %v3457 = vadd.f32 0.0, %v3456
        %v3458 = vpop.f32.mrb[0].mxu0
        %v3459 = vpop.f32.mrb[0].mxu0
        %v3460 = vadd.f32 0.0, %v3459
        %v3461 = vpop.f32.mrb[0].mxu0
        %3462 = vmatprep.mubr.bf16.mxu0 0
        %3463 = vmatmul.mubr.bf16.gmra.mrb[0].mxu0 %v3372
        %v3464 = vpop.f32.mrb[0].mxu0
        %v3465 = vadd.f32 0.0, %v3464
        %v3466 = vpop.f32.mrb[0].mxu0
        %v3467 = vpop.f32.mrb[0].mxu0
        %v3468 = vadd.f32 0.0, %v3467
        %v3469 = vpop.f32.mrb[0].mxu0
        %3470 = vdwg.mxu0
        %v3475 = vunpack.c.l.b16 %v3300
        %v3476 = vunpack.c.l.b16 %v3301
        %v3477 = vunpack.c.l.b16 %v3302
        %v3478 = vunpack.c.l.b16 %v3303
        %v3479 = vpack.c.b16 %v3476, %v3475
        %v3480 = vpack.c.b16 %v3478, %v3477
        %v3484 = vsel %vm615, %v3291, 0
        %v3487 = vsel %vm615, %v3292, 0
        %v3490 = vsel %vm615, %v3293, 0
        %v3493 = vsel %vm615, %v3294, 0
        %v3496 = vsel %vm615, %v3295, 0
        %v3499 = vsel %vm615, %v3296, 0
        %v3502 = vsel %vm615, %v3297, 0
        %v3505 = vsel %vm615, %v3298, 0
        %3507 = vmatprep.subr.bf16.mxu0 0
        %3508 = vmatpush1.bf16.msra.mxu0 %v3479
        %3509 = vmatprep.subr.bf16.mxu0 0
        %3510 = vmatpush1.bf16.msra.mxu0 %v3480
        %3511 = vmatprep.subr.bf16.mxu0 0
        %3512 = vmatpush1.bf16.msra.mxu0 0
        %3513 = vmatprep.subr.bf16.mxu0 0
        %3514 = vmatpush1.bf16.msra.mxu0 0
        %3515 = vmatprep.subr.bf16.mxu0 0
        %3516 = vmatpush1.bf16.msra.mxu0 0
        %3517 = vmatprep.subr.bf16.mxu0 0
        %3518 = vmatpush1.bf16.msra.mxu0 0
        %3519 = vmatprep.subr.bf16.mxu0 0
        %3520 = vmatpush1.bf16.msra.mxu0 0
        %3521 = vmatprep.subr.bf16.mxu0 0
        %3522 = vmatpush1.bf16.msra.mxu0 0
        %3523 = vmatprep.subr.bf16.mxu0 0
        %3524 = vmatpush1.bf16.msra.mxu0 0
        %3525 = vmatprep.subr.bf16.mxu0 0
        %3526 = vmatpush1.bf16.msra.mxu0 0
        %3527 = vmatprep.subr.bf16.mxu0 0
        %3528 = vmatpush1.bf16.msra.mxu0 0
        %3529 = vmatprep.subr.bf16.mxu0 0
        %3530 = vmatpush1.bf16.msra.mxu0 0
        %3531 = vmatprep.subr.bf16.mxu0 0
        %3532 = vmatpush1.bf16.msra.mxu0 0
        %3533 = vmatprep.subr.bf16.mxu0 0
        %3534 = vmatpush1.bf16.msra.mxu0 0
        %3535 = vmatprep.subr.bf16.mxu0 0
        %3536 = vmatpush1.bf16.msra.mxu0 0
        %3537 = vmatprep.subr.bf16.mxu0 0
        %3538 = vmatpush1.bf16.msra.mxu0 0
        %3539 = vmatprep.mubr.bf16.mxu0 0
        %3540 = vmatmul.mubr.bf16.gmra.mrb[0].mxu0 %v3484
        %v3541 = vpop.f32.mrb[0].mxu0
        %v3542 = vadd.f32 %v3409, %v3541
        %v3543 = vpop.f32.mrb[0].mxu0
        %v3544 = vpop.f32.mrb[0].mxu0
        %v3545 = vadd.f32 %v3412, %v3544
        %v3546 = vpop.f32.mrb[0].mxu0
        %3547 = vmatprep.mubr.bf16.mxu0 0
        %3548 = vmatmul.mubr.bf16.gmra.mrb[0].mxu0 %v3487
        %v3549 = vpop.f32.mrb[0].mxu0
        %v3550 = vadd.f32 %v3417, %v3549
        %v3551 = vpop.f32.mrb[0].mxu0
        %v3552 = vpop.f32.mrb[0].mxu0
        %v3553 = vadd.f32 %v3420, %v3552
        %v3554 = vpop.f32.mrb[0].mxu0
        %3555 = vmatprep.mubr.bf16.mxu0 0
        %3556 = vmatmul.mubr.bf16.gmra.mrb[0].mxu0 %v3490
        %v3557 = vpop.f32.mrb[0].mxu0
        %v3558 = vadd.f32 %v3425, %v3557
        %v3559 = vpop.f32.mrb[0].mxu0
        %v3560 = vpop.f32.mrb[0].mxu0
        %v3561 = vadd.f32 %v3428, %v3560
        %v3562 = vpop.f32.mrb[0].mxu0
        %3563 = vmatprep.mubr.bf16.mxu0 0
        %3564 = vmatmul.mubr.bf16.gmra.mrb[0].mxu0 %v3493
        %v3565 = vpop.f32.mrb[0].mxu0
        %v3566 = vadd.f32 %v3433, %v3565
        %v3567 = vpop.f32.mrb[0].mxu0
        %v3568 = vpop.f32.mrb[0].mxu0
        %v3569 = vadd.f32 %v3436, %v3568
        %v3570 = vpop.f32.mrb[0].mxu0
        %3571 = vmatprep.mubr.bf16.mxu0 0
        %3572 = vmatmul.mubr.bf16.gmra.mrb[0].mxu0 %v3496
        %v3573 = vpop.f32.mrb[0].mxu0
        %v3574 = vadd.f32 %v3441, %v3573
        %v3575 = vpop.f32.mrb[0].mxu0
        %v3576 = vpop.f32.mrb[0].mxu0
        %v3577 = vadd.f32 %v3444, %v3576
        %v3578 = vpop.f32.mrb[0].mxu0
        %3579 = vmatprep.mubr.bf16.mxu0 0
        %3580 = vmatmul.mubr.bf16.gmra.mrb[0].mxu0 %v3499
        %v3581 = vpop.f32.mrb[0].mxu0
        %v3582 = vadd.f32 %v3449, %v3581
        %v3583 = vpop.f32.mrb[0].mxu0
        %v3584 = vpop.f32.mrb[0].mxu0
        %v3585 = vadd.f32 %v3452, %v3584
        %v3586 = vpop.f32.mrb[0].mxu0
        %3587 = vmatprep.mubr.bf16.mxu0 0
        %3588 = vmatmul.mubr.bf16.gmra.mrb[0].mxu0 %v3502
        %v3589 = vpop.f32.mrb[0].mxu0
        %v3590 = vadd.f32 %v3457, %v3589
        %v3591 = vpop.f32.mrb[0].mxu0
        %v3592 = vpop.f32.mrb[0].mxu0
        %v3593 = vadd.f32 %v3460, %v3592
        %v3594 = vpop.f32.mrb[0].mxu0
        %3595 = vmatprep.mubr.bf16.mxu0 0
        %3596 = vmatmul.mubr.bf16.gmra.mrb[0].mxu0 %v3505
        %v3597 = vpop.f32.mrb[0].mxu0
        %v3598 = vadd.f32 %v3465, %v3597
        %v3599 = vpop.f32.mrb[0].mxu0
        %v3600 = vpop.f32.mrb[0].mxu0
        %v3601 = vadd.f32 %v3468, %v3600
        %v3602 = vpop.f32.mrb[0].mxu0
        %3603 = vdwg.mxu0
        %s3604 = scalar_lea.vmem %s3, 112
        %v3605 = vld [vmem:[%s3604] sm:$0xf]
        %v3606 = vld [vmem:[%s3604 + $0x4] sm:$0xf]
        %v3607 = vld [vmem:[%s3604 + $0x8] sm:$0xf]
        %v3608 = vld [vmem:[%s3604 + $0xc] sm:$0xf]
        %v3613 = vunpack.c.l.b16 %v3605
        %v3614 = vunpack.c.l.b16 %v3606
        %v3615 = vunpack.c.l.b16 %v3607
        %v3616 = vunpack.c.l.b16 %v3608
        %v3617 = vpack.c.b16 %v3614, %v3613
        %v3618 = vpack.c.b16 %v3616, %v3615
        %3621 = vmatprep.subr.bf16.mxu0 0
        %3622 = vmatpush1.bf16.msra.mxu0 %v3617
        %3623 = vmatprep.subr.bf16.mxu0 0
        %3624 = vmatpush1.bf16.msra.mxu0 %v3618
        %3625 = vmatprep.subr.bf16.mxu0 0
        %3626 = vmatpush1.bf16.msra.mxu0 0
        %3627 = vmatprep.subr.bf16.mxu0 0
        %3628 = vmatpush1.bf16.msra.mxu0 0
        %3629 = vmatprep.subr.bf16.mxu0 0
        %3630 = vmatpush1.bf16.msra.mxu0 0
        %3631 = vmatprep.subr.bf16.mxu0 0
        %3632 = vmatpush1.bf16.msra.mxu0 0
        %3633 = vmatprep.subr.bf16.mxu0 0
        %3634 = vmatpush1.bf16.msra.mxu0 0
        %3635 = vmatprep.subr.bf16.mxu0 0
        %3636 = vmatpush1.bf16.msra.mxu0 0
        %3637 = vmatprep.subr.bf16.mxu0 0
        %3638 = vmatpush1.bf16.msra.mxu0 0
        %3639 = vmatprep.subr.bf16.mxu0 0
        %3640 = vmatpush1.bf16.msra.mxu0 0
        %3641 = vmatprep.subr.bf16.mxu0 0
        %3642 = vmatpush1.bf16.msra.mxu0 0
        %3643 = vmatprep.subr.bf16.mxu0 0
        %3644 = vmatpush1.bf16.msra.mxu0 0
        %3645 = vmatprep.subr.bf16.mxu0 0
        %3646 = vmatpush1.bf16.msra.mxu0 0
        %3647 = vmatprep.subr.bf16.mxu0 0
        %3648 = vmatpush1.bf16.msra.mxu0 0
        %3649 = vmatprep.subr.bf16.mxu0 0
        %3650 = vmatpush1.bf16.msra.mxu0 0
        %3651 = vmatprep.subr.bf16.mxu0 0
        %3652 = vmatpush1.bf16.msra.mxu0 0
        %3653 = vmatprep.mubr.bf16.mxu0 0
        %3654 = vmatmul.mubr.bf16.gmra.mrb[0].mxu0 %v3351
        %v3655 = vpop.f32.mrb[0].mxu0
        %v3656 = vadd.f32 0.0, %v3655
        %v3657 = vpop.f32.mrb[0].mxu0
        %v3658 = vpop.f32.mrb[0].mxu0
        %v3659 = vadd.f32 0.0, %v3658
        %v3660 = vpop.f32.mrb[0].mxu0
        %3661 = vmatprep.mubr.bf16.mxu0 0
        %3662 = vmatmul.mubr.bf16.gmra.mrb[0].mxu0 %v3354
        %v3663 = vpop.f32.mrb[0].mxu0
        %v3664 = vadd.f32 0.0, %v3663
        %v3665 = vpop.f32.mrb[0].mxu0
        %v3666 = vpop.f32.mrb[0].mxu0
        %v3667 = vadd.f32 0.0, %v3666
        %v3668 = vpop.f32.mrb[0].mxu0
        %3669 = vmatprep.mubr.bf16.mxu0 0
        %3670 = vmatmul.mubr.bf16.gmra.mrb[0].mxu0 %v3357
        %v3671 = vpop.f32.mrb[0].mxu0
        %v3672 = vadd.f32 0.0, %v3671
        %v3673 = vpop.f32.mrb[0].mxu0
        %v3674 = vpop.f32.mrb[0].mxu0
        %v3675 = vadd.f32 0.0, %v3674
        %v3676 = vpop.f32.mrb[0].mxu0
        %3677 = vmatprep.mubr.bf16.mxu0 0
        %3678 = vmatmul.mubr.bf16.gmra.mrb[0].mxu0 %v3360
        %v3679 = vpop.f32.mrb[0].mxu0
        %v3680 = vadd.f32 0.0, %v3679
        %v3681 = vpop.f32.mrb[0].mxu0
        %v3682 = vpop.f32.mrb[0].mxu0
        %v3683 = vadd.f32 0.0, %v3682
        %v3684 = vpop.f32.mrb[0].mxu0
        %3685 = vmatprep.mubr.bf16.mxu0 0
        %3686 = vmatmul.mubr.bf16.gmra.mrb[0].mxu0 %v3363
        %v3687 = vpop.f32.mrb[0].mxu0
        %v3688 = vadd.f32 0.0, %v3687
        %v3689 = vpop.f32.mrb[0].mxu0
        %v3690 = vpop.f32.mrb[0].mxu0
        %v3691 = vadd.f32 0.0, %v3690
        %v3692 = vpop.f32.mrb[0].mxu0
        %3693 = vmatprep.mubr.bf16.mxu0 0
        %3694 = vmatmul.mubr.bf16.gmra.mrb[0].mxu0 %v3366
        %v3695 = vpop.f32.mrb[0].mxu0
        %v3696 = vadd.f32 0.0, %v3695
        %v3697 = vpop.f32.mrb[0].mxu0
        %v3698 = vpop.f32.mrb[0].mxu0
        %v3699 = vadd.f32 0.0, %v3698
        %v3700 = vpop.f32.mrb[0].mxu0
        %3701 = vmatprep.mubr.bf16.mxu0 0
        %3702 = vmatmul.mubr.bf16.gmra.mrb[0].mxu0 %v3369
        %v3703 = vpop.f32.mrb[0].mxu0
        %v3704 = vadd.f32 0.0, %v3703
        %v3705 = vpop.f32.mrb[0].mxu0
        %v3706 = vpop.f32.mrb[0].mxu0
        %v3707 = vadd.f32 0.0, %v3706
        %v3708 = vpop.f32.mrb[0].mxu0
        %3709 = vmatprep.mubr.bf16.mxu0 0
        %3710 = vmatmul.mubr.bf16.gmra.mrb[0].mxu0 %v3372
        %v3711 = vpop.f32.mrb[0].mxu0
        %v3712 = vadd.f32 0.0, %v3711
        %v3713 = vpop.f32.mrb[0].mxu0
        %v3714 = vpop.f32.mrb[0].mxu0
        %v3715 = vadd.f32 0.0, %v3714
        %v3716 = vpop.f32.mrb[0].mxu0
        %3717 = vdwg.mxu0
        %v3722 = vunpack.c.l.b16 %v3305
        %v3723 = vunpack.c.l.b16 %v3306
        %v3724 = vunpack.c.l.b16 %v3307
        %v3725 = vunpack.c.l.b16 %v3308
        %v3726 = vpack.c.b16 %v3723, %v3722
        %v3727 = vpack.c.b16 %v3725, %v3724
        %3730 = vmatprep.subr.bf16.mxu0 0
        %3731 = vmatpush1.bf16.msra.mxu0 %v3726
        %3732 = vmatprep.subr.bf16.mxu0 0
        %3733 = vmatpush1.bf16.msra.mxu0 %v3727
        %3734 = vmatprep.subr.bf16.mxu0 0
        %3735 = vmatpush1.bf16.msra.mxu0 0
        %3736 = vmatprep.subr.bf16.mxu0 0
        %3737 = vmatpush1.bf16.msra.mxu0 0
        %3738 = vmatprep.subr.bf16.mxu0 0
        %3739 = vmatpush1.bf16.msra.mxu0 0
        %3740 = vmatprep.subr.bf16.mxu0 0
        %3741 = vmatpush1.bf16.msra.mxu0 0
        %3742 = vmatprep.subr.bf16.mxu0 0
        %3743 = vmatpush1.bf16.msra.mxu0 0
        %3744 = vmatprep.subr.bf16.mxu0 0
        %3745 = vmatpush1.bf16.msra.mxu0 0
        %3746 = vmatprep.subr.bf16.mxu0 0
        %3747 = vmatpush1.bf16.msra.mxu0 0
        %3748 = vmatprep.subr.bf16.mxu0 0
        %3749 = vmatpush1.bf16.msra.mxu0 0
        %3750 = vmatprep.subr.bf16.mxu0 0
        %3751 = vmatpush1.bf16.msra.mxu0 0
        %3752 = vmatprep.subr.bf16.mxu0 0
        %3753 = vmatpush1.bf16.msra.mxu0 0
        %3754 = vmatprep.subr.bf16.mxu0 0
        %3755 = vmatpush1.bf16.msra.mxu0 0
        %3756 = vmatprep.subr.bf16.mxu0 0
        %3757 = vmatpush1.bf16.msra.mxu0 0
        %3758 = vmatprep.subr.bf16.mxu0 0
        %3759 = vmatpush1.bf16.msra.mxu0 0
        %3760 = vmatprep.subr.bf16.mxu0 0
        %3761 = vmatpush1.bf16.msra.mxu0 0
        %3762 = vmatprep.mubr.bf16.mxu0 0
        %3763 = vmatmul.mubr.bf16.gmra.mrb[0].mxu0 %v3484
        %v3764 = vpop.f32.mrb[0].mxu0
        %v3765 = vadd.f32 %v3656, %v3764
        %v3766 = vpop.f32.mrb[0].mxu0
        %v3767 = vpop.f32.mrb[0].mxu0
        %v3768 = vadd.f32 %v3659, %v3767
        %v3769 = vpop.f32.mrb[0].mxu0
        %3770 = vmatprep.mubr.bf16.mxu0 0
        %3771 = vmatmul.mubr.bf16.gmra.mrb[0].mxu0 %v3487
        %v3772 = vpop.f32.mrb[0].mxu0
        %v3773 = vadd.f32 %v3664, %v3772
        %v3774 = vpop.f32.mrb[0].mxu0
        %v3775 = vpop.f32.mrb[0].mxu0
        %v3776 = vadd.f32 %v3667, %v3775
        %v3777 = vpop.f32.mrb[0].mxu0
        %3778 = vmatprep.mubr.bf16.mxu0 0
        %3779 = vmatmul.mubr.bf16.gmra.mrb[0].mxu0 %v3490
        %v3780 = vpop.f32.mrb[0].mxu0
        %v3781 = vadd.f32 %v3672, %v3780
        %v3782 = vpop.f32.mrb[0].mxu0
        %v3783 = vpop.f32.mrb[0].mxu0
        %v3784 = vadd.f32 %v3675, %v3783
        %v3785 = vpop.f32.mrb[0].mxu0
        %3786 = vmatprep.mubr.bf16.mxu0 0
        %3787 = vmatmul.mubr.bf16.gmra.mrb[0].mxu0 %v3493
        %v3788 = vpop.f32.mrb[0].mxu0
        %v3789 = vadd.f32 %v3680, %v3788
        %v3790 = vpop.f32.mrb[0].mxu0
        %v3791 = vpop.f32.mrb[0].mxu0
        %v3792 = vadd.f32 %v3683, %v3791
        %v3793 = vpop.f32.mrb[0].mxu0
        %3794 = vmatprep.mubr.bf16.mxu0 0
        %3795 = vmatmul.mubr.bf16.gmra.mrb[0].mxu0 %v3496
        %v3796 = vpop.f32.mrb[0].mxu0
        %v3797 = vadd.f32 %v3688, %v3796
        %v3798 = vpop.f32.mrb[0].mxu0
        %v3799 = vpop.f32.mrb[0].mxu0
        %v3800 = vadd.f32 %v3691, %v3799
        %v3801 = vpop.f32.mrb[0].mxu0
        %3802 = vmatprep.mubr.bf16.mxu0 0
        %3803 = vmatmul.mubr.bf16.gmra.mrb[0].mxu0 %v3499
        %v3804 = vpop.f32.mrb[0].mxu0
        %v3805 = vadd.f32 %v3696, %v3804
        %v3806 = vpop.f32.mrb[0].mxu0
        %v3807 = vpop.f32.mrb[0].mxu0
        %v3808 = vadd.f32 %v3699, %v3807
        %v3809 = vpop.f32.mrb[0].mxu0
        %3810 = vmatprep.mubr.bf16.mxu0 0
        %3811 = vmatmul.mubr.bf16.gmra.mrb[0].mxu0 %v3502
        %v3812 = vpop.f32.mrb[0].mxu0
        %v3813 = vadd.f32 %v3704, %v3812
        %v3814 = vpop.f32.mrb[0].mxu0
        %v3815 = vpop.f32.mrb[0].mxu0
        %v3816 = vadd.f32 %v3707, %v3815
        %v3817 = vpop.f32.mrb[0].mxu0
        %3818 = vmatprep.mubr.bf16.mxu0 0
        %3819 = vmatmul.mubr.bf16.gmra.mrb[0].mxu0 %v3505
        %v3820 = vpop.f32.mrb[0].mxu0
        %v3821 = vadd.f32 %v3712, %v3820
        %v3822 = vpop.f32.mrb[0].mxu0
        %v3823 = vpop.f32.mrb[0].mxu0
        %v3824 = vadd.f32 %v3715, %v3823
        %v3825 = vpop.f32.mrb[0].mxu0
        %3826 = vdwg.mxu0
        %v3827 = vld [vmem:[#allocation2 + $0xc] sm:$0xff]
        %v3828 = vld [vmem:[#allocation2 + $0x14] sm:$0xff]
        %v3829 = vld [vmem:[#allocation2 + $0x2c] sm:$0xff]
        %v3830 = vld [vmem:[#allocation2 + $0x34] sm:$0xff]
        %v3831 = vld [vmem:[#allocation2 + $0x4c] sm:$0xff]
        %v3832 = vld [vmem:[#allocation2 + $0x54] sm:$0xff]
        %v3833 = vld [vmem:[#allocation2 + $0x6c] sm:$0xff]
        %v3834 = vld [vmem:[#allocation2 + $0x74] sm:$0xff]
        %v3835 = vld [vmem:[#allocation2 + $0x8c] sm:$0xff]
        %v3836 = vld [vmem:[#allocation2 + $0x94] sm:$0xff]
        %v3837 = vld [vmem:[#allocation2 + $0xac] sm:$0xff]
        %v3838 = vld [vmem:[#allocation2 + $0xb4] sm:$0xff]
        %v3839 = vld [vmem:[#allocation2 + $0xcc] sm:$0xff]
        %v3840 = vld [vmem:[#allocation2 + $0xd4] sm:$0xff]
        %v3841 = vld [vmem:[#allocation2 + $0xec] sm:$0xff]
        %v3842 = vld [vmem:[#allocation2 + $0xf4] sm:$0xff]
        %v3843 = vpack.c.bf16 %v3828, %v3827
        %v3844 = vpack.c.bf16 %v3830, %v3829
        %v3845 = vpack.c.bf16 %v3832, %v3831
        %v3846 = vpack.c.bf16 %v3834, %v3833
        %v3847 = vpack.c.bf16 %v3836, %v3835
        %v3848 = vpack.c.bf16 %v3838, %v3837
        %v3849 = vpack.c.bf16 %v3840, %v3839
        %v3850 = vpack.c.bf16 %v3842, %v3841
        %s3851 = scalar_lea.vmem %s2, 128
        %v3852 = vld [vmem:[%s3851] sm:$0xf]
        %v3853 = vld [vmem:[%s3851 + $0x4] sm:$0xf]
        %v3854 = vld [vmem:[%s3851 + $0x8] sm:$0xf]
        %v3855 = vld [vmem:[%s3851 + $0xc] sm:$0xf]
        %v3860 = vunpack.c.l.b16 %v3852
        %v3861 = vunpack.c.l.b16 %v3853
        %v3862 = vunpack.c.l.b16 %v3854
        %v3863 = vunpack.c.l.b16 %v3855
        %v3864 = vpack.c.b16 %v3861, %v3860
        %v3865 = vpack.c.b16 %v3863, %v3862
        %v3869 = vsel %vm615, %v3843, 0
        %v3872 = vsel %vm615, %v3844, 0
        %v3875 = vsel %vm615, %v3845, 0
        %v3878 = vsel %vm615, %v3846, 0
        %v3881 = vsel %vm615, %v3847, 0
        %v3884 = vsel %vm615, %v3848, 0
        %v3887 = vsel %vm615, %v3849, 0
        %v3890 = vsel %vm615, %v3850, 0
        %3892 = vmatprep.subr.bf16.mxu0 0
        %3893 = vmatpush1.bf16.msra.mxu0 %v3864
        %3894 = vmatprep.subr.bf16.mxu0 0
        %3895 = vmatpush1.bf16.msra.mxu0 %v3865
        %3896 = vmatprep.subr.bf16.mxu0 0
        %3897 = vmatpush1.bf16.msra.mxu0 0
        %3898 = vmatprep.subr.bf16.mxu0 0
        %3899 = vmatpush1.bf16.msra.mxu0 0
        %3900 = vmatprep.subr.bf16.mxu0 0
        %3901 = vmatpush1.bf16.msra.mxu0 0
        %3902 = vmatprep.subr.bf16.mxu0 0
        %3903 = vmatpush1.bf16.msra.mxu0 0
        %3904 = vmatprep.subr.bf16.mxu0 0
        %3905 = vmatpush1.bf16.msra.mxu0 0
        %3906 = vmatprep.subr.bf16.mxu0 0
        %3907 = vmatpush1.bf16.msra.mxu0 0
        %3908 = vmatprep.subr.bf16.mxu0 0
        %3909 = vmatpush1.bf16.msra.mxu0 0
        %3910 = vmatprep.subr.bf16.mxu0 0
        %3911 = vmatpush1.bf16.msra.mxu0 0
        %3912 = vmatprep.subr.bf16.mxu0 0
        %3913 = vmatpush1.bf16.msra.mxu0 0
        %3914 = vmatprep.subr.bf16.mxu0 0
        %3915 = vmatpush1.bf16.msra.mxu0 0
        %3916 = vmatprep.subr.bf16.mxu0 0
        %3917 = vmatpush1.bf16.msra.mxu0 0
        %3918 = vmatprep.subr.bf16.mxu0 0
        %3919 = vmatpush1.bf16.msra.mxu0 0
        %3920 = vmatprep.subr.bf16.mxu0 0
        %3921 = vmatpush1.bf16.msra.mxu0 0
        %3922 = vmatprep.subr.bf16.mxu0 0
        %3923 = vmatpush1.bf16.msra.mxu0 0
        %3924 = vmatprep.mubr.bf16.mxu0 0
        %3925 = vmatmul.mubr.bf16.gmra.mrb[0].mxu0 %v3869
        %v3926 = vpop.f32.mrb[0].mxu0
        %v3927 = vadd.f32 0.0, %v3926
        %v3928 = vpop.f32.mrb[0].mxu0
        %v3929 = vpop.f32.mrb[0].mxu0
        %v3930 = vadd.f32 0.0, %v3929
        %v3931 = vpop.f32.mrb[0].mxu0
        %3932 = vmatprep.mubr.bf16.mxu0 0
        %3933 = vmatmul.mubr.bf16.gmra.mrb[0].mxu0 %v3872
        %v3934 = vpop.f32.mrb[0].mxu0
        %v3935 = vadd.f32 0.0, %v3934
        %v3936 = vpop.f32.mrb[0].mxu0
        %v3937 = vpop.f32.mrb[0].mxu0
        %v3938 = vadd.f32 0.0, %v3937
        %v3939 = vpop.f32.mrb[0].mxu0
        %3940 = vmatprep.mubr.bf16.mxu0 0
        %3941 = vmatmul.mubr.bf16.gmra.mrb[0].mxu0 %v3875
        %v3942 = vpop.f32.mrb[0].mxu0
        %v3943 = vadd.f32 0.0, %v3942
        %v3944 = vpop.f32.mrb[0].mxu0
        %v3945 = vpop.f32.mrb[0].mxu0
        %v3946 = vadd.f32 0.0, %v3945
        %v3947 = vpop.f32.mrb[0].mxu0
        %3948 = vmatprep.mubr.bf16.mxu0 0
        %3949 = vmatmul.mubr.bf16.gmra.mrb[0].mxu0 %v3878
        %v3950 = vpop.f32.mrb[0].mxu0
        %v3951 = vadd.f32 0.0, %v3950
        %v3952 = vpop.f32.mrb[0].mxu0
        %v3953 = vpop.f32.mrb[0].mxu0
        %v3954 = vadd.f32 0.0, %v3953
        %v3955 = vpop.f32.mrb[0].mxu0
        %3956 = vmatprep.mubr.bf16.mxu0 0
        %3957 = vmatmul.mubr.bf16.gmra.mrb[0].mxu0 %v3881
        %v3958 = vpop.f32.mrb[0].mxu0
        %v3959 = vadd.f32 0.0, %v3958
        %v3960 = vpop.f32.mrb[0].mxu0
        %v3961 = vpop.f32.mrb[0].mxu0
        %v3962 = vadd.f32 0.0, %v3961
        %v3963 = vpop.f32.mrb[0].mxu0
        %3964 = vmatprep.mubr.bf16.mxu0 0
        %3965 = vmatmul.mubr.bf16.gmra.mrb[0].mxu0 %v3884
        %v3966 = vpop.f32.mrb[0].mxu0
        %v3967 = vadd.f32 0.0, %v3966
        %v3968 = vpop.f32.mrb[0].mxu0
        %v3969 = vpop.f32.mrb[0].mxu0
        %v3970 = vadd.f32 0.0, %v3969
        %v3971 = vpop.f32.mrb[0].mxu0
        %3972 = vmatprep.mubr.bf16.mxu0 0
        %3973 = vmatmul.mubr.bf16.gmra.mrb[0].mxu0 %v3887
        %v3974 = vpop.f32.mrb[0].mxu0
        %v3975 = vadd.f32 0.0, %v3974
        %v3976 = vpop.f32.mrb[0].mxu0
        %v3977 = vpop.f32.mrb[0].mxu0
        %v3978 = vadd.f32 0.0, %v3977
        %v3979 = vpop.f32.mrb[0].mxu0
        %3980 = vmatprep.mubr.bf16.mxu0 0
        %3981 = vmatmul.mubr.bf16.gmra.mrb[0].mxu0 %v3890
        %v3982 = vpop.f32.mrb[0].mxu0
        %v3983 = vadd.f32 0.0, %v3982
        %v3984 = vpop.f32.mrb[0].mxu0
        %v3985 = vpop.f32.mrb[0].mxu0
        %v3986 = vadd.f32 0.0, %v3985
        %v3987 = vpop.f32.mrb[0].mxu0
        %3988 = vdwg.mxu0
        %v3989 = vadd.f32 %v3542, %v3927
        %v3990 = vadd.f32 %v3545, %v3930
        %v3991 = vadd.f32 %v3550, %v3935
        %v3992 = vadd.f32 %v3553, %v3938
        %v3993 = vadd.f32 %v3558, %v3943
        %v3994 = vadd.f32 %v3561, %v3946
        %v3995 = vadd.f32 %v3566, %v3951
        %v3996 = vadd.f32 %v3569, %v3954
        %v3997 = vadd.f32 %v3574, %v3959
        %v3998 = vadd.f32 %v3577, %v3962
        %v3999 = vadd.f32 %v3582, %v3967
        %v4000 = vadd.f32 %v3585, %v3970
        %v4001 = vadd.f32 %v3590, %v3975
        %v4002 = vadd.f32 %v3593, %v3978
        %v4003 = vadd.f32 %v3598, %v3983
        %v4004 = vadd.f32 %v3601, %v3986
        %s4005 = scalar_lea.vmem %s3, 128
        %v4006 = vld [vmem:[%s4005] sm:$0xf]
        %v4007 = vld [vmem:[%s4005 + $0x4] sm:$0xf]
        %v4008 = vld [vmem:[%s4005 + $0x8] sm:$0xf]
        %v4009 = vld [vmem:[%s4005 + $0xc] sm:$0xf]
        %v4014 = vunpack.c.l.b16 %v4006
        %v4015 = vunpack.c.l.b16 %v4007
        %v4016 = vunpack.c.l.b16 %v4008
        %v4017 = vunpack.c.l.b16 %v4009
        %v4018 = vpack.c.b16 %v4015, %v4014
        %v4019 = vpack.c.b16 %v4017, %v4016
        %4022 = vmatprep.subr.bf16.mxu0 0
        %4023 = vmatpush1.bf16.msra.mxu0 %v4018
        %4024 = vmatprep.subr.bf16.mxu0 0
        %4025 = vmatpush1.bf16.msra.mxu0 %v4019
        %4026 = vmatprep.subr.bf16.mxu0 0
        %4027 = vmatpush1.bf16.msra.mxu0 0
        %4028 = vmatprep.subr.bf16.mxu0 0
        %4029 = vmatpush1.bf16.msra.mxu0 0
        %4030 = vmatprep.subr.bf16.mxu0 0
        %4031 = vmatpush1.bf16.msra.mxu0 0
        %4032 = vmatprep.subr.bf16.mxu0 0
        %4033 = vmatpush1.bf16.msra.mxu0 0
        %4034 = vmatprep.subr.bf16.mxu0 0
        %4035 = vmatpush1.bf16.msra.mxu0 0
        %4036 = vmatprep.subr.bf16.mxu0 0
        %4037 = vmatpush1.bf16.msra.mxu0 0
        %4038 = vmatprep.subr.bf16.mxu0 0
        %4039 = vmatpush1.bf16.msra.mxu0 0
        %4040 = vmatprep.subr.bf16.mxu0 0
        %4041 = vmatpush1.bf16.msra.mxu0 0
        %4042 = vmatprep.subr.bf16.mxu0 0
        %4043 = vmatpush1.bf16.msra.mxu0 0
        %4044 = vmatprep.subr.bf16.mxu0 0
        %4045 = vmatpush1.bf16.msra.mxu0 0
        %4046 = vmatprep.subr.bf16.mxu0 0
        %4047 = vmatpush1.bf16.msra.mxu0 0
        %4048 = vmatprep.subr.bf16.mxu0 0
        %4049 = vmatpush1.bf16.msra.mxu0 0
        %4050 = vmatprep.subr.bf16.mxu0 0
        %4051 = vmatpush1.bf16.msra.mxu0 0
        %4052 = vmatprep.subr.bf16.mxu0 0
        %4053 = vmatpush1.bf16.msra.mxu0 0
        %4054 = vmatprep.mubr.bf16.mxu0 0
        %4055 = vmatmul.mubr.bf16.gmra.mrb[0].mxu0 %v3869
        %v4056 = vpop.f32.mrb[0].mxu0
        %v4057 = vadd.f32 0.0, %v4056
        %v4058 = vpop.f32.mrb[0].mxu0
        %v4059 = vpop.f32.mrb[0].mxu0
        %v4060 = vadd.f32 0.0, %v4059
        %v4061 = vpop.f32.mrb[0].mxu0
        %4062 = vmatprep.mubr.bf16.mxu0 0
        %4063 = vmatmul.mubr.bf16.gmra.mrb[0].mxu0 %v3872
        %v4064 = vpop.f32.mrb[0].mxu0
        %v4065 = vadd.f32 0.0, %v4064
        %v4066 = vpop.f32.mrb[0].mxu0
        %v4067 = vpop.f32.mrb[0].mxu0
        %v4068 = vadd.f32 0.0, %v4067
        %v4069 = vpop.f32.mrb[0].mxu0
        %4070 = vmatprep.mubr.bf16.mxu0 0
        %4071 = vmatmul.mubr.bf16.gmra.mrb[0].mxu0 %v3875
        %v4072 = vpop.f32.mrb[0].mxu0
        %v4073 = vadd.f32 0.0, %v4072
        %v4074 = vpop.f32.mrb[0].mxu0
        %v4075 = vpop.f32.mrb[0].mxu0
        %v4076 = vadd.f32 0.0, %v4075
        %v4077 = vpop.f32.mrb[0].mxu0
        %4078 = vmatprep.mubr.bf16.mxu0 0
        %4079 = vmatmul.mubr.bf16.gmra.mrb[0].mxu0 %v3878
        %v4080 = vpop.f32.mrb[0].mxu0
        %v4081 = vadd.f32 0.0, %v4080
        %v4082 = vpop.f32.mrb[0].mxu0
        %v4083 = vpop.f32.mrb[0].mxu0
        %v4084 = vadd.f32 0.0, %v4083
        %v4085 = vpop.f32.mrb[0].mxu0
        %4086 = vmatprep.mubr.bf16.mxu0 0
        %4087 = vmatmul.mubr.bf16.gmra.mrb[0].mxu0 %v3881
        %v4088 = vpop.f32.mrb[0].mxu0
        %v4089 = vadd.f32 0.0, %v4088
        %v4090 = vpop.f32.mrb[0].mxu0
        %v4091 = vpop.f32.mrb[0].mxu0
        %v4092 = vadd.f32 0.0, %v4091
        %v4093 = vpop.f32.mrb[0].mxu0
        %4094 = vmatprep.mubr.bf16.mxu0 0
        %4095 = vmatmul.mubr.bf16.gmra.mrb[0].mxu0 %v3884
        %v4096 = vpop.f32.mrb[0].mxu0
        %v4097 = vadd.f32 0.0, %v4096
        %v4098 = vpop.f32.mrb[0].mxu0
        %v4099 = vpop.f32.mrb[0].mxu0
        %v4100 = vadd.f32 0.0, %v4099
        %v4101 = vpop.f32.mrb[0].mxu0
        %4102 = vmatprep.mubr.bf16.mxu0 0
        %4103 = vmatmul.mubr.bf16.gmra.mrb[0].mxu0 %v3887
        %v4104 = vpop.f32.mrb[0].mxu0
        %v4105 = vadd.f32 0.0, %v4104
        %v4106 = vpop.f32.mrb[0].mxu0
        %v4107 = vpop.f32.mrb[0].mxu0
        %v4108 = vadd.f32 0.0, %v4107
        %v4109 = vpop.f32.mrb[0].mxu0
        %4110 = vmatprep.mubr.bf16.mxu0 0
        %4111 = vmatmul.mubr.bf16.gmra.mrb[0].mxu0 %v3890
        %v4112 = vpop.f32.mrb[0].mxu0
        %v4113 = vadd.f32 0.0, %v4112
        %v4114 = vpop.f32.mrb[0].mxu0
        %v4115 = vpop.f32.mrb[0].mxu0
        %v4116 = vadd.f32 0.0, %v4115
        %v4117 = vpop.f32.mrb[0].mxu0
        %4118 = vdwg.mxu0
        %v4119 = vadd.f32 %v3765, %v4057
        %v4120 = vadd.f32 %v3768, %v4060
        %v4121 = vadd.f32 %v3773, %v4065
        %v4122 = vadd.f32 %v3776, %v4068
        %v4123 = vadd.f32 %v3781, %v4073
        %v4124 = vadd.f32 %v3784, %v4076
        %v4125 = vadd.f32 %v3789, %v4081
        %v4126 = vadd.f32 %v3792, %v4084
        %v4127 = vadd.f32 %v3797, %v4089
        %v4128 = vadd.f32 %v3800, %v4092
        %v4129 = vadd.f32 %v3805, %v4097
        %v4130 = vadd.f32 %v3808, %v4100
        %v4131 = vadd.f32 %v3813, %v4105
        %v4132 = vadd.f32 %v3816, %v4108
        %v4133 = vadd.f32 %v3821, %v4113
        %v4134 = vadd.f32 %v3824, %v4116
        %v4135 = vld [vmem:[%s4 + $0x2] sm:$0x1]
        %v4136 = vlaneseq
        %v4137 = vshrl.u32 %v4136, 7
        %v4138 = vsub.s32 0, %v4137
        %v4139 = vrot.slane %v4135, %v4138
        %v4140 = vadd.f32 %v3989, %v4139
        %v4141 = vadd.f32 %v3990, %v4139
        %v4142 = vadd.f32 %v3991, %v4139
        %v4143 = vadd.f32 %v3992, %v4139
        %v4144 = vadd.f32 %v3993, %v4139
        %v4145 = vadd.f32 %v3994, %v4139
        %v4146 = vadd.f32 %v3995, %v4139
        %v4147 = vadd.f32 %v3996, %v4139
        %v4148 = vadd.f32 %v3997, %v4139
        %v4149 = vadd.f32 %v3998, %v4139
        %v4150 = vadd.f32 %v3999, %v4139
        %v4151 = vadd.f32 %v4000, %v4139
        %v4152 = vadd.f32 %v4001, %v4139
        %v4153 = vadd.f32 %v4002, %v4139
        %v4154 = vadd.f32 %v4003, %v4139
        %v4155 = vadd.f32 %v4004, %v4139
        %v4156 = vld [vmem:[%s5 + $0x2] sm:$0x1]
        %v4157 = vlaneseq
        %v4158 = vshrl.u32 %v4157, 7
        %v4159 = vsub.s32 0, %v4158
        %v4160 = vrot.slane %v4156, %v4159
        %v4161 = vadd.f32 %v4119, %v4160
        %v4162 = vadd.f32 %v4120, %v4160
        %v4163 = vadd.f32 %v4121, %v4160
        %v4164 = vadd.f32 %v4122, %v4160
        %v4165 = vadd.f32 %v4123, %v4160
        %v4166 = vadd.f32 %v4124, %v4160
        %v4167 = vadd.f32 %v4125, %v4160
        %v4168 = vadd.f32 %v4126, %v4160
        %v4169 = vadd.f32 %v4127, %v4160
        %v4170 = vadd.f32 %v4128, %v4160
        %v4171 = vadd.f32 %v4129, %v4160
        %v4172 = vadd.f32 %v4130, %v4160
        %v4173 = vadd.f32 %v4131, %v4160
        %v4174 = vadd.f32 %v4132, %v4160
        %v4175 = vadd.f32 %v4133, %v4160
        %v4176 = vadd.f32 %v4134, %v4160
        %v4177 = vxor.u32 %v4161, 2147483648
        %v4178 = vxor.u32 %v4162, 2147483648
        %v4179 = vxor.u32 %v4163, 2147483648
        %v4180 = vxor.u32 %v4164, 2147483648
        %v4181 = vxor.u32 %v4165, 2147483648
        %v4182 = vxor.u32 %v4166, 2147483648
        %v4183 = vxor.u32 %v4167, 2147483648
        %v4184 = vxor.u32 %v4168, 2147483648
        %v4185 = vxor.u32 %v4169, 2147483648
        %v4186 = vxor.u32 %v4170, 2147483648
        %v4187 = vxor.u32 %v4171, 2147483648
        %v4188 = vxor.u32 %v4172, 2147483648
        %v4189 = vxor.u32 %v4173, 2147483648
        %v4190 = vxor.u32 %v4174, 2147483648
        %v4191 = vxor.u32 %v4175, 2147483648
        %v4192 = vxor.u32 %v4176, 2147483648
        %v4193 = vmul.f32 %v4177, 1.442695
        %v4194 = vpow.pop %v4193
        %v4195 = vmul.f32 %v4178, 1.442695
        %v4196 = vpow.pop %v4195
        %v4197 = vmul.f32 %v4179, 1.442695
        %v4198 = vpow.pop %v4197
        %v4199 = vmul.f32 %v4180, 1.442695
        %v4200 = vpow.pop %v4199
        %v4201 = vmul.f32 %v4181, 1.442695
        %v4202 = vpow.pop %v4201
        %v4203 = vmul.f32 %v4182, 1.442695
        %v4204 = vpow.pop %v4203
        %v4205 = vmul.f32 %v4183, 1.442695
        %v4206 = vpow.pop %v4205
        %v4207 = vmul.f32 %v4184, 1.442695
        %v4208 = vpow.pop %v4207
        %v4209 = vmul.f32 %v4185, 1.442695
        %v4210 = vpow.pop %v4209
        %v4211 = vmul.f32 %v4186, 1.442695
        %v4212 = vpow.pop %v4211
        %v4213 = vmul.f32 %v4187, 1.442695
        %v4214 = vpow.pop %v4213
        %v4215 = vmul.f32 %v4188, 1.442695
        %v4216 = vpow.pop %v4215
        %v4217 = vmul.f32 %v4189, 1.442695
        %v4218 = vpow.pop %v4217
        %v4219 = vmul.f32 %v4190, 1.442695
        %v4220 = vpow.pop %v4219
        %v4221 = vmul.f32 %v4191, 1.442695
        %v4222 = vpow.pop %v4221
        %v4223 = vmul.f32 %v4192, 1.442695
        %v4224 = vpow.pop %v4223
        %v4225 = vadd.f32 %v4194, 1.0
        %v4226 = vadd.f32 %v4196, 1.0
        %v4227 = vadd.f32 %v4198, 1.0
        %v4228 = vadd.f32 %v4200, 1.0
        %v4229 = vadd.f32 %v4202, 1.0
        %v4230 = vadd.f32 %v4204, 1.0
        %v4231 = vadd.f32 %v4206, 1.0
        %v4232 = vadd.f32 %v4208, 1.0
        %v4233 = vadd.f32 %v4210, 1.0
        %v4234 = vadd.f32 %v4212, 1.0
        %v4235 = vadd.f32 %v4214, 1.0
        %v4236 = vadd.f32 %v4216, 1.0
        %v4237 = vadd.f32 %v4218, 1.0
        %v4238 = vadd.f32 %v4220, 1.0
        %v4239 = vadd.f32 %v4222, 1.0
        %v4240 = vadd.f32 %v4224, 1.0
        %v4241 = vrcp.pop %v4225
        %v4242 = vmul.f32 1.0, %v4241
        %v4243 = vrcp.pop %v4226
        %v4244 = vmul.f32 1.0, %v4243
        %v4245 = vrcp.pop %v4227
        %v4246 = vmul.f32 1.0, %v4245
        %v4247 = vrcp.pop %v4228
        %v4248 = vmul.f32 1.0, %v4247
        %v4249 = vrcp.pop %v4229
        %v4250 = vmul.f32 1.0, %v4249
        %v4251 = vrcp.pop %v4230
        %v4252 = vmul.f32 1.0, %v4251
        %v4253 = vrcp.pop %v4231
        %v4254 = vmul.f32 1.0, %v4253
        %v4255 = vrcp.pop %v4232
        %v4256 = vmul.f32 1.0, %v4255
        %v4257 = vrcp.pop %v4233
        %v4258 = vmul.f32 1.0, %v4257
        %v4259 = vrcp.pop %v4234
        %v4260 = vmul.f32 1.0, %v4259
        %v4261 = vrcp.pop %v4235
        %v4262 = vmul.f32 1.0, %v4261
        %v4263 = vrcp.pop %v4236
        %v4264 = vmul.f32 1.0, %v4263
        %v4265 = vrcp.pop %v4237
        %v4266 = vmul.f32 1.0, %v4265
        %v4267 = vrcp.pop %v4238
        %v4268 = vmul.f32 1.0, %v4267
        %v4269 = vrcp.pop %v4239
        %v4270 = vmul.f32 1.0, %v4269
        %v4271 = vrcp.pop %v4240
        %v4272 = vmul.f32 1.0, %v4271
        %v4273 = vmul.f32 %v4140, %v4242
        %v4274 = vmul.f32 %v4141, %v4244
        %v4275 = vmul.f32 %v4142, %v4246
        %v4276 = vmul.f32 %v4143, %v4248
        %v4277 = vmul.f32 %v4144, %v4250
        %v4278 = vmul.f32 %v4145, %v4252
        %v4279 = vmul.f32 %v4146, %v4254
        %v4280 = vmul.f32 %v4147, %v4256
        %v4281 = vmul.f32 %v4148, %v4258
        %v4282 = vmul.f32 %v4149, %v4260
        %v4283 = vmul.f32 %v4150, %v4262
        %v4284 = vmul.f32 %v4151, %v4264
        %v4285 = vmul.f32 %v4152, %v4266
        %v4286 = vmul.f32 %v4153, %v4268
        %v4287 = vmul.f32 %v4154, %v4270
        %v4288 = vmul.f32 %v4155, %v4272
        %v4289 = vsel %vm615, %v4273, 0.0
        %4290 = vadd.xlane.f32.xlu0 %v4289
        %v4291 = vpop.xlane.xlu0 %4290
        %v4292 = vsel %vm615, %v4274, 0.0
        %4293 = vadd.xlane.f32.xlu0 %v4292
        %v4294 = vpop.xlane.xlu0 %4293
        %v4295 = vsel %vm615, %v4275, 0.0
        %4296 = vadd.xlane.f32.xlu0 %v4295
        %v4297 = vpop.xlane.xlu0 %4296
        %v4298 = vsel %vm615, %v4276, 0.0
        %4299 = vadd.xlane.f32.xlu0 %v4298
        %v4300 = vpop.xlane.xlu0 %4299
        %v4301 = vsel %vm615, %v4277, 0.0
        %4302 = vadd.xlane.f32.xlu0 %v4301
        %v4303 = vpop.xlane.xlu0 %4302
        %v4304 = vsel %vm615, %v4278, 0.0
        %4305 = vadd.xlane.f32.xlu0 %v4304
        %v4306 = vpop.xlane.xlu0 %4305
        %v4307 = vsel %vm615, %v4279, 0.0
        %4308 = vadd.xlane.f32.xlu0 %v4307
        %v4309 = vpop.xlane.xlu0 %4308
        %v4310 = vsel %vm615, %v4280, 0.0
        %4311 = vadd.xlane.f32.xlu0 %v4310
        %v4312 = vpop.xlane.xlu0 %4311
        %v4313 = vsel %vm615, %v4281, 0.0
        %4314 = vadd.xlane.f32.xlu0 %v4313
        %v4315 = vpop.xlane.xlu0 %4314
        %v4316 = vsel %vm615, %v4282, 0.0
        %4317 = vadd.xlane.f32.xlu0 %v4316
        %v4318 = vpop.xlane.xlu0 %4317
        %v4319 = vsel %vm615, %v4283, 0.0
        %4320 = vadd.xlane.f32.xlu0 %v4319
        %v4321 = vpop.xlane.xlu0 %4320
        %v4322 = vsel %vm615, %v4284, 0.0
        %4323 = vadd.xlane.f32.xlu0 %v4322
        %v4324 = vpop.xlane.xlu0 %4323
        %v4325 = vsel %vm615, %v4285, 0.0
        %4326 = vadd.xlane.f32.xlu0 %v4325
        %v4327 = vpop.xlane.xlu0 %4326
        %v4328 = vsel %vm615, %v4286, 0.0
        %4329 = vadd.xlane.f32.xlu0 %v4328
        %v4330 = vpop.xlane.xlu0 %4329
        %v4331 = vsel %vm615, %v4287, 0.0
        %4332 = vadd.xlane.f32.xlu0 %v4331
        %v4333 = vpop.xlane.xlu0 %4332
        %v4334 = vsel %vm615, %v4288, 0.0
        %4335 = vadd.xlane.f32.xlu0 %v4334
        %v4336 = vpop.xlane.xlu0 %4335
        %v4337 = vmul.f32 %v4291, %v1708
        %v4338 = vmul.f32 %v4294, %v1708
        %v4339 = vmul.f32 %v4297, %v1708
        %v4340 = vmul.f32 %v4300, %v1708
        %v4341 = vmul.f32 %v4303, %v1708
        %v4342 = vmul.f32 %v4306, %v1708
        %v4343 = vmul.f32 %v4309, %v1708
        %v4344 = vmul.f32 %v4312, %v1708
        %v4345 = vmul.f32 %v4315, %v1708
        %v4346 = vmul.f32 %v4318, %v1708
        %v4347 = vmul.f32 %v4321, %v1708
        %v4348 = vmul.f32 %v4324, %v1708
        %v4349 = vmul.f32 %v4327, %v1708
        %v4350 = vmul.f32 %v4330, %v1708
        %v4351 = vmul.f32 %v4333, %v1708
        %v4352 = vmul.f32 %v4336, %v1708
        %v4353 = vsub.f32 %v4273, %v4337
        %v4354 = vsub.f32 %v4274, %v4338
        %v4355 = vsub.f32 %v4275, %v4339
        %v4356 = vsub.f32 %v4276, %v4340
        %v4357 = vsub.f32 %v4277, %v4341
        %v4358 = vsub.f32 %v4278, %v4342
        %v4359 = vsub.f32 %v4279, %v4343
        %v4360 = vsub.f32 %v4280, %v4344
        %v4361 = vsub.f32 %v4281, %v4345
        %v4362 = vsub.f32 %v4282, %v4346
        %v4363 = vsub.f32 %v4283, %v4347
        %v4364 = vsub.f32 %v4284, %v4348
        %v4365 = vsub.f32 %v4285, %v4349
        %v4366 = vsub.f32 %v4286, %v4350
        %v4367 = vsub.f32 %v4287, %v4351
        %v4368 = vsub.f32 %v4288, %v4352
        %v4369 = vmul.f32 %v4353, %v4353
        %v4370 = vmul.f32 %v4354, %v4354
        %v4371 = vmul.f32 %v4355, %v4355
        %v4372 = vmul.f32 %v4356, %v4356
        %v4373 = vmul.f32 %v4357, %v4357
        %v4374 = vmul.f32 %v4358, %v4358
        %v4375 = vmul.f32 %v4359, %v4359
        %v4376 = vmul.f32 %v4360, %v4360
        %v4377 = vmul.f32 %v4361, %v4361
        %v4378 = vmul.f32 %v4362, %v4362
        %v4379 = vmul.f32 %v4363, %v4363
        %v4380 = vmul.f32 %v4364, %v4364
        %v4381 = vmul.f32 %v4365, %v4365
        %v4382 = vmul.f32 %v4366, %v4366
        %v4383 = vmul.f32 %v4367, %v4367
        %v4384 = vmul.f32 %v4368, %v4368
        %v4385 = vsel %vm615, %v4369, 0.0
        %4386 = vadd.xlane.f32.xlu0 %v4385
        %v4387 = vpop.xlane.xlu0 %4386
        %v4388 = vsel %vm615, %v4370, 0.0
        %4389 = vadd.xlane.f32.xlu0 %v4388
        %v4390 = vpop.xlane.xlu0 %4389
        %v4391 = vsel %vm615, %v4371, 0.0
        %4392 = vadd.xlane.f32.xlu0 %v4391
        %v4393 = vpop.xlane.xlu0 %4392
        %v4394 = vsel %vm615, %v4372, 0.0
        %4395 = vadd.xlane.f32.xlu0 %v4394
        %v4396 = vpop.xlane.xlu0 %4395
        %v4397 = vsel %vm615, %v4373, 0.0
        %4398 = vadd.xlane.f32.xlu0 %v4397
        %v4399 = vpop.xlane.xlu0 %4398
        %v4400 = vsel %vm615, %v4374, 0.0
        %4401 = vadd.xlane.f32.xlu0 %v4400
        %v4402 = vpop.xlane.xlu0 %4401
        %v4403 = vsel %vm615, %v4375, 0.0
        %4404 = vadd.xlane.f32.xlu0 %v4403
        %v4405 = vpop.xlane.xlu0 %4404
        %v4406 = vsel %vm615, %v4376, 0.0
        %4407 = vadd.xlane.f32.xlu0 %v4406
        %v4408 = vpop.xlane.xlu0 %4407
        %v4409 = vsel %vm615, %v4377, 0.0
        %4410 = vadd.xlane.f32.xlu0 %v4409
        %v4411 = vpop.xlane.xlu0 %4410
        %v4412 = vsel %vm615, %v4378, 0.0
        %4413 = vadd.xlane.f32.xlu0 %v4412
        %v4414 = vpop.xlane.xlu0 %4413
        %v4415 = vsel %vm615, %v4379, 0.0
        %4416 = vadd.xlane.f32.xlu0 %v4415
        %v4417 = vpop.xlane.xlu0 %4416
        %v4418 = vsel %vm615, %v4380, 0.0
        %4419 = vadd.xlane.f32.xlu0 %v4418
        %v4420 = vpop.xlane.xlu0 %4419
        %v4421 = vsel %vm615, %v4381, 0.0
        %4422 = vadd.xlane.f32.xlu0 %v4421
        %v4423 = vpop.xlane.xlu0 %4422
        %v4424 = vsel %vm615, %v4382, 0.0
        %4425 = vadd.xlane.f32.xlu0 %v4424
        %v4426 = vpop.xlane.xlu0 %4425
        %v4427 = vsel %vm615, %v4383, 0.0
        %4428 = vadd.xlane.f32.xlu0 %v4427
        %v4429 = vpop.xlane.xlu0 %4428
        %v4430 = vsel %vm615, %v4384, 0.0
        %4431 = vadd.xlane.f32.xlu0 %v4430
        %v4432 = vpop.xlane.xlu0 %4431
        %v4433 = vmul.f32 %v4387, %v1708
        %v4434 = vmul.f32 %v4390, %v1708
        %v4435 = vmul.f32 %v4393, %v1708
        %v4436 = vmul.f32 %v4396, %v1708
        %v4437 = vmul.f32 %v4399, %v1708
        %v4438 = vmul.f32 %v4402, %v1708
        %v4439 = vmul.f32 %v4405, %v1708
        %v4440 = vmul.f32 %v4408, %v1708
        %v4441 = vmul.f32 %v4411, %v1708
        %v4442 = vmul.f32 %v4414, %v1708
        %v4443 = vmul.f32 %v4417, %v1708
        %v4444 = vmul.f32 %v4420, %v1708
        %v4445 = vmul.f32 %v4423, %v1708
        %v4446 = vmul.f32 %v4426, %v1708
        %v4447 = vmul.f32 %v4429, %v1708
        %v4448 = vmul.f32 %v4432, %v1708
        %v4449 = vadd.f32 %v4433, 1e-05
        %v4450 = vadd.f32 %v4434, 1e-05
        %v4451 = vadd.f32 %v4435, 1e-05
        %v4452 = vadd.f32 %v4436, 1e-05
        %v4453 = vadd.f32 %v4437, 1e-05
        %v4454 = vadd.f32 %v4438, 1e-05
        %v4455 = vadd.f32 %v4439, 1e-05
        %v4456 = vadd.f32 %v4440, 1e-05
        %v4457 = vadd.f32 %v4441, 1e-05
        %v4458 = vadd.f32 %v4442, 1e-05
        %v4459 = vadd.f32 %v4443, 1e-05
        %v4460 = vadd.f32 %v4444, 1e-05
        %v4461 = vadd.f32 %v4445, 1e-05
        %v4462 = vadd.f32 %v4446, 1e-05
        %v4463 = vadd.f32 %v4447, 1e-05
        %v4464 = vadd.f32 %v4448, 1e-05
        %v4465 = vrsqrt.pop %v4449
        %v4466 = vrsqrt.pop %v4450
        %v4467 = vrsqrt.pop %v4451
        %v4468 = vrsqrt.pop %v4452
        %v4469 = vrsqrt.pop %v4453
        %v4470 = vrsqrt.pop %v4454
        %v4471 = vrsqrt.pop %v4455
        %v4472 = vrsqrt.pop %v4456
        %v4473 = vrsqrt.pop %v4457
        %v4474 = vrsqrt.pop %v4458
        %v4475 = vrsqrt.pop %v4459
        %v4476 = vrsqrt.pop %v4460
        %v4477 = vrsqrt.pop %v4461
        %v4478 = vrsqrt.pop %v4462
        %v4479 = vrsqrt.pop %v4463
        %v4480 = vrsqrt.pop %v4464
        %v4481 = vmul.f32 %v4353, %v4465
        %v4482 = vmul.f32 %v4354, %v4466
        %v4483 = vmul.f32 %v4355, %v4467
        %v4484 = vmul.f32 %v4356, %v4468
        %v4485 = vmul.f32 %v4357, %v4469
        %v4486 = vmul.f32 %v4358, %v4470
        %v4487 = vmul.f32 %v4359, %v4471
        %v4488 = vmul.f32 %v4360, %v4472
        %v4489 = vmul.f32 %v4361, %v4473
        %v4490 = vmul.f32 %v4362, %v4474
        %v4491 = vmul.f32 %v4363, %v4475
        %v4492 = vmul.f32 %v4364, %v4476
        %v4493 = vmul.f32 %v4365, %v4477
        %v4494 = vmul.f32 %v4366, %v4478
        %v4495 = vmul.f32 %v4367, %v4479
        %v4496 = vmul.f32 %v4368, %v4480
        %v4497 = vld [vmem:[%s6 + $0x2] sm:$0x1]
        %v4498 = vlaneseq
        %v4499 = vshrl.u32 %v4498, 7
        %v4500 = vsub.s32 0, %v4499
        %v4501 = vrot.slane %v4497, %v4500
        %v4502 = vmul.f32 %v4481, %v4501
        %v4503 = vmul.f32 %v4482, %v4501
        %v4504 = vmul.f32 %v4483, %v4501
        %v4505 = vmul.f32 %v4484, %v4501
        %v4506 = vmul.f32 %v4485, %v4501
        %v4507 = vmul.f32 %v4486, %v4501
        %v4508 = vmul.f32 %v4487, %v4501
        %v4509 = vmul.f32 %v4488, %v4501
        %v4510 = vmul.f32 %v4489, %v4501
        %v4511 = vmul.f32 %v4490, %v4501
        %v4512 = vmul.f32 %v4491, %v4501
        %v4513 = vmul.f32 %v4492, %v4501
        %v4514 = vmul.f32 %v4493, %v4501
        %v4515 = vmul.f32 %v4494, %v4501
        %v4516 = vmul.f32 %v4495, %v4501
        %v4517 = vmul.f32 %v4496, %v4501
        %v4518 = vld [vmem:[%s7 + $0x2] sm:$0x1]
        %v4519 = vlaneseq
        %v4520 = vshrl.u32 %v4519, 7
        %v4521 = vsub.s32 0, %v4520
        %v4522 = vrot.slane %v4518, %v4521
        %v4523 = vadd.f32 %v4502, %v4522
        %v4524 = vadd.f32 %v4503, %v4522
        %v4525 = vadd.f32 %v4504, %v4522
        %v4526 = vadd.f32 %v4505, %v4522
        %v4527 = vadd.f32 %v4506, %v4522
        %v4528 = vadd.f32 %v4507, %v4522
        %v4529 = vadd.f32 %v4508, %v4522
        %v4530 = vadd.f32 %v4509, %v4522
        %v4531 = vadd.f32 %v4510, %v4522
        %v4532 = vadd.f32 %v4511, %v4522
        %v4533 = vadd.f32 %v4512, %v4522
        %v4534 = vadd.f32 %v4513, %v4522
        %v4535 = vadd.f32 %v4514, %v4522
        %v4536 = vadd.f32 %v4515, %v4522
        %v4537 = vadd.f32 %v4516, %v4522
        %v4538 = vadd.f32 %v4517, %v4522
        %s4539 = sld [smem:[#allocation3 + $0x2]]
        %v4540 = vstv %s4539
        %v4541 = vmul.f32 %v4540, %v4523
        %v4542 = vmul.f32 %v4540, %v4524
        %v4543 = vmul.f32 %v4540, %v4525
        %v4544 = vmul.f32 %v4540, %v4526
        %v4545 = vmul.f32 %v4540, %v4527
        %v4546 = vmul.f32 %v4540, %v4528
        %v4547 = vmul.f32 %v4540, %v4529
        %v4548 = vmul.f32 %v4540, %v4530
        %v4549 = vmul.f32 %v4540, %v4531
        %v4550 = vmul.f32 %v4540, %v4532
        %v4551 = vmul.f32 %v4540, %v4533
        %v4552 = vmul.f32 %v4540, %v4534
        %v4553 = vmul.f32 %v4540, %v4535
        %v4554 = vmul.f32 %v4540, %v4536
        %v4555 = vmul.f32 %v4540, %v4537
        %v4556 = vmul.f32 %v4540, %v4538
        %v4557 = vadd.f32 %v3243, %v4541
        %v4558 = vadd.f32 %v3244, %v4542
        %v4559 = vadd.f32 %v3245, %v4543
        %v4560 = vadd.f32 %v3246, %v4544
        %v4561 = vadd.f32 %v3247, %v4545
        %v4562 = vadd.f32 %v3248, %v4546
        %v4563 = vadd.f32 %v3249, %v4547
        %v4564 = vadd.f32 %v3250, %v4548
        %v4565 = vadd.f32 %v3251, %v4549
        %v4566 = vadd.f32 %v3252, %v4550
        %v4567 = vadd.f32 %v3253, %v4551
        %v4568 = vadd.f32 %v3254, %v4552
        %v4569 = vadd.f32 %v3255, %v4553
        %v4570 = vadd.f32 %v3256, %v4554
        %v4571 = vadd.f32 %v3257, %v4555
        %v4572 = vadd.f32 %v3258, %v4556
        %4573 = vst.msk [vmem:[#allocation2 + $0x8] sm:$0xff] %vm615, %v4557
        %4574 = vst.msk [vmem:[#allocation2 + $0x10] sm:$0xff] %vm615, %v4558
        %4575 = vst.msk [vmem:[#allocation2 + $0x28] sm:$0xff] %vm615, %v4559
        %4576 = vst.msk [vmem:[#allocation2 + $0x30] sm:$0xff] %vm615, %v4560
        %4577 = vst.msk [vmem:[#allocation2 + $0x48] sm:$0xff] %vm615, %v4561
        %4578 = vst.msk [vmem:[#allocation2 + $0x50] sm:$0xff] %vm615, %v4562
        %4579 = vst.msk [vmem:[#allocation2 + $0x68] sm:$0xff] %vm615, %v4563
        %4580 = vst.msk [vmem:[#allocation2 + $0x70] sm:$0xff] %vm615, %v4564
        %4581 = vst.msk [vmem:[#allocation2 + $0x88] sm:$0xff] %vm615, %v4565
        %4582 = vst.msk [vmem:[#allocation2 + $0x90] sm:$0xff] %vm615, %v4566
        %4583 = vst.msk [vmem:[#allocation2 + $0xa8] sm:$0xff] %vm615, %v4567
        %4584 = vst.msk [vmem:[#allocation2 + $0xb0] sm:$0xff] %vm615, %v4568
        %4585 = vst.msk [vmem:[#allocation2 + $0xc8] sm:$0xff] %vm615, %v4569
        %4586 = vst.msk [vmem:[#allocation2 + $0xd0] sm:$0xff] %vm615, %v4570
        %4587 = vst.msk [vmem:[#allocation2 + $0xe8] sm:$0xff] %vm615, %v4571
        %4588 = vst.msk [vmem:[#allocation2 + $0xf0] sm:$0xff] %vm615, %v4572
        %v4589 = vld [vmem:[#allocation2] sm:$0xff]
        %v4590 = vld [vmem:[#allocation2 + $0x8] sm:$0xff]
        %v4591 = vld [vmem:[#allocation2 + $0x20] sm:$0xff]
        %v4592 = vld [vmem:[#allocation2 + $0x28] sm:$0xff]
        %v4593 = vld [vmem:[#allocation2 + $0x40] sm:$0xff]
        %v4594 = vld [vmem:[#allocation2 + $0x48] sm:$0xff]
        %v4595 = vld [vmem:[#allocation2 + $0x60] sm:$0xff]
        %v4596 = vld [vmem:[#allocation2 + $0x68] sm:$0xff]
        %v4597 = vld [vmem:[#allocation2 + $0x80] sm:$0xff]
        %v4598 = vld [vmem:[#allocation2 + $0x88] sm:$0xff]
        %v4599 = vld [vmem:[#allocation2 + $0xa0] sm:$0xff]
        %v4600 = vld [vmem:[#allocation2 + $0xa8] sm:$0xff]
        %v4601 = vld [vmem:[#allocation2 + $0xc0] sm:$0xff]
        %v4602 = vld [vmem:[#allocation2 + $0xc8] sm:$0xff]
        %v4603 = vld [vmem:[#allocation2 + $0xe0] sm:$0xff]
        %v4604 = vld [vmem:[#allocation2 + $0xe8] sm:$0xff]
        %v4605 = vpack.c.bf16 %v4590, %v4589
        %v4606 = vpack.c.bf16 %v4592, %v4591
        %v4607 = vpack.c.bf16 %v4594, %v4593
        %v4608 = vpack.c.bf16 %v4596, %v4595
        %v4609 = vpack.c.bf16 %v4598, %v4597
        %v4610 = vpack.c.bf16 %v4600, %v4599
        %v4611 = vpack.c.bf16 %v4602, %v4601
        %v4612 = vpack.c.bf16 %v4604, %v4603
        %s4613 = scalar_lea.vmem %s2, 144
        %v4614 = vld [vmem:[%s4613] sm:$0xf]
        %v4615 = vld [vmem:[%s4613 + $0x4] sm:$0xf]
        %v4616 = vld [vmem:[%s4613 + $0x8] sm:$0xf]
        %v4617 = vld [vmem:[%s4613 + $0xc] sm:$0xf]
        %s4618 = scalar_lea.vmem %s3, 144
        %v4619 = vld [vmem:[%s4618] sm:$0xf]
        %v4620 = vld [vmem:[%s4618 + $0x4] sm:$0xf]
        %v4621 = vld [vmem:[%s4618 + $0x8] sm:$0xf]
        %v4622 = vld [vmem:[%s4618 + $0xc] sm:$0xf]
        %v4623 = vld [vmem:[#allocation2 + $0x10] sm:$0xff]
        %v4624 = vld [vmem:[#allocation2 + $0x30] sm:$0xff]
        %v4625 = vld [vmem:[#allocation2 + $0x50] sm:$0xff]
        %v4626 = vld [vmem:[#allocation2 + $0x70] sm:$0xff]
        %v4627 = vld [vmem:[#allocation2 + $0x90] sm:$0xff]
        %v4628 = vld [vmem:[#allocation2 + $0xb0] sm:$0xff]
        %v4629 = vld [vmem:[#allocation2 + $0xd0] sm:$0xff]
        %v4630 = vld [vmem:[#allocation2 + $0xf0] sm:$0xff]
        %v4631 = vpack.c.bf16 %v4623, %v4590
        %v4632 = vpack.c.bf16 %v4624, %v4592
        %v4633 = vpack.c.bf16 %v4625, %v4594
        %v4634 = vpack.c.bf16 %v4626, %v4596
        %v4635 = vpack.c.bf16 %v4627, %v4598
        %v4636 = vpack.c.bf16 %v4628, %v4600
        %v4637 = vpack.c.bf16 %v4629, %v4602
        %v4638 = vpack.c.bf16 %v4630, %v4604
        %s4639 = scalar_lea.vmem %s2, 160
        %v4640 = vld [vmem:[%s4639] sm:$0xf]
        %v4641 = vld [vmem:[%s4639 + $0x4] sm:$0xf]
        %v4642 = vld [vmem:[%s4639 + $0x8] sm:$0xf]
        %v4643 = vld [vmem:[%s4639 + $0xc] sm:$0xf]
        %v4648 = vunpack.c.l.b16 %v4640
        %v4649 = vunpack.c.l.b16 %v4641
        %v4650 = vunpack.c.l.b16 %v4642
        %v4651 = vunpack.c.l.b16 %v4643
        %v4652 = vpack.c.b16 %v4649, %v4648
        %v4653 = vpack.c.b16 %v4651, %v4650
        %v4657 = vsel %vm615, %v4631, 0
        %v4660 = vsel %vm615, %v4632, 0
        %v4663 = vsel %vm615, %v4633, 0
        %v4666 = vsel %vm615, %v4634, 0
        %v4669 = vsel %vm615, %v4635, 0
        %v4672 = vsel %vm615, %v4636, 0
        %v4675 = vsel %vm615, %v4637, 0
        %v4678 = vsel %vm615, %v4638, 0
        %4680 = vmatprep.subr.bf16.mxu0 0
        %4681 = vmatpush1.bf16.msra.mxu0 %v4652
        %4682 = vmatprep.subr.bf16.mxu0 0
        %4683 = vmatpush1.bf16.msra.mxu0 %v4653
        %4684 = vmatprep.subr.bf16.mxu0 0
        %4685 = vmatpush1.bf16.msra.mxu0 0
        %4686 = vmatprep.subr.bf16.mxu0 0
        %4687 = vmatpush1.bf16.msra.mxu0 0
        %4688 = vmatprep.subr.bf16.mxu0 0
        %4689 = vmatpush1.bf16.msra.mxu0 0
        %4690 = vmatprep.subr.bf16.mxu0 0
        %4691 = vmatpush1.bf16.msra.mxu0 0
        %4692 = vmatprep.subr.bf16.mxu0 0
        %4693 = vmatpush1.bf16.msra.mxu0 0
        %4694 = vmatprep.subr.bf16.mxu0 0
        %4695 = vmatpush1.bf16.msra.mxu0 0
        %4696 = vmatprep.subr.bf16.mxu0 0
        %4697 = vmatpush1.bf16.msra.mxu0 0
        %4698 = vmatprep.subr.bf16.mxu0 0
        %4699 = vmatpush1.bf16.msra.mxu0 0
        %4700 = vmatprep.subr.bf16.mxu0 0
        %4701 = vmatpush1.bf16.msra.mxu0 0
        %4702 = vmatprep.subr.bf16.mxu0 0
        %4703 = vmatpush1.bf16.msra.mxu0 0
        %4704 = vmatprep.subr.bf16.mxu0 0
        %4705 = vmatpush1.bf16.msra.mxu0 0
        %4706 = vmatprep.subr.bf16.mxu0 0
        %4707 = vmatpush1.bf16.msra.mxu0 0
        %4708 = vmatprep.subr.bf16.mxu0 0
        %4709 = vmatpush1.bf16.msra.mxu0 0
        %4710 = vmatprep.subr.bf16.mxu0 0
        %4711 = vmatpush1.bf16.msra.mxu0 0
        %4712 = vmatprep.mubr.bf16.mxu0 0
        %4713 = vmatmul.mubr.bf16.gmra.mrb[0].mxu0 %v4657
        %v4714 = vpop.f32.mrb[0].mxu0
        %v4715 = vadd.f32 0.0, %v4714
        %v4716 = vpop.f32.mrb[0].mxu0
        %v4717 = vpop.f32.mrb[0].mxu0
        %v4718 = vadd.f32 0.0, %v4717
        %v4719 = vpop.f32.mrb[0].mxu0
        %4720 = vmatprep.mubr.bf16.mxu0 0
        %4721 = vmatmul.mubr.bf16.gmra.mrb[0].mxu0 %v4660
        %v4722 = vpop.f32.mrb[0].mxu0
        %v4723 = vadd.f32 0.0, %v4722
        %v4724 = vpop.f32.mrb[0].mxu0
        %v4725 = vpop.f32.mrb[0].mxu0
        %v4726 = vadd.f32 0.0, %v4725
        %v4727 = vpop.f32.mrb[0].mxu0
        %4728 = vmatprep.mubr.bf16.mxu0 0
        %4729 = vmatmul.mubr.bf16.gmra.mrb[0].mxu0 %v4663
        %v4730 = vpop.f32.mrb[0].mxu0
        %v4731 = vadd.f32 0.0, %v4730
        %v4732 = vpop.f32.mrb[0].mxu0
        %v4733 = vpop.f32.mrb[0].mxu0
        %v4734 = vadd.f32 0.0, %v4733
        %v4735 = vpop.f32.mrb[0].mxu0
        %4736 = vmatprep.mubr.bf16.mxu0 0
        %4737 = vmatmul.mubr.bf16.gmra.mrb[0].mxu0 %v4666
        %v4738 = vpop.f32.mrb[0].mxu0
        %v4739 = vadd.f32 0.0, %v4738
        %v4740 = vpop.f32.mrb[0].mxu0
        %v4741 = vpop.f32.mrb[0].mxu0
        %v4742 = vadd.f32 0.0, %v4741
        %v4743 = vpop.f32.mrb[0].mxu0
        %4744 = vmatprep.mubr.bf16.mxu0 0
        %4745 = vmatmul.mubr.bf16.gmra.mrb[0].mxu0 %v4669
        %v4746 = vpop.f32.mrb[0].mxu0
        %v4747 = vadd.f32 0.0, %v4746
        %v4748 = vpop.f32.mrb[0].mxu0
        %v4749 = vpop.f32.mrb[0].mxu0
        %v4750 = vadd.f32 0.0, %v4749
        %v4751 = vpop.f32.mrb[0].mxu0
        %4752 = vmatprep.mubr.bf16.mxu0 0
        %4753 = vmatmul.mubr.bf16.gmra.mrb[0].mxu0 %v4672
        %v4754 = vpop.f32.mrb[0].mxu0
        %v4755 = vadd.f32 0.0, %v4754
        %v4756 = vpop.f32.mrb[0].mxu0
        %v4757 = vpop.f32.mrb[0].mxu0
        %v4758 = vadd.f32 0.0, %v4757
        %v4759 = vpop.f32.mrb[0].mxu0
        %4760 = vmatprep.mubr.bf16.mxu0 0
        %4761 = vmatmul.mubr.bf16.gmra.mrb[0].mxu0 %v4675
        %v4762 = vpop.f32.mrb[0].mxu0
        %v4763 = vadd.f32 0.0, %v4762
        %v4764 = vpop.f32.mrb[0].mxu0
        %v4765 = vpop.f32.mrb[0].mxu0
        %v4766 = vadd.f32 0.0, %v4765
        %v4767 = vpop.f32.mrb[0].mxu0
        %4768 = vmatprep.mubr.bf16.mxu0 0
        %4769 = vmatmul.mubr.bf16.gmra.mrb[0].mxu0 %v4678
        %v4770 = vpop.f32.mrb[0].mxu0
        %v4771 = vadd.f32 0.0, %v4770
        %v4772 = vpop.f32.mrb[0].mxu0
        %v4773 = vpop.f32.mrb[0].mxu0
        %v4774 = vadd.f32 0.0, %v4773
        %v4775 = vpop.f32.mrb[0].mxu0
        %4776 = vdwg.mxu0
        %v4781 = vunpack.c.l.b16 %v4614
        %v4782 = vunpack.c.l.b16 %v4615
        %v4783 = vunpack.c.l.b16 %v4616
        %v4784 = vunpack.c.l.b16 %v4617
        %v4785 = vpack.c.b16 %v4782, %v4781
        %v4786 = vpack.c.b16 %v4784, %v4783
        %v4790 = vsel %vm615, %v4605, 0
        %v4793 = vsel %vm615, %v4606, 0
        %v4796 = vsel %vm615, %v4607, 0
        %v4799 = vsel %vm615, %v4608, 0
        %v4802 = vsel %vm615, %v4609, 0
        %v4805 = vsel %vm615, %v4610, 0
        %v4808 = vsel %vm615, %v4611, 0
        %v4811 = vsel %vm615, %v4612, 0
        %4813 = vmatprep.subr.bf16.mxu0 0
        %4814 = vmatpush1.bf16.msra.mxu0 %v4785
        %4815 = vmatprep.subr.bf16.mxu0 0
        %4816 = vmatpush1.bf16.msra.mxu0 %v4786
        %4817 = vmatprep.subr.bf16.mxu0 0
        %4818 = vmatpush1.bf16.msra.mxu0 0
        %4819 = vmatprep.subr.bf16.mxu0 0
        %4820 = vmatpush1.bf16.msra.mxu0 0
        %4821 = vmatprep.subr.bf16.mxu0 0
        %4822 = vmatpush1.bf16.msra.mxu0 0
        %4823 = vmatprep.subr.bf16.mxu0 0
        %4824 = vmatpush1.bf16.msra.mxu0 0
        %4825 = vmatprep.subr.bf16.mxu0 0
        %4826 = vmatpush1.bf16.msra.mxu0 0
        %4827 = vmatprep.subr.bf16.mxu0 0
        %4828 = vmatpush1.bf16.msra.mxu0 0
        %4829 = vmatprep.subr.bf16.mxu0 0
        %4830 = vmatpush1.bf16.msra.mxu0 0
        %4831 = vmatprep.subr.bf16.mxu0 0
        %4832 = vmatpush1.bf16.msra.mxu0 0
        %4833 = vmatprep.subr.bf16.mxu0 0
        %4834 = vmatpush1.bf16.msra.mxu0 0
        %4835 = vmatprep.subr.bf16.mxu0 0
        %4836 = vmatpush1.bf16.msra.mxu0 0
        %4837 = vmatprep.subr.bf16.mxu0 0
        %4838 = vmatpush1.bf16.msra.mxu0 0
        %4839 = vmatprep.subr.bf16.mxu0 0
        %4840 = vmatpush1.bf16.msra.mxu0 0
        %4841 = vmatprep.subr.bf16.mxu0 0
        %4842 = vmatpush1.bf16.msra.mxu0 0
        %4843 = vmatprep.subr.bf16.mxu0 0
        %4844 = vmatpush1.bf16.msra.mxu0 0
        %4845 = vmatprep.mubr.bf16.mxu0 0
        %4846 = vmatmul.mubr.bf16.gmra.mrb[0].mxu0 %v4790
        %v4847 = vpop.f32.mrb[0].mxu0
        %v4848 = vadd.f32 %v4715, %v4847
        %v4849 = vpop.f32.mrb[0].mxu0
        %v4850 = vpop.f32.mrb[0].mxu0
        %v4851 = vadd.f32 %v4718, %v4850
        %v4852 = vpop.f32.mrb[0].mxu0
        %4853 = vmatprep.mubr.bf16.mxu0 0
        %4854 = vmatmul.mubr.bf16.gmra.mrb[0].mxu0 %v4793
        %v4855 = vpop.f32.mrb[0].mxu0
        %v4856 = vadd.f32 %v4723, %v4855
        %v4857 = vpop.f32.mrb[0].mxu0
        %v4858 = vpop.f32.mrb[0].mxu0
        %v4859 = vadd.f32 %v4726, %v4858
        %v4860 = vpop.f32.mrb[0].mxu0
        %4861 = vmatprep.mubr.bf16.mxu0 0
        %4862 = vmatmul.mubr.bf16.gmra.mrb[0].mxu0 %v4796
        %v4863 = vpop.f32.mrb[0].mxu0
        %v4864 = vadd.f32 %v4731, %v4863
        %v4865 = vpop.f32.mrb[0].mxu0
        %v4866 = vpop.f32.mrb[0].mxu0
        %v4867 = vadd.f32 %v4734, %v4866
        %v4868 = vpop.f32.mrb[0].mxu0
        %4869 = vmatprep.mubr.bf16.mxu0 0
        %4870 = vmatmul.mubr.bf16.gmra.mrb[0].mxu0 %v4799
        %v4871 = vpop.f32.mrb[0].mxu0
        %v4872 = vadd.f32 %v4739, %v4871
        %v4873 = vpop.f32.mrb[0].mxu0
        %v4874 = vpop.f32.mrb[0].mxu0
        %v4875 = vadd.f32 %v4742, %v4874
        %v4876 = vpop.f32.mrb[0].mxu0
        %4877 = vmatprep.mubr.bf16.mxu0 0
        %4878 = vmatmul.mubr.bf16.gmra.mrb[0].mxu0 %v4802
        %v4879 = vpop.f32.mrb[0].mxu0
        %v4880 = vadd.f32 %v4747, %v4879
        %v4881 = vpop.f32.mrb[0].mxu0
        %v4882 = vpop.f32.mrb[0].mxu0
        %v4883 = vadd.f32 %v4750, %v4882
        %v4884 = vpop.f32.mrb[0].mxu0
        %4885 = vmatprep.mubr.bf16.mxu0 0
        %4886 = vmatmul.mubr.bf16.gmra.mrb[0].mxu0 %v4805
        %v4887 = vpop.f32.mrb[0].mxu0
        %v4888 = vadd.f32 %v4755, %v4887
        %v4889 = vpop.f32.mrb[0].mxu0
        %v4890 = vpop.f32.mrb[0].mxu0
        %v4891 = vadd.f32 %v4758, %v4890
        %v4892 = vpop.f32.mrb[0].mxu0
        %4893 = vmatprep.mubr.bf16.mxu0 0
        %4894 = vmatmul.mubr.bf16.gmra.mrb[0].mxu0 %v4808
        %v4895 = vpop.f32.mrb[0].mxu0
        %v4896 = vadd.f32 %v4763, %v4895
        %v4897 = vpop.f32.mrb[0].mxu0
        %v4898 = vpop.f32.mrb[0].mxu0
        %v4899 = vadd.f32 %v4766, %v4898
        %v4900 = vpop.f32.mrb[0].mxu0
        %4901 = vmatprep.mubr.bf16.mxu0 0
        %4902 = vmatmul.mubr.bf16.gmra.mrb[0].mxu0 %v4811
        %v4903 = vpop.f32.mrb[0].mxu0
        %v4904 = vadd.f32 %v4771, %v4903
        %v4905 = vpop.f32.mrb[0].mxu0
        %v4906 = vpop.f32.mrb[0].mxu0
        %v4907 = vadd.f32 %v4774, %v4906
        %v4908 = vpop.f32.mrb[0].mxu0
        %4909 = vdwg.mxu0
        %s4910 = scalar_lea.vmem %s3, 160
        %v4911 = vld [vmem:[%s4910] sm:$0xf]
        %v4912 = vld [vmem:[%s4910 + $0x4] sm:$0xf]
        %v4913 = vld [vmem:[%s4910 + $0x8] sm:$0xf]
        %v4914 = vld [vmem:[%s4910 + $0xc] sm:$0xf]
        %v4919 = vunpack.c.l.b16 %v4911
        %v4920 = vunpack.c.l.b16 %v4912
        %v4921 = vunpack.c.l.b16 %v4913
        %v4922 = vunpack.c.l.b16 %v4914
        %v4923 = vpack.c.b16 %v4920, %v4919
        %v4924 = vpack.c.b16 %v4922, %v4921
        %4927 = vmatprep.subr.bf16.mxu0 0
        %4928 = vmatpush1.bf16.msra.mxu0 %v4923
        %4929 = vmatprep.subr.bf16.mxu0 0
        %4930 = vmatpush1.bf16.msra.mxu0 %v4924
        %4931 = vmatprep.subr.bf16.mxu0 0
        %4932 = vmatpush1.bf16.msra.mxu0 0
        %4933 = vmatprep.subr.bf16.mxu0 0
        %4934 = vmatpush1.bf16.msra.mxu0 0
        %4935 = vmatprep.subr.bf16.mxu0 0
        %4936 = vmatpush1.bf16.msra.mxu0 0
        %4937 = vmatprep.subr.bf16.mxu0 0
        %4938 = vmatpush1.bf16.msra.mxu0 0
        %4939 = vmatprep.subr.bf16.mxu0 0
        %4940 = vmatpush1.bf16.msra.mxu0 0
        %4941 = vmatprep.subr.bf16.mxu0 0
        %4942 = vmatpush1.bf16.msra.mxu0 0
        %4943 = vmatprep.subr.bf16.mxu0 0
        %4944 = vmatpush1.bf16.msra.mxu0 0
        %4945 = vmatprep.subr.bf16.mxu0 0
        %4946 = vmatpush1.bf16.msra.mxu0 0
        %4947 = vmatprep.subr.bf16.mxu0 0
        %4948 = vmatpush1.bf16.msra.mxu0 0
        %4949 = vmatprep.subr.bf16.mxu0 0
        %4950 = vmatpush1.bf16.msra.mxu0 0
        %4951 = vmatprep.subr.bf16.mxu0 0
        %4952 = vmatpush1.bf16.msra.mxu0 0
        %4953 = vmatprep.subr.bf16.mxu0 0
        %4954 = vmatpush1.bf16.msra.mxu0 0
        %4955 = vmatprep.subr.bf16.mxu0 0
        %4956 = vmatpush1.bf16.msra.mxu0 0
        %4957 = vmatprep.subr.bf16.mxu0 0
        %4958 = vmatpush1.bf16.msra.mxu0 0
        %4959 = vmatprep.mubr.bf16.mxu0 0
        %4960 = vmatmul.mubr.bf16.gmra.mrb[0].mxu0 %v4657
        %v4961 = vpop.f32.mrb[0].mxu0
        %v4962 = vadd.f32 0.0, %v4961
        %v4963 = vpop.f32.mrb[0].mxu0
        %v4964 = vpop.f32.mrb[0].mxu0
        %v4965 = vadd.f32 0.0, %v4964
        %v4966 = vpop.f32.mrb[0].mxu0
        %4967 = vmatprep.mubr.bf16.mxu0 0
        %4968 = vmatmul.mubr.bf16.gmra.mrb[0].mxu0 %v4660
        %v4969 = vpop.f32.mrb[0].mxu0
        %v4970 = vadd.f32 0.0, %v4969
        %v4971 = vpop.f32.mrb[0].mxu0
        %v4972 = vpop.f32.mrb[0].mxu0
        %v4973 = vadd.f32 0.0, %v4972
        %v4974 = vpop.f32.mrb[0].mxu0
        %4975 = vmatprep.mubr.bf16.mxu0 0
        %4976 = vmatmul.mubr.bf16.gmra.mrb[0].mxu0 %v4663
        %v4977 = vpop.f32.mrb[0].mxu0
        %v4978 = vadd.f32 0.0, %v4977
        %v4979 = vpop.f32.mrb[0].mxu0
        %v4980 = vpop.f32.mrb[0].mxu0
        %v4981 = vadd.f32 0.0, %v4980
        %v4982 = vpop.f32.mrb[0].mxu0
        %4983 = vmatprep.mubr.bf16.mxu0 0
        %4984 = vmatmul.mubr.bf16.gmra.mrb[0].mxu0 %v4666
        %v4985 = vpop.f32.mrb[0].mxu0
        %v4986 = vadd.f32 0.0, %v4985
        %v4987 = vpop.f32.mrb[0].mxu0
        %v4988 = vpop.f32.mrb[0].mxu0
        %v4989 = vadd.f32 0.0, %v4988
        %v4990 = vpop.f32.mrb[0].mxu0
        %4991 = vmatprep.mubr.bf16.mxu0 0
        %4992 = vmatmul.mubr.bf16.gmra.mrb[0].mxu0 %v4669
        %v4993 = vpop.f32.mrb[0].mxu0
        %v4994 = vadd.f32 0.0, %v4993
        %v4995 = vpop.f32.mrb[0].mxu0
        %v4996 = vpop.f32.mrb[0].mxu0
        %v4997 = vadd.f32 0.0, %v4996
        %v4998 = vpop.f32.mrb[0].mxu0
        %4999 = vmatprep.mubr.bf16.mxu0 0
        %5000 = vmatmul.mubr.bf16.gmra.mrb[0].mxu0 %v4672
        %v5001 = vpop.f32.mrb[0].mxu0
        %v5002 = vadd.f32 0.0, %v5001
        %v5003 = vpop.f32.mrb[0].mxu0
        %v5004 = vpop.f32.mrb[0].mxu0
        %v5005 = vadd.f32 0.0, %v5004
        %v5006 = vpop.f32.mrb[0].mxu0
        %5007 = vmatprep.mubr.bf16.mxu0 0
        %5008 = vmatmul.mubr.bf16.gmra.mrb[0].mxu0 %v4675
        %v5009 = vpop.f32.mrb[0].mxu0
        %v5010 = vadd.f32 0.0, %v5009
        %v5011 = vpop.f32.mrb[0].mxu0
        %v5012 = vpop.f32.mrb[0].mxu0
        %v5013 = vadd.f32 0.0, %v5012
        %v5014 = vpop.f32.mrb[0].mxu0
        %5015 = vmatprep.mubr.bf16.mxu0 0
        %5016 = vmatmul.mubr.bf16.gmra.mrb[0].mxu0 %v4678
        %v5017 = vpop.f32.mrb[0].mxu0
        %v5018 = vadd.f32 0.0, %v5017
        %v5019 = vpop.f32.mrb[0].mxu0
        %v5020 = vpop.f32.mrb[0].mxu0
        %v5021 = vadd.f32 0.0, %v5020
        %v5022 = vpop.f32.mrb[0].mxu0
        %5023 = vdwg.mxu0
        %v5028 = vunpack.c.l.b16 %v4619
        %v5029 = vunpack.c.l.b16 %v4620
        %v5030 = vunpack.c.l.b16 %v4621
        %v5031 = vunpack.c.l.b16 %v4622
        %v5032 = vpack.c.b16 %v5029, %v5028
        %v5033 = vpack.c.b16 %v5031, %v5030
        %5036 = vmatprep.subr.bf16.mxu0 0
        %5037 = vmatpush1.bf16.msra.mxu0 %v5032
        %5038 = vmatprep.subr.bf16.mxu0 0
        %5039 = vmatpush1.bf16.msra.mxu0 %v5033
        %5040 = vmatprep.subr.bf16.mxu0 0
        %5041 = vmatpush1.bf16.msra.mxu0 0
        %5042 = vmatprep.subr.bf16.mxu0 0
        %5043 = vmatpush1.bf16.msra.mxu0 0
        %5044 = vmatprep.subr.bf16.mxu0 0
        %5045 = vmatpush1.bf16.msra.mxu0 0
        %5046 = vmatprep.subr.bf16.mxu0 0
        %5047 = vmatpush1.bf16.msra.mxu0 0
        %5048 = vmatprep.subr.bf16.mxu0 0
        %5049 = vmatpush1.bf16.msra.mxu0 0
        %5050 = vmatprep.subr.bf16.mxu0 0
        %5051 = vmatpush1.bf16.msra.mxu0 0
        %5052 = vmatprep.subr.bf16.mxu0 0
        %5053 = vmatpush1.bf16.msra.mxu0 0
        %5054 = vmatprep.subr.bf16.mxu0 0
        %5055 = vmatpush1.bf16.msra.mxu0 0
        %5056 = vmatprep.subr.bf16.mxu0 0
        %5057 = vmatpush1.bf16.msra.mxu0 0
        %5058 = vmatprep.subr.bf16.mxu0 0
        %5059 = vmatpush1.bf16.msra.mxu0 0
        %5060 = vmatprep.subr.bf16.mxu0 0
        %5061 = vmatpush1.bf16.msra.mxu0 0
        %5062 = vmatprep.subr.bf16.mxu0 0
        %5063 = vmatpush1.bf16.msra.mxu0 0
        %5064 = vmatprep.subr.bf16.mxu0 0
        %5065 = vmatpush1.bf16.msra.mxu0 0
        %5066 = vmatprep.subr.bf16.mxu0 0
        %5067 = vmatpush1.bf16.msra.mxu0 0
        %5068 = vmatprep.mubr.bf16.mxu0 0
        %5069 = vmatmul.mubr.bf16.gmra.mrb[0].mxu0 %v4790
        %v5070 = vpop.f32.mrb[0].mxu0
        %v5071 = vadd.f32 %v4962, %v5070
        %v5072 = vpop.f32.mrb[0].mxu0
        %v5073 = vpop.f32.mrb[0].mxu0
        %v5074 = vadd.f32 %v4965, %v5073
        %v5075 = vpop.f32.mrb[0].mxu0
        %5076 = vmatprep.mubr.bf16.mxu0 0
        %5077 = vmatmul.mubr.bf16.gmra.mrb[0].mxu0 %v4793
        %v5078 = vpop.f32.mrb[0].mxu0
        %v5079 = vadd.f32 %v4970, %v5078
        %v5080 = vpop.f32.mrb[0].mxu0
        %v5081 = vpop.f32.mrb[0].mxu0
        %v5082 = vadd.f32 %v4973, %v5081
        %v5083 = vpop.f32.mrb[0].mxu0
        %5084 = vmatprep.mubr.bf16.mxu0 0
        %5085 = vmatmul.mubr.bf16.gmra.mrb[0].mxu0 %v4796
        %v5086 = vpop.f32.mrb[0].mxu0
        %v5087 = vadd.f32 %v4978, %v5086
        %v5088 = vpop.f32.mrb[0].mxu0
        %v5089 = vpop.f32.mrb[0].mxu0
        %v5090 = vadd.f32 %v4981, %v5089
        %v5091 = vpop.f32.mrb[0].mxu0
        %5092 = vmatprep.mubr.bf16.mxu0 0
        %5093 = vmatmul.mubr.bf16.gmra.mrb[0].mxu0 %v4799
        %v5094 = vpop.f32.mrb[0].mxu0
        %v5095 = vadd.f32 %v4986, %v5094
        %v5096 = vpop.f32.mrb[0].mxu0
        %v5097 = vpop.f32.mrb[0].mxu0
        %v5098 = vadd.f32 %v4989, %v5097
        %v5099 = vpop.f32.mrb[0].mxu0
        %5100 = vmatprep.mubr.bf16.mxu0 0
        %5101 = vmatmul.mubr.bf16.gmra.mrb[0].mxu0 %v4802
        %v5102 = vpop.f32.mrb[0].mxu0
        %v5103 = vadd.f32 %v4994, %v5102
        %v5104 = vpop.f32.mrb[0].mxu0
        %v5105 = vpop.f32.mrb[0].mxu0
        %v5106 = vadd.f32 %v4997, %v5105
        %v5107 = vpop.f32.mrb[0].mxu0
        %5108 = vmatprep.mubr.bf16.mxu0 0
        %5109 = vmatmul.mubr.bf16.gmra.mrb[0].mxu0 %v4805
        %v5110 = vpop.f32.mrb[0].mxu0
        %v5111 = vadd.f32 %v5002, %v5110
        %v5112 = vpop.f32.mrb[0].mxu0
        %v5113 = vpop.f32.mrb[0].mxu0
        %v5114 = vadd.f32 %v5005, %v5113
        %v5115 = vpop.f32.mrb[0].mxu0
        %5116 = vmatprep.mubr.bf16.mxu0 0
        %5117 = vmatmul.mubr.bf16.gmra.mrb[0].mxu0 %v4808
        %v5118 = vpop.f32.mrb[0].mxu0
        %v5119 = vadd.f32 %v5010, %v5118
        %v5120 = vpop.f32.mrb[0].mxu0
        %v5121 = vpop.f32.mrb[0].mxu0
        %v5122 = vadd.f32 %v5013, %v5121
        %v5123 = vpop.f32.mrb[0].mxu0
        %5124 = vmatprep.mubr.bf16.mxu0 0
        %5125 = vmatmul.mubr.bf16.gmra.mrb[0].mxu0 %v4811
        %v5126 = vpop.f32.mrb[0].mxu0
        %v5127 = vadd.f32 %v5018, %v5126
        %v5128 = vpop.f32.mrb[0].mxu0
        %v5129 = vpop.f32.mrb[0].mxu0
        %v5130 = vadd.f32 %v5021, %v5129
        %v5131 = vpop.f32.mrb[0].mxu0
        %5132 = vdwg.mxu0
        %v5133 = vld [vmem:[#allocation2 + $0x10] sm:$0xff]
        %v5134 = vld [vmem:[#allocation2 + $0x18] sm:$0xff]
        %v5135 = vld [vmem:[#allocation2 + $0x30] sm:$0xff]
        %v5136 = vld [vmem:[#allocation2 + $0x38] sm:$0xff]
        %v5137 = vld [vmem:[#allocation2 + $0x50] sm:$0xff]
        %v5138 = vld [vmem:[#allocation2 + $0x58] sm:$0xff]
        %v5139 = vld [vmem:[#allocation2 + $0x70] sm:$0xff]
        %v5140 = vld [vmem:[#allocation2 + $0x78] sm:$0xff]
        %v5141 = vld [vmem:[#allocation2 + $0x90] sm:$0xff]
        %v5142 = vld [vmem:[#allocation2 + $0x98] sm:$0xff]
        %v5143 = vld [vmem:[#allocation2 + $0xb0] sm:$0xff]
        %v5144 = vld [vmem:[#allocation2 + $0xb8] sm:$0xff]
        %v5145 = vld [vmem:[#allocation2 + $0xd0] sm:$0xff]
        %v5146 = vld [vmem:[#allocation2 + $0xd8] sm:$0xff]
        %v5147 = vld [vmem:[#allocation2 + $0xf0] sm:$0xff]
        %v5148 = vld [vmem:[#allocation2 + $0xf8] sm:$0xff]
        %v5149 = vpack.c.bf16 %v5134, %v5133
        %v5150 = vpack.c.bf16 %v5136, %v5135
        %v5151 = vpack.c.bf16 %v5138, %v5137
        %v5152 = vpack.c.bf16 %v5140, %v5139
        %v5153 = vpack.c.bf16 %v5142, %v5141
        %v5154 = vpack.c.bf16 %v5144, %v5143
        %v5155 = vpack.c.bf16 %v5146, %v5145
        %v5156 = vpack.c.bf16 %v5148, %v5147
        %s5157 = scalar_lea.vmem %s2, 176
        %v5158 = vld [vmem:[%s5157] sm:$0xf]
        %v5159 = vld [vmem:[%s5157 + $0x4] sm:$0xf]
        %v5160 = vld [vmem:[%s5157 + $0x8] sm:$0xf]
        %v5161 = vld [vmem:[%s5157 + $0xc] sm:$0xf]
        %v5166 = vunpack.c.l.b16 %v5158
        %v5167 = vunpack.c.l.b16 %v5159
        %v5168 = vunpack.c.l.b16 %v5160
        %v5169 = vunpack.c.l.b16 %v5161
        %v5170 = vpack.c.b16 %v5167, %v5166
        %v5171 = vpack.c.b16 %v5169, %v5168
        %v5175 = vsel %vm615, %v5149, 0
        %v5178 = vsel %vm615, %v5150, 0
        %v5181 = vsel %vm615, %v5151, 0
        %v5184 = vsel %vm615, %v5152, 0
        %v5187 = vsel %vm615, %v5153, 0
        %v5190 = vsel %vm615, %v5154, 0
        %v5193 = vsel %vm615, %v5155, 0
        %v5196 = vsel %vm615, %v5156, 0
        %5198 = vmatprep.subr.bf16.mxu0 0
        %5199 = vmatpush1.bf16.msra.mxu0 %v5170
        %5200 = vmatprep.subr.bf16.mxu0 0
        %5201 = vmatpush1.bf16.msra.mxu0 %v5171
        %5202 = vmatprep.subr.bf16.mxu0 0
        %5203 = vmatpush1.bf16.msra.mxu0 0
        %5204 = vmatprep.subr.bf16.mxu0 0
        %5205 = vmatpush1.bf16.msra.mxu0 0
        %5206 = vmatprep.subr.bf16.mxu0 0
        %5207 = vmatpush1.bf16.msra.mxu0 0
        %5208 = vmatprep.subr.bf16.mxu0 0
        %5209 = vmatpush1.bf16.msra.mxu0 0
        %5210 = vmatprep.subr.bf16.mxu0 0
        %5211 = vmatpush1.bf16.msra.mxu0 0
        %5212 = vmatprep.subr.bf16.mxu0 0
        %5213 = vmatpush1.bf16.msra.mxu0 0
        %5214 = vmatprep.subr.bf16.mxu0 0
        %5215 = vmatpush1.bf16.msra.mxu0 0
        %5216 = vmatprep.subr.bf16.mxu0 0
        %5217 = vmatpush1.bf16.msra.mxu0 0
        %5218 = vmatprep.subr.bf16.mxu0 0
        %5219 = vmatpush1.bf16.msra.mxu0 0
        %5220 = vmatprep.subr.bf16.mxu0 0
        %5221 = vmatpush1.bf16.msra.mxu0 0
        %5222 = vmatprep.subr.bf16.mxu0 0
        %5223 = vmatpush1.bf16.msra.mxu0 0
        %5224 = vmatprep.subr.bf16.mxu0 0
        %5225 = vmatpush1.bf16.msra.mxu0 0
        %5226 = vmatprep.subr.bf16.mxu0 0
        %5227 = vmatpush1.bf16.msra.mxu0 0
        %5228 = vmatprep.subr.bf16.mxu0 0
        %5229 = vmatpush1.bf16.msra.mxu0 0
        %5230 = vmatprep.mubr.bf16.mxu0 0
        %5231 = vmatmul.mubr.bf16.gmra.mrb[0].mxu0 %v5175
        %v5232 = vpop.f32.mrb[0].mxu0
        %v5233 = vadd.f32 0.0, %v5232
        %v5234 = vpop.f32.mrb[0].mxu0
        %v5235 = vpop.f32.mrb[0].mxu0
        %v5236 = vadd.f32 0.0, %v5235
        %v5237 = vpop.f32.mrb[0].mxu0
        %5238 = vmatprep.mubr.bf16.mxu0 0
        %5239 = vmatmul.mubr.bf16.gmra.mrb[0].mxu0 %v5178
        %v5240 = vpop.f32.mrb[0].mxu0
        %v5241 = vadd.f32 0.0, %v5240
        %v5242 = vpop.f32.mrb[0].mxu0
        %v5243 = vpop.f32.mrb[0].mxu0
        %v5244 = vadd.f32 0.0, %v5243
        %v5245 = vpop.f32.mrb[0].mxu0
        %5246 = vmatprep.mubr.bf16.mxu0 0
        %5247 = vmatmul.mubr.bf16.gmra.mrb[0].mxu0 %v5181
        %v5248 = vpop.f32.mrb[0].mxu0
        %v5249 = vadd.f32 0.0, %v5248
        %v5250 = vpop.f32.mrb[0].mxu0
        %v5251 = vpop.f32.mrb[0].mxu0
        %v5252 = vadd.f32 0.0, %v5251
        %v5253 = vpop.f32.mrb[0].mxu0
        %5254 = vmatprep.mubr.bf16.mxu0 0
        %5255 = vmatmul.mubr.bf16.gmra.mrb[0].mxu0 %v5184
        %v5256 = vpop.f32.mrb[0].mxu0
        %v5257 = vadd.f32 0.0, %v5256
        %v5258 = vpop.f32.mrb[0].mxu0
        %v5259 = vpop.f32.mrb[0].mxu0
        %v5260 = vadd.f32 0.0, %v5259
        %v5261 = vpop.f32.mrb[0].mxu0
        %5262 = vmatprep.mubr.bf16.mxu0 0
        %5263 = vmatmul.mubr.bf16.gmra.mrb[0].mxu0 %v5187
        %v5264 = vpop.f32.mrb[0].mxu0
        %v5265 = vadd.f32 0.0, %v5264
        %v5266 = vpop.f32.mrb[0].mxu0
        %v5267 = vpop.f32.mrb[0].mxu0
        %v5268 = vadd.f32 0.0, %v5267
        %v5269 = vpop.f32.mrb[0].mxu0
        %5270 = vmatprep.mubr.bf16.mxu0 0
        %5271 = vmatmul.mubr.bf16.gmra.mrb[0].mxu0 %v5190
        %v5272 = vpop.f32.mrb[0].mxu0
        %v5273 = vadd.f32 0.0, %v5272
        %v5274 = vpop.f32.mrb[0].mxu0
        %v5275 = vpop.f32.mrb[0].mxu0
        %v5276 = vadd.f32 0.0, %v5275
        %v5277 = vpop.f32.mrb[0].mxu0
        %5278 = vmatprep.mubr.bf16.mxu0 0
        %5279 = vmatmul.mubr.bf16.gmra.mrb[0].mxu0 %v5193
        %v5280 = vpop.f32.mrb[0].mxu0
        %v5281 = vadd.f32 0.0, %v5280
        %v5282 = vpop.f32.mrb[0].mxu0
        %v5283 = vpop.f32.mrb[0].mxu0
        %v5284 = vadd.f32 0.0, %v5283
        %v5285 = vpop.f32.mrb[0].mxu0
        %5286 = vmatprep.mubr.bf16.mxu0 0
        %5287 = vmatmul.mubr.bf16.gmra.mrb[0].mxu0 %v5196
        %v5288 = vpop.f32.mrb[0].mxu0
        %v5289 = vadd.f32 0.0, %v5288
        %v5290 = vpop.f32.mrb[0].mxu0
        %v5291 = vpop.f32.mrb[0].mxu0
        %v5292 = vadd.f32 0.0, %v5291
        %v5293 = vpop.f32.mrb[0].mxu0
        %5294 = vdwg.mxu0
        %v5295 = vadd.f32 %v4848, %v5233
        %v5296 = vadd.f32 %v4851, %v5236
        %v5297 = vadd.f32 %v4856, %v5241
        %v5298 = vadd.f32 %v4859, %v5244
        %v5299 = vadd.f32 %v4864, %v5249
        %v5300 = vadd.f32 %v4867, %v5252
        %v5301 = vadd.f32 %v4872, %v5257
        %v5302 = vadd.f32 %v4875, %v5260
        %v5303 = vadd.f32 %v4880, %v5265
        %v5304 = vadd.f32 %v4883, %v5268
        %v5305 = vadd.f32 %v4888, %v5273
        %v5306 = vadd.f32 %v4891, %v5276
        %v5307 = vadd.f32 %v4896, %v5281
        %v5308 = vadd.f32 %v4899, %v5284
        %v5309 = vadd.f32 %v4904, %v5289
        %v5310 = vadd.f32 %v4907, %v5292
        %s5311 = scalar_lea.vmem %s3, 176
        %v5312 = vld [vmem:[%s5311] sm:$0xf]
        %v5313 = vld [vmem:[%s5311 + $0x4] sm:$0xf]
        %v5314 = vld [vmem:[%s5311 + $0x8] sm:$0xf]
        %v5315 = vld [vmem:[%s5311 + $0xc] sm:$0xf]
        %v5320 = vunpack.c.l.b16 %v5312
        %v5321 = vunpack.c.l.b16 %v5313
        %v5322 = vunpack.c.l.b16 %v5314
        %v5323 = vunpack.c.l.b16 %v5315
        %v5324 = vpack.c.b16 %v5321, %v5320
        %v5325 = vpack.c.b16 %v5323, %v5322
        %5328 = vmatprep.subr.bf16.mxu0 0
        %5329 = vmatpush1.bf16.msra.mxu0 %v5324
        %5330 = vmatprep.subr.bf16.mxu0 0
        %5331 = vmatpush1.bf16.msra.mxu0 %v5325
        %5332 = vmatprep.subr.bf16.mxu0 0
        %5333 = vmatpush1.bf16.msra.mxu0 0
        %5334 = vmatprep.subr.bf16.mxu0 0
        %5335 = vmatpush1.bf16.msra.mxu0 0
        %5336 = vmatprep.subr.bf16.mxu0 0
        %5337 = vmatpush1.bf16.msra.mxu0 0
        %5338 = vmatprep.subr.bf16.mxu0 0
        %5339 = vmatpush1.bf16.msra.mxu0 0
        %5340 = vmatprep.subr.bf16.mxu0 0
        %5341 = vmatpush1.bf16.msra.mxu0 0
        %5342 = vmatprep.subr.bf16.mxu0 0
        %5343 = vmatpush1.bf16.msra.mxu0 0
        %5344 = vmatprep.subr.bf16.mxu0 0
        %5345 = vmatpush1.bf16.msra.mxu0 0
        %5346 = vmatprep.subr.bf16.mxu0 0
        %5347 = vmatpush1.bf16.msra.mxu0 0
        %5348 = vmatprep.subr.bf16.mxu0 0
        %5349 = vmatpush1.bf16.msra.mxu0 0
        %5350 = vmatprep.subr.bf16.mxu0 0
        %5351 = vmatpush1.bf16.msra.mxu0 0
        %5352 = vmatprep.subr.bf16.mxu0 0
        %5353 = vmatpush1.bf16.msra.mxu0 0
        %5354 = vmatprep.subr.bf16.mxu0 0
        %5355 = vmatpush1.bf16.msra.mxu0 0
        %5356 = vmatprep.subr.bf16.mxu0 0
        %5357 = vmatpush1.bf16.msra.mxu0 0
        %5358 = vmatprep.subr.bf16.mxu0 0
        %5359 = vmatpush1.bf16.msra.mxu0 0
        %5360 = vmatprep.mubr.bf16.mxu0 0
        %5361 = vmatmul.mubr.bf16.gmra.mrb[0].mxu0 %v5175
        %v5362 = vpop.f32.mrb[0].mxu0
        %v5363 = vadd.f32 0.0, %v5362
        %v5364 = vpop.f32.mrb[0].mxu0
        %v5365 = vpop.f32.mrb[0].mxu0
        %v5366 = vadd.f32 0.0, %v5365
        %v5367 = vpop.f32.mrb[0].mxu0
        %5368 = vmatprep.mubr.bf16.mxu0 0
        %5369 = vmatmul.mubr.bf16.gmra.mrb[0].mxu0 %v5178
        %v5370 = vpop.f32.mrb[0].mxu0
        %v5371 = vadd.f32 0.0, %v5370
        %v5372 = vpop.f32.mrb[0].mxu0
        %v5373 = vpop.f32.mrb[0].mxu0
        %v5374 = vadd.f32 0.0, %v5373
        %v5375 = vpop.f32.mrb[0].mxu0
        %5376 = vmatprep.mubr.bf16.mxu0 0
        %5377 = vmatmul.mubr.bf16.gmra.mrb[0].mxu0 %v5181
        %v5378 = vpop.f32.mrb[0].mxu0
        %v5379 = vadd.f32 0.0, %v5378
        %v5380 = vpop.f32.mrb[0].mxu0
        %v5381 = vpop.f32.mrb[0].mxu0
        %v5382 = vadd.f32 0.0, %v5381
        %v5383 = vpop.f32.mrb[0].mxu0
        %5384 = vmatprep.mubr.bf16.mxu0 0
        %5385 = vmatmul.mubr.bf16.gmra.mrb[0].mxu0 %v5184
        %v5386 = vpop.f32.mrb[0].mxu0
        %v5387 = vadd.f32 0.0, %v5386
        %v5388 = vpop.f32.mrb[0].mxu0
        %v5389 = vpop.f32.mrb[0].mxu0
        %v5390 = vadd.f32 0.0, %v5389
        %v5391 = vpop.f32.mrb[0].mxu0
        %5392 = vmatprep.mubr.bf16.mxu0 0
        %5393 = vmatmul.mubr.bf16.gmra.mrb[0].mxu0 %v5187
        %v5394 = vpop.f32.mrb[0].mxu0
        %v5395 = vadd.f32 0.0, %v5394
        %v5396 = vpop.f32.mrb[0].mxu0
        %v5397 = vpop.f32.mrb[0].mxu0
        %v5398 = vadd.f32 0.0, %v5397
        %v5399 = vpop.f32.mrb[0].mxu0
        %5400 = vmatprep.mubr.bf16.mxu0 0
        %5401 = vmatmul.mubr.bf16.gmra.mrb[0].mxu0 %v5190
        %v5402 = vpop.f32.mrb[0].mxu0
        %v5403 = vadd.f32 0.0, %v5402
        %v5404 = vpop.f32.mrb[0].mxu0
        %v5405 = vpop.f32.mrb[0].mxu0
        %v5406 = vadd.f32 0.0, %v5405
        %v5407 = vpop.f32.mrb[0].mxu0
        %5408 = vmatprep.mubr.bf16.mxu0 0
        %5409 = vmatmul.mubr.bf16.gmra.mrb[0].mxu0 %v5193
        %v5410 = vpop.f32.mrb[0].mxu0
        %v5411 = vadd.f32 0.0, %v5410
        %v5412 = vpop.f32.mrb[0].mxu0
        %v5413 = vpop.f32.mrb[0].mxu0
        %v5414 = vadd.f32 0.0, %v5413
        %v5415 = vpop.f32.mrb[0].mxu0
        %5416 = vmatprep.mubr.bf16.mxu0 0
        %5417 = vmatmul.mubr.bf16.gmra.mrb[0].mxu0 %v5196
        %v5418 = vpop.f32.mrb[0].mxu0
        %v5419 = vadd.f32 0.0, %v5418
        %v5420 = vpop.f32.mrb[0].mxu0
        %v5421 = vpop.f32.mrb[0].mxu0
        %v5422 = vadd.f32 0.0, %v5421
        %v5423 = vpop.f32.mrb[0].mxu0
        %5424 = vdwg.mxu0
        %v5425 = vadd.f32 %v5071, %v5363
        %v5426 = vadd.f32 %v5074, %v5366
        %v5427 = vadd.f32 %v5079, %v5371
        %v5428 = vadd.f32 %v5082, %v5374
        %v5429 = vadd.f32 %v5087, %v5379
        %v5430 = vadd.f32 %v5090, %v5382
        %v5431 = vadd.f32 %v5095, %v5387
        %v5432 = vadd.f32 %v5098, %v5390
        %v5433 = vadd.f32 %v5103, %v5395
        %v5434 = vadd.f32 %v5106, %v5398
        %v5435 = vadd.f32 %v5111, %v5403
        %v5436 = vadd.f32 %v5114, %v5406
        %v5437 = vadd.f32 %v5119, %v5411
        %v5438 = vadd.f32 %v5122, %v5414
        %v5439 = vadd.f32 %v5127, %v5419
        %v5440 = vadd.f32 %v5130, %v5422
        %v5441 = vld [vmem:[%s4 + $0x3] sm:$0x1]
        %v5442 = vlaneseq
        %v5443 = vshrl.u32 %v5442, 7
        %v5444 = vsub.s32 0, %v5443
        %v5445 = vrot.slane %v5441, %v5444
        %v5446 = vadd.f32 %v5295, %v5445
        %v5447 = vadd.f32 %v5296, %v5445
        %v5448 = vadd.f32 %v5297, %v5445
        %v5449 = vadd.f32 %v5298, %v5445
        %v5450 = vadd.f32 %v5299, %v5445
        %v5451 = vadd.f32 %v5300, %v5445
        %v5452 = vadd.f32 %v5301, %v5445
        %v5453 = vadd.f32 %v5302, %v5445
        %v5454 = vadd.f32 %v5303, %v5445
        %v5455 = vadd.f32 %v5304, %v5445
        %v5456 = vadd.f32 %v5305, %v5445
        %v5457 = vadd.f32 %v5306, %v5445
        %v5458 = vadd.f32 %v5307, %v5445
        %v5459 = vadd.f32 %v5308, %v5445
        %v5460 = vadd.f32 %v5309, %v5445
        %v5461 = vadd.f32 %v5310, %v5445
        %v5462 = vld [vmem:[%s5 + $0x3] sm:$0x1]
        %v5463 = vlaneseq
        %v5464 = vshrl.u32 %v5463, 7
        %v5465 = vsub.s32 0, %v5464
        %v5466 = vrot.slane %v5462, %v5465
        %v5467 = vadd.f32 %v5425, %v5466
        %v5468 = vadd.f32 %v5426, %v5466
        %v5469 = vadd.f32 %v5427, %v5466
        %v5470 = vadd.f32 %v5428, %v5466
        %v5471 = vadd.f32 %v5429, %v5466
        %v5472 = vadd.f32 %v5430, %v5466
        %v5473 = vadd.f32 %v5431, %v5466
        %v5474 = vadd.f32 %v5432, %v5466
        %v5475 = vadd.f32 %v5433, %v5466
        %v5476 = vadd.f32 %v5434, %v5466
        %v5477 = vadd.f32 %v5435, %v5466
        %v5478 = vadd.f32 %v5436, %v5466
        %v5479 = vadd.f32 %v5437, %v5466
        %v5480 = vadd.f32 %v5438, %v5466
        %v5481 = vadd.f32 %v5439, %v5466
        %v5482 = vadd.f32 %v5440, %v5466
        %v5483 = vxor.u32 %v5467, 2147483648
        %v5484 = vxor.u32 %v5468, 2147483648
        %v5485 = vxor.u32 %v5469, 2147483648
        %v5486 = vxor.u32 %v5470, 2147483648
        %v5487 = vxor.u32 %v5471, 2147483648
        %v5488 = vxor.u32 %v5472, 2147483648
        %v5489 = vxor.u32 %v5473, 2147483648
        %v5490 = vxor.u32 %v5474, 2147483648
        %v5491 = vxor.u32 %v5475, 2147483648
        %v5492 = vxor.u32 %v5476, 2147483648
        %v5493 = vxor.u32 %v5477, 2147483648
        %v5494 = vxor.u32 %v5478, 2147483648
        %v5495 = vxor.u32 %v5479, 2147483648
        %v5496 = vxor.u32 %v5480, 2147483648
        %v5497 = vxor.u32 %v5481, 2147483648
        %v5498 = vxor.u32 %v5482, 2147483648
        %v5499 = vmul.f32 %v5483, 1.442695
        %v5500 = vpow.pop %v5499
        %v5501 = vmul.f32 %v5484, 1.442695
        %v5502 = vpow.pop %v5501
        %v5503 = vmul.f32 %v5485, 1.442695
        %v5504 = vpow.pop %v5503
        %v5505 = vmul.f32 %v5486, 1.442695
        %v5506 = vpow.pop %v5505
        %v5507 = vmul.f32 %v5487, 1.442695
        %v5508 = vpow.pop %v5507
        %v5509 = vmul.f32 %v5488, 1.442695
        %v5510 = vpow.pop %v5509
        %v5511 = vmul.f32 %v5489, 1.442695
        %v5512 = vpow.pop %v5511
        %v5513 = vmul.f32 %v5490, 1.442695
        %v5514 = vpow.pop %v5513
        %v5515 = vmul.f32 %v5491, 1.442695
        %v5516 = vpow.pop %v5515
        %v5517 = vmul.f32 %v5492, 1.442695
        %v5518 = vpow.pop %v5517
        %v5519 = vmul.f32 %v5493, 1.442695
        %v5520 = vpow.pop %v5519
        %v5521 = vmul.f32 %v5494, 1.442695
        %v5522 = vpow.pop %v5521
        %v5523 = vmul.f32 %v5495, 1.442695
        %v5524 = vpow.pop %v5523
        %v5525 = vmul.f32 %v5496, 1.442695
        %v5526 = vpow.pop %v5525
        %v5527 = vmul.f32 %v5497, 1.442695
        %v5528 = vpow.pop %v5527
        %v5529 = vmul.f32 %v5498, 1.442695
        %v5530 = vpow.pop %v5529
        %v5531 = vadd.f32 %v5500, 1.0
        %v5532 = vadd.f32 %v5502, 1.0
        %v5533 = vadd.f32 %v5504, 1.0
        %v5534 = vadd.f32 %v5506, 1.0
        %v5535 = vadd.f32 %v5508, 1.0
        %v5536 = vadd.f32 %v5510, 1.0
        %v5537 = vadd.f32 %v5512, 1.0
        %v5538 = vadd.f32 %v5514, 1.0
        %v5539 = vadd.f32 %v5516, 1.0
        %v5540 = vadd.f32 %v5518, 1.0
        %v5541 = vadd.f32 %v5520, 1.0
        %v5542 = vadd.f32 %v5522, 1.0
        %v5543 = vadd.f32 %v5524, 1.0
        %v5544 = vadd.f32 %v5526, 1.0
        %v5545 = vadd.f32 %v5528, 1.0
        %v5546 = vadd.f32 %v5530, 1.0
        %v5547 = vrcp.pop %v5531
        %v5548 = vmul.f32 1.0, %v5547
        %v5549 = vrcp.pop %v5532
        %v5550 = vmul.f32 1.0, %v5549
        %v5551 = vrcp.pop %v5533
        %v5552 = vmul.f32 1.0, %v5551
        %v5553 = vrcp.pop %v5534
        %v5554 = vmul.f32 1.0, %v5553
        %v5555 = vrcp.pop %v5535
        %v5556 = vmul.f32 1.0, %v5555
        %v5557 = vrcp.pop %v5536
        %v5558 = vmul.f32 1.0, %v5557
        %v5559 = vrcp.pop %v5537
        %v5560 = vmul.f32 1.0, %v5559
        %v5561 = vrcp.pop %v5538
        %v5562 = vmul.f32 1.0, %v5561
        %v5563 = vrcp.pop %v5539
        %v5564 = vmul.f32 1.0, %v5563
        %v5565 = vrcp.pop %v5540
        %v5566 = vmul.f32 1.0, %v5565
        %v5567 = vrcp.pop %v5541
        %v5568 = vmul.f32 1.0, %v5567
        %v5569 = vrcp.pop %v5542
        %v5570 = vmul.f32 1.0, %v5569
        %v5571 = vrcp.pop %v5543
        %v5572 = vmul.f32 1.0, %v5571
        %v5573 = vrcp.pop %v5544
        %v5574 = vmul.f32 1.0, %v5573
        %v5575 = vrcp.pop %v5545
        %v5576 = vmul.f32 1.0, %v5575
        %v5577 = vrcp.pop %v5546
        %v5578 = vmul.f32 1.0, %v5577
        %v5579 = vmul.f32 %v5446, %v5548
        %v5580 = vmul.f32 %v5447, %v5550
        %v5581 = vmul.f32 %v5448, %v5552
        %v5582 = vmul.f32 %v5449, %v5554
        %v5583 = vmul.f32 %v5450, %v5556
        %v5584 = vmul.f32 %v5451, %v5558
        %v5585 = vmul.f32 %v5452, %v5560
        %v5586 = vmul.f32 %v5453, %v5562
        %v5587 = vmul.f32 %v5454, %v5564
        %v5588 = vmul.f32 %v5455, %v5566
        %v5589 = vmul.f32 %v5456, %v5568
        %v5590 = vmul.f32 %v5457, %v5570
        %v5591 = vmul.f32 %v5458, %v5572
        %v5592 = vmul.f32 %v5459, %v5574
        %v5593 = vmul.f32 %v5460, %v5576
        %v5594 = vmul.f32 %v5461, %v5578
        %v5595 = vsel %vm615, %v5579, 0.0
        %5596 = vadd.xlane.f32.xlu0 %v5595
        %v5597 = vpop.xlane.xlu0 %5596
        %v5598 = vsel %vm615, %v5580, 0.0
        %5599 = vadd.xlane.f32.xlu0 %v5598
        %v5600 = vpop.xlane.xlu0 %5599
        %v5601 = vsel %vm615, %v5581, 0.0
        %5602 = vadd.xlane.f32.xlu0 %v5601
        %v5603 = vpop.xlane.xlu0 %5602
        %v5604 = vsel %vm615, %v5582, 0.0
        %5605 = vadd.xlane.f32.xlu0 %v5604
        %v5606 = vpop.xlane.xlu0 %5605
        %v5607 = vsel %vm615, %v5583, 0.0
        %5608 = vadd.xlane.f32.xlu0 %v5607
        %v5609 = vpop.xlane.xlu0 %5608
        %v5610 = vsel %vm615, %v5584, 0.0
        %5611 = vadd.xlane.f32.xlu0 %v5610
        %v5612 = vpop.xlane.xlu0 %5611
        %v5613 = vsel %vm615, %v5585, 0.0
        %5614 = vadd.xlane.f32.xlu0 %v5613
        %v5615 = vpop.xlane.xlu0 %5614
        %v5616 = vsel %vm615, %v5586, 0.0
        %5617 = vadd.xlane.f32.xlu0 %v5616
        %v5618 = vpop.xlane.xlu0 %5617
        %v5619 = vsel %vm615, %v5587, 0.0
        %5620 = vadd.xlane.f32.xlu0 %v5619
        %v5621 = vpop.xlane.xlu0 %5620
        %v5622 = vsel %vm615, %v5588, 0.0
        %5623 = vadd.xlane.f32.xlu0 %v5622
        %v5624 = vpop.xlane.xlu0 %5623
        %v5625 = vsel %vm615, %v5589, 0.0
        %5626 = vadd.xlane.f32.xlu0 %v5625
        %v5627 = vpop.xlane.xlu0 %5626
        %v5628 = vsel %vm615, %v5590, 0.0
        %5629 = vadd.xlane.f32.xlu0 %v5628
        %v5630 = vpop.xlane.xlu0 %5629
        %v5631 = vsel %vm615, %v5591, 0.0
        %5632 = vadd.xlane.f32.xlu0 %v5631
        %v5633 = vpop.xlane.xlu0 %5632
        %v5634 = vsel %vm615, %v5592, 0.0
        %5635 = vadd.xlane.f32.xlu0 %v5634
        %v5636 = vpop.xlane.xlu0 %5635
        %v5637 = vsel %vm615, %v5593, 0.0
        %5638 = vadd.xlane.f32.xlu0 %v5637
        %v5639 = vpop.xlane.xlu0 %5638
        %v5640 = vsel %vm615, %v5594, 0.0
        %5641 = vadd.xlane.f32.xlu0 %v5640
        %v5642 = vpop.xlane.xlu0 %5641
        %v5643 = vmul.f32 %v5597, %v1708
        %v5644 = vmul.f32 %v5600, %v1708
        %v5645 = vmul.f32 %v5603, %v1708
        %v5646 = vmul.f32 %v5606, %v1708
        %v5647 = vmul.f32 %v5609, %v1708
        %v5648 = vmul.f32 %v5612, %v1708
        %v5649 = vmul.f32 %v5615, %v1708
        %v5650 = vmul.f32 %v5618, %v1708
        %v5651 = vmul.f32 %v5621, %v1708
        %v5652 = vmul.f32 %v5624, %v1708
        %v5653 = vmul.f32 %v5627, %v1708
        %v5654 = vmul.f32 %v5630, %v1708
        %v5655 = vmul.f32 %v5633, %v1708
        %v5656 = vmul.f32 %v5636, %v1708
        %v5657 = vmul.f32 %v5639, %v1708
        %v5658 = vmul.f32 %v5642, %v1708
        %v5659 = vsub.f32 %v5579, %v5643
        %v5660 = vsub.f32 %v5580, %v5644
        %v5661 = vsub.f32 %v5581, %v5645
        %v5662 = vsub.f32 %v5582, %v5646
        %v5663 = vsub.f32 %v5583, %v5647
        %v5664 = vsub.f32 %v5584, %v5648
        %v5665 = vsub.f32 %v5585, %v5649
        %v5666 = vsub.f32 %v5586, %v5650
        %v5667 = vsub.f32 %v5587, %v5651
        %v5668 = vsub.f32 %v5588, %v5652
        %v5669 = vsub.f32 %v5589, %v5653
        %v5670 = vsub.f32 %v5590, %v5654
        %v5671 = vsub.f32 %v5591, %v5655
        %v5672 = vsub.f32 %v5592, %v5656
        %v5673 = vsub.f32 %v5593, %v5657
        %v5674 = vsub.f32 %v5594, %v5658
        %v5675 = vmul.f32 %v5659, %v5659
        %v5676 = vmul.f32 %v5660, %v5660
        %v5677 = vmul.f32 %v5661, %v5661
        %v5678 = vmul.f32 %v5662, %v5662
        %v5679 = vmul.f32 %v5663, %v5663
        %v5680 = vmul.f32 %v5664, %v5664
        %v5681 = vmul.f32 %v5665, %v5665
        %v5682 = vmul.f32 %v5666, %v5666
        %v5683 = vmul.f32 %v5667, %v5667
        %v5684 = vmul.f32 %v5668, %v5668
        %v5685 = vmul.f32 %v5669, %v5669
        %v5686 = vmul.f32 %v5670, %v5670
        %v5687 = vmul.f32 %v5671, %v5671
        %v5688 = vmul.f32 %v5672, %v5672
        %v5689 = vmul.f32 %v5673, %v5673
        %v5690 = vmul.f32 %v5674, %v5674
        %v5691 = vsel %vm615, %v5675, 0.0
        %5692 = vadd.xlane.f32.xlu0 %v5691
        %v5693 = vpop.xlane.xlu0 %5692
        %v5694 = vsel %vm615, %v5676, 0.0
        %5695 = vadd.xlane.f32.xlu0 %v5694
        %v5696 = vpop.xlane.xlu0 %5695
        %v5697 = vsel %vm615, %v5677, 0.0
        %5698 = vadd.xlane.f32.xlu0 %v5697
        %v5699 = vpop.xlane.xlu0 %5698
        %v5700 = vsel %vm615, %v5678, 0.0
        %5701 = vadd.xlane.f32.xlu0 %v5700
        %v5702 = vpop.xlane.xlu0 %5701
        %v5703 = vsel %vm615, %v5679, 0.0
        %5704 = vadd.xlane.f32.xlu0 %v5703
        %v5705 = vpop.xlane.xlu0 %5704
        %v5706 = vsel %vm615, %v5680, 0.0
        %5707 = vadd.xlane.f32.xlu0 %v5706
        %v5708 = vpop.xlane.xlu0 %5707
        %v5709 = vsel %vm615, %v5681, 0.0
        %5710 = vadd.xlane.f32.xlu0 %v5709
        %v5711 = vpop.xlane.xlu0 %5710
        %v5712 = vsel %vm615, %v5682, 0.0
        %5713 = vadd.xlane.f32.xlu0 %v5712
        %v5714 = vpop.xlane.xlu0 %5713
        %v5715 = vsel %vm615, %v5683, 0.0
        %5716 = vadd.xlane.f32.xlu0 %v5715
        %v5717 = vpop.xlane.xlu0 %5716
        %v5718 = vsel %vm615, %v5684, 0.0
        %5719 = vadd.xlane.f32.xlu0 %v5718
        %v5720 = vpop.xlane.xlu0 %5719
        %v5721 = vsel %vm615, %v5685, 0.0
        %5722 = vadd.xlane.f32.xlu0 %v5721
        %v5723 = vpop.xlane.xlu0 %5722
        %v5724 = vsel %vm615, %v5686, 0.0
        %5725 = vadd.xlane.f32.xlu0 %v5724
        %v5726 = vpop.xlane.xlu0 %5725
        %v5727 = vsel %vm615, %v5687, 0.0
        %5728 = vadd.xlane.f32.xlu0 %v5727
        %v5729 = vpop.xlane.xlu0 %5728
        %v5730 = vsel %vm615, %v5688, 0.0
        %5731 = vadd.xlane.f32.xlu0 %v5730
        %v5732 = vpop.xlane.xlu0 %5731
        %v5733 = vsel %vm615, %v5689, 0.0
        %5734 = vadd.xlane.f32.xlu0 %v5733
        %v5735 = vpop.xlane.xlu0 %5734
        %v5736 = vsel %vm615, %v5690, 0.0
        %5737 = vadd.xlane.f32.xlu0 %v5736
        %v5738 = vpop.xlane.xlu0 %5737
        %v5739 = vmul.f32 %v5693, %v1708
        %v5740 = vmul.f32 %v5696, %v1708
        %v5741 = vmul.f32 %v5699, %v1708
        %v5742 = vmul.f32 %v5702, %v1708
        %v5743 = vmul.f32 %v5705, %v1708
        %v5744 = vmul.f32 %v5708, %v1708
        %v5745 = vmul.f32 %v5711, %v1708
        %v5746 = vmul.f32 %v5714, %v1708
        %v5747 = vmul.f32 %v5717, %v1708
        %v5748 = vmul.f32 %v5720, %v1708
        %v5749 = vmul.f32 %v5723, %v1708
        %v5750 = vmul.f32 %v5726, %v1708
        %v5751 = vmul.f32 %v5729, %v1708
        %v5752 = vmul.f32 %v5732, %v1708
        %v5753 = vmul.f32 %v5735, %v1708
        %v5754 = vmul.f32 %v5738, %v1708
        %v5755 = vadd.f32 %v5739, 1e-05
        %v5756 = vadd.f32 %v5740, 1e-05
        %v5757 = vadd.f32 %v5741, 1e-05
        %v5758 = vadd.f32 %v5742, 1e-05
        %v5759 = vadd.f32 %v5743, 1e-05
        %v5760 = vadd.f32 %v5744, 1e-05
        %v5761 = vadd.f32 %v5745, 1e-05
        %v5762 = vadd.f32 %v5746, 1e-05
        %v5763 = vadd.f32 %v5747, 1e-05
        %v5764 = vadd.f32 %v5748, 1e-05
        %v5765 = vadd.f32 %v5749, 1e-05
        %v5766 = vadd.f32 %v5750, 1e-05
        %v5767 = vadd.f32 %v5751, 1e-05
        %v5768 = vadd.f32 %v5752, 1e-05
        %v5769 = vadd.f32 %v5753, 1e-05
        %v5770 = vadd.f32 %v5754, 1e-05
        %v5771 = vrsqrt.pop %v5755
        %v5772 = vrsqrt.pop %v5756
        %v5773 = vrsqrt.pop %v5757
        %v5774 = vrsqrt.pop %v5758
        %v5775 = vrsqrt.pop %v5759
        %v5776 = vrsqrt.pop %v5760
        %v5777 = vrsqrt.pop %v5761
        %v5778 = vrsqrt.pop %v5762
        %v5779 = vrsqrt.pop %v5763
        %v5780 = vrsqrt.pop %v5764
        %v5781 = vrsqrt.pop %v5765
        %v5782 = vrsqrt.pop %v5766
        %v5783 = vrsqrt.pop %v5767
        %v5784 = vrsqrt.pop %v5768
        %v5785 = vrsqrt.pop %v5769
        %v5786 = vrsqrt.pop %v5770
        %v5787 = vmul.f32 %v5659, %v5771
        %v5788 = vmul.f32 %v5660, %v5772
        %v5789 = vmul.f32 %v5661, %v5773
        %v5790 = vmul.f32 %v5662, %v5774
        %v5791 = vmul.f32 %v5663, %v5775
        %v5792 = vmul.f32 %v5664, %v5776
        %v5793 = vmul.f32 %v5665, %v5777
        %v5794 = vmul.f32 %v5666, %v5778
        %v5795 = vmul.f32 %v5667, %v5779
        %v5796 = vmul.f32 %v5668, %v5780
        %v5797 = vmul.f32 %v5669, %v5781
        %v5798 = vmul.f32 %v5670, %v5782
        %v5799 = vmul.f32 %v5671, %v5783
        %v5800 = vmul.f32 %v5672, %v5784
        %v5801 = vmul.f32 %v5673, %v5785
        %v5802 = vmul.f32 %v5674, %v5786
        %v5803 = vld [vmem:[%s6 + $0x3] sm:$0x1]
        %v5804 = vlaneseq
        %v5805 = vshrl.u32 %v5804, 7
        %v5806 = vsub.s32 0, %v5805
        %v5807 = vrot.slane %v5803, %v5806
        %v5808 = vmul.f32 %v5787, %v5807
        %v5809 = vmul.f32 %v5788, %v5807
        %v5810 = vmul.f32 %v5789, %v5807
        %v5811 = vmul.f32 %v5790, %v5807
        %v5812 = vmul.f32 %v5791, %v5807
        %v5813 = vmul.f32 %v5792, %v5807
        %v5814 = vmul.f32 %v5793, %v5807
        %v5815 = vmul.f32 %v5794, %v5807
        %v5816 = vmul.f32 %v5795, %v5807
        %v5817 = vmul.f32 %v5796, %v5807
        %v5818 = vmul.f32 %v5797, %v5807
        %v5819 = vmul.f32 %v5798, %v5807
        %v5820 = vmul.f32 %v5799, %v5807
        %v5821 = vmul.f32 %v5800, %v5807
        %v5822 = vmul.f32 %v5801, %v5807
        %v5823 = vmul.f32 %v5802, %v5807
        %v5824 = vld [vmem:[%s7 + $0x3] sm:$0x1]
        %v5825 = vlaneseq
        %v5826 = vshrl.u32 %v5825, 7
        %v5827 = vsub.s32 0, %v5826
        %v5828 = vrot.slane %v5824, %v5827
        %v5829 = vadd.f32 %v5808, %v5828
        %v5830 = vadd.f32 %v5809, %v5828
        %v5831 = vadd.f32 %v5810, %v5828
        %v5832 = vadd.f32 %v5811, %v5828
        %v5833 = vadd.f32 %v5812, %v5828
        %v5834 = vadd.f32 %v5813, %v5828
        %v5835 = vadd.f32 %v5814, %v5828
        %v5836 = vadd.f32 %v5815, %v5828
        %v5837 = vadd.f32 %v5816, %v5828
        %v5838 = vadd.f32 %v5817, %v5828
        %v5839 = vadd.f32 %v5818, %v5828
        %v5840 = vadd.f32 %v5819, %v5828
        %v5841 = vadd.f32 %v5820, %v5828
        %v5842 = vadd.f32 %v5821, %v5828
        %v5843 = vadd.f32 %v5822, %v5828
        %v5844 = vadd.f32 %v5823, %v5828
        %s5845 = sld [smem:[#allocation3 + $0x3]]
        %v5846 = vstv %s5845
        %v5847 = vmul.f32 %v5846, %v5829
        %v5848 = vmul.f32 %v5846, %v5830
        %v5849 = vmul.f32 %v5846, %v5831
        %v5850 = vmul.f32 %v5846, %v5832
        %v5851 = vmul.f32 %v5846, %v5833
        %v5852 = vmul.f32 %v5846, %v5834
        %v5853 = vmul.f32 %v5846, %v5835
        %v5854 = vmul.f32 %v5846, %v5836
        %v5855 = vmul.f32 %v5846, %v5837
        %v5856 = vmul.f32 %v5846, %v5838
        %v5857 = vmul.f32 %v5846, %v5839
        %v5858 = vmul.f32 %v5846, %v5840
        %v5859 = vmul.f32 %v5846, %v5841
        %v5860 = vmul.f32 %v5846, %v5842
        %v5861 = vmul.f32 %v5846, %v5843
        %v5862 = vmul.f32 %v5846, %v5844
        %v5863 = vadd.f32 %v4557, %v5847
        %v5864 = vadd.f32 %v4558, %v5848
        %v5865 = vadd.f32 %v4559, %v5849
        %v5866 = vadd.f32 %v4560, %v5850
        %v5867 = vadd.f32 %v4561, %v5851
        %v5868 = vadd.f32 %v4562, %v5852
        %v5869 = vadd.f32 %v4563, %v5853
        %v5870 = vadd.f32 %v4564, %v5854
        %v5871 = vadd.f32 %v4565, %v5855
        %v5872 = vadd.f32 %v4566, %v5856
        %v5873 = vadd.f32 %v4567, %v5857
        %v5874 = vadd.f32 %v4568, %v5858
        %v5875 = vadd.f32 %v4569, %v5859
        %v5876 = vadd.f32 %v4570, %v5860
        %v5877 = vadd.f32 %v4571, %v5861
        %v5878 = vadd.f32 %v4572, %v5862
        %5879 = vst.msk [vmem:[#allocation2 + $0x8] sm:$0xff] %vm615, %v5863
        %5880 = vst.msk [vmem:[#allocation2 + $0x10] sm:$0xff] %vm615, %v5864
        %5881 = vst.msk [vmem:[#allocation2 + $0x28] sm:$0xff] %vm615, %v5865
        %5882 = vst.msk [vmem:[#allocation2 + $0x30] sm:$0xff] %vm615, %v5866
        %5883 = vst.msk [vmem:[#allocation2 + $0x48] sm:$0xff] %vm615, %v5867
        %5884 = vst.msk [vmem:[#allocation2 + $0x50] sm:$0xff] %vm615, %v5868
        %5885 = vst.msk [vmem:[#allocation2 + $0x68] sm:$0xff] %vm615, %v5869
        %5886 = vst.msk [vmem:[#allocation2 + $0x70] sm:$0xff] %vm615, %v5870
        %5887 = vst.msk [vmem:[#allocation2 + $0x88] sm:$0xff] %vm615, %v5871
        %5888 = vst.msk [vmem:[#allocation2 + $0x90] sm:$0xff] %vm615, %v5872
        %5889 = vst.msk [vmem:[#allocation2 + $0xa8] sm:$0xff] %vm615, %v5873
        %5890 = vst.msk [vmem:[#allocation2 + $0xb0] sm:$0xff] %vm615, %v5874
        %5891 = vst.msk [vmem:[#allocation2 + $0xc8] sm:$0xff] %vm615, %v5875
        %5892 = vst.msk [vmem:[#allocation2 + $0xd0] sm:$0xff] %vm615, %v5876
        %5893 = vst.msk [vmem:[#allocation2 + $0xe8] sm:$0xff] %vm615, %v5877
        %5894 = vst.msk [vmem:[#allocation2 + $0xf0] sm:$0xff] %vm615, %v5878
        %v5895 = vld [vmem:[#allocation2 + $0x7] sm:$0xff]
        %v5896 = vld [vmem:[#allocation2 + $0xf] sm:$0xff]
        %v5897 = vld [vmem:[#allocation2 + $0x27] sm:$0xff]
        %v5898 = vld [vmem:[#allocation2 + $0x2f] sm:$0xff]
        %v5899 = vld [vmem:[#allocation2 + $0x47] sm:$0xff]
        %v5900 = vld [vmem:[#allocation2 + $0x4f] sm:$0xff]
        %v5901 = vld [vmem:[#allocation2 + $0x67] sm:$0xff]
        %v5902 = vld [vmem:[#allocation2 + $0x6f] sm:$0xff]
        %v5903 = vld [vmem:[#allocation2 + $0x87] sm:$0xff]
        %v5904 = vld [vmem:[#allocation2 + $0x8f] sm:$0xff]
        %v5905 = vld [vmem:[#allocation2 + $0xa7] sm:$0xff]
        %v5906 = vld [vmem:[#allocation2 + $0xaf] sm:$0xff]
        %v5907 = vld [vmem:[#allocation2 + $0xc7] sm:$0xff]
        %v5908 = vld [vmem:[#allocation2 + $0xcf] sm:$0xff]
        %v5909 = vld [vmem:[#allocation2 + $0xe7] sm:$0xff]
        %v5910 = vld [vmem:[#allocation2 + $0xef] sm:$0xff]
        %v5911 = vpack.c.bf16 %v5896, %v5895
        %v5912 = vpack.c.bf16 %v5898, %v5897
        %v5913 = vpack.c.bf16 %v5900, %v5899
        %v5914 = vpack.c.bf16 %v5902, %v5901
        %v5915 = vpack.c.bf16 %v5904, %v5903
        %v5916 = vpack.c.bf16 %v5906, %v5905
        %v5917 = vpack.c.bf16 %v5908, %v5907
        %v5918 = vpack.c.bf16 %v5910, %v5909
        %s5919 = scalar_lea.vmem %s2, 192
        %v5920 = vld [vmem:[%s5919] sm:$0xf]
        %v5921 = vld [vmem:[%s5919 + $0x4] sm:$0xf]
        %v5922 = vld [vmem:[%s5919 + $0x8] sm:$0xf]
        %v5923 = vld [vmem:[%s5919 + $0xc] sm:$0xf]
        %s5924 = scalar_lea.vmem %s3, 192
        %v5925 = vld [vmem:[%s5924] sm:$0xf]
        %v5926 = vld [vmem:[%s5924 + $0x4] sm:$0xf]
        %v5927 = vld [vmem:[%s5924 + $0x8] sm:$0xf]
        %v5928 = vld [vmem:[%s5924 + $0xc] sm:$0xf]
        %v5929 = vld [vmem:[#allocation2 + $0x8] sm:$0xff]
        %v5930 = vld [vmem:[#allocation2 + $0x10] sm:$0xff]
        %v5931 = vld [vmem:[#allocation2 + $0x28] sm:$0xff]
        %v5932 = vld [vmem:[#allocation2 + $0x30] sm:$0xff]
        %v5933 = vld [vmem:[#allocation2 + $0x48] sm:$0xff]
        %v5934 = vld [vmem:[#allocation2 + $0x50] sm:$0xff]
        %v5935 = vld [vmem:[#allocation2 + $0x68] sm:$0xff]
        %v5936 = vld [vmem:[#allocation2 + $0x70] sm:$0xff]
        %v5937 = vld [vmem:[#allocation2 + $0x88] sm:$0xff]
        %v5938 = vld [vmem:[#allocation2 + $0x90] sm:$0xff]
        %v5939 = vld [vmem:[#allocation2 + $0xa8] sm:$0xff]
        %v5940 = vld [vmem:[#allocation2 + $0xb0] sm:$0xff]
        %v5941 = vld [vmem:[#allocation2 + $0xc8] sm:$0xff]
        %v5942 = vld [vmem:[#allocation2 + $0xd0] sm:$0xff]
        %v5943 = vld [vmem:[#allocation2 + $0xe8] sm:$0xff]
        %v5944 = vld [vmem:[#allocation2 + $0xf0] sm:$0xff]
        %v5945 = vpack.c.bf16 %v5930, %v5929
        %v5946 = vpack.c.bf16 %v5932, %v5931
        %v5947 = vpack.c.bf16 %v5934, %v5933
        %v5948 = vpack.c.bf16 %v5936, %v5935
        %v5949 = vpack.c.bf16 %v5938, %v5937
        %v5950 = vpack.c.bf16 %v5940, %v5939
        %v5951 = vpack.c.bf16 %v5942, %v5941
        %v5952 = vpack.c.bf16 %v5944, %v5943
        %s5953 = scalar_lea.vmem %s2, 208
        %v5954 = vld [vmem:[%s5953] sm:$0xf]
        %v5955 = vld [vmem:[%s5953 + $0x4] sm:$0xf]
        %v5956 = vld [vmem:[%s5953 + $0x8] sm:$0xf]
        %v5957 = vld [vmem:[%s5953 + $0xc] sm:$0xf]
        %v5962 = vunpack.c.l.b16 %v5954
        %v5963 = vunpack.c.l.b16 %v5955
        %v5964 = vunpack.c.l.b16 %v5956
        %v5965 = vunpack.c.l.b16 %v5957
        %v5966 = vpack.c.b16 %v5963, %v5962
        %v5967 = vpack.c.b16 %v5965, %v5964
        %v5971 = vsel %vm615, %v5945, 0
        %v5974 = vsel %vm615, %v5946, 0
        %v5977 = vsel %vm615, %v5947, 0
        %v5980 = vsel %vm615, %v5948, 0
        %v5983 = vsel %vm615, %v5949, 0
        %v5986 = vsel %vm615, %v5950, 0
        %v5989 = vsel %vm615, %v5951, 0
        %v5992 = vsel %vm615, %v5952, 0
        %5994 = vmatprep.subr.bf16.mxu0 0
        %5995 = vmatpush1.bf16.msra.mxu0 %v5966
        %5996 = vmatprep.subr.bf16.mxu0 0
        %5997 = vmatpush1.bf16.msra.mxu0 %v5967
        %5998 = vmatprep.subr.bf16.mxu0 0
        %5999 = vmatpush1.bf16.msra.mxu0 0
        %6000 = vmatprep.subr.bf16.mxu0 0
        %6001 = vmatpush1.bf16.msra.mxu0 0
        %6002 = vmatprep.subr.bf16.mxu0 0
        %6003 = vmatpush1.bf16.msra.mxu0 0
        %6004 = vmatprep.subr.bf16.mxu0 0
        %6005 = vmatpush1.bf16.msra.mxu0 0
        %6006 = vmatprep.subr.bf16.mxu0 0
        %6007 = vmatpush1.bf16.msra.mxu0 0
        %6008 = vmatprep.subr.bf16.mxu0 0
        %6009 = vmatpush1.bf16.msra.mxu0 0
        %6010 = vmatprep.subr.bf16.mxu0 0
        %6011 = vmatpush1.bf16.msra.mxu0 0
        %6012 = vmatprep.subr.bf16.mxu0 0
        %6013 = vmatpush1.bf16.msra.mxu0 0
        %6014 = vmatprep.subr.bf16.mxu0 0
        %6015 = vmatpush1.bf16.msra.mxu0 0
        %6016 = vmatprep.subr.bf16.mxu0 0
        %6017 = vmatpush1.bf16.msra.mxu0 0
        %6018 = vmatprep.subr.bf16.mxu0 0
        %6019 = vmatpush1.bf16.msra.mxu0 0
        %6020 = vmatprep.subr.bf16.mxu0 0
        %6021 = vmatpush1.bf16.msra.mxu0 0
        %6022 = vmatprep.subr.bf16.mxu0 0
        %6023 = vmatpush1.bf16.msra.mxu0 0
        %6024 = vmatprep.subr.bf16.mxu0 0
        %6025 = vmatpush1.bf16.msra.mxu0 0
        %6026 = vmatprep.mubr.bf16.mxu0 0
        %6027 = vmatmul.mubr.bf16.gmra.mrb[0].mxu0 %v5971
        %v6028 = vpop.f32.mrb[0].mxu0
        %v6029 = vadd.f32 0.0, %v6028
        %v6030 = vpop.f32.mrb[0].mxu0
        %v6031 = vpop.f32.mrb[0].mxu0
        %v6032 = vadd.f32 0.0, %v6031
        %v6033 = vpop.f32.mrb[0].mxu0
        %6034 = vmatprep.mubr.bf16.mxu0 0
        %6035 = vmatmul.mubr.bf16.gmra.mrb[0].mxu0 %v5974
        %v6036 = vpop.f32.mrb[0].mxu0
        %v6037 = vadd.f32 0.0, %v6036
        %v6038 = vpop.f32.mrb[0].mxu0
        %v6039 = vpop.f32.mrb[0].mxu0
        %v6040 = vadd.f32 0.0, %v6039
        %v6041 = vpop.f32.mrb[0].mxu0
        %6042 = vmatprep.mubr.bf16.mxu0 0
        %6043 = vmatmul.mubr.bf16.gmra.mrb[0].mxu0 %v5977
        %v6044 = vpop.f32.mrb[0].mxu0
        %v6045 = vadd.f32 0.0, %v6044
        %v6046 = vpop.f32.mrb[0].mxu0
        %v6047 = vpop.f32.mrb[0].mxu0
        %v6048 = vadd.f32 0.0, %v6047
        %v6049 = vpop.f32.mrb[0].mxu0
        %6050 = vmatprep.mubr.bf16.mxu0 0
        %6051 = vmatmul.mubr.bf16.gmra.mrb[0].mxu0 %v5980
        %v6052 = vpop.f32.mrb[0].mxu0
        %v6053 = vadd.f32 0.0, %v6052
        %v6054 = vpop.f32.mrb[0].mxu0
        %v6055 = vpop.f32.mrb[0].mxu0
        %v6056 = vadd.f32 0.0, %v6055
        %v6057 = vpop.f32.mrb[0].mxu0
        %6058 = vmatprep.mubr.bf16.mxu0 0
        %6059 = vmatmul.mubr.bf16.gmra.mrb[0].mxu0 %v5983
        %v6060 = vpop.f32.mrb[0].mxu0
        %v6061 = vadd.f32 0.0, %v6060
        %v6062 = vpop.f32.mrb[0].mxu0
        %v6063 = vpop.f32.mrb[0].mxu0
        %v6064 = vadd.f32 0.0, %v6063
        %v6065 = vpop.f32.mrb[0].mxu0
        %6066 = vmatprep.mubr.bf16.mxu0 0
        %6067 = vmatmul.mubr.bf16.gmra.mrb[0].mxu0 %v5986
        %v6068 = vpop.f32.mrb[0].mxu0
        %v6069 = vadd.f32 0.0, %v6068
        %v6070 = vpop.f32.mrb[0].mxu0
        %v6071 = vpop.f32.mrb[0].mxu0
        %v6072 = vadd.f32 0.0, %v6071
        %v6073 = vpop.f32.mrb[0].mxu0
        %6074 = vmatprep.mubr.bf16.mxu0 0
        %6075 = vmatmul.mubr.bf16.gmra.mrb[0].mxu0 %v5989
        %v6076 = vpop.f32.mrb[0].mxu0
        %v6077 = vadd.f32 0.0, %v6076
        %v6078 = vpop.f32.mrb[0].mxu0
        %v6079 = vpop.f32.mrb[0].mxu0
        %v6080 = vadd.f32 0.0, %v6079
        %v6081 = vpop.f32.mrb[0].mxu0
        %6082 = vmatprep.mubr.bf16.mxu0 0
        %6083 = vmatmul.mubr.bf16.gmra.mrb[0].mxu0 %v5992
        %v6084 = vpop.f32.mrb[0].mxu0
        %v6085 = vadd.f32 0.0, %v6084
        %v6086 = vpop.f32.mrb[0].mxu0
        %v6087 = vpop.f32.mrb[0].mxu0
        %v6088 = vadd.f32 0.0, %v6087
        %v6089 = vpop.f32.mrb[0].mxu0
        %6090 = vdwg.mxu0
        %v6095 = vunpack.c.l.b16 %v5920
        %v6096 = vunpack.c.l.b16 %v5921
        %v6097 = vunpack.c.l.b16 %v5922
        %v6098 = vunpack.c.l.b16 %v5923
        %v6099 = vpack.c.b16 %v6096, %v6095
        %v6100 = vpack.c.b16 %v6098, %v6097
        %v6104 = vsel %vm615, %v5911, 0
        %v6107 = vsel %vm615, %v5912, 0
        %v6110 = vsel %vm615, %v5913, 0
        %v6113 = vsel %vm615, %v5914, 0
        %v6116 = vsel %vm615, %v5915, 0
        %v6119 = vsel %vm615, %v5916, 0
        %v6122 = vsel %vm615, %v5917, 0
        %v6125 = vsel %vm615, %v5918, 0
        %6127 = vmatprep.subr.bf16.mxu0 0
        %6128 = vmatpush1.bf16.msra.mxu0 %v6099
        %6129 = vmatprep.subr.bf16.mxu0 0
        %6130 = vmatpush1.bf16.msra.mxu0 %v6100
        %6131 = vmatprep.subr.bf16.mxu0 0
        %6132 = vmatpush1.bf16.msra.mxu0 0
        %6133 = vmatprep.subr.bf16.mxu0 0
        %6134 = vmatpush1.bf16.msra.mxu0 0
        %6135 = vmatprep.subr.bf16.mxu0 0
        %6136 = vmatpush1.bf16.msra.mxu0 0
        %6137 = vmatprep.subr.bf16.mxu0 0
        %6138 = vmatpush1.bf16.msra.mxu0 0
        %6139 = vmatprep.subr.bf16.mxu0 0
        %6140 = vmatpush1.bf16.msra.mxu0 0
        %6141 = vmatprep.subr.bf16.mxu0 0
        %6142 = vmatpush1.bf16.msra.mxu0 0
        %6143 = vmatprep.subr.bf16.mxu0 0
        %6144 = vmatpush1.bf16.msra.mxu0 0
        %6145 = vmatprep.subr.bf16.mxu0 0
        %6146 = vmatpush1.bf16.msra.mxu0 0
        %6147 = vmatprep.subr.bf16.mxu0 0
        %6148 = vmatpush1.bf16.msra.mxu0 0
        %6149 = vmatprep.subr.bf16.mxu0 0
        %6150 = vmatpush1.bf16.msra.mxu0 0
        %6151 = vmatprep.subr.bf16.mxu0 0
        %6152 = vmatpush1.bf16.msra.mxu0 0
        %6153 = vmatprep.subr.bf16.mxu0 0
        %6154 = vmatpush1.bf16.msra.mxu0 0
        %6155 = vmatprep.subr.bf16.mxu0 0
        %6156 = vmatpush1.bf16.msra.mxu0 0
        %6157 = vmatprep.subr.bf16.mxu0 0
        %6158 = vmatpush1.bf16.msra.mxu0 0
        %6159 = vmatprep.mubr.bf16.mxu0 0
        %6160 = vmatmul.mubr.bf16.gmra.mrb[0].mxu0 %v6104
        %v6161 = vpop.f32.mrb[0].mxu0
        %v6162 = vadd.f32 %v6029, %v6161
        %v6163 = vpop.f32.mrb[0].mxu0
        %v6164 = vpop.f32.mrb[0].mxu0
        %v6165 = vadd.f32 %v6032, %v6164
        %v6166 = vpop.f32.mrb[0].mxu0
        %6167 = vmatprep.mubr.bf16.mxu0 0
        %6168 = vmatmul.mubr.bf16.gmra.mrb[0].mxu0 %v6107
        %v6169 = vpop.f32.mrb[0].mxu0
        %v6170 = vadd.f32 %v6037, %v6169
        %v6171 = vpop.f32.mrb[0].mxu0
        %v6172 = vpop.f32.mrb[0].mxu0
        %v6173 = vadd.f32 %v6040, %v6172
        %v6174 = vpop.f32.mrb[0].mxu0
        %6175 = vmatprep.mubr.bf16.mxu0 0
        %6176 = vmatmul.mubr.bf16.gmra.mrb[0].mxu0 %v6110
        %v6177 = vpop.f32.mrb[0].mxu0
        %v6178 = vadd.f32 %v6045, %v6177
        %v6179 = vpop.f32.mrb[0].mxu0
        %v6180 = vpop.f32.mrb[0].mxu0
        %v6181 = vadd.f32 %v6048, %v6180
        %v6182 = vpop.f32.mrb[0].mxu0
        %6183 = vmatprep.mubr.bf16.mxu0 0
        %6184 = vmatmul.mubr.bf16.gmra.mrb[0].mxu0 %v6113
        %v6185 = vpop.f32.mrb[0].mxu0
        %v6186 = vadd.f32 %v6053, %v6185
        %v6187 = vpop.f32.mrb[0].mxu0
        %v6188 = vpop.f32.mrb[0].mxu0
        %v6189 = vadd.f32 %v6056, %v6188
        %v6190 = vpop.f32.mrb[0].mxu0
        %6191 = vmatprep.mubr.bf16.mxu0 0
        %6192 = vmatmul.mubr.bf16.gmra.mrb[0].mxu0 %v6116
        %v6193 = vpop.f32.mrb[0].mxu0
        %v6194 = vadd.f32 %v6061, %v6193
        %v6195 = vpop.f32.mrb[0].mxu0
        %v6196 = vpop.f32.mrb[0].mxu0
        %v6197 = vadd.f32 %v6064, %v6196
        %v6198 = vpop.f32.mrb[0].mxu0
        %6199 = vmatprep.mubr.bf16.mxu0 0
        %6200 = vmatmul.mubr.bf16.gmra.mrb[0].mxu0 %v6119
        %v6201 = vpop.f32.mrb[0].mxu0
        %v6202 = vadd.f32 %v6069, %v6201
        %v6203 = vpop.f32.mrb[0].mxu0
        %v6204 = vpop.f32.mrb[0].mxu0
        %v6205 = vadd.f32 %v6072, %v6204
        %v6206 = vpop.f32.mrb[0].mxu0
        %6207 = vmatprep.mubr.bf16.mxu0 0
        %6208 = vmatmul.mubr.bf16.gmra.mrb[0].mxu0 %v6122
        %v6209 = vpop.f32.mrb[0].mxu0
        %v6210 = vadd.f32 %v6077, %v6209
        %v6211 = vpop.f32.mrb[0].mxu0
        %v6212 = vpop.f32.mrb[0].mxu0
        %v6213 = vadd.f32 %v6080, %v6212
        %v6214 = vpop.f32.mrb[0].mxu0
        %6215 = vmatprep.mubr.bf16.mxu0 0
        %6216 = vmatmul.mubr.bf16.gmra.mrb[0].mxu0 %v6125
        %v6217 = vpop.f32.mrb[0].mxu0
        %v6218 = vadd.f32 %v6085, %v6217
        %v6219 = vpop.f32.mrb[0].mxu0
        %v6220 = vpop.f32.mrb[0].mxu0
        %v6221 = vadd.f32 %v6088, %v6220
        %v6222 = vpop.f32.mrb[0].mxu0
        %6223 = vdwg.mxu0
        %s6224 = scalar_lea.vmem %s3, 208
        %v6225 = vld [vmem:[%s6224] sm:$0xf]
        %v6226 = vld [vmem:[%s6224 + $0x4] sm:$0xf]
        %v6227 = vld [vmem:[%s6224 + $0x8] sm:$0xf]
        %v6228 = vld [vmem:[%s6224 + $0xc] sm:$0xf]
        %v6233 = vunpack.c.l.b16 %v6225
        %v6234 = vunpack.c.l.b16 %v6226
        %v6235 = vunpack.c.l.b16 %v6227
        %v6236 = vunpack.c.l.b16 %v6228
        %v6237 = vpack.c.b16 %v6234, %v6233
        %v6238 = vpack.c.b16 %v6236, %v6235
        %6241 = vmatprep.subr.bf16.mxu0 0
        %6242 = vmatpush1.bf16.msra.mxu0 %v6237
        %6243 = vmatprep.subr.bf16.mxu0 0
        %6244 = vmatpush1.bf16.msra.mxu0 %v6238
        %6245 = vmatprep.subr.bf16.mxu0 0
        %6246 = vmatpush1.bf16.msra.mxu0 0
        %6247 = vmatprep.subr.bf16.mxu0 0
        %6248 = vmatpush1.bf16.msra.mxu0 0
        %6249 = vmatprep.subr.bf16.mxu0 0
        %6250 = vmatpush1.bf16.msra.mxu0 0
        %6251 = vmatprep.subr.bf16.mxu0 0
        %6252 = vmatpush1.bf16.msra.mxu0 0
        %6253 = vmatprep.subr.bf16.mxu0 0
        %6254 = vmatpush1.bf16.msra.mxu0 0
        %6255 = vmatprep.subr.bf16.mxu0 0
        %6256 = vmatpush1.bf16.msra.mxu0 0
        %6257 = vmatprep.subr.bf16.mxu0 0
        %6258 = vmatpush1.bf16.msra.mxu0 0
        %6259 = vmatprep.subr.bf16.mxu0 0
        %6260 = vmatpush1.bf16.msra.mxu0 0
        %6261 = vmatprep.subr.bf16.mxu0 0
        %6262 = vmatpush1.bf16.msra.mxu0 0
        %6263 = vmatprep.subr.bf16.mxu0 0
        %6264 = vmatpush1.bf16.msra.mxu0 0
        %6265 = vmatprep.subr.bf16.mxu0 0
        %6266 = vmatpush1.bf16.msra.mxu0 0
        %6267 = vmatprep.subr.bf16.mxu0 0
        %6268 = vmatpush1.bf16.msra.mxu0 0
        %6269 = vmatprep.subr.bf16.mxu0 0
        %6270 = vmatpush1.bf16.msra.mxu0 0
        %6271 = vmatprep.subr.bf16.mxu0 0
        %6272 = vmatpush1.bf16.msra.mxu0 0
        %6273 = vmatprep.mubr.bf16.mxu0 0
        %6274 = vmatmul.mubr.bf16.gmra.mrb[0].mxu0 %v5971
        %v6275 = vpop.f32.mrb[0].mxu0
        %v6276 = vadd.f32 0.0, %v6275
        %v6277 = vpop.f32.mrb[0].mxu0
        %v6278 = vpop.f32.mrb[0].mxu0
        %v6279 = vadd.f32 0.0, %v6278
        %v6280 = vpop.f32.mrb[0].mxu0
        %6281 = vmatprep.mubr.bf16.mxu0 0
        %6282 = vmatmul.mubr.bf16.gmra.mrb[0].mxu0 %v5974
        %v6283 = vpop.f32.mrb[0].mxu0
        %v6284 = vadd.f32 0.0, %v6283
        %v6285 = vpop.f32.mrb[0].mxu0
        %v6286 = vpop.f32.mrb[0].mxu0
        %v6287 = vadd.f32 0.0, %v6286
        %v6288 = vpop.f32.mrb[0].mxu0
        %6289 = vmatprep.mubr.bf16.mxu0 0
        %6290 = vmatmul.mubr.bf16.gmra.mrb[0].mxu0 %v5977
        %v6291 = vpop.f32.mrb[0].mxu0
        %v6292 = vadd.f32 0.0, %v6291
        %v6293 = vpop.f32.mrb[0].mxu0
        %v6294 = vpop.f32.mrb[0].mxu0
        %v6295 = vadd.f32 0.0, %v6294
        %v6296 = vpop.f32.mrb[0].mxu0
        %6297 = vmatprep.mubr.bf16.mxu0 0
        %6298 = vmatmul.mubr.bf16.gmra.mrb[0].mxu0 %v5980
        %v6299 = vpop.f32.mrb[0].mxu0
        %v6300 = vadd.f32 0.0, %v6299
        %v6301 = vpop.f32.mrb[0].mxu0
        %v6302 = vpop.f32.mrb[0].mxu0
        %v6303 = vadd.f32 0.0, %v6302
        %v6304 = vpop.f32.mrb[0].mxu0
        %6305 = vmatprep.mubr.bf16.mxu0 0
        %6306 = vmatmul.mubr.bf16.gmra.mrb[0].mxu0 %v5983
        %v6307 = vpop.f32.mrb[0].mxu0
        %v6308 = vadd.f32 0.0, %v6307
        %v6309 = vpop.f32.mrb[0].mxu0
        %v6310 = vpop.f32.mrb[0].mxu0
        %v6311 = vadd.f32 0.0, %v6310
        %v6312 = vpop.f32.mrb[0].mxu0
        %6313 = vmatprep.mubr.bf16.mxu0 0
        %6314 = vmatmul.mubr.bf16.gmra.mrb[0].mxu0 %v5986
        %v6315 = vpop.f32.mrb[0].mxu0
        %v6316 = vadd.f32 0.0, %v6315
        %v6317 = vpop.f32.mrb[0].mxu0
        %v6318 = vpop.f32.mrb[0].mxu0
        %v6319 = vadd.f32 0.0, %v6318
        %v6320 = vpop.f32.mrb[0].mxu0
        %6321 = vmatprep.mubr.bf16.mxu0 0
        %6322 = vmatmul.mubr.bf16.gmra.mrb[0].mxu0 %v5989
        %v6323 = vpop.f32.mrb[0].mxu0
        %v6324 = vadd.f32 0.0, %v6323
        %v6325 = vpop.f32.mrb[0].mxu0
        %v6326 = vpop.f32.mrb[0].mxu0
        %v6327 = vadd.f32 0.0, %v6326
        %v6328 = vpop.f32.mrb[0].mxu0
        %6329 = vmatprep.mubr.bf16.mxu0 0
        %6330 = vmatmul.mubr.bf16.gmra.mrb[0].mxu0 %v5992
        %v6331 = vpop.f32.mrb[0].mxu0
        %v6332 = vadd.f32 0.0, %v6331
        %v6333 = vpop.f32.mrb[0].mxu0
        %v6334 = vpop.f32.mrb[0].mxu0
        %v6335 = vadd.f32 0.0, %v6334
        %v6336 = vpop.f32.mrb[0].mxu0
        %6337 = vdwg.mxu0
        %v6342 = vunpack.c.l.b16 %v5925
        %v6343 = vunpack.c.l.b16 %v5926
        %v6344 = vunpack.c.l.b16 %v5927
        %v6345 = vunpack.c.l.b16 %v5928
        %v6346 = vpack.c.b16 %v6343, %v6342
        %v6347 = vpack.c.b16 %v6345, %v6344
        %6350 = vmatprep.subr.bf16.mxu0 0
        %6351 = vmatpush1.bf16.msra.mxu0 %v6346
        %6352 = vmatprep.subr.bf16.mxu0 0
        %6353 = vmatpush1.bf16.msra.mxu0 %v6347
        %6354 = vmatprep.subr.bf16.mxu0 0
        %6355 = vmatpush1.bf16.msra.mxu0 0
        %6356 = vmatprep.subr.bf16.mxu0 0
        %6357 = vmatpush1.bf16.msra.mxu0 0
        %6358 = vmatprep.subr.bf16.mxu0 0
        %6359 = vmatpush1.bf16.msra.mxu0 0
        %6360 = vmatprep.subr.bf16.mxu0 0
        %6361 = vmatpush1.bf16.msra.mxu0 0
        %6362 = vmatprep.subr.bf16.mxu0 0
        %6363 = vmatpush1.bf16.msra.mxu0 0
        %6364 = vmatprep.subr.bf16.mxu0 0
        %6365 = vmatpush1.bf16.msra.mxu0 0
        %6366 = vmatprep.subr.bf16.mxu0 0
        %6367 = vmatpush1.bf16.msra.mxu0 0
        %6368 = vmatprep.subr.bf16.mxu0 0
        %6369 = vmatpush1.bf16.msra.mxu0 0
        %6370 = vmatprep.subr.bf16.mxu0 0
        %6371 = vmatpush1.bf16.msra.mxu0 0
        %6372 = vmatprep.subr.bf16.mxu0 0
        %6373 = vmatpush1.bf16.msra.mxu0 0
        %6374 = vmatprep.subr.bf16.mxu0 0
        %6375 = vmatpush1.bf16.msra.mxu0 0
        %6376 = vmatprep.subr.bf16.mxu0 0
        %6377 = vmatpush1.bf16.msra.mxu0 0
        %6378 = vmatprep.subr.bf16.mxu0 0
        %6379 = vmatpush1.bf16.msra.mxu0 0
        %6380 = vmatprep.subr.bf16.mxu0 0
        %6381 = vmatpush1.bf16.msra.mxu0 0
        %6382 = vmatprep.mubr.bf16.mxu0 0
        %6383 = vmatmul.mubr.bf16.gmra.mrb[0].mxu0 %v6104
        %v6384 = vpop.f32.mrb[0].mxu0
        %v6385 = vadd.f32 %v6276, %v6384
        %v6386 = vpop.f32.mrb[0].mxu0
        %v6387 = vpop.f32.mrb[0].mxu0
        %v6388 = vadd.f32 %v6279, %v6387
        %v6389 = vpop.f32.mrb[0].mxu0
        %6390 = vmatprep.mubr.bf16.mxu0 0
        %6391 = vmatmul.mubr.bf16.gmra.mrb[0].mxu0 %v6107
        %v6392 = vpop.f32.mrb[0].mxu0
        %v6393 = vadd.f32 %v6284, %v6392
        %v6394 = vpop.f32.mrb[0].mxu0
        %v6395 = vpop.f32.mrb[0].mxu0
        %v6396 = vadd.f32 %v6287, %v6395
        %v6397 = vpop.f32.mrb[0].mxu0
        %6398 = vmatprep.mubr.bf16.mxu0 0
        %6399 = vmatmul.mubr.bf16.gmra.mrb[0].mxu0 %v6110
        %v6400 = vpop.f32.mrb[0].mxu0
        %v6401 = vadd.f32 %v6292, %v6400
        %v6402 = vpop.f32.mrb[0].mxu0
        %v6403 = vpop.f32.mrb[0].mxu0
        %v6404 = vadd.f32 %v6295, %v6403
        %v6405 = vpop.f32.mrb[0].mxu0
        %6406 = vmatprep.mubr.bf16.mxu0 0
        %6407 = vmatmul.mubr.bf16.gmra.mrb[0].mxu0 %v6113
        %v6408 = vpop.f32.mrb[0].mxu0
        %v6409 = vadd.f32 %v6300, %v6408
        %v6410 = vpop.f32.mrb[0].mxu0
        %v6411 = vpop.f32.mrb[0].mxu0
        %v6412 = vadd.f32 %v6303, %v6411
        %v6413 = vpop.f32.mrb[0].mxu0
        %6414 = vmatprep.mubr.bf16.mxu0 0
        %6415 = vmatmul.mubr.bf16.gmra.mrb[0].mxu0 %v6116
        %v6416 = vpop.f32.mrb[0].mxu0
        %v6417 = vadd.f32 %v6308, %v6416
        %v6418 = vpop.f32.mrb[0].mxu0
        %v6419 = vpop.f32.mrb[0].mxu0
        %v6420 = vadd.f32 %v6311, %v6419
        %v6421 = vpop.f32.mrb[0].mxu0
        %6422 = vmatprep.mubr.bf16.mxu0 0
        %6423 = vmatmul.mubr.bf16.gmra.mrb[0].mxu0 %v6119
        %v6424 = vpop.f32.mrb[0].mxu0
        %v6425 = vadd.f32 %v6316, %v6424
        %v6426 = vpop.f32.mrb[0].mxu0
        %v6427 = vpop.f32.mrb[0].mxu0
        %v6428 = vadd.f32 %v6319, %v6427
        %v6429 = vpop.f32.mrb[0].mxu0
        %6430 = vmatprep.mubr.bf16.mxu0 0
        %6431 = vmatmul.mubr.bf16.gmra.mrb[0].mxu0 %v6122
        %v6432 = vpop.f32.mrb[0].mxu0
        %v6433 = vadd.f32 %v6324, %v6432
        %v6434 = vpop.f32.mrb[0].mxu0
        %v6435 = vpop.f32.mrb[0].mxu0
        %v6436 = vadd.f32 %v6327, %v6435
        %v6437 = vpop.f32.mrb[0].mxu0
        %6438 = vmatprep.mubr.bf16.mxu0 0
        %6439 = vmatmul.mubr.bf16.gmra.mrb[0].mxu0 %v6125
        %v6440 = vpop.f32.mrb[0].mxu0
        %v6441 = vadd.f32 %v6332, %v6440
        %v6442 = vpop.f32.mrb[0].mxu0
        %v6443 = vpop.f32.mrb[0].mxu0
        %v6444 = vadd.f32 %v6335, %v6443
        %v6445 = vpop.f32.mrb[0].mxu0
        %6446 = vdwg.mxu0
        %v6447 = vld [vmem:[#allocation2 + $0x9] sm:$0xff]
        %v6448 = vld [vmem:[#allocation2 + $0x11] sm:$0xff]
        %v6449 = vld [vmem:[#allocation2 + $0x29] sm:$0xff]
        %v6450 = vld [vmem:[#allocation2 + $0x31] sm:$0xff]
        %v6451 = vld [vmem:[#allocation2 + $0x49] sm:$0xff]
        %v6452 = vld [vmem:[#allocation2 + $0x51] sm:$0xff]
        %v6453 = vld [vmem:[#allocation2 + $0x69] sm:$0xff]
        %v6454 = vld [vmem:[#allocation2 + $0x71] sm:$0xff]
        %v6455 = vld [vmem:[#allocation2 + $0x89] sm:$0xff]
        %v6456 = vld [vmem:[#allocation2 + $0x91] sm:$0xff]
        %v6457 = vld [vmem:[#allocation2 + $0xa9] sm:$0xff]
        %v6458 = vld [vmem:[#allocation2 + $0xb1] sm:$0xff]
        %v6459 = vld [vmem:[#allocation2 + $0xc9] sm:$0xff]
        %v6460 = vld [vmem:[#allocation2 + $0xd1] sm:$0xff]
        %v6461 = vld [vmem:[#allocation2 + $0xe9] sm:$0xff]
        %v6462 = vld [vmem:[#allocation2 + $0xf1] sm:$0xff]
        %v6463 = vpack.c.bf16 %v6448, %v6447
        %v6464 = vpack.c.bf16 %v6450, %v6449
        %v6465 = vpack.c.bf16 %v6452, %v6451
        %v6466 = vpack.c.bf16 %v6454, %v6453
        %v6467 = vpack.c.bf16 %v6456, %v6455
        %v6468 = vpack.c.bf16 %v6458, %v6457
        %v6469 = vpack.c.bf16 %v6460, %v6459
        %v6470 = vpack.c.bf16 %v6462, %v6461
        %s6471 = scalar_lea.vmem %s2, 224
        %v6472 = vld [vmem:[%s6471] sm:$0xf]
        %v6473 = vld [vmem:[%s6471 + $0x4] sm:$0xf]
        %v6474 = vld [vmem:[%s6471 + $0x8] sm:$0xf]
        %v6475 = vld [vmem:[%s6471 + $0xc] sm:$0xf]
        %v6480 = vunpack.c.l.b16 %v6472
        %v6481 = vunpack.c.l.b16 %v6473
        %v6482 = vunpack.c.l.b16 %v6474
        %v6483 = vunpack.c.l.b16 %v6475
        %v6484 = vpack.c.b16 %v6481, %v6480
        %v6485 = vpack.c.b16 %v6483, %v6482
        %v6489 = vsel %vm615, %v6463, 0
        %v6492 = vsel %vm615, %v6464, 0
        %v6495 = vsel %vm615, %v6465, 0
        %v6498 = vsel %vm615, %v6466, 0
        %v6501 = vsel %vm615, %v6467, 0
        %v6504 = vsel %vm615, %v6468, 0
        %v6507 = vsel %vm615, %v6469, 0
        %v6510 = vsel %vm615, %v6470, 0
        %6512 = vmatprep.subr.bf16.mxu0 0
        %6513 = vmatpush1.bf16.msra.mxu0 %v6484
        %6514 = vmatprep.subr.bf16.mxu0 0
        %6515 = vmatpush1.bf16.msra.mxu0 %v6485
        %6516 = vmatprep.subr.bf16.mxu0 0
        %6517 = vmatpush1.bf16.msra.mxu0 0
        %6518 = vmatprep.subr.bf16.mxu0 0
        %6519 = vmatpush1.bf16.msra.mxu0 0
        %6520 = vmatprep.subr.bf16.mxu0 0
        %6521 = vmatpush1.bf16.msra.mxu0 0
        %6522 = vmatprep.subr.bf16.mxu0 0
        %6523 = vmatpush1.bf16.msra.mxu0 0
        %6524 = vmatprep.subr.bf16.mxu0 0
        %6525 = vmatpush1.bf16.msra.mxu0 0
        %6526 = vmatprep.subr.bf16.mxu0 0
        %6527 = vmatpush1.bf16.msra.mxu0 0
        %6528 = vmatprep.subr.bf16.mxu0 0
        %6529 = vmatpush1.bf16.msra.mxu0 0
        %6530 = vmatprep.subr.bf16.mxu0 0
        %6531 = vmatpush1.bf16.msra.mxu0 0
        %6532 = vmatprep.subr.bf16.mxu0 0
        %6533 = vmatpush1.bf16.msra.mxu0 0
        %6534 = vmatprep.subr.bf16.mxu0 0
        %6535 = vmatpush1.bf16.msra.mxu0 0
        %6536 = vmatprep.subr.bf16.mxu0 0
        %6537 = vmatpush1.bf16.msra.mxu0 0
        %6538 = vmatprep.subr.bf16.mxu0 0
        %6539 = vmatpush1.bf16.msra.mxu0 0
        %6540 = vmatprep.subr.bf16.mxu0 0
        %6541 = vmatpush1.bf16.msra.mxu0 0
        %6542 = vmatprep.subr.bf16.mxu0 0
        %6543 = vmatpush1.bf16.msra.mxu0 0
        %6544 = vmatprep.mubr.bf16.mxu0 0
        %6545 = vmatmul.mubr.bf16.gmra.mrb[0].mxu0 %v6489
        %v6546 = vpop.f32.mrb[0].mxu0
        %v6547 = vadd.f32 0.0, %v6546
        %v6548 = vpop.f32.mrb[0].mxu0
        %v6549 = vpop.f32.mrb[0].mxu0
        %v6550 = vadd.f32 0.0, %v6549
        %v6551 = vpop.f32.mrb[0].mxu0
        %6552 = vmatprep.mubr.bf16.mxu0 0
        %6553 = vmatmul.mubr.bf16.gmra.mrb[0].mxu0 %v6492
        %v6554 = vpop.f32.mrb[0].mxu0
        %v6555 = vadd.f32 0.0, %v6554
        %v6556 = vpop.f32.mrb[0].mxu0
        %v6557 = vpop.f32.mrb[0].mxu0
        %v6558 = vadd.f32 0.0, %v6557
        %v6559 = vpop.f32.mrb[0].mxu0
        %6560 = vmatprep.mubr.bf16.mxu0 0
        %6561 = vmatmul.mubr.bf16.gmra.mrb[0].mxu0 %v6495
        %v6562 = vpop.f32.mrb[0].mxu0
        %v6563 = vadd.f32 0.0, %v6562
        %v6564 = vpop.f32.mrb[0].mxu0
        %v6565 = vpop.f32.mrb[0].mxu0
        %v6566 = vadd.f32 0.0, %v6565
        %v6567 = vpop.f32.mrb[0].mxu0
        %6568 = vmatprep.mubr.bf16.mxu0 0
        %6569 = vmatmul.mubr.bf16.gmra.mrb[0].mxu0 %v6498
        %v6570 = vpop.f32.mrb[0].mxu0
        %v6571 = vadd.f32 0.0, %v6570
        %v6572 = vpop.f32.mrb[0].mxu0
        %v6573 = vpop.f32.mrb[0].mxu0
        %v6574 = vadd.f32 0.0, %v6573
        %v6575 = vpop.f32.mrb[0].mxu0
        %6576 = vmatprep.mubr.bf16.mxu0 0
        %6577 = vmatmul.mubr.bf16.gmra.mrb[0].mxu0 %v6501
        %v6578 = vpop.f32.mrb[0].mxu0
        %v6579 = vadd.f32 0.0, %v6578
        %v6580 = vpop.f32.mrb[0].mxu0
        %v6581 = vpop.f32.mrb[0].mxu0
        %v6582 = vadd.f32 0.0, %v6581
        %v6583 = vpop.f32.mrb[0].mxu0
        %6584 = vmatprep.mubr.bf16.mxu0 0
        %6585 = vmatmul.mubr.bf16.gmra.mrb[0].mxu0 %v6504
        %v6586 = vpop.f32.mrb[0].mxu0
        %v6587 = vadd.f32 0.0, %v6586
        %v6588 = vpop.f32.mrb[0].mxu0
        %v6589 = vpop.f32.mrb[0].mxu0
        %v6590 = vadd.f32 0.0, %v6589
        %v6591 = vpop.f32.mrb[0].mxu0
        %6592 = vmatprep.mubr.bf16.mxu0 0
        %6593 = vmatmul.mubr.bf16.gmra.mrb[0].mxu0 %v6507
        %v6594 = vpop.f32.mrb[0].mxu0
        %v6595 = vadd.f32 0.0, %v6594
        %v6596 = vpop.f32.mrb[0].mxu0
        %v6597 = vpop.f32.mrb[0].mxu0
        %v6598 = vadd.f32 0.0, %v6597
        %v6599 = vpop.f32.mrb[0].mxu0
        %6600 = vmatprep.mubr.bf16.mxu0 0
        %6601 = vmatmul.mubr.bf16.gmra.mrb[0].mxu0 %v6510
        %v6602 = vpop.f32.mrb[0].mxu0
        %v6603 = vadd.f32 0.0, %v6602
        %v6604 = vpop.f32.mrb[0].mxu0
        %v6605 = vpop.f32.mrb[0].mxu0
        %v6606 = vadd.f32 0.0, %v6605
        %v6607 = vpop.f32.mrb[0].mxu0
        %6608 = vdwg.mxu0
        %v6609 = vadd.f32 %v6162, %v6547
        %v6610 = vadd.f32 %v6165, %v6550
        %v6611 = vadd.f32 %v6170, %v6555
        %v6612 = vadd.f32 %v6173, %v6558
        %v6613 = vadd.f32 %v6178, %v6563
        %v6614 = vadd.f32 %v6181, %v6566
        %v6615 = vadd.f32 %v6186, %v6571
        %v6616 = vadd.f32 %v6189, %v6574
        %v6617 = vadd.f32 %v6194, %v6579
        %v6618 = vadd.f32 %v6197, %v6582
        %v6619 = vadd.f32 %v6202, %v6587
        %v6620 = vadd.f32 %v6205, %v6590
        %v6621 = vadd.f32 %v6210, %v6595
        %v6622 = vadd.f32 %v6213, %v6598
        %v6623 = vadd.f32 %v6218, %v6603
        %v6624 = vadd.f32 %v6221, %v6606
        %s6625 = scalar_lea.vmem %s3, 224
        %v6626 = vld [vmem:[%s6625] sm:$0xf]
        %v6627 = vld [vmem:[%s6625 + $0x4] sm:$0xf]
        %v6628 = vld [vmem:[%s6625 + $0x8] sm:$0xf]
        %v6629 = vld [vmem:[%s6625 + $0xc] sm:$0xf]
        %v6634 = vunpack.c.l.b16 %v6626
        %v6635 = vunpack.c.l.b16 %v6627
        %v6636 = vunpack.c.l.b16 %v6628
        %v6637 = vunpack.c.l.b16 %v6629
        %v6638 = vpack.c.b16 %v6635, %v6634
        %v6639 = vpack.c.b16 %v6637, %v6636
        %6642 = vmatprep.subr.bf16.mxu0 0
        %6643 = vmatpush1.bf16.msra.mxu0 %v6638
        %6644 = vmatprep.subr.bf16.mxu0 0
        %6645 = vmatpush1.bf16.msra.mxu0 %v6639
        %6646 = vmatprep.subr.bf16.mxu0 0
        %6647 = vmatpush1.bf16.msra.mxu0 0
        %6648 = vmatprep.subr.bf16.mxu0 0
        %6649 = vmatpush1.bf16.msra.mxu0 0
        %6650 = vmatprep.subr.bf16.mxu0 0
        %6651 = vmatpush1.bf16.msra.mxu0 0
        %6652 = vmatprep.subr.bf16.mxu0 0
        %6653 = vmatpush1.bf16.msra.mxu0 0
        %6654 = vmatprep.subr.bf16.mxu0 0
        %6655 = vmatpush1.bf16.msra.mxu0 0
        %6656 = vmatprep.subr.bf16.mxu0 0
        %6657 = vmatpush1.bf16.msra.mxu0 0
        %6658 = vmatprep.subr.bf16.mxu0 0
        %6659 = vmatpush1.bf16.msra.mxu0 0
        %6660 = vmatprep.subr.bf16.mxu0 0
        %6661 = vmatpush1.bf16.msra.mxu0 0
        %6662 = vmatprep.subr.bf16.mxu0 0
        %6663 = vmatpush1.bf16.msra.mxu0 0
        %6664 = vmatprep.subr.bf16.mxu0 0
        %6665 = vmatpush1.bf16.msra.mxu0 0
        %6666 = vmatprep.subr.bf16.mxu0 0
        %6667 = vmatpush1.bf16.msra.mxu0 0
        %6668 = vmatprep.subr.bf16.mxu0 0
        %6669 = vmatpush1.bf16.msra.mxu0 0
        %6670 = vmatprep.subr.bf16.mxu0 0
        %6671 = vmatpush1.bf16.msra.mxu0 0
        %6672 = vmatprep.subr.bf16.mxu0 0
        %6673 = vmatpush1.bf16.msra.mxu0 0
        %6674 = vmatprep.mubr.bf16.mxu0 0
        %6675 = vmatmul.mubr.bf16.gmra.mrb[0].mxu0 %v6489
        %v6676 = vpop.f32.mrb[0].mxu0
        %v6677 = vadd.f32 0.0, %v6676
        %v6678 = vpop.f32.mrb[0].mxu0
        %v6679 = vpop.f32.mrb[0].mxu0
        %v6680 = vadd.f32 0.0, %v6679
        %v6681 = vpop.f32.mrb[0].mxu0
        %6682 = vmatprep.mubr.bf16.mxu0 0
        %6683 = vmatmul.mubr.bf16.gmra.mrb[0].mxu0 %v6492
        %v6684 = vpop.f32.mrb[0].mxu0
        %v6685 = vadd.f32 0.0, %v6684
        %v6686 = vpop.f32.mrb[0].mxu0
        %v6687 = vpop.f32.mrb[0].mxu0
        %v6688 = vadd.f32 0.0, %v6687
        %v6689 = vpop.f32.mrb[0].mxu0
        %6690 = vmatprep.mubr.bf16.mxu0 0
        %6691 = vmatmul.mubr.bf16.gmra.mrb[0].mxu0 %v6495
        %v6692 = vpop.f32.mrb[0].mxu0
        %v6693 = vadd.f32 0.0, %v6692
        %v6694 = vpop.f32.mrb[0].mxu0
        %v6695 = vpop.f32.mrb[0].mxu0
        %v6696 = vadd.f32 0.0, %v6695
        %v6697 = vpop.f32.mrb[0].mxu0
        %6698 = vmatprep.mubr.bf16.mxu0 0
        %6699 = vmatmul.mubr.bf16.gmra.mrb[0].mxu0 %v6498
        %v6700 = vpop.f32.mrb[0].mxu0
        %v6701 = vadd.f32 0.0, %v6700
        %v6702 = vpop.f32.mrb[0].mxu0
        %v6703 = vpop.f32.mrb[0].mxu0
        %v6704 = vadd.f32 0.0, %v6703
        %v6705 = vpop.f32.mrb[0].mxu0
        %6706 = vmatprep.mubr.bf16.mxu0 0
        %6707 = vmatmul.mubr.bf16.gmra.mrb[0].mxu0 %v6501
        %v6708 = vpop.f32.mrb[0].mxu0
        %v6709 = vadd.f32 0.0, %v6708
        %v6710 = vpop.f32.mrb[0].mxu0
        %v6711 = vpop.f32.mrb[0].mxu0
        %v6712 = vadd.f32 0.0, %v6711
        %v6713 = vpop.f32.mrb[0].mxu0
        %6714 = vmatprep.mubr.bf16.mxu0 0
        %6715 = vmatmul.mubr.bf16.gmra.mrb[0].mxu0 %v6504
        %v6716 = vpop.f32.mrb[0].mxu0
        %v6717 = vadd.f32 0.0, %v6716
        %v6718 = vpop.f32.mrb[0].mxu0
        %v6719 = vpop.f32.mrb[0].mxu0
        %v6720 = vadd.f32 0.0, %v6719
        %v6721 = vpop.f32.mrb[0].mxu0
        %6722 = vmatprep.mubr.bf16.mxu0 0
        %6723 = vmatmul.mubr.bf16.gmra.mrb[0].mxu0 %v6507
        %v6724 = vpop.f32.mrb[0].mxu0
        %v6725 = vadd.f32 0.0, %v6724
        %v6726 = vpop.f32.mrb[0].mxu0
        %v6727 = vpop.f32.mrb[0].mxu0
        %v6728 = vadd.f32 0.0, %v6727
        %v6729 = vpop.f32.mrb[0].mxu0
        %6730 = vmatprep.mubr.bf16.mxu0 0
        %6731 = vmatmul.mubr.bf16.gmra.mrb[0].mxu0 %v6510
        %v6732 = vpop.f32.mrb[0].mxu0
        %v6733 = vadd.f32 0.0, %v6732
        %v6734 = vpop.f32.mrb[0].mxu0
        %v6735 = vpop.f32.mrb[0].mxu0
        %v6736 = vadd.f32 0.0, %v6735
        %v6737 = vpop.f32.mrb[0].mxu0
        %6738 = vdwg.mxu0
        %v6739 = vadd.f32 %v6385, %v6677
        %v6740 = vadd.f32 %v6388, %v6680
        %v6741 = vadd.f32 %v6393, %v6685
        %v6742 = vadd.f32 %v6396, %v6688
        %v6743 = vadd.f32 %v6401, %v6693
        %v6744 = vadd.f32 %v6404, %v6696
        %v6745 = vadd.f32 %v6409, %v6701
        %v6746 = vadd.f32 %v6412, %v6704
        %v6747 = vadd.f32 %v6417, %v6709
        %v6748 = vadd.f32 %v6420, %v6712
        %v6749 = vadd.f32 %v6425, %v6717
        %v6750 = vadd.f32 %v6428, %v6720
        %v6751 = vadd.f32 %v6433, %v6725
        %v6752 = vadd.f32 %v6436, %v6728
        %v6753 = vadd.f32 %v6441, %v6733
        %v6754 = vadd.f32 %v6444, %v6736
        %v6755 = vld [vmem:[%s4 + $0x4] sm:$0x1]
        %v6756 = vlaneseq
        %v6757 = vshrl.u32 %v6756, 7
        %v6758 = vsub.s32 0, %v6757
        %v6759 = vrot.slane %v6755, %v6758
        %v6760 = vadd.f32 %v6609, %v6759
        %v6761 = vadd.f32 %v6610, %v6759
        %v6762 = vadd.f32 %v6611, %v6759
        %v6763 = vadd.f32 %v6612, %v6759
        %v6764 = vadd.f32 %v6613, %v6759
        %v6765 = vadd.f32 %v6614, %v6759
        %v6766 = vadd.f32 %v6615, %v6759
        %v6767 = vadd.f32 %v6616, %v6759
        %v6768 = vadd.f32 %v6617, %v6759
        %v6769 = vadd.f32 %v6618, %v6759
        %v6770 = vadd.f32 %v6619, %v6759
        %v6771 = vadd.f32 %v6620, %v6759
        %v6772 = vadd.f32 %v6621, %v6759
        %v6773 = vadd.f32 %v6622, %v6759
        %v6774 = vadd.f32 %v6623, %v6759
        %v6775 = vadd.f32 %v6624, %v6759
        %v6776 = vld [vmem:[%s5 + $0x4] sm:$0x1]
        %v6777 = vlaneseq
        %v6778 = vshrl.u32 %v6777, 7
        %v6779 = vsub.s32 0, %v6778
        %v6780 = vrot.slane %v6776, %v6779
        %v6781 = vadd.f32 %v6739, %v6780
        %v6782 = vadd.f32 %v6740, %v6780
        %v6783 = vadd.f32 %v6741, %v6780
        %v6784 = vadd.f32 %v6742, %v6780
        %v6785 = vadd.f32 %v6743, %v6780
        %v6786 = vadd.f32 %v6744, %v6780
        %v6787 = vadd.f32 %v6745, %v6780
        %v6788 = vadd.f32 %v6746, %v6780
        %v6789 = vadd.f32 %v6747, %v6780
        %v6790 = vadd.f32 %v6748, %v6780
        %v6791 = vadd.f32 %v6749, %v6780
        %v6792 = vadd.f32 %v6750, %v6780
        %v6793 = vadd.f32 %v6751, %v6780
        %v6794 = vadd.f32 %v6752, %v6780
        %v6795 = vadd.f32 %v6753, %v6780
        %v6796 = vadd.f32 %v6754, %v6780
        %v6797 = vxor.u32 %v6781, 2147483648
        %v6798 = vxor.u32 %v6782, 2147483648
        %v6799 = vxor.u32 %v6783, 2147483648
        %v6800 = vxor.u32 %v6784, 2147483648
        %v6801 = vxor.u32 %v6785, 2147483648
        %v6802 = vxor.u32 %v6786, 2147483648
        %v6803 = vxor.u32 %v6787, 2147483648
        %v6804 = vxor.u32 %v6788, 2147483648
        %v6805 = vxor.u32 %v6789, 2147483648
        %v6806 = vxor.u32 %v6790, 2147483648
        %v6807 = vxor.u32 %v6791, 2147483648
        %v6808 = vxor.u32 %v6792, 2147483648
        %v6809 = vxor.u32 %v6793, 2147483648
        %v6810 = vxor.u32 %v6794, 2147483648
        %v6811 = vxor.u32 %v6795, 2147483648
        %v6812 = vxor.u32 %v6796, 2147483648
        %v6813 = vmul.f32 %v6797, 1.442695
        %v6814 = vpow.pop %v6813
        %v6815 = vmul.f32 %v6798, 1.442695
        %v6816 = vpow.pop %v6815
        %v6817 = vmul.f32 %v6799, 1.442695
        %v6818 = vpow.pop %v6817
        %v6819 = vmul.f32 %v6800, 1.442695
        %v6820 = vpow.pop %v6819
        %v6821 = vmul.f32 %v6801, 1.442695
        %v6822 = vpow.pop %v6821
        %v6823 = vmul.f32 %v6802, 1.442695
        %v6824 = vpow.pop %v6823
        %v6825 = vmul.f32 %v6803, 1.442695
        %v6826 = vpow.pop %v6825
        %v6827 = vmul.f32 %v6804, 1.442695
        %v6828 = vpow.pop %v6827
        %v6829 = vmul.f32 %v6805, 1.442695
        %v6830 = vpow.pop %v6829
        %v6831 = vmul.f32 %v6806, 1.442695
        %v6832 = vpow.pop %v6831
        %v6833 = vmul.f32 %v6807, 1.442695
        %v6834 = vpow.pop %v6833
        %v6835 = vmul.f32 %v6808, 1.442695
        %v6836 = vpow.pop %v6835
        %v6837 = vmul.f32 %v6809, 1.442695
        %v6838 = vpow.pop %v6837
        %v6839 = vmul.f32 %v6810, 1.442695
        %v6840 = vpow.pop %v6839
        %v6841 = vmul.f32 %v6811, 1.442695
        %v6842 = vpow.pop %v6841
        %v6843 = vmul.f32 %v6812, 1.442695
        %v6844 = vpow.pop %v6843
        %v6845 = vadd.f32 %v6814, 1.0
        %v6846 = vadd.f32 %v6816, 1.0
        %v6847 = vadd.f32 %v6818, 1.0
        %v6848 = vadd.f32 %v6820, 1.0
        %v6849 = vadd.f32 %v6822, 1.0
        %v6850 = vadd.f32 %v6824, 1.0
        %v6851 = vadd.f32 %v6826, 1.0
        %v6852 = vadd.f32 %v6828, 1.0
        %v6853 = vadd.f32 %v6830, 1.0
        %v6854 = vadd.f32 %v6832, 1.0
        %v6855 = vadd.f32 %v6834, 1.0
        %v6856 = vadd.f32 %v6836, 1.0
        %v6857 = vadd.f32 %v6838, 1.0
        %v6858 = vadd.f32 %v6840, 1.0
        %v6859 = vadd.f32 %v6842, 1.0
        %v6860 = vadd.f32 %v6844, 1.0
        %v6861 = vrcp.pop %v6845
        %v6862 = vmul.f32 1.0, %v6861
        %v6863 = vrcp.pop %v6846
        %v6864 = vmul.f32 1.0, %v6863
        %v6865 = vrcp.pop %v6847
        %v6866 = vmul.f32 1.0, %v6865
        %v6867 = vrcp.pop %v6848
        %v6868 = vmul.f32 1.0, %v6867
        %v6869 = vrcp.pop %v6849
        %v6870 = vmul.f32 1.0, %v6869
        %v6871 = vrcp.pop %v6850
        %v6872 = vmul.f32 1.0, %v6871
        %v6873 = vrcp.pop %v6851
        %v6874 = vmul.f32 1.0, %v6873
        %v6875 = vrcp.pop %v6852
        %v6876 = vmul.f32 1.0, %v6875
        %v6877 = vrcp.pop %v6853
        %v6878 = vmul.f32 1.0, %v6877
        %v6879 = vrcp.pop %v6854
        %v6880 = vmul.f32 1.0, %v6879
        %v6881 = vrcp.pop %v6855
        %v6882 = vmul.f32 1.0, %v6881
        %v6883 = vrcp.pop %v6856
        %v6884 = vmul.f32 1.0, %v6883
        %v6885 = vrcp.pop %v6857
        %v6886 = vmul.f32 1.0, %v6885
        %v6887 = vrcp.pop %v6858
        %v6888 = vmul.f32 1.0, %v6887
        %v6889 = vrcp.pop %v6859
        %v6890 = vmul.f32 1.0, %v6889
        %v6891 = vrcp.pop %v6860
        %v6892 = vmul.f32 1.0, %v6891
        %v6893 = vmul.f32 %v6760, %v6862
        %v6894 = vmul.f32 %v6761, %v6864
        %v6895 = vmul.f32 %v6762, %v6866
        %v6896 = vmul.f32 %v6763, %v6868
        %v6897 = vmul.f32 %v6764, %v6870
        %v6898 = vmul.f32 %v6765, %v6872
        %v6899 = vmul.f32 %v6766, %v6874
        %v6900 = vmul.f32 %v6767, %v6876
        %v6901 = vmul.f32 %v6768, %v6878
        %v6902 = vmul.f32 %v6769, %v6880
        %v6903 = vmul.f32 %v6770, %v6882
        %v6904 = vmul.f32 %v6771, %v6884
        %v6905 = vmul.f32 %v6772, %v6886
        %v6906 = vmul.f32 %v6773, %v6888
        %v6907 = vmul.f32 %v6774, %v6890
        %v6908 = vmul.f32 %v6775, %v6892
        %v6909 = vsel %vm615, %v6893, 0.0
        %6910 = vadd.xlane.f32.xlu0 %v6909
        %v6911 = vpop.xlane.xlu0 %6910
        %v6912 = vsel %vm615, %v6894, 0.0
        %6913 = vadd.xlane.f32.xlu0 %v6912
        %v6914 = vpop.xlane.xlu0 %6913
        %v6915 = vsel %vm615, %v6895, 0.0
        %6916 = vadd.xlane.f32.xlu0 %v6915
        %v6917 = vpop.xlane.xlu0 %6916
        %v6918 = vsel %vm615, %v6896, 0.0
        %6919 = vadd.xlane.f32.xlu0 %v6918
        %v6920 = vpop.xlane.xlu0 %6919
        %v6921 = vsel %vm615, %v6897, 0.0
        %6922 = vadd.xlane.f32.xlu0 %v6921
        %v6923 = vpop.xlane.xlu0 %6922
        %v6924 = vsel %vm615, %v6898, 0.0
        %6925 = vadd.xlane.f32.xlu0 %v6924
        %v6926 = vpop.xlane.xlu0 %6925
        %v6927 = vsel %vm615, %v6899, 0.0
        %6928 = vadd.xlane.f32.xlu0 %v6927
        %v6929 = vpop.xlane.xlu0 %6928
        %v6930 = vsel %vm615, %v6900, 0.0
        %6931 = vadd.xlane.f32.xlu0 %v6930
        %v6932 = vpop.xlane.xlu0 %6931
        %v6933 = vsel %vm615, %v6901, 0.0
        %6934 = vadd.xlane.f32.xlu0 %v6933
        %v6935 = vpop.xlane.xlu0 %6934
        %v6936 = vsel %vm615, %v6902, 0.0
        %6937 = vadd.xlane.f32.xlu0 %v6936
        %v6938 = vpop.xlane.xlu0 %6937
        %v6939 = vsel %vm615, %v6903, 0.0
        %6940 = vadd.xlane.f32.xlu0 %v6939
        %v6941 = vpop.xlane.xlu0 %6940
        %v6942 = vsel %vm615, %v6904, 0.0
        %6943 = vadd.xlane.f32.xlu0 %v6942
        %v6944 = vpop.xlane.xlu0 %6943
        %v6945 = vsel %vm615, %v6905, 0.0
        %6946 = vadd.xlane.f32.xlu0 %v6945
        %v6947 = vpop.xlane.xlu0 %6946
        %v6948 = vsel %vm615, %v6906, 0.0
        %6949 = vadd.xlane.f32.xlu0 %v6948
        %v6950 = vpop.xlane.xlu0 %6949
        %v6951 = vsel %vm615, %v6907, 0.0
        %6952 = vadd.xlane.f32.xlu0 %v6951
        %v6953 = vpop.xlane.xlu0 %6952
        %v6954 = vsel %vm615, %v6908, 0.0
        %6955 = vadd.xlane.f32.xlu0 %v6954
        %v6956 = vpop.xlane.xlu0 %6955
        %v6957 = vmul.f32 %v6911, %v1708
        %v6958 = vmul.f32 %v6914, %v1708
        %v6959 = vmul.f32 %v6917, %v1708
        %v6960 = vmul.f32 %v6920, %v1708
        %v6961 = vmul.f32 %v6923, %v1708
        %v6962 = vmul.f32 %v6926, %v1708
        %v6963 = vmul.f32 %v6929, %v1708
        %v6964 = vmul.f32 %v6932, %v1708
        %v6965 = vmul.f32 %v6935, %v1708
        %v6966 = vmul.f32 %v6938, %v1708
        %v6967 = vmul.f32 %v6941, %v1708
        %v6968 = vmul.f32 %v6944, %v1708
        %v6969 = vmul.f32 %v6947, %v1708
        %v6970 = vmul.f32 %v6950, %v1708
        %v6971 = vmul.f32 %v6953, %v1708
        %v6972 = vmul.f32 %v6956, %v1708
        %v6973 = vsub.f32 %v6893, %v6957
        %v6974 = vsub.f32 %v6894, %v6958
        %v6975 = vsub.f32 %v6895, %v6959
        %v6976 = vsub.f32 %v6896, %v6960
        %v6977 = vsub.f32 %v6897, %v6961
        %v6978 = vsub.f32 %v6898, %v6962
        %v6979 = vsub.f32 %v6899, %v6963
        %v6980 = vsub.f32 %v6900, %v6964
        %v6981 = vsub.f32 %v6901, %v6965
        %v6982 = vsub.f32 %v6902, %v6966
        %v6983 = vsub.f32 %v6903, %v6967
        %v6984 = vsub.f32 %v6904, %v6968
        %v6985 = vsub.f32 %v6905, %v6969
        %v6986 = vsub.f32 %v6906, %v6970
        %v6987 = vsub.f32 %v6907, %v6971
        %v6988 = vsub.f32 %v6908, %v6972
        %v6989 = vmul.f32 %v6973, %v6973
        %v6990 = vmul.f32 %v6974, %v6974
        %v6991 = vmul.f32 %v6975, %v6975
        %v6992 = vmul.f32 %v6976, %v6976
        %v6993 = vmul.f32 %v6977, %v6977
        %v6994 = vmul.f32 %v6978, %v6978
        %v6995 = vmul.f32 %v6979, %v6979
        %v6996 = vmul.f32 %v6980, %v6980
        %v6997 = vmul.f32 %v6981, %v6981
        %v6998 = vmul.f32 %v6982, %v6982
        %v6999 = vmul.f32 %v6983, %v6983
        %v7000 = vmul.f32 %v6984, %v6984
        %v7001 = vmul.f32 %v6985, %v6985
        %v7002 = vmul.f32 %v6986, %v6986
        %v7003 = vmul.f32 %v6987, %v6987
        %v7004 = vmul.f32 %v6988, %v6988
        %v7005 = vsel %vm615, %v6989, 0.0
        %7006 = vadd.xlane.f32.xlu0 %v7005
        %v7007 = vpop.xlane.xlu0 %7006
        %v7008 = vsel %vm615, %v6990, 0.0
        %7009 = vadd.xlane.f32.xlu0 %v7008
        %v7010 = vpop.xlane.xlu0 %7009
        %v7011 = vsel %vm615, %v6991, 0.0
        %7012 = vadd.xlane.f32.xlu0 %v7011
        %v7013 = vpop.xlane.xlu0 %7012
        %v7014 = vsel %vm615, %v6992, 0.0
        %7015 = vadd.xlane.f32.xlu0 %v7014
        %v7016 = vpop.xlane.xlu0 %7015
        %v7017 = vsel %vm615, %v6993, 0.0
        %7018 = vadd.xlane.f32.xlu0 %v7017
        %v7019 = vpop.xlane.xlu0 %7018
        %v7020 = vsel %vm615, %v6994, 0.0
        %7021 = vadd.xlane.f32.xlu0 %v7020
        %v7022 = vpop.xlane.xlu0 %7021
        %v7023 = vsel %vm615, %v6995, 0.0
        %7024 = vadd.xlane.f32.xlu0 %v7023
        %v7025 = vpop.xlane.xlu0 %7024
        %v7026 = vsel %vm615, %v6996, 0.0
        %7027 = vadd.xlane.f32.xlu0 %v7026
        %v7028 = vpop.xlane.xlu0 %7027
        %v7029 = vsel %vm615, %v6997, 0.0
        %7030 = vadd.xlane.f32.xlu0 %v7029
        %v7031 = vpop.xlane.xlu0 %7030
        %v7032 = vsel %vm615, %v6998, 0.0
        %7033 = vadd.xlane.f32.xlu0 %v7032
        %v7034 = vpop.xlane.xlu0 %7033
        %v7035 = vsel %vm615, %v6999, 0.0
        %7036 = vadd.xlane.f32.xlu0 %v7035
        %v7037 = vpop.xlane.xlu0 %7036
        %v7038 = vsel %vm615, %v7000, 0.0
        %7039 = vadd.xlane.f32.xlu0 %v7038
        %v7040 = vpop.xlane.xlu0 %7039
        %v7041 = vsel %vm615, %v7001, 0.0
        %7042 = vadd.xlane.f32.xlu0 %v7041
        %v7043 = vpop.xlane.xlu0 %7042
        %v7044 = vsel %vm615, %v7002, 0.0
        %7045 = vadd.xlane.f32.xlu0 %v7044
        %v7046 = vpop.xlane.xlu0 %7045
        %v7047 = vsel %vm615, %v7003, 0.0
        %7048 = vadd.xlane.f32.xlu0 %v7047
        %v7049 = vpop.xlane.xlu0 %7048
        %v7050 = vsel %vm615, %v7004, 0.0
        %7051 = vadd.xlane.f32.xlu0 %v7050
        %v7052 = vpop.xlane.xlu0 %7051
        %v7053 = vmul.f32 %v7007, %v1708
        %v7054 = vmul.f32 %v7010, %v1708
        %v7055 = vmul.f32 %v7013, %v1708
        %v7056 = vmul.f32 %v7016, %v1708
        %v7057 = vmul.f32 %v7019, %v1708
        %v7058 = vmul.f32 %v7022, %v1708
        %v7059 = vmul.f32 %v7025, %v1708
        %v7060 = vmul.f32 %v7028, %v1708
        %v7061 = vmul.f32 %v7031, %v1708
        %v7062 = vmul.f32 %v7034, %v1708
        %v7063 = vmul.f32 %v7037, %v1708
        %v7064 = vmul.f32 %v7040, %v1708
        %v7065 = vmul.f32 %v7043, %v1708
        %v7066 = vmul.f32 %v7046, %v1708
        %v7067 = vmul.f32 %v7049, %v1708
        %v7068 = vmul.f32 %v7052, %v1708
        %v7069 = vadd.f32 %v7053, 1e-05
        %v7070 = vadd.f32 %v7054, 1e-05
        %v7071 = vadd.f32 %v7055, 1e-05
        %v7072 = vadd.f32 %v7056, 1e-05
        %v7073 = vadd.f32 %v7057, 1e-05
        %v7074 = vadd.f32 %v7058, 1e-05
        %v7075 = vadd.f32 %v7059, 1e-05
        %v7076 = vadd.f32 %v7060, 1e-05
        %v7077 = vadd.f32 %v7061, 1e-05
        %v7078 = vadd.f32 %v7062, 1e-05
        %v7079 = vadd.f32 %v7063, 1e-05
        %v7080 = vadd.f32 %v7064, 1e-05
        %v7081 = vadd.f32 %v7065, 1e-05
        %v7082 = vadd.f32 %v7066, 1e-05
        %v7083 = vadd.f32 %v7067, 1e-05
        %v7084 = vadd.f32 %v7068, 1e-05
        %v7085 = vrsqrt.pop %v7069
        %v7086 = vrsqrt.pop %v7070
        %v7087 = vrsqrt.pop %v7071
        %v7088 = vrsqrt.pop %v7072
        %v7089 = vrsqrt.pop %v7073
        %v7090 = vrsqrt.pop %v7074
        %v7091 = vrsqrt.pop %v7075
        %v7092 = vrsqrt.pop %v7076
        %v7093 = vrsqrt.pop %v7077
        %v7094 = vrsqrt.pop %v7078
        %v7095 = vrsqrt.pop %v7079
        %v7096 = vrsqrt.pop %v7080
        %v7097 = vrsqrt.pop %v7081
        %v7098 = vrsqrt.pop %v7082
        %v7099 = vrsqrt.pop %v7083
        %v7100 = vrsqrt.pop %v7084
        %v7101 = vmul.f32 %v6973, %v7085
        %v7102 = vmul.f32 %v6974, %v7086
        %v7103 = vmul.f32 %v6975, %v7087
        %v7104 = vmul.f32 %v6976, %v7088
        %v7105 = vmul.f32 %v6977, %v7089
        %v7106 = vmul.f32 %v6978, %v7090
        %v7107 = vmul.f32 %v6979, %v7091
        %v7108 = vmul.f32 %v6980, %v7092
        %v7109 = vmul.f32 %v6981, %v7093
        %v7110 = vmul.f32 %v6982, %v7094
        %v7111 = vmul.f32 %v6983, %v7095
        %v7112 = vmul.f32 %v6984, %v7096
        %v7113 = vmul.f32 %v6985, %v7097
        %v7114 = vmul.f32 %v6986, %v7098
        %v7115 = vmul.f32 %v6987, %v7099
        %v7116 = vmul.f32 %v6988, %v7100
        %v7117 = vld [vmem:[%s6 + $0x4] sm:$0x1]
        %v7118 = vlaneseq
        %v7119 = vshrl.u32 %v7118, 7
        %v7120 = vsub.s32 0, %v7119
        %v7121 = vrot.slane %v7117, %v7120
        %v7122 = vmul.f32 %v7101, %v7121
        %v7123 = vmul.f32 %v7102, %v7121
        %v7124 = vmul.f32 %v7103, %v7121
        %v7125 = vmul.f32 %v7104, %v7121
        %v7126 = vmul.f32 %v7105, %v7121
        %v7127 = vmul.f32 %v7106, %v7121
        %v7128 = vmul.f32 %v7107, %v7121
        %v7129 = vmul.f32 %v7108, %v7121
        %v7130 = vmul.f32 %v7109, %v7121
        %v7131 = vmul.f32 %v7110, %v7121
        %v7132 = vmul.f32 %v7111, %v7121
        %v7133 = vmul.f32 %v7112, %v7121
        %v7134 = vmul.f32 %v7113, %v7121
        %v7135 = vmul.f32 %v7114, %v7121
        %v7136 = vmul.f32 %v7115, %v7121
        %v7137 = vmul.f32 %v7116, %v7121
        %v7138 = vld [vmem:[%s7 + $0x4] sm:$0x1]
        %v7139 = vlaneseq
        %v7140 = vshrl.u32 %v7139, 7
        %v7141 = vsub.s32 0, %v7140
        %v7142 = vrot.slane %v7138, %v7141
        %v7143 = vadd.f32 %v7122, %v7142
        %v7144 = vadd.f32 %v7123, %v7142
        %v7145 = vadd.f32 %v7124, %v7142
        %v7146 = vadd.f32 %v7125, %v7142
        %v7147 = vadd.f32 %v7126, %v7142
        %v7148 = vadd.f32 %v7127, %v7142
        %v7149 = vadd.f32 %v7128, %v7142
        %v7150 = vadd.f32 %v7129, %v7142
        %v7151 = vadd.f32 %v7130, %v7142
        %v7152 = vadd.f32 %v7131, %v7142
        %v7153 = vadd.f32 %v7132, %v7142
        %v7154 = vadd.f32 %v7133, %v7142
        %v7155 = vadd.f32 %v7134, %v7142
        %v7156 = vadd.f32 %v7135, %v7142
        %v7157 = vadd.f32 %v7136, %v7142
        %v7158 = vadd.f32 %v7137, %v7142
        %s7159 = sld [smem:[#allocation3 + $0x4]]
        %v7160 = vstv %s7159
        %v7161 = vmul.f32 %v7160, %v7143
        %v7162 = vmul.f32 %v7160, %v7144
        %v7163 = vmul.f32 %v7160, %v7145
        %v7164 = vmul.f32 %v7160, %v7146
        %v7165 = vmul.f32 %v7160, %v7147
        %v7166 = vmul.f32 %v7160, %v7148
        %v7167 = vmul.f32 %v7160, %v7149
        %v7168 = vmul.f32 %v7160, %v7150
        %v7169 = vmul.f32 %v7160, %v7151
        %v7170 = vmul.f32 %v7160, %v7152
        %v7171 = vmul.f32 %v7160, %v7153
        %v7172 = vmul.f32 %v7160, %v7154
        %v7173 = vmul.f32 %v7160, %v7155
        %v7174 = vmul.f32 %v7160, %v7156
        %v7175 = vmul.f32 %v7160, %v7157
        %v7176 = vmul.f32 %v7160, %v7158
        %v7177 = vadd.f32 %v5863, %v7161
        %v7178 = vadd.f32 %v5864, %v7162
        %v7179 = vadd.f32 %v5865, %v7163
        %v7180 = vadd.f32 %v5866, %v7164
        %v7181 = vadd.f32 %v5867, %v7165
        %v7182 = vadd.f32 %v5868, %v7166
        %v7183 = vadd.f32 %v5869, %v7167
        %v7184 = vadd.f32 %v5870, %v7168
        %v7185 = vadd.f32 %v5871, %v7169
        %v7186 = vadd.f32 %v5872, %v7170
        %v7187 = vadd.f32 %v5873, %v7171
        %v7188 = vadd.f32 %v5874, %v7172
        %v7189 = vadd.f32 %v5875, %v7173
        %v7190 = vadd.f32 %v5876, %v7174
        %v7191 = vadd.f32 %v5877, %v7175
        %v7192 = vadd.f32 %v5878, %v7176
        %7193 = vst.msk [vmem:[#allocation2 + $0x8] sm:$0xff] %vm615, %v7177
        %7194 = vst.msk [vmem:[#allocation2 + $0x10] sm:$0xff] %vm615, %v7178
        %7195 = vst.msk [vmem:[#allocation2 + $0x28] sm:$0xff] %vm615, %v7179
        %7196 = vst.msk [vmem:[#allocation2 + $0x30] sm:$0xff] %vm615, %v7180
        %7197 = vst.msk [vmem:[#allocation2 + $0x48] sm:$0xff] %vm615, %v7181
        %7198 = vst.msk [vmem:[#allocation2 + $0x50] sm:$0xff] %vm615, %v7182
        %7199 = vst.msk [vmem:[#allocation2 + $0x68] sm:$0xff] %vm615, %v7183
        %7200 = vst.msk [vmem:[#allocation2 + $0x70] sm:$0xff] %vm615, %v7184
        %7201 = vst.msk [vmem:[#allocation2 + $0x88] sm:$0xff] %vm615, %v7185
        %7202 = vst.msk [vmem:[#allocation2 + $0x90] sm:$0xff] %vm615, %v7186
        %7203 = vst.msk [vmem:[#allocation2 + $0xa8] sm:$0xff] %vm615, %v7187
        %7204 = vst.msk [vmem:[#allocation2 + $0xb0] sm:$0xff] %vm615, %v7188
        %7205 = vst.msk [vmem:[#allocation2 + $0xc8] sm:$0xff] %vm615, %v7189
        %7206 = vst.msk [vmem:[#allocation2 + $0xd0] sm:$0xff] %vm615, %v7190
        %7207 = vst.msk [vmem:[#allocation2 + $0xe8] sm:$0xff] %vm615, %v7191
        %7208 = vst.msk [vmem:[#allocation2 + $0xf0] sm:$0xff] %vm615, %v7192
        %v7209 = vld [vmem:[#allocation2 + $0x7] sm:$0xff]
        %v7210 = vld [vmem:[#allocation2 + $0xf] sm:$0xff]
        %v7211 = vld [vmem:[#allocation2 + $0x27] sm:$0xff]
        %v7212 = vld [vmem:[#allocation2 + $0x2f] sm:$0xff]
        %v7213 = vld [vmem:[#allocation2 + $0x47] sm:$0xff]
        %v7214 = vld [vmem:[#allocation2 + $0x4f] sm:$0xff]
        %v7215 = vld [vmem:[#allocation2 + $0x67] sm:$0xff]
        %v7216 = vld [vmem:[#allocation2 + $0x6f] sm:$0xff]
        %v7217 = vld [vmem:[#allocation2 + $0x87] sm:$0xff]
        %v7218 = vld [vmem:[#allocation2 + $0x8f] sm:$0xff]
        %v7219 = vld [vmem:[#allocation2 + $0xa7] sm:$0xff]
        %v7220 = vld [vmem:[#allocation2 + $0xaf] sm:$0xff]
        %v7221 = vld [vmem:[#allocation2 + $0xc7] sm:$0xff]
        %v7222 = vld [vmem:[#allocation2 + $0xcf] sm:$0xff]
        %v7223 = vld [vmem:[#allocation2 + $0xe7] sm:$0xff]
        %v7224 = vld [vmem:[#allocation2 + $0xef] sm:$0xff]
        %v7225 = vpack.c.bf16 %v7210, %v7209
        %v7226 = vpack.c.bf16 %v7212, %v7211
        %v7227 = vpack.c.bf16 %v7214, %v7213
        %v7228 = vpack.c.bf16 %v7216, %v7215
        %v7229 = vpack.c.bf16 %v7218, %v7217
        %v7230 = vpack.c.bf16 %v7220, %v7219
        %v7231 = vpack.c.bf16 %v7222, %v7221
        %v7232 = vpack.c.bf16 %v7224, %v7223
        %s7233 = scalar_lea.vmem %s2, 240
        %v7234 = vld [vmem:[%s7233] sm:$0xf]
        %v7235 = vld [vmem:[%s7233 + $0x4] sm:$0xf]
        %v7236 = vld [vmem:[%s7233 + $0x8] sm:$0xf]
        %v7237 = vld [vmem:[%s7233 + $0xc] sm:$0xf]
        %s7238 = scalar_lea.vmem %s3, 240
        %v7239 = vld [vmem:[%s7238] sm:$0xf]
        %v7240 = vld [vmem:[%s7238 + $0x4] sm:$0xf]
        %v7241 = vld [vmem:[%s7238 + $0x8] sm:$0xf]
        %v7242 = vld [vmem:[%s7238 + $0xc] sm:$0xf]
        %v7243 = vld [vmem:[#allocation2 + $0x8] sm:$0xff]
        %v7244 = vld [vmem:[#allocation2 + $0x10] sm:$0xff]
        %v7245 = vld [vmem:[#allocation2 + $0x28] sm:$0xff]
        %v7246 = vld [vmem:[#allocation2 + $0x30] sm:$0xff]
        %v7247 = vld [vmem:[#allocation2 + $0x48] sm:$0xff]
        %v7248 = vld [vmem:[#allocation2 + $0x50] sm:$0xff]
        %v7249 = vld [vmem:[#allocation2 + $0x68] sm:$0xff]
        %v7250 = vld [vmem:[#allocation2 + $0x70] sm:$0xff]
        %v7251 = vld [vmem:[#allocation2 + $0x88] sm:$0xff]
        %v7252 = vld [vmem:[#allocation2 + $0x90] sm:$0xff]
        %v7253 = vld [vmem:[#allocation2 + $0xa8] sm:$0xff]
        %v7254 = vld [vmem:[#allocation2 + $0xb0] sm:$0xff]
        %v7255 = vld [vmem:[#allocation2 + $0xc8] sm:$0xff]
        %v7256 = vld [vmem:[#allocation2 + $0xd0] sm:$0xff]
        %v7257 = vld [vmem:[#allocation2 + $0xe8] sm:$0xff]
        %v7258 = vld [vmem:[#allocation2 + $0xf0] sm:$0xff]
        %v7259 = vpack.c.bf16 %v7244, %v7243
        %v7260 = vpack.c.bf16 %v7246, %v7245
        %v7261 = vpack.c.bf16 %v7248, %v7247
        %v7262 = vpack.c.bf16 %v7250, %v7249
        %v7263 = vpack.c.bf16 %v7252, %v7251
        %v7264 = vpack.c.bf16 %v7254, %v7253
        %v7265 = vpack.c.bf16 %v7256, %v7255
        %v7266 = vpack.c.bf16 %v7258, %v7257
        %s7267 = scalar_lea.vmem %s2, 256
        %v7268 = vld [vmem:[%s7267] sm:$0xf]
        %v7269 = vld [vmem:[%s7267 + $0x4] sm:$0xf]
        %v7270 = vld [vmem:[%s7267 + $0x8] sm:$0xf]
        %v7271 = vld [vmem:[%s7267 + $0xc] sm:$0xf]
        %v7276 = vunpack.c.l.b16 %v7268
        %v7277 = vunpack.c.l.b16 %v7269
        %v7278 = vunpack.c.l.b16 %v7270
        %v7279 = vunpack.c.l.b16 %v7271
        %v7280 = vpack.c.b16 %v7277, %v7276
        %v7281 = vpack.c.b16 %v7279, %v7278
        %v7285 = vsel %vm615, %v7259, 0
        %v7288 = vsel %vm615, %v7260, 0
        %v7291 = vsel %vm615, %v7261, 0
        %v7294 = vsel %vm615, %v7262, 0
        %v7297 = vsel %vm615, %v7263, 0
        %v7300 = vsel %vm615, %v7264, 0
        %v7303 = vsel %vm615, %v7265, 0
        %v7306 = vsel %vm615, %v7266, 0
        %7308 = vmatprep.subr.bf16.mxu0 0
        %7309 = vmatpush1.bf16.msra.mxu0 %v7280
        %7310 = vmatprep.subr.bf16.mxu0 0
        %7311 = vmatpush1.bf16.msra.mxu0 %v7281
        %7312 = vmatprep.subr.bf16.mxu0 0
        %7313 = vmatpush1.bf16.msra.mxu0 0
        %7314 = vmatprep.subr.bf16.mxu0 0
        %7315 = vmatpush1.bf16.msra.mxu0 0
        %7316 = vmatprep.subr.bf16.mxu0 0
        %7317 = vmatpush1.bf16.msra.mxu0 0
        %7318 = vmatprep.subr.bf16.mxu0 0
        %7319 = vmatpush1.bf16.msra.mxu0 0
        %7320 = vmatprep.subr.bf16.mxu0 0
        %7321 = vmatpush1.bf16.msra.mxu0 0
        %7322 = vmatprep.subr.bf16.mxu0 0
        %7323 = vmatpush1.bf16.msra.mxu0 0
        %7324 = vmatprep.subr.bf16.mxu0 0
        %7325 = vmatpush1.bf16.msra.mxu0 0
        %7326 = vmatprep.subr.bf16.mxu0 0
        %7327 = vmatpush1.bf16.msra.mxu0 0
        %7328 = vmatprep.subr.bf16.mxu0 0
        %7329 = vmatpush1.bf16.msra.mxu0 0
        %7330 = vmatprep.subr.bf16.mxu0 0
        %7331 = vmatpush1.bf16.msra.mxu0 0
        %7332 = vmatprep.subr.bf16.mxu0 0
        %7333 = vmatpush1.bf16.msra.mxu0 0
        %7334 = vmatprep.subr.bf16.mxu0 0
        %7335 = vmatpush1.bf16.msra.mxu0 0
        %7336 = vmatprep.subr.bf16.mxu0 0
        %7337 = vmatpush1.bf16.msra.mxu0 0
        %7338 = vmatprep.subr.bf16.mxu0 0
        %7339 = vmatpush1.bf16.msra.mxu0 0
        %7340 = vmatprep.mubr.bf16.mxu0 0
        %7341 = vmatmul.mubr.bf16.gmra.mrb[0].mxu0 %v7285
        %v7342 = vpop.f32.mrb[0].mxu0
        %v7343 = vadd.f32 0.0, %v7342
        %v7344 = vpop.f32.mrb[0].mxu0
        %v7345 = vpop.f32.mrb[0].mxu0
        %v7346 = vadd.f32 0.0, %v7345
        %v7347 = vpop.f32.mrb[0].mxu0
        %7348 = vmatprep.mubr.bf16.mxu0 0
        %7349 = vmatmul.mubr.bf16.gmra.mrb[0].mxu0 %v7288
        %v7350 = vpop.f32.mrb[0].mxu0
        %v7351 = vadd.f32 0.0, %v7350
        %v7352 = vpop.f32.mrb[0].mxu0
        %v7353 = vpop.f32.mrb[0].mxu0
        %v7354 = vadd.f32 0.0, %v7353
        %v7355 = vpop.f32.mrb[0].mxu0
        %7356 = vmatprep.mubr.bf16.mxu0 0
        %7357 = vmatmul.mubr.bf16.gmra.mrb[0].mxu0 %v7291
        %v7358 = vpop.f32.mrb[0].mxu0
        %v7359 = vadd.f32 0.0, %v7358
        %v7360 = vpop.f32.mrb[0].mxu0
        %v7361 = vpop.f32.mrb[0].mxu0
        %v7362 = vadd.f32 0.0, %v7361
        %v7363 = vpop.f32.mrb[0].mxu0
        %7364 = vmatprep.mubr.bf16.mxu0 0
        %7365 = vmatmul.mubr.bf16.gmra.mrb[0].mxu0 %v7294
        %v7366 = vpop.f32.mrb[0].mxu0
        %v7367 = vadd.f32 0.0, %v7366
        %v7368 = vpop.f32.mrb[0].mxu0
        %v7369 = vpop.f32.mrb[0].mxu0
        %v7370 = vadd.f32 0.0, %v7369
        %v7371 = vpop.f32.mrb[0].mxu0
        %7372 = vmatprep.mubr.bf16.mxu0 0
        %7373 = vmatmul.mubr.bf16.gmra.mrb[0].mxu0 %v7297
        %v7374 = vpop.f32.mrb[0].mxu0
        %v7375 = vadd.f32 0.0, %v7374
        %v7376 = vpop.f32.mrb[0].mxu0
        %v7377 = vpop.f32.mrb[0].mxu0
        %v7378 = vadd.f32 0.0, %v7377
        %v7379 = vpop.f32.mrb[0].mxu0
        %7380 = vmatprep.mubr.bf16.mxu0 0
        %7381 = vmatmul.mubr.bf16.gmra.mrb[0].mxu0 %v7300
        %v7382 = vpop.f32.mrb[0].mxu0
        %v7383 = vadd.f32 0.0, %v7382
        %v7384 = vpop.f32.mrb[0].mxu0
        %v7385 = vpop.f32.mrb[0].mxu0
        %v7386 = vadd.f32 0.0, %v7385
        %v7387 = vpop.f32.mrb[0].mxu0
        %7388 = vmatprep.mubr.bf16.mxu0 0
        %7389 = vmatmul.mubr.bf16.gmra.mrb[0].mxu0 %v7303
        %v7390 = vpop.f32.mrb[0].mxu0
        %v7391 = vadd.f32 0.0, %v7390
        %v7392 = vpop.f32.mrb[0].mxu0
        %v7393 = vpop.f32.mrb[0].mxu0
        %v7394 = vadd.f32 0.0, %v7393
        %v7395 = vpop.f32.mrb[0].mxu0
        %7396 = vmatprep.mubr.bf16.mxu0 0
        %7397 = vmatmul.mubr.bf16.gmra.mrb[0].mxu0 %v7306
        %v7398 = vpop.f32.mrb[0].mxu0
        %v7399 = vadd.f32 0.0, %v7398
        %v7400 = vpop.f32.mrb[0].mxu0
        %v7401 = vpop.f32.mrb[0].mxu0
        %v7402 = vadd.f32 0.0, %v7401
        %v7403 = vpop.f32.mrb[0].mxu0
        %7404 = vdwg.mxu0
        %v7409 = vunpack.c.l.b16 %v7234
        %v7410 = vunpack.c.l.b16 %v7235
        %v7411 = vunpack.c.l.b16 %v7236
        %v7412 = vunpack.c.l.b16 %v7237
        %v7413 = vpack.c.b16 %v7410, %v7409
        %v7414 = vpack.c.b16 %v7412, %v7411
        %v7418 = vsel %vm615, %v7225, 0
        %v7421 = vsel %vm615, %v7226, 0
        %v7424 = vsel %vm615, %v7227, 0
        %v7427 = vsel %vm615, %v7228, 0
        %v7430 = vsel %vm615, %v7229, 0
        %v7433 = vsel %vm615, %v7230, 0
        %v7436 = vsel %vm615, %v7231, 0
        %v7439 = vsel %vm615, %v7232, 0
        %7441 = vmatprep.subr.bf16.mxu0 0
        %7442 = vmatpush1.bf16.msra.mxu0 %v7413
        %7443 = vmatprep.subr.bf16.mxu0 0
        %7444 = vmatpush1.bf16.msra.mxu0 %v7414
        %7445 = vmatprep.subr.bf16.mxu0 0
        %7446 = vmatpush1.bf16.msra.mxu0 0
        %7447 = vmatprep.subr.bf16.mxu0 0
        %7448 = vmatpush1.bf16.msra.mxu0 0
        %7449 = vmatprep.subr.bf16.mxu0 0
        %7450 = vmatpush1.bf16.msra.mxu0 0
        %7451 = vmatprep.subr.bf16.mxu0 0
        %7452 = vmatpush1.bf16.msra.mxu0 0
        %7453 = vmatprep.subr.bf16.mxu0 0
        %7454 = vmatpush1.bf16.msra.mxu0 0
        %7455 = vmatprep.subr.bf16.mxu0 0
        %7456 = vmatpush1.bf16.msra.mxu0 0
        %7457 = vmatprep.subr.bf16.mxu0 0
        %7458 = vmatpush1.bf16.msra.mxu0 0
        %7459 = vmatprep.subr.bf16.mxu0 0
        %7460 = vmatpush1.bf16.msra.mxu0 0
        %7461 = vmatprep.subr.bf16.mxu0 0
        %7462 = vmatpush1.bf16.msra.mxu0 0
        %7463 = vmatprep.subr.bf16.mxu0 0
        %7464 = vmatpush1.bf16.msra.mxu0 0
        %7465 = vmatprep.subr.bf16.mxu0 0
        %7466 = vmatpush1.bf16.msra.mxu0 0
        %7467 = vmatprep.subr.bf16.mxu0 0
        %7468 = vmatpush1.bf16.msra.mxu0 0
        %7469 = vmatprep.subr.bf16.mxu0 0
        %7470 = vmatpush1.bf16.msra.mxu0 0
        %7471 = vmatprep.subr.bf16.mxu0 0
        %7472 = vmatpush1.bf16.msra.mxu0 0
        %7473 = vmatprep.mubr.bf16.mxu0 0
        %7474 = vmatmul.mubr.bf16.gmra.mrb[0].mxu0 %v7418
        %v7475 = vpop.f32.mrb[0].mxu0
        %v7476 = vadd.f32 %v7343, %v7475
        %v7477 = vpop.f32.mrb[0].mxu0
        %v7478 = vpop.f32.mrb[0].mxu0
        %v7479 = vadd.f32 %v7346, %v7478
        %v7480 = vpop.f32.mrb[0].mxu0
        %7481 = vmatprep.mubr.bf16.mxu0 0
        %7482 = vmatmul.mubr.bf16.gmra.mrb[0].mxu0 %v7421
        %v7483 = vpop.f32.mrb[0].mxu0
        %v7484 = vadd.f32 %v7351, %v7483
        %v7485 = vpop.f32.mrb[0].mxu0
        %v7486 = vpop.f32.mrb[0].mxu0
        %v7487 = vadd.f32 %v7354, %v7486
        %v7488 = vpop.f32.mrb[0].mxu0
        %7489 = vmatprep.mubr.bf16.mxu0 0
        %7490 = vmatmul.mubr.bf16.gmra.mrb[0].mxu0 %v7424
        %v7491 = vpop.f32.mrb[0].mxu0
        %v7492 = vadd.f32 %v7359, %v7491
        %v7493 = vpop.f32.mrb[0].mxu0
        %v7494 = vpop.f32.mrb[0].mxu0
        %v7495 = vadd.f32 %v7362, %v7494
        %v7496 = vpop.f32.mrb[0].mxu0
        %7497 = vmatprep.mubr.bf16.mxu0 0
        %7498 = vmatmul.mubr.bf16.gmra.mrb[0].mxu0 %v7427
        %v7499 = vpop.f32.mrb[0].mxu0
        %v7500 = vadd.f32 %v7367, %v7499
        %v7501 = vpop.f32.mrb[0].mxu0
        %v7502 = vpop.f32.mrb[0].mxu0
        %v7503 = vadd.f32 %v7370, %v7502
        %v7504 = vpop.f32.mrb[0].mxu0
        %7505 = vmatprep.mubr.bf16.mxu0 0
        %7506 = vmatmul.mubr.bf16.gmra.mrb[0].mxu0 %v7430
        %v7507 = vpop.f32.mrb[0].mxu0
        %v7508 = vadd.f32 %v7375, %v7507
        %v7509 = vpop.f32.mrb[0].mxu0
        %v7510 = vpop.f32.mrb[0].mxu0
        %v7511 = vadd.f32 %v7378, %v7510
        %v7512 = vpop.f32.mrb[0].mxu0
        %7513 = vmatprep.mubr.bf16.mxu0 0
        %7514 = vmatmul.mubr.bf16.gmra.mrb[0].mxu0 %v7433
        %v7515 = vpop.f32.mrb[0].mxu0
        %v7516 = vadd.f32 %v7383, %v7515
        %v7517 = vpop.f32.mrb[0].mxu0
        %v7518 = vpop.f32.mrb[0].mxu0
        %v7519 = vadd.f32 %v7386, %v7518
        %v7520 = vpop.f32.mrb[0].mxu0
        %7521 = vmatprep.mubr.bf16.mxu0 0
        %7522 = vmatmul.mubr.bf16.gmra.mrb[0].mxu0 %v7436
        %v7523 = vpop.f32.mrb[0].mxu0
        %v7524 = vadd.f32 %v7391, %v7523
        %v7525 = vpop.f32.mrb[0].mxu0
        %v7526 = vpop.f32.mrb[0].mxu0
        %v7527 = vadd.f32 %v7394, %v7526
        %v7528 = vpop.f32.mrb[0].mxu0
        %7529 = vmatprep.mubr.bf16.mxu0 0
        %7530 = vmatmul.mubr.bf16.gmra.mrb[0].mxu0 %v7439
        %v7531 = vpop.f32.mrb[0].mxu0
        %v7532 = vadd.f32 %v7399, %v7531
        %v7533 = vpop.f32.mrb[0].mxu0
        %v7534 = vpop.f32.mrb[0].mxu0
        %v7535 = vadd.f32 %v7402, %v7534
        %v7536 = vpop.f32.mrb[0].mxu0
        %7537 = vdwg.mxu0
        %s7538 = scalar_lea.vmem %s3, 256
        %v7539 = vld [vmem:[%s7538] sm:$0xf]
        %v7540 = vld [vmem:[%s7538 + $0x4] sm:$0xf]
        %v7541 = vld [vmem:[%s7538 + $0x8] sm:$0xf]
        %v7542 = vld [vmem:[%s7538 + $0xc] sm:$0xf]
        %v7547 = vunpack.c.l.b16 %v7539
        %v7548 = vunpack.c.l.b16 %v7540
        %v7549 = vunpack.c.l.b16 %v7541
        %v7550 = vunpack.c.l.b16 %v7542
        %v7551 = vpack.c.b16 %v7548, %v7547
        %v7552 = vpack.c.b16 %v7550, %v7549
        %7555 = vmatprep.subr.bf16.mxu0 0
        %7556 = vmatpush1.bf16.msra.mxu0 %v7551
        %7557 = vmatprep.subr.bf16.mxu0 0
        %7558 = vmatpush1.bf16.msra.mxu0 %v7552
        %7559 = vmatprep.subr.bf16.mxu0 0
        %7560 = vmatpush1.bf16.msra.mxu0 0
        %7561 = vmatprep.subr.bf16.mxu0 0
        %7562 = vmatpush1.bf16.msra.mxu0 0
        %7563 = vmatprep.subr.bf16.mxu0 0
        %7564 = vmatpush1.bf16.msra.mxu0 0
        %7565 = vmatprep.subr.bf16.mxu0 0
        %7566 = vmatpush1.bf16.msra.mxu0 0
        %7567 = vmatprep.subr.bf16.mxu0 0
        %7568 = vmatpush1.bf16.msra.mxu0 0
        %7569 = vmatprep.subr.bf16.mxu0 0
        %7570 = vmatpush1.bf16.msra.mxu0 0
        %7571 = vmatprep.subr.bf16.mxu0 0
        %7572 = vmatpush1.bf16.msra.mxu0 0
        %7573 = vmatprep.subr.bf16.mxu0 0
        %7574 = vmatpush1.bf16.msra.mxu0 0
        %7575 = vmatprep.subr.bf16.mxu0 0
        %7576 = vmatpush1.bf16.msra.mxu0 0
        %7577 = vmatprep.subr.bf16.mxu0 0
        %7578 = vmatpush1.bf16.msra.mxu0 0
        %7579 = vmatprep.subr.bf16.mxu0 0
        %7580 = vmatpush1.bf16.msra.mxu0 0
        %7581 = vmatprep.subr.bf16.mxu0 0
        %7582 = vmatpush1.bf16.msra.mxu0 0
        %7583 = vmatprep.subr.bf16.mxu0 0
        %7584 = vmatpush1.bf16.msra.mxu0 0
        %7585 = vmatprep.subr.bf16.mxu0 0
        %7586 = vmatpush1.bf16.msra.mxu0 0
        %7587 = vmatprep.mubr.bf16.mxu0 0
        %7588 = vmatmul.mubr.bf16.gmra.mrb[0].mxu0 %v7285
        %v7589 = vpop.f32.mrb[0].mxu0
        %v7590 = vadd.f32 0.0, %v7589
        %v7591 = vpop.f32.mrb[0].mxu0
        %v7592 = vpop.f32.mrb[0].mxu0
        %v7593 = vadd.f32 0.0, %v7592
        %v7594 = vpop.f32.mrb[0].mxu0
        %7595 = vmatprep.mubr.bf16.mxu0 0
        %7596 = vmatmul.mubr.bf16.gmra.mrb[0].mxu0 %v7288
        %v7597 = vpop.f32.mrb[0].mxu0
        %v7598 = vadd.f32 0.0, %v7597
        %v7599 = vpop.f32.mrb[0].mxu0
        %v7600 = vpop.f32.mrb[0].mxu0
        %v7601 = vadd.f32 0.0, %v7600
        %v7602 = vpop.f32.mrb[0].mxu0
        %7603 = vmatprep.mubr.bf16.mxu0 0
        %7604 = vmatmul.mubr.bf16.gmra.mrb[0].mxu0 %v7291
        %v7605 = vpop.f32.mrb[0].mxu0
        %v7606 = vadd.f32 0.0, %v7605
        %v7607 = vpop.f32.mrb[0].mxu0
        %v7608 = vpop.f32.mrb[0].mxu0
        %v7609 = vadd.f32 0.0, %v7608
        %v7610 = vpop.f32.mrb[0].mxu0
        %7611 = vmatprep.mubr.bf16.mxu0 0
        %7612 = vmatmul.mubr.bf16.gmra.mrb[0].mxu0 %v7294
        %v7613 = vpop.f32.mrb[0].mxu0
        %v7614 = vadd.f32 0.0, %v7613
        %v7615 = vpop.f32.mrb[0].mxu0
        %v7616 = vpop.f32.mrb[0].mxu0
        %v7617 = vadd.f32 0.0, %v7616
        %v7618 = vpop.f32.mrb[0].mxu0
        %7619 = vmatprep.mubr.bf16.mxu0 0
        %7620 = vmatmul.mubr.bf16.gmra.mrb[0].mxu0 %v7297
        %v7621 = vpop.f32.mrb[0].mxu0
        %v7622 = vadd.f32 0.0, %v7621
        %v7623 = vpop.f32.mrb[0].mxu0
        %v7624 = vpop.f32.mrb[0].mxu0
        %v7625 = vadd.f32 0.0, %v7624
        %v7626 = vpop.f32.mrb[0].mxu0
        %7627 = vmatprep.mubr.bf16.mxu0 0
        %7628 = vmatmul.mubr.bf16.gmra.mrb[0].mxu0 %v7300
        %v7629 = vpop.f32.mrb[0].mxu0
        %v7630 = vadd.f32 0.0, %v7629
        %v7631 = vpop.f32.mrb[0].mxu0
        %v7632 = vpop.f32.mrb[0].mxu0
        %v7633 = vadd.f32 0.0, %v7632
        %v7634 = vpop.f32.mrb[0].mxu0
        %7635 = vmatprep.mubr.bf16.mxu0 0
        %7636 = vmatmul.mubr.bf16.gmra.mrb[0].mxu0 %v7303
        %v7637 = vpop.f32.mrb[0].mxu0
        %v7638 = vadd.f32 0.0, %v7637
        %v7639 = vpop.f32.mrb[0].mxu0
        %v7640 = vpop.f32.mrb[0].mxu0
        %v7641 = vadd.f32 0.0, %v7640
        %v7642 = vpop.f32.mrb[0].mxu0
        %7643 = vmatprep.mubr.bf16.mxu0 0
        %7644 = vmatmul.mubr.bf16.gmra.mrb[0].mxu0 %v7306
        %v7645 = vpop.f32.mrb[0].mxu0
        %v7646 = vadd.f32 0.0, %v7645
        %v7647 = vpop.f32.mrb[0].mxu0
        %v7648 = vpop.f32.mrb[0].mxu0
        %v7649 = vadd.f32 0.0, %v7648
        %v7650 = vpop.f32.mrb[0].mxu0
        %7651 = vdwg.mxu0
        %v7656 = vunpack.c.l.b16 %v7239
        %v7657 = vunpack.c.l.b16 %v7240
        %v7658 = vunpack.c.l.b16 %v7241
        %v7659 = vunpack.c.l.b16 %v7242
        %v7660 = vpack.c.b16 %v7657, %v7656
        %v7661 = vpack.c.b16 %v7659, %v7658
        %7664 = vmatprep.subr.bf16.mxu0 0
        %7665 = vmatpush1.bf16.msra.mxu0 %v7660
        %7666 = vmatprep.subr.bf16.mxu0 0
        %7667 = vmatpush1.bf16.msra.mxu0 %v7661
        %7668 = vmatprep.subr.bf16.mxu0 0
        %7669 = vmatpush1.bf16.msra.mxu0 0
        %7670 = vmatprep.subr.bf16.mxu0 0
        %7671 = vmatpush1.bf16.msra.mxu0 0
        %7672 = vmatprep.subr.bf16.mxu0 0
        %7673 = vmatpush1.bf16.msra.mxu0 0
        %7674 = vmatprep.subr.bf16.mxu0 0
        %7675 = vmatpush1.bf16.msra.mxu0 0
        %7676 = vmatprep.subr.bf16.mxu0 0
        %7677 = vmatpush1.bf16.msra.mxu0 0
        %7678 = vmatprep.subr.bf16.mxu0 0
        %7679 = vmatpush1.bf16.msra.mxu0 0
        %7680 = vmatprep.subr.bf16.mxu0 0
        %7681 = vmatpush1.bf16.msra.mxu0 0
        %7682 = vmatprep.subr.bf16.mxu0 0
        %7683 = vmatpush1.bf16.msra.mxu0 0
        %7684 = vmatprep.subr.bf16.mxu0 0
        %7685 = vmatpush1.bf16.msra.mxu0 0
        %7686 = vmatprep.subr.bf16.mxu0 0
        %7687 = vmatpush1.bf16.msra.mxu0 0
        %7688 = vmatprep.subr.bf16.mxu0 0
        %7689 = vmatpush1.bf16.msra.mxu0 0
        %7690 = vmatprep.subr.bf16.mxu0 0
        %7691 = vmatpush1.bf16.msra.mxu0 0
        %7692 = vmatprep.subr.bf16.mxu0 0
        %7693 = vmatpush1.bf16.msra.mxu0 0
        %7694 = vmatprep.subr.bf16.mxu0 0
        %7695 = vmatpush1.bf16.msra.mxu0 0
        %7696 = vmatprep.mubr.bf16.mxu0 0
        %7697 = vmatmul.mubr.bf16.gmra.mrb[0].mxu0 %v7418
        %v7698 = vpop.f32.mrb[0].mxu0
        %v7699 = vadd.f32 %v7590, %v7698
        %v7700 = vpop.f32.mrb[0].mxu0
        %v7701 = vpop.f32.mrb[0].mxu0
        %v7702 = vadd.f32 %v7593, %v7701
        %v7703 = vpop.f32.mrb[0].mxu0
        %7704 = vmatprep.mubr.bf16.mxu0 0
        %7705 = vmatmul.mubr.bf16.gmra.mrb[0].mxu0 %v7421
        %v7706 = vpop.f32.mrb[0].mxu0
        %v7707 = vadd.f32 %v7598, %v7706
        %v7708 = vpop.f32.mrb[0].mxu0
        %v7709 = vpop.f32.mrb[0].mxu0
        %v7710 = vadd.f32 %v7601, %v7709
        %v7711 = vpop.f32.mrb[0].mxu0
        %7712 = vmatprep.mubr.bf16.mxu0 0
        %7713 = vmatmul.mubr.bf16.gmra.mrb[0].mxu0 %v7424
        %v7714 = vpop.f32.mrb[0].mxu0
        %v7715 = vadd.f32 %v7606, %v7714
        %v7716 = vpop.f32.mrb[0].mxu0
        %v7717 = vpop.f32.mrb[0].mxu0
        %v7718 = vadd.f32 %v7609, %v7717
        %v7719 = vpop.f32.mrb[0].mxu0
        %7720 = vmatprep.mubr.bf16.mxu0 0
        %7721 = vmatmul.mubr.bf16.gmra.mrb[0].mxu0 %v7427
        %v7722 = vpop.f32.mrb[0].mxu0
        %v7723 = vadd.f32 %v7614, %v7722
        %v7724 = vpop.f32.mrb[0].mxu0
        %v7725 = vpop.f32.mrb[0].mxu0
        %v7726 = vadd.f32 %v7617, %v7725
        %v7727 = vpop.f32.mrb[0].mxu0
        %7728 = vmatprep.mubr.bf16.mxu0 0
        %7729 = vmatmul.mubr.bf16.gmra.mrb[0].mxu0 %v7430
        %v7730 = vpop.f32.mrb[0].mxu0
        %v7731 = vadd.f32 %v7622, %v7730
        %v7732 = vpop.f32.mrb[0].mxu0
        %v7733 = vpop.f32.mrb[0].mxu0
        %v7734 = vadd.f32 %v7625, %v7733
        %v7735 = vpop.f32.mrb[0].mxu0
        %7736 = vmatprep.mubr.bf16.mxu0 0
        %7737 = vmatmul.mubr.bf16.gmra.mrb[0].mxu0 %v7433
        %v7738 = vpop.f32.mrb[0].mxu0
        %v7739 = vadd.f32 %v7630, %v7738
        %v7740 = vpop.f32.mrb[0].mxu0
        %v7741 = vpop.f32.mrb[0].mxu0
        %v7742 = vadd.f32 %v7633, %v7741
        %v7743 = vpop.f32.mrb[0].mxu0
        %7744 = vmatprep.mubr.bf16.mxu0 0
        %7745 = vmatmul.mubr.bf16.gmra.mrb[0].mxu0 %v7436
        %v7746 = vpop.f32.mrb[0].mxu0
        %v7747 = vadd.f32 %v7638, %v7746
        %v7748 = vpop.f32.mrb[0].mxu0
        %v7749 = vpop.f32.mrb[0].mxu0
        %v7750 = vadd.f32 %v7641, %v7749
        %v7751 = vpop.f32.mrb[0].mxu0
        %7752 = vmatprep.mubr.bf16.mxu0 0
        %7753 = vmatmul.mubr.bf16.gmra.mrb[0].mxu0 %v7439
        %v7754 = vpop.f32.mrb[0].mxu0
        %v7755 = vadd.f32 %v7646, %v7754
        %v7756 = vpop.f32.mrb[0].mxu0
        %v7757 = vpop.f32.mrb[0].mxu0
        %v7758 = vadd.f32 %v7649, %v7757
        %v7759 = vpop.f32.mrb[0].mxu0
        %7760 = vdwg.mxu0
        %v7761 = vld [vmem:[#allocation2 + $0x9] sm:$0xff]
        %v7762 = vld [vmem:[#allocation2 + $0x11] sm:$0xff]
        %v7763 = vld [vmem:[#allocation2 + $0x29] sm:$0xff]
        %v7764 = vld [vmem:[#allocation2 + $0x31] sm:$0xff]
        %v7765 = vld [vmem:[#allocation2 + $0x49] sm:$0xff]
        %v7766 = vld [vmem:[#allocation2 + $0x51] sm:$0xff]
        %v7767 = vld [vmem:[#allocation2 + $0x69] sm:$0xff]
        %v7768 = vld [vmem:[#allocation2 + $0x71] sm:$0xff]
        %v7769 = vld [vmem:[#allocation2 + $0x89] sm:$0xff]
        %v7770 = vld [vmem:[#allocation2 + $0x91] sm:$0xff]
        %v7771 = vld [vmem:[#allocation2 + $0xa9] sm:$0xff]
        %v7772 = vld [vmem:[#allocation2 + $0xb1] sm:$0xff]
        %v7773 = vld [vmem:[#allocation2 + $0xc9] sm:$0xff]
        %v7774 = vld [vmem:[#allocation2 + $0xd1] sm:$0xff]
        %v7775 = vld [vmem:[#allocation2 + $0xe9] sm:$0xff]
        %v7776 = vld [vmem:[#allocation2 + $0xf1] sm:$0xff]
        %v7777 = vpack.c.bf16 %v7762, %v7761
        %v7778 = vpack.c.bf16 %v7764, %v7763
        %v7779 = vpack.c.bf16 %v7766, %v7765
        %v7780 = vpack.c.bf16 %v7768, %v7767
        %v7781 = vpack.c.bf16 %v7770, %v7769
        %v7782 = vpack.c.bf16 %v7772, %v7771
        %v7783 = vpack.c.bf16 %v7774, %v7773
        %v7784 = vpack.c.bf16 %v7776, %v7775
        %s7785 = scalar_lea.vmem %s2, 272
        %v7786 = vld [vmem:[%s7785] sm:$0xf]
        %v7787 = vld [vmem:[%s7785 + $0x4] sm:$0xf]
        %v7788 = vld [vmem:[%s7785 + $0x8] sm:$0xf]
        %v7789 = vld [vmem:[%s7785 + $0xc] sm:$0xf]
        %v7794 = vunpack.c.l.b16 %v7786
        %v7795 = vunpack.c.l.b16 %v7787
        %v7796 = vunpack.c.l.b16 %v7788
        %v7797 = vunpack.c.l.b16 %v7789
        %v7798 = vpack.c.b16 %v7795, %v7794
        %v7799 = vpack.c.b16 %v7797, %v7796
        %v7803 = vsel %vm615, %v7777, 0
        %v7806 = vsel %vm615, %v7778, 0
        %v7809 = vsel %vm615, %v7779, 0
        %v7812 = vsel %vm615, %v7780, 0
        %v7815 = vsel %vm615, %v7781, 0
        %v7818 = vsel %vm615, %v7782, 0
        %v7821 = vsel %vm615, %v7783, 0
        %v7824 = vsel %vm615, %v7784, 0
        %7826 = vmatprep.subr.bf16.mxu0 0
        %7827 = vmatpush1.bf16.msra.mxu0 %v7798
        %7828 = vmatprep.subr.bf16.mxu0 0
        %7829 = vmatpush1.bf16.msra.mxu0 %v7799
        %7830 = vmatprep.subr.bf16.mxu0 0
        %7831 = vmatpush1.bf16.msra.mxu0 0
        %7832 = vmatprep.subr.bf16.mxu0 0
        %7833 = vmatpush1.bf16.msra.mxu0 0
        %7834 = vmatprep.subr.bf16.mxu0 0
        %7835 = vmatpush1.bf16.msra.mxu0 0
        %7836 = vmatprep.subr.bf16.mxu0 0
        %7837 = vmatpush1.bf16.msra.mxu0 0
        %7838 = vmatprep.subr.bf16.mxu0 0
        %7839 = vmatpush1.bf16.msra.mxu0 0
        %7840 = vmatprep.subr.bf16.mxu0 0
        %7841 = vmatpush1.bf16.msra.mxu0 0
        %7842 = vmatprep.subr.bf16.mxu0 0
        %7843 = vmatpush1.bf16.msra.mxu0 0
        %7844 = vmatprep.subr.bf16.mxu0 0
        %7845 = vmatpush1.bf16.msra.mxu0 0
        %7846 = vmatprep.subr.bf16.mxu0 0
        %7847 = vmatpush1.bf16.msra.mxu0 0
        %7848 = vmatprep.subr.bf16.mxu0 0
        %7849 = vmatpush1.bf16.msra.mxu0 0
        %7850 = vmatprep.subr.bf16.mxu0 0
        %7851 = vmatpush1.bf16.msra.mxu0 0
        %7852 = vmatprep.subr.bf16.mxu0 0
        %7853 = vmatpush1.bf16.msra.mxu0 0
        %7854 = vmatprep.subr.bf16.mxu0 0
        %7855 = vmatpush1.bf16.msra.mxu0 0
        %7856 = vmatprep.subr.bf16.mxu0 0
        %7857 = vmatpush1.bf16.msra.mxu0 0
        %7858 = vmatprep.mubr.bf16.mxu0 0
        %7859 = vmatmul.mubr.bf16.gmra.mrb[0].mxu0 %v7803
        %v7860 = vpop.f32.mrb[0].mxu0
        %v7861 = vadd.f32 0.0, %v7860
        %v7862 = vpop.f32.mrb[0].mxu0
        %v7863 = vpop.f32.mrb[0].mxu0
        %v7864 = vadd.f32 0.0, %v7863
        %v7865 = vpop.f32.mrb[0].mxu0
        %7866 = vmatprep.mubr.bf16.mxu0 0
        %7867 = vmatmul.mubr.bf16.gmra.mrb[0].mxu0 %v7806
        %v7868 = vpop.f32.mrb[0].mxu0
        %v7869 = vadd.f32 0.0, %v7868
        %v7870 = vpop.f32.mrb[0].mxu0
        %v7871 = vpop.f32.mrb[0].mxu0
        %v7872 = vadd.f32 0.0, %v7871
        %v7873 = vpop.f32.mrb[0].mxu0
        %7874 = vmatprep.mubr.bf16.mxu0 0
        %7875 = vmatmul.mubr.bf16.gmra.mrb[0].mxu0 %v7809
        %v7876 = vpop.f32.mrb[0].mxu0
        %v7877 = vadd.f32 0.0, %v7876
        %v7878 = vpop.f32.mrb[0].mxu0
        %v7879 = vpop.f32.mrb[0].mxu0
        %v7880 = vadd.f32 0.0, %v7879
        %v7881 = vpop.f32.mrb[0].mxu0
        %7882 = vmatprep.mubr.bf16.mxu0 0
        %7883 = vmatmul.mubr.bf16.gmra.mrb[0].mxu0 %v7812
        %v7884 = vpop.f32.mrb[0].mxu0
        %v7885 = vadd.f32 0.0, %v7884
        %v7886 = vpop.f32.mrb[0].mxu0
        %v7887 = vpop.f32.mrb[0].mxu0
        %v7888 = vadd.f32 0.0, %v7887
        %v7889 = vpop.f32.mrb[0].mxu0
        %7890 = vmatprep.mubr.bf16.mxu0 0
        %7891 = vmatmul.mubr.bf16.gmra.mrb[0].mxu0 %v7815
        %v7892 = vpop.f32.mrb[0].mxu0
        %v7893 = vadd.f32 0.0, %v7892
        %v7894 = vpop.f32.mrb[0].mxu0
        %v7895 = vpop.f32.mrb[0].mxu0
        %v7896 = vadd.f32 0.0, %v7895
        %v7897 = vpop.f32.mrb[0].mxu0
        %7898 = vmatprep.mubr.bf16.mxu0 0
        %7899 = vmatmul.mubr.bf16.gmra.mrb[0].mxu0 %v7818
        %v7900 = vpop.f32.mrb[0].mxu0
        %v7901 = vadd.f32 0.0, %v7900
        %v7902 = vpop.f32.mrb[0].mxu0
        %v7903 = vpop.f32.mrb[0].mxu0
        %v7904 = vadd.f32 0.0, %v7903
        %v7905 = vpop.f32.mrb[0].mxu0
        %7906 = vmatprep.mubr.bf16.mxu0 0
        %7907 = vmatmul.mubr.bf16.gmra.mrb[0].mxu0 %v7821
        %v7908 = vpop.f32.mrb[0].mxu0
        %v7909 = vadd.f32 0.0, %v7908
        %v7910 = vpop.f32.mrb[0].mxu0
        %v7911 = vpop.f32.mrb[0].mxu0
        %v7912 = vadd.f32 0.0, %v7911
        %v7913 = vpop.f32.mrb[0].mxu0
        %7914 = vmatprep.mubr.bf16.mxu0 0
        %7915 = vmatmul.mubr.bf16.gmra.mrb[0].mxu0 %v7824
        %v7916 = vpop.f32.mrb[0].mxu0
        %v7917 = vadd.f32 0.0, %v7916
        %v7918 = vpop.f32.mrb[0].mxu0
        %v7919 = vpop.f32.mrb[0].mxu0
        %v7920 = vadd.f32 0.0, %v7919
        %v7921 = vpop.f32.mrb[0].mxu0
        %7922 = vdwg.mxu0
        %v7923 = vadd.f32 %v7476, %v7861
        %v7924 = vadd.f32 %v7479, %v7864
        %v7925 = vadd.f32 %v7484, %v7869
        %v7926 = vadd.f32 %v7487, %v7872
        %v7927 = vadd.f32 %v7492, %v7877
        %v7928 = vadd.f32 %v7495, %v7880
        %v7929 = vadd.f32 %v7500, %v7885
        %v7930 = vadd.f32 %v7503, %v7888
        %v7931 = vadd.f32 %v7508, %v7893
        %v7932 = vadd.f32 %v7511, %v7896
        %v7933 = vadd.f32 %v7516, %v7901
        %v7934 = vadd.f32 %v7519, %v7904
        %v7935 = vadd.f32 %v7524, %v7909
        %v7936 = vadd.f32 %v7527, %v7912
        %v7937 = vadd.f32 %v7532, %v7917
        %v7938 = vadd.f32 %v7535, %v7920
        %s7939 = scalar_lea.vmem %s3, 272
        %v7940 = vld [vmem:[%s7939] sm:$0xf]
        %v7941 = vld [vmem:[%s7939 + $0x4] sm:$0xf]
        %v7942 = vld [vmem:[%s7939 + $0x8] sm:$0xf]
        %v7943 = vld [vmem:[%s7939 + $0xc] sm:$0xf]
        %v7948 = vunpack.c.l.b16 %v7940
        %v7949 = vunpack.c.l.b16 %v7941
        %v7950 = vunpack.c.l.b16 %v7942
        %v7951 = vunpack.c.l.b16 %v7943
        %v7952 = vpack.c.b16 %v7949, %v7948
        %v7953 = vpack.c.b16 %v7951, %v7950
        %7956 = vmatprep.subr.bf16.mxu0 0
        %7957 = vmatpush1.bf16.msra.mxu0 %v7952
        %7958 = vmatprep.subr.bf16.mxu0 0
        %7959 = vmatpush1.bf16.msra.mxu0 %v7953
        %7960 = vmatprep.subr.bf16.mxu0 0
        %7961 = vmatpush1.bf16.msra.mxu0 0
        %7962 = vmatprep.subr.bf16.mxu0 0
        %7963 = vmatpush1.bf16.msra.mxu0 0
        %7964 = vmatprep.subr.bf16.mxu0 0
        %7965 = vmatpush1.bf16.msra.mxu0 0
        %7966 = vmatprep.subr.bf16.mxu0 0
        %7967 = vmatpush1.bf16.msra.mxu0 0
        %7968 = vmatprep.subr.bf16.mxu0 0
        %7969 = vmatpush1.bf16.msra.mxu0 0
        %7970 = vmatprep.subr.bf16.mxu0 0
        %7971 = vmatpush1.bf16.msra.mxu0 0
        %7972 = vmatprep.subr.bf16.mxu0 0
        %7973 = vmatpush1.bf16.msra.mxu0 0
        %7974 = vmatprep.subr.bf16.mxu0 0
        %7975 = vmatpush1.bf16.msra.mxu0 0
        %7976 = vmatprep.subr.bf16.mxu0 0
        %7977 = vmatpush1.bf16.msra.mxu0 0
        %7978 = vmatprep.subr.bf16.mxu0 0
        %7979 = vmatpush1.bf16.msra.mxu0 0
        %7980 = vmatprep.subr.bf16.mxu0 0
        %7981 = vmatpush1.bf16.msra.mxu0 0
        %7982 = vmatprep.subr.bf16.mxu0 0
        %7983 = vmatpush1.bf16.msra.mxu0 0
        %7984 = vmatprep.subr.bf16.mxu0 0
        %7985 = vmatpush1.bf16.msra.mxu0 0
        %7986 = vmatprep.subr.bf16.mxu0 0
        %7987 = vmatpush1.bf16.msra.mxu0 0
        %7988 = vmatprep.mubr.bf16.mxu0 0
        %7989 = vmatmul.mubr.bf16.gmra.mrb[0].mxu0 %v7803
        %v7990 = vpop.f32.mrb[0].mxu0
        %v7991 = vadd.f32 0.0, %v7990
        %v7992 = vpop.f32.mrb[0].mxu0
        %v7993 = vpop.f32.mrb[0].mxu0
        %v7994 = vadd.f32 0.0, %v7993
        %v7995 = vpop.f32.mrb[0].mxu0
        %7996 = vmatprep.mubr.bf16.mxu0 0
        %7997 = vmatmul.mubr.bf16.gmra.mrb[0].mxu0 %v7806
        %v7998 = vpop.f32.mrb[0].mxu0
        %v7999 = vadd.f32 0.0, %v7998
        %v8000 = vpop.f32.mrb[0].mxu0
        %v8001 = vpop.f32.mrb[0].mxu0
        %v8002 = vadd.f32 0.0, %v8001
        %v8003 = vpop.f32.mrb[0].mxu0
        %8004 = vmatprep.mubr.bf16.mxu0 0
        %8005 = vmatmul.mubr.bf16.gmra.mrb[0].mxu0 %v7809
        %v8006 = vpop.f32.mrb[0].mxu0
        %v8007 = vadd.f32 0.0, %v8006
        %v8008 = vpop.f32.mrb[0].mxu0
        %v8009 = vpop.f32.mrb[0].mxu0
        %v8010 = vadd.f32 0.0, %v8009
        %v8011 = vpop.f32.mrb[0].mxu0
        %8012 = vmatprep.mubr.bf16.mxu0 0
        %8013 = vmatmul.mubr.bf16.gmra.mrb[0].mxu0 %v7812
        %v8014 = vpop.f32.mrb[0].mxu0
        %v8015 = vadd.f32 0.0, %v8014
        %v8016 = vpop.f32.mrb[0].mxu0
        %v8017 = vpop.f32.mrb[0].mxu0
        %v8018 = vadd.f32 0.0, %v8017
        %v8019 = vpop.f32.mrb[0].mxu0
        %8020 = vmatprep.mubr.bf16.mxu0 0
        %8021 = vmatmul.mubr.bf16.gmra.mrb[0].mxu0 %v7815
        %v8022 = vpop.f32.mrb[0].mxu0
        %v8023 = vadd.f32 0.0, %v8022
        %v8024 = vpop.f32.mrb[0].mxu0
        %v8025 = vpop.f32.mrb[0].mxu0
        %v8026 = vadd.f32 0.0, %v8025
        %v8027 = vpop.f32.mrb[0].mxu0
        %8028 = vmatprep.mubr.bf16.mxu0 0
        %8029 = vmatmul.mubr.bf16.gmra.mrb[0].mxu0 %v7818
        %v8030 = vpop.f32.mrb[0].mxu0
        %v8031 = vadd.f32 0.0, %v8030
        %v8032 = vpop.f32.mrb[0].mxu0
        %v8033 = vpop.f32.mrb[0].mxu0
        %v8034 = vadd.f32 0.0, %v8033
        %v8035 = vpop.f32.mrb[0].mxu0
        %8036 = vmatprep.mubr.bf16.mxu0 0
        %8037 = vmatmul.mubr.bf16.gmra.mrb[0].mxu0 %v7821
        %v8038 = vpop.f32.mrb[0].mxu0
        %v8039 = vadd.f32 0.0, %v8038
        %v8040 = vpop.f32.mrb[0].mxu0
        %v8041 = vpop.f32.mrb[0].mxu0
        %v8042 = vadd.f32 0.0, %v8041
        %v8043 = vpop.f32.mrb[0].mxu0
        %8044 = vmatprep.mubr.bf16.mxu0 0
        %8045 = vmatmul.mubr.bf16.gmra.mrb[0].mxu0 %v7824
        %v8046 = vpop.f32.mrb[0].mxu0
        %v8047 = vadd.f32 0.0, %v8046
        %v8048 = vpop.f32.mrb[0].mxu0
        %v8049 = vpop.f32.mrb[0].mxu0
        %v8050 = vadd.f32 0.0, %v8049
        %v8051 = vpop.f32.mrb[0].mxu0
        %8052 = vdwg.mxu0
        %v8053 = vadd.f32 %v7699, %v7991
        %v8054 = vadd.f32 %v7702, %v7994
        %v8055 = vadd.f32 %v7707, %v7999
        %v8056 = vadd.f32 %v7710, %v8002
        %v8057 = vadd.f32 %v7715, %v8007
        %v8058 = vadd.f32 %v7718, %v8010
        %v8059 = vadd.f32 %v7723, %v8015
        %v8060 = vadd.f32 %v7726, %v8018
        %v8061 = vadd.f32 %v7731, %v8023
        %v8062 = vadd.f32 %v7734, %v8026
        %v8063 = vadd.f32 %v7739, %v8031
        %v8064 = vadd.f32 %v7742, %v8034
        %v8065 = vadd.f32 %v7747, %v8039
        %v8066 = vadd.f32 %v7750, %v8042
        %v8067 = vadd.f32 %v7755, %v8047
        %v8068 = vadd.f32 %v7758, %v8050
        %v8069 = vld [vmem:[%s4 + $0x5] sm:$0x1]
        %v8070 = vlaneseq
        %v8071 = vshrl.u32 %v8070, 7
        %v8072 = vsub.s32 0, %v8071
        %v8073 = vrot.slane %v8069, %v8072
        %v8074 = vadd.f32 %v7923, %v8073
        %v8075 = vadd.f32 %v7924, %v8073
        %v8076 = vadd.f32 %v7925, %v8073
        %v8077 = vadd.f32 %v7926, %v8073
        %v8078 = vadd.f32 %v7927, %v8073
        %v8079 = vadd.f32 %v7928, %v8073
        %v8080 = vadd.f32 %v7929, %v8073
        %v8081 = vadd.f32 %v7930, %v8073
        %v8082 = vadd.f32 %v7931, %v8073
        %v8083 = vadd.f32 %v7932, %v8073
        %v8084 = vadd.f32 %v7933, %v8073
        %v8085 = vadd.f32 %v7934, %v8073
        %v8086 = vadd.f32 %v7935, %v8073
        %v8087 = vadd.f32 %v7936, %v8073
        %v8088 = vadd.f32 %v7937, %v8073
        %v8089 = vadd.f32 %v7938, %v8073
        %v8090 = vld [vmem:[%s5 + $0x5] sm:$0x1]
        %v8091 = vlaneseq
        %v8092 = vshrl.u32 %v8091, 7
        %v8093 = vsub.s32 0, %v8092
        %v8094 = vrot.slane %v8090, %v8093
        %v8095 = vadd.f32 %v8053, %v8094
        %v8096 = vadd.f32 %v8054, %v8094
        %v8097 = vadd.f32 %v8055, %v8094
        %v8098 = vadd.f32 %v8056, %v8094
        %v8099 = vadd.f32 %v8057, %v8094
        %v8100 = vadd.f32 %v8058, %v8094
        %v8101 = vadd.f32 %v8059, %v8094
        %v8102 = vadd.f32 %v8060, %v8094
        %v8103 = vadd.f32 %v8061, %v8094
        %v8104 = vadd.f32 %v8062, %v8094
        %v8105 = vadd.f32 %v8063, %v8094
        %v8106 = vadd.f32 %v8064, %v8094
        %v8107 = vadd.f32 %v8065, %v8094
        %v8108 = vadd.f32 %v8066, %v8094
        %v8109 = vadd.f32 %v8067, %v8094
        %v8110 = vadd.f32 %v8068, %v8094
        %v8111 = vxor.u32 %v8095, 2147483648
        %v8112 = vxor.u32 %v8096, 2147483648
        %v8113 = vxor.u32 %v8097, 2147483648
        %v8114 = vxor.u32 %v8098, 2147483648
        %v8115 = vxor.u32 %v8099, 2147483648
        %v8116 = vxor.u32 %v8100, 2147483648
        %v8117 = vxor.u32 %v8101, 2147483648
        %v8118 = vxor.u32 %v8102, 2147483648
        %v8119 = vxor.u32 %v8103, 2147483648
        %v8120 = vxor.u32 %v8104, 2147483648
        %v8121 = vxor.u32 %v8105, 2147483648
        %v8122 = vxor.u32 %v8106, 2147483648
        %v8123 = vxor.u32 %v8107, 2147483648
        %v8124 = vxor.u32 %v8108, 2147483648
        %v8125 = vxor.u32 %v8109, 2147483648
        %v8126 = vxor.u32 %v8110, 2147483648
        %v8127 = vmul.f32 %v8111, 1.442695
        %v8128 = vpow.pop %v8127
        %v8129 = vmul.f32 %v8112, 1.442695
        %v8130 = vpow.pop %v8129
        %v8131 = vmul.f32 %v8113, 1.442695
        %v8132 = vpow.pop %v8131
        %v8133 = vmul.f32 %v8114, 1.442695
        %v8134 = vpow.pop %v8133
        %v8135 = vmul.f32 %v8115, 1.442695
        %v8136 = vpow.pop %v8135
        %v8137 = vmul.f32 %v8116, 1.442695
        %v8138 = vpow.pop %v8137
        %v8139 = vmul.f32 %v8117, 1.442695
        %v8140 = vpow.pop %v8139
        %v8141 = vmul.f32 %v8118, 1.442695
        %v8142 = vpow.pop %v8141
        %v8143 = vmul.f32 %v8119, 1.442695
        %v8144 = vpow.pop %v8143
        %v8145 = vmul.f32 %v8120, 1.442695
        %v8146 = vpow.pop %v8145
        %v8147 = vmul.f32 %v8121, 1.442695
        %v8148 = vpow.pop %v8147
        %v8149 = vmul.f32 %v8122, 1.442695
        %v8150 = vpow.pop %v8149
        %v8151 = vmul.f32 %v8123, 1.442695
        %v8152 = vpow.pop %v8151
        %v8153 = vmul.f32 %v8124, 1.442695
        %v8154 = vpow.pop %v8153
        %v8155 = vmul.f32 %v8125, 1.442695
        %v8156 = vpow.pop %v8155
        %v8157 = vmul.f32 %v8126, 1.442695
        %v8158 = vpow.pop %v8157
        %v8159 = vadd.f32 %v8128, 1.0
        %v8160 = vadd.f32 %v8130, 1.0
        %v8161 = vadd.f32 %v8132, 1.0
        %v8162 = vadd.f32 %v8134, 1.0
        %v8163 = vadd.f32 %v8136, 1.0
        %v8164 = vadd.f32 %v8138, 1.0
        %v8165 = vadd.f32 %v8140, 1.0
        %v8166 = vadd.f32 %v8142, 1.0
        %v8167 = vadd.f32 %v8144, 1.0
        %v8168 = vadd.f32 %v8146, 1.0
        %v8169 = vadd.f32 %v8148, 1.0
        %v8170 = vadd.f32 %v8150, 1.0
        %v8171 = vadd.f32 %v8152, 1.0
        %v8172 = vadd.f32 %v8154, 1.0
        %v8173 = vadd.f32 %v8156, 1.0
        %v8174 = vadd.f32 %v8158, 1.0
        %v8175 = vrcp.pop %v8159
        %v8176 = vmul.f32 1.0, %v8175
        %v8177 = vrcp.pop %v8160
        %v8178 = vmul.f32 1.0, %v8177
        %v8179 = vrcp.pop %v8161
        %v8180 = vmul.f32 1.0, %v8179
        %v8181 = vrcp.pop %v8162
        %v8182 = vmul.f32 1.0, %v8181
        %v8183 = vrcp.pop %v8163
        %v8184 = vmul.f32 1.0, %v8183
        %v8185 = vrcp.pop %v8164
        %v8186 = vmul.f32 1.0, %v8185
        %v8187 = vrcp.pop %v8165
        %v8188 = vmul.f32 1.0, %v8187
        %v8189 = vrcp.pop %v8166
        %v8190 = vmul.f32 1.0, %v8189
        %v8191 = vrcp.pop %v8167
        %v8192 = vmul.f32 1.0, %v8191
        %v8193 = vrcp.pop %v8168
        %v8194 = vmul.f32 1.0, %v8193
        %v8195 = vrcp.pop %v8169
        %v8196 = vmul.f32 1.0, %v8195
        %v8197 = vrcp.pop %v8170
        %v8198 = vmul.f32 1.0, %v8197
        %v8199 = vrcp.pop %v8171
        %v8200 = vmul.f32 1.0, %v8199
        %v8201 = vrcp.pop %v8172
        %v8202 = vmul.f32 1.0, %v8201
        %v8203 = vrcp.pop %v8173
        %v8204 = vmul.f32 1.0, %v8203
        %v8205 = vrcp.pop %v8174
        %v8206 = vmul.f32 1.0, %v8205
        %v8207 = vmul.f32 %v8074, %v8176
        %v8208 = vmul.f32 %v8075, %v8178
        %v8209 = vmul.f32 %v8076, %v8180
        %v8210 = vmul.f32 %v8077, %v8182
        %v8211 = vmul.f32 %v8078, %v8184
        %v8212 = vmul.f32 %v8079, %v8186
        %v8213 = vmul.f32 %v8080, %v8188
        %v8214 = vmul.f32 %v8081, %v8190
        %v8215 = vmul.f32 %v8082, %v8192
        %v8216 = vmul.f32 %v8083, %v8194
        %v8217 = vmul.f32 %v8084, %v8196
        %v8218 = vmul.f32 %v8085, %v8198
        %v8219 = vmul.f32 %v8086, %v8200
        %v8220 = vmul.f32 %v8087, %v8202
        %v8221 = vmul.f32 %v8088, %v8204
        %v8222 = vmul.f32 %v8089, %v8206
        %v8223 = vsel %vm615, %v8207, 0.0
        %8224 = vadd.xlane.f32.xlu0 %v8223
        %v8225 = vpop.xlane.xlu0 %8224
        %v8226 = vsel %vm615, %v8208, 0.0
        %8227 = vadd.xlane.f32.xlu0 %v8226
        %v8228 = vpop.xlane.xlu0 %8227
        %v8229 = vsel %vm615, %v8209, 0.0
        %8230 = vadd.xlane.f32.xlu0 %v8229
        %v8231 = vpop.xlane.xlu0 %8230
        %v8232 = vsel %vm615, %v8210, 0.0
        %8233 = vadd.xlane.f32.xlu0 %v8232
        %v8234 = vpop.xlane.xlu0 %8233
        %v8235 = vsel %vm615, %v8211, 0.0
        %8236 = vadd.xlane.f32.xlu0 %v8235
        %v8237 = vpop.xlane.xlu0 %8236
        %v8238 = vsel %vm615, %v8212, 0.0
        %8239 = vadd.xlane.f32.xlu0 %v8238
        %v8240 = vpop.xlane.xlu0 %8239
        %v8241 = vsel %vm615, %v8213, 0.0
        %8242 = vadd.xlane.f32.xlu0 %v8241
        %v8243 = vpop.xlane.xlu0 %8242
        %v8244 = vsel %vm615, %v8214, 0.0
        %8245 = vadd.xlane.f32.xlu0 %v8244
        %v8246 = vpop.xlane.xlu0 %8245
        %v8247 = vsel %vm615, %v8215, 0.0
        %8248 = vadd.xlane.f32.xlu0 %v8247
        %v8249 = vpop.xlane.xlu0 %8248
        %v8250 = vsel %vm615, %v8216, 0.0
        %8251 = vadd.xlane.f32.xlu0 %v8250
        %v8252 = vpop.xlane.xlu0 %8251
        %v8253 = vsel %vm615, %v8217, 0.0
        %8254 = vadd.xlane.f32.xlu0 %v8253
        %v8255 = vpop.xlane.xlu0 %8254
        %v8256 = vsel %vm615, %v8218, 0.0
        %8257 = vadd.xlane.f32.xlu0 %v8256
        %v8258 = vpop.xlane.xlu0 %8257
        %v8259 = vsel %vm615, %v8219, 0.0
        %8260 = vadd.xlane.f32.xlu0 %v8259
        %v8261 = vpop.xlane.xlu0 %8260
        %v8262 = vsel %vm615, %v8220, 0.0
        %8263 = vadd.xlane.f32.xlu0 %v8262
        %v8264 = vpop.xlane.xlu0 %8263
        %v8265 = vsel %vm615, %v8221, 0.0
        %8266 = vadd.xlane.f32.xlu0 %v8265
        %v8267 = vpop.xlane.xlu0 %8266
        %v8268 = vsel %vm615, %v8222, 0.0
        %8269 = vadd.xlane.f32.xlu0 %v8268
        %v8270 = vpop.xlane.xlu0 %8269
        %v8271 = vmul.f32 %v8225, %v1708
        %v8272 = vmul.f32 %v8228, %v1708
        %v8273 = vmul.f32 %v8231, %v1708
        %v8274 = vmul.f32 %v8234, %v1708
        %v8275 = vmul.f32 %v8237, %v1708
        %v8276 = vmul.f32 %v8240, %v1708
        %v8277 = vmul.f32 %v8243, %v1708
        %v8278 = vmul.f32 %v8246, %v1708
        %v8279 = vmul.f32 %v8249, %v1708
        %v8280 = vmul.f32 %v8252, %v1708
        %v8281 = vmul.f32 %v8255, %v1708
        %v8282 = vmul.f32 %v8258, %v1708
        %v8283 = vmul.f32 %v8261, %v1708
        %v8284 = vmul.f32 %v8264, %v1708
        %v8285 = vmul.f32 %v8267, %v1708
        %v8286 = vmul.f32 %v8270, %v1708
        %v8287 = vsub.f32 %v8207, %v8271
        %v8288 = vsub.f32 %v8208, %v8272
        %v8289 = vsub.f32 %v8209, %v8273
        %v8290 = vsub.f32 %v8210, %v8274
        %v8291 = vsub.f32 %v8211, %v8275
        %v8292 = vsub.f32 %v8212, %v8276
        %v8293 = vsub.f32 %v8213, %v8277
        %v8294 = vsub.f32 %v8214, %v8278
        %v8295 = vsub.f32 %v8215, %v8279
        %v8296 = vsub.f32 %v8216, %v8280
        %v8297 = vsub.f32 %v8217, %v8281
        %v8298 = vsub.f32 %v8218, %v8282
        %v8299 = vsub.f32 %v8219, %v8283
        %v8300 = vsub.f32 %v8220, %v8284
        %v8301 = vsub.f32 %v8221, %v8285
        %v8302 = vsub.f32 %v8222, %v8286
        %v8303 = vmul.f32 %v8287, %v8287
        %v8304 = vmul.f32 %v8288, %v8288
        %v8305 = vmul.f32 %v8289, %v8289
        %v8306 = vmul.f32 %v8290, %v8290
        %v8307 = vmul.f32 %v8291, %v8291
        %v8308 = vmul.f32 %v8292, %v8292
        %v8309 = vmul.f32 %v8293, %v8293
        %v8310 = vmul.f32 %v8294, %v8294
        %v8311 = vmul.f32 %v8295, %v8295
        %v8312 = vmul.f32 %v8296, %v8296
        %v8313 = vmul.f32 %v8297, %v8297
        %v8314 = vmul.f32 %v8298, %v8298
        %v8315 = vmul.f32 %v8299, %v8299
        %v8316 = vmul.f32 %v8300, %v8300
        %v8317 = vmul.f32 %v8301, %v8301
        %v8318 = vmul.f32 %v8302, %v8302
        %v8319 = vsel %vm615, %v8303, 0.0
        %8320 = vadd.xlane.f32.xlu0 %v8319
        %v8321 = vpop.xlane.xlu0 %8320
        %v8322 = vsel %vm615, %v8304, 0.0
        %8323 = vadd.xlane.f32.xlu0 %v8322
        %v8324 = vpop.xlane.xlu0 %8323
        %v8325 = vsel %vm615, %v8305, 0.0
        %8326 = vadd.xlane.f32.xlu0 %v8325
        %v8327 = vpop.xlane.xlu0 %8326
        %v8328 = vsel %vm615, %v8306, 0.0
        %8329 = vadd.xlane.f32.xlu0 %v8328
        %v8330 = vpop.xlane.xlu0 %8329
        %v8331 = vsel %vm615, %v8307, 0.0
        %8332 = vadd.xlane.f32.xlu0 %v8331
        %v8333 = vpop.xlane.xlu0 %8332
        %v8334 = vsel %vm615, %v8308, 0.0
        %8335 = vadd.xlane.f32.xlu0 %v8334
        %v8336 = vpop.xlane.xlu0 %8335
        %v8337 = vsel %vm615, %v8309, 0.0
        %8338 = vadd.xlane.f32.xlu0 %v8337
        %v8339 = vpop.xlane.xlu0 %8338
        %v8340 = vsel %vm615, %v8310, 0.0
        %8341 = vadd.xlane.f32.xlu0 %v8340
        %v8342 = vpop.xlane.xlu0 %8341
        %v8343 = vsel %vm615, %v8311, 0.0
        %8344 = vadd.xlane.f32.xlu0 %v8343
        %v8345 = vpop.xlane.xlu0 %8344
        %v8346 = vsel %vm615, %v8312, 0.0
        %8347 = vadd.xlane.f32.xlu0 %v8346
        %v8348 = vpop.xlane.xlu0 %8347
        %v8349 = vsel %vm615, %v8313, 0.0
        %8350 = vadd.xlane.f32.xlu0 %v8349
        %v8351 = vpop.xlane.xlu0 %8350
        %v8352 = vsel %vm615, %v8314, 0.0
        %8353 = vadd.xlane.f32.xlu0 %v8352
        %v8354 = vpop.xlane.xlu0 %8353
        %v8355 = vsel %vm615, %v8315, 0.0
        %8356 = vadd.xlane.f32.xlu0 %v8355
        %v8357 = vpop.xlane.xlu0 %8356
        %v8358 = vsel %vm615, %v8316, 0.0
        %8359 = vadd.xlane.f32.xlu0 %v8358
        %v8360 = vpop.xlane.xlu0 %8359
        %v8361 = vsel %vm615, %v8317, 0.0
        %8362 = vadd.xlane.f32.xlu0 %v8361
        %v8363 = vpop.xlane.xlu0 %8362
        %v8364 = vsel %vm615, %v8318, 0.0
        %8365 = vadd.xlane.f32.xlu0 %v8364
        %v8366 = vpop.xlane.xlu0 %8365
        %v8367 = vmul.f32 %v8321, %v1708
        %v8368 = vmul.f32 %v8324, %v1708
        %v8369 = vmul.f32 %v8327, %v1708
        %v8370 = vmul.f32 %v8330, %v1708
        %v8371 = vmul.f32 %v8333, %v1708
        %v8372 = vmul.f32 %v8336, %v1708
        %v8373 = vmul.f32 %v8339, %v1708
        %v8374 = vmul.f32 %v8342, %v1708
        %v8375 = vmul.f32 %v8345, %v1708
        %v8376 = vmul.f32 %v8348, %v1708
        %v8377 = vmul.f32 %v8351, %v1708
        %v8378 = vmul.f32 %v8354, %v1708
        %v8379 = vmul.f32 %v8357, %v1708
        %v8380 = vmul.f32 %v8360, %v1708
        %v8381 = vmul.f32 %v8363, %v1708
        %v8382 = vmul.f32 %v8366, %v1708
        %v8383 = vadd.f32 %v8367, 1e-05
        %v8384 = vadd.f32 %v8368, 1e-05
        %v8385 = vadd.f32 %v8369, 1e-05
        %v8386 = vadd.f32 %v8370, 1e-05
        %v8387 = vadd.f32 %v8371, 1e-05
        %v8388 = vadd.f32 %v8372, 1e-05
        %v8389 = vadd.f32 %v8373, 1e-05
        %v8390 = vadd.f32 %v8374, 1e-05
        %v8391 = vadd.f32 %v8375, 1e-05
        %v8392 = vadd.f32 %v8376, 1e-05
        %v8393 = vadd.f32 %v8377, 1e-05
        %v8394 = vadd.f32 %v8378, 1e-05
        %v8395 = vadd.f32 %v8379, 1e-05
        %v8396 = vadd.f32 %v8380, 1e-05
        %v8397 = vadd.f32 %v8381, 1e-05
        %v8398 = vadd.f32 %v8382, 1e-05
        %v8399 = vrsqrt.pop %v8383
        %v8400 = vrsqrt.pop %v8384
        %v8401 = vrsqrt.pop %v8385
        %v8402 = vrsqrt.pop %v8386
        %v8403 = vrsqrt.pop %v8387
        %v8404 = vrsqrt.pop %v8388
        %v8405 = vrsqrt.pop %v8389
        %v8406 = vrsqrt.pop %v8390
        %v8407 = vrsqrt.pop %v8391
        %v8408 = vrsqrt.pop %v8392
        %v8409 = vrsqrt.pop %v8393
        %v8410 = vrsqrt.pop %v8394
        %v8411 = vrsqrt.pop %v8395
        %v8412 = vrsqrt.pop %v8396
        %v8413 = vrsqrt.pop %v8397
        %v8414 = vrsqrt.pop %v8398
        %v8415 = vmul.f32 %v8287, %v8399
        %v8416 = vmul.f32 %v8288, %v8400
        %v8417 = vmul.f32 %v8289, %v8401
        %v8418 = vmul.f32 %v8290, %v8402
        %v8419 = vmul.f32 %v8291, %v8403
        %v8420 = vmul.f32 %v8292, %v8404
        %v8421 = vmul.f32 %v8293, %v8405
        %v8422 = vmul.f32 %v8294, %v8406
        %v8423 = vmul.f32 %v8295, %v8407
        %v8424 = vmul.f32 %v8296, %v8408
        %v8425 = vmul.f32 %v8297, %v8409
        %v8426 = vmul.f32 %v8298, %v8410
        %v8427 = vmul.f32 %v8299, %v8411
        %v8428 = vmul.f32 %v8300, %v8412
        %v8429 = vmul.f32 %v8301, %v8413
        %v8430 = vmul.f32 %v8302, %v8414
        %v8431 = vld [vmem:[%s6 + $0x5] sm:$0x1]
        %v8432 = vlaneseq
        %v8433 = vshrl.u32 %v8432, 7
        %v8434 = vsub.s32 0, %v8433
        %v8435 = vrot.slane %v8431, %v8434
        %v8436 = vmul.f32 %v8415, %v8435
        %v8437 = vmul.f32 %v8416, %v8435
        %v8438 = vmul.f32 %v8417, %v8435
        %v8439 = vmul.f32 %v8418, %v8435
        %v8440 = vmul.f32 %v8419, %v8435
        %v8441 = vmul.f32 %v8420, %v8435
        %v8442 = vmul.f32 %v8421, %v8435
        %v8443 = vmul.f32 %v8422, %v8435
        %v8444 = vmul.f32 %v8423, %v8435
        %v8445 = vmul.f32 %v8424, %v8435
        %v8446 = vmul.f32 %v8425, %v8435
        %v8447 = vmul.f32 %v8426, %v8435
        %v8448 = vmul.f32 %v8427, %v8435
        %v8449 = vmul.f32 %v8428, %v8435
        %v8450 = vmul.f32 %v8429, %v8435
        %v8451 = vmul.f32 %v8430, %v8435
        %v8452 = vld [vmem:[%s7 + $0x5] sm:$0x1]
        %v8453 = vlaneseq
        %v8454 = vshrl.u32 %v8453, 7
        %v8455 = vsub.s32 0, %v8454
        %v8456 = vrot.slane %v8452, %v8455
        %v8457 = vadd.f32 %v8436, %v8456
        %v8458 = vadd.f32 %v8437, %v8456
        %v8459 = vadd.f32 %v8438, %v8456
        %v8460 = vadd.f32 %v8439, %v8456
        %v8461 = vadd.f32 %v8440, %v8456
        %v8462 = vadd.f32 %v8441, %v8456
        %v8463 = vadd.f32 %v8442, %v8456
        %v8464 = vadd.f32 %v8443, %v8456
        %v8465 = vadd.f32 %v8444, %v8456
        %v8466 = vadd.f32 %v8445, %v8456
        %v8467 = vadd.f32 %v8446, %v8456
        %v8468 = vadd.f32 %v8447, %v8456
        %v8469 = vadd.f32 %v8448, %v8456
        %v8470 = vadd.f32 %v8449, %v8456
        %v8471 = vadd.f32 %v8450, %v8456
        %v8472 = vadd.f32 %v8451, %v8456
        %s8473 = sld [smem:[#allocation3 + $0x5]]
        %v8474 = vstv %s8473
        %v8475 = vmul.f32 %v8474, %v8457
        %v8476 = vmul.f32 %v8474, %v8458
        %v8477 = vmul.f32 %v8474, %v8459
        %v8478 = vmul.f32 %v8474, %v8460
        %v8479 = vmul.f32 %v8474, %v8461
        %v8480 = vmul.f32 %v8474, %v8462
        %v8481 = vmul.f32 %v8474, %v8463
        %v8482 = vmul.f32 %v8474, %v8464
        %v8483 = vmul.f32 %v8474, %v8465
        %v8484 = vmul.f32 %v8474, %v8466
        %v8485 = vmul.f32 %v8474, %v8467
        %v8486 = vmul.f32 %v8474, %v8468
        %v8487 = vmul.f32 %v8474, %v8469
        %v8488 = vmul.f32 %v8474, %v8470
        %v8489 = vmul.f32 %v8474, %v8471
        %v8490 = vmul.f32 %v8474, %v8472
        %v8491 = vadd.f32 %v7177, %v8475
        %v8492 = vadd.f32 %v7178, %v8476
        %v8493 = vadd.f32 %v7179, %v8477
        %v8494 = vadd.f32 %v7180, %v8478
        %v8495 = vadd.f32 %v7181, %v8479
        %v8496 = vadd.f32 %v7182, %v8480
        %v8497 = vadd.f32 %v7183, %v8481
        %v8498 = vadd.f32 %v7184, %v8482
        %v8499 = vadd.f32 %v7185, %v8483
        %v8500 = vadd.f32 %v7186, %v8484
        %v8501 = vadd.f32 %v7187, %v8485
        %v8502 = vadd.f32 %v7188, %v8486
        %v8503 = vadd.f32 %v7189, %v8487
        %v8504 = vadd.f32 %v7190, %v8488
        %v8505 = vadd.f32 %v7191, %v8489
        %v8506 = vadd.f32 %v7192, %v8490
        %v8507 = vld [vmem:[%s8] sm:$0x3]
        %v8508 = vpack.c.bf16 %v8492, %v8491
        %v8509 = vpack.c.bf16 %v8494, %v8493
        %v8510 = vpack.c.bf16 %v8496, %v8495
        %v8511 = vpack.c.bf16 %v8498, %v8497
        %v8512 = vpack.c.bf16 %v8500, %v8499
        %v8513 = vpack.c.bf16 %v8502, %v8501
        %v8514 = vpack.c.bf16 %v8504, %v8503
        %v8515 = vpack.c.bf16 %v8506, %v8505
        %v8516 = vld [vmem:[%s9] sm:$0xf]
        %8518 = vset.pattern.permute.xlu0 0
        %8519 = vperm.xlu0 %8518, %v8516
        %v8520 = vpop.permute.xlu0 %8519
        %v8523 = vsel %vm615, %v8507, 0
        %v8526 = vsel %vm615, %v8508, 0
        %v8529 = vsel %vm615, %v8509, 0
        %v8532 = vsel %vm615, %v8510, 0
        %v8535 = vsel %vm615, %v8511, 0
        %v8538 = vsel %vm615, %v8512, 0
        %v8541 = vsel %vm615, %v8513, 0
        %v8544 = vsel %vm615, %v8514, 0
        %v8547 = vsel %vm615, %v8515, 0
        %8549 = vmatprep.subr.bf16.mxu0 0
        %8550 = vmatpush1.bf16.xpose.msra.mxu0 %v8526
        %8551 = vmatprep.subr.bf16.mxu0 0
        %8552 = vmatpush1.bf16.xpose.msra.mxu0 %v8529
        %8553 = vmatprep.subr.bf16.mxu0 0
        %8554 = vmatpush1.bf16.xpose.msra.mxu0 %v8532
        %8555 = vmatprep.subr.bf16.mxu0 0
        %8556 = vmatpush1.bf16.xpose.msra.mxu0 %v8535
        %8557 = vmatprep.subr.bf16.mxu0 0
        %8558 = vmatpush1.bf16.xpose.msra.mxu0 %v8538
        %8559 = vmatprep.subr.bf16.mxu0 0
        %8560 = vmatpush1.bf16.xpose.msra.mxu0 %v8541
        %8561 = vmatprep.subr.bf16.mxu0 0
        %8562 = vmatpush1.bf16.xpose.msra.mxu0 %v8544
        %8563 = vmatprep.subr.bf16.mxu0 0
        %8564 = vmatpush1.bf16.xpose.msra.mxu0 %v8547
        %8565 = vmatprep.subr.bf16.mxu0 0
        %8566 = vmatpush1.bf16.xpose.msra.mxu0 0
        %8567 = vmatprep.subr.bf16.mxu0 0
        %8568 = vmatpush1.bf16.xpose.msra.mxu0 0
        %8569 = vmatprep.subr.bf16.mxu0 0
        %8570 = vmatpush1.bf16.xpose.msra.mxu0 0
        %8571 = vmatprep.subr.bf16.mxu0 0
        %8572 = vmatpush1.bf16.xpose.msra.mxu0 0
        %8573 = vmatprep.subr.bf16.mxu0 0
        %8574 = vmatpush1.bf16.xpose.msra.mxu0 0
        %8575 = vmatprep.subr.bf16.mxu0 0
        %8576 = vmatpush1.bf16.xpose.msra.mxu0 0
        %8577 = vmatprep.subr.bf16.mxu0 0
        %8578 = vmatpush1.bf16.xpose.msra.mxu0 0
        %8579 = vmatprep.subr.bf16.mxu0 0
        %8580 = vmatpush1.bf16.xpose.msra.mxu0 0
        %8581 = vmatprep.mubr.bf16.mxu0 0
        %8582 = vmatmul.mubr.bf16.gmra.mrb[0].mxu0 %v8523
        %v8583 = vpop.f32.mrb[0].mxu0
        %v8584 = vadd.f32 %v8520, %v8583
        %v8585 = vpop.f32.mrb[0].mxu0
        %v8586 = vpop.f32.mrb[0].mxu0
        %v8587 = vpop.f32.mrb[0].mxu0
        %8588 = vdwg.mxu0
        %8589 = vst [vmem:[%s403] sm:$0xf] %v8584
        %p8590 = scmp.lt.s32.totalorder %s23, 1
        %s8591 = scalar_select %p8590, %s23, 1
        %s8592 = smul.addr %s8591, 4
        %s8593 = scalar_lea.vmem %s11, %s8592
        // Predicated region
        $region69: #{selector2_forward.1} parent=63 // pred_check
          %p8594 = pneg %p277
        $region70: #{selector2_forward.1} parent=63 // pred_check_branch
          %8596 = sbr.rel (%p8594) target = $region72
        $region71: #{selector2_forward.1} parent=63 // pred_region
          _
        $region72: #{selector2_forward.1} parent=63 // pred_fallthru
          _
      $region64: #{selector2_forward.1} parent=5 // pred_fallthru
        _
      %p8597 = scmp.le.s32.totalorder 2, %s18
      // Predicated region
      $region73: #{selector2_forward.1} parent=5 // pred_check
        %p8598 = pneg %p8597
      $region74: #{selector2_forward.1} parent=5 // pred_check_branch
        %8600 = sbr.rel (%p8598) target = $region76
      $region75: #{selector2_forward.1} parent=5 // pred_region
        %s8601 = ssub.s32 %s18, 2
        // Predicated region
        $region77: #{selector2_forward.1} parent=75 // pred_check
          %p8602 = pneg %p283
        $region78: #{selector2_forward.1} parent=75 // pred_check_branch
          %8604 = sbr.rel (%p8602) target = $region80
        $region79: #{selector2_forward.1} parent=75 // pred_region
          %p8605 = scmp.lt.s32.totalorder %s24, 1
          %s8606 = scalar_select %p8605, %s24, 1
          %s8607 = smul.addr %s8606, 4
          %s8608 = scalar_lea.vmem %s11, %s8607
        $region80: #{selector2_forward.1} parent=75 // pred_fallthru
          _
      $region76: #{selector2_forward.1} parent=5 // pred_fallthru
        _
    $region6: #{selector2_forward.1} parent=1 // loop_footer
      %s22 = sadd.s32 1, %s18
    $region7: #{selector2_forward.1} parent=1 // loop_footer_branch
      %17 = sbr.rel target = $region3
    $region8: #{selector2_forward.1} parent=1 // loop_exit
      _
    %8609 = vsyncpa [#allocation4], 1
    %s8610 = scalar_lea.sflag [#allocation4], 1
    %8611 = vsyncpa %s8610, 1

</llo_original>
